<compile_context>
chip_gen: v7x
topology: tpu7x:2x2x1
jax: 0.10.0
libtpu: 0.0.40
codegen_flags: <defaults>
</compile_context>

<pallas_src>
import functools

import jax
import jax.numpy as jnp
from jax.experimental import pallas as pl
from jax.experimental.pallas import tpu as pltpu

KSIZE = 5
PAD = 2
BN_EPS = 1e-5
N_MEL = 80            # mel channels fixed by the module
C0 = 128              # mel channels padded up to one full lane register
HIDDEN = 512          # hidden channels fixed by the module
HALO = 16             # front/back time halo (>= PAD); 16 keeps bf16 stores sublane-aligned
ACT_DTYPE = jnp.bfloat16   # matmul operand dtype; accumulation stays f32


def _postnet_kernel(x_ref, w0_ref, wh_hbm, w4_ref, sh_h_ref, sh4_ref,
                    o_ref, xpad_ref, h_ref, wbuf_ref, sem,
                    *, batch, seq_len, seq_valid):
    # x_ref:    (B, T, C0)           bf16 padded mel input, channels-last
    # w0_ref:   (KSIZE, C0, HIDDEN)  bf16 layer-0 weight (BN scale folded in)
    # wh_hbm:   (3, KSIZE, H, H)     bf16 layers 1..3 weights, left in HBM
    # w4_ref:   (KSIZE, HIDDEN, C0)  bf16 layer-4 weight (Cout padded to 128)
    # sh_h_ref: (4, HIDDEN)          f32 folded BN shift, layers 0..3
    # sh4_ref:  (1, C0)              f32 folded BN shift, layer 4
    # o_ref:    (B, T, C0)           f32 output
    # xpad_ref: (B, T+2*HALO, C0)    bf16 VMEM scratch (layer-0 input + halo)
    # h_ref:    (B, T+2*HALO, H)     bf16 VMEM scratch (hidden acts + halo)
    # wbuf_ref: (3, KSIZE, H, H)     bf16 VMEM landing buffers for wh
    # sem:      DMA semaphores (3,)
    B, T = batch, seq_len

    # ---- kick off hidden-layer weight fetches; they overlap layers 0..2 -----
    cps = []
    for l in range(3):
        cp = pltpu.make_async_copy(wh_hbm.at[l], wbuf_ref.at[l], sem.at[l])
        cp.start()
        cps.append(cp)

    # ---- zero only the halo rows (not the whole scratch buffers) ------------
    xpad_ref[:, :HALO, :] = jnp.zeros((B, HALO, C0), ACT_DTYPE)
    xpad_ref[:, HALO + T:, :] = jnp.zeros((B, HALO, C0), ACT_DTYPE)
    h_ref[:, :HALO, :] = jnp.zeros((B, HALO, HIDDEN), ACT_DTYPE)
    h_ref[:, HALO + T:, :] = jnp.zeros((B, HALO, HIDDEN), ACT_DTYPE)
    xpad_ref[:, HALO:HALO + T, :] = x_ref[...]

    # Tail mask only exists when T was rounded up to a multiple of 8; it keeps
    # the padded tail of the hidden state at exactly zero so the 'same'
    # zero-padding semantics of every layer are preserved.
    tail_mask = None
    if seq_valid < seq_len:
        tail_mask = jax.lax.broadcasted_iota(jnp.int32, (B, T, 1), 1) < seq_valid

    def conv(buf_ref, w_at):
        # Tap-accumulated conv: 5 x (B*T, Cin) @ (Cin, Cout), f32 accumulation.
        cin = buf_ref.shape[-1]
        acc = None
        for k in range(KSIZE):
            s = HALO - PAD + k
            xk = buf_ref[:, s:s + T, :].reshape(B * T, cin)
            p = jnp.dot(xk, w_at(k), preferred_element_type=jnp.float32)
            acc = p if acc is None else acc + p
        return acc

    def store_hidden(y):
        y = y.reshape(B, T, HIDDEN)
        if tail_mask is not None:
            y = jnp.where(tail_mask, y, 0.0)
        h_ref[:, HALO:HALO + T, :] = y.astype(ACT_DTYPE)

    # ---- layer 0: C0 -> HIDDEN, tanh (BN scale folded into weights) ---------
    y = jnp.tanh(conv(xpad_ref, lambda k: w0_ref[k]) + sh_h_ref[0:1, :])
    store_hidden(y)

    # ---- layers 1..3: HIDDEN -> HIDDEN, tanh ---------------------------------
    for l in range(1, 4):
        idx = l - 1
        cps[idx].wait()                      # weights for this layer have landed
        y = jnp.tanh(conv(h_ref, lambda k, idx=idx: wbuf_ref[idx, k])
                     + sh_h_ref[l:l + 1, :])
        store_hidden(y)

    # ---- layer 4: HIDDEN -> C0 (padded mel), linear ---------------------------
    y = conv(h_ref, lambda k: w4_ref[k]) + sh4_ref[...]
    o_ref[...] = y.reshape(B, T, C0).astype(o_ref.dtype)


def init_postnet_params(key, n_mel=N_MEL, hidden=HIDDEN):
    """Deterministic synthetic parameters mirroring the PyTorch module's shapes."""
    layer_defs = [
        (n_mel, hidden, 5.0 / 3.0),    # tanh gain
        (hidden, hidden, 5.0 / 3.0),
        (hidden, hidden, 5.0 / 3.0),
        (hidden, hidden, 5.0 / 3.0),
        (hidden, n_mel, 1.0),          # linear gain
    ]
    params = []
    for (cin, cout, gain) in layer_defs:
        key, kw, kb, kg, kbe, km, kv = jax.random.split(key, 7)
        fan_in, fan_out = cin * KSIZE, cout * KSIZE
        bound = gain * jnp.sqrt(6.0 / (fan_in + fan_out))          # xavier_uniform_
        w = jax.random.uniform(kw, (KSIZE, cin, cout), jnp.float32, -bound, bound)
        b_bound = 1.0 / jnp.sqrt(fan_in)
        bias = jax.random.uniform(kb, (cout,), jnp.float32, -b_bound, b_bound)
        gamma = jax.random.uniform(kg, (cout,), jnp.float32, 0.5, 1.5)
        beta = 0.1 * jax.random.normal(kbe, (cout,), jnp.float32)
        r_mean = 0.1 * jax.random.normal(km, (cout,), jnp.float32)
        r_var = jax.random.uniform(kv, (cout,), jnp.float32, 0.5, 1.5)
        # fold conv bias + BN (eval mode) into a single per-channel affine
        scale = gamma / jnp.sqrt(r_var + BN_EPS)
        shift = (bias - r_mean) * scale + beta
        params.append((w, scale, shift))
    return params


def pack_params(params, n_mel):
    """Fold BN scale into the weight columns, pad channels, cast weights to bf16."""
    ws, shifts = [], []
    for (w, scale, shift) in params:
        ws.append(w * scale[None, None, :])          # scale folded into Cout columns
        shifts.append(shift)
    pad_c = C0 - n_mel
    # layer 0: pad Cin 80 -> 128 with zero rows (padded input channels are zero too)
    w0p = jnp.pad(ws[0], ((0, 0), (0, pad_c), (0, 0))).astype(ACT_DTYPE)   # (K, C0, H)
    wh = jnp.stack(ws[1:4]).astype(ACT_DTYPE)                              # (3, K, H, H)
    # layer 4: pad Cout 80 -> 128 with zero columns (lane-dense output store)
    w4p = jnp.pad(ws[4], ((0, 0), (0, 0), (0, pad_c))).astype(ACT_DTYPE)   # (K, H, C0)
    sh_h = jnp.stack(shifts[0:4])                                          # (4, H) f32
    sh4 = jnp.pad(shifts[4], (0, pad_c)).reshape(1, C0)                    # (1, C0) f32
    return w0p, wh, w4p, sh_h, sh4


def postnet_forward(x_ncw, params):
    """x_ncw: (B, n_mel, T) like the PyTorch module. Returns (B, n_mel, T) f32."""
    B, c_mel, T = x_ncw.shape
    w0p, wh, w4p, sh_h, sh4 = pack_params(params, c_mel)

    T_round = ((T + 7) // 8) * 8                                # keep reshapes tile-aligned
    x = jnp.transpose(x_ncw, (0, 2, 1))                         # NCW -> BTC
    x = jnp.pad(x, ((0, 0), (0, T_round - T), (0, C0 - c_mel))) # lane-pad 80 -> 128
    x = x.astype(ACT_DTYPE)

    kernel = functools.partial(_postnet_kernel, batch=B,
                               seq_len=T_round, seq_valid=T)
    vmem = pl.BlockSpec(memory_space=pltpu.MemorySpace.VMEM)
    hbm = pl.BlockSpec(memory_space=pl.ANY)      # hidden weights stay in HBM, DMA'd manually

    out = pl.pallas_call(
        kernel,
        out_shape=jax.ShapeDtypeStruct((B, T_round, C0), jnp.float32),
        in_specs=[vmem, vmem, hbm, vmem, vmem, vmem],
        out_specs=vmem,
        scratch_shapes=[
            pltpu.VMEM((B, T_round + 2 * HALO, C0), ACT_DTYPE),      # padded layer-0 input
            pltpu.VMEM((B, T_round + 2 * HALO, HIDDEN), ACT_DTYPE),  # padded hidden acts
            pltpu.VMEM((3, KSIZE, HIDDEN, HIDDEN), ACT_DTYPE),       # hidden weight landing bufs
            pltpu.SemaphoreType.DMA((3,)),
        ],
        compiler_params=pltpu.CompilerParams(
            vmem_limit_bytes=48 * 1024 * 1024),   # ~10 MB used; fits v7x 64 MiB and v5e/v6e
    )(x, w0p, wh, w4p, sh_h, sh4)

    out = out[:, :T, :c_mel]                                    # drop time/channel pad
    return jnp.transpose(out, (0, 2, 1))                        # BTC -> NCW


def postnet_reference(x_ncw, params):
    """Pure-JAX reference mirroring the kernel's numerics: BN eval fold, bf16
    matmul operands (weights & activations), f32 accumulation."""
    x = jnp.transpose(x_ncw, (0, 2, 1))
    n = len(params)
    for i, (w, scale, shift) in enumerate(params):
        T = x.shape[1]
        w_eff = (w * scale[None, None, :]).astype(ACT_DTYPE).astype(jnp.float32)
        xq = x.astype(ACT_DTYPE).astype(jnp.float32)
        xp = jnp.pad(xq, ((0, 0), (PAD, PAD), (0, 0)))
        y = sum(jnp.einsum('btc,cd->btd', xp[:, k:k + T, :], w_eff[k])
                for k in range(KSIZE))
        y = y + shift
        x = jnp.tanh(y) if i < n - 1 else y
    return jnp.transpose(x, (0, 2, 1))


if __name__ == "__main__":
    key = jax.random.PRNGKey(0)
    k_params, k_x = jax.random.split(key)

    B, T = 2, 16                                   # channel sizes fixed by the module
    params = init_postnet_params(k_params, n_mel=N_MEL, hidden=HIDDEN)
    x = jax.random.normal(k_x, (B, N_MEL, T), jnp.float32)   # PyTorch-style (N, C, W)

    out = postnet_forward(x, params)
    jax.block_until_ready(out)
    assert out.shape == (B, N_MEL, T), out.shape

    ref = postnet_reference(x, params)
    max_err = float(jnp.max(jnp.abs(out - ref)))
    assert jnp.allclose(out, ref, atol=2e-2, rtol=2e-2), max_err
    print("KERNEL_OK")
</pallas_src>

<mosaic_0001>
module attributes {stable_mosaic.version = 11 : i64} {
  func.func @_postnet_kernel(%arg0: memref<2x16x128xbf16, #tpu.memory_space<vmem>>, %arg1: memref<5x128x512xbf16, #tpu.memory_space<vmem>>, %arg2: memref<3x5x512x512xbf16, #tpu.memory_space<any>>, %arg3: memref<5x512x128xbf16, #tpu.memory_space<vmem>>, %arg4: memref<4x512xf32, #tpu.memory_space<vmem>>, %arg5: memref<1x128xf32, #tpu.memory_space<vmem>>, %arg6: memref<2x16x128xf32, #tpu.memory_space<vmem>>, %arg7: memref<2x48x128xbf16, #tpu.memory_space<vmem>>, %arg8: memref<2x48x512xbf16, #tpu.memory_space<vmem>>, %arg9: memref<3x5x512x512xbf16, #tpu.memory_space<vmem>>, %arg10: memref<3x!tpu.dma_semaphore, #tpu.memory_space<semaphore_mem>>) attributes {dimension_semantics = [], scalar_prefetch = 0 : i64, scratch_operands = 4 : i64, tpu.core_type = #tpu.core_type<tc>} {
    %c0_i32 = arith.constant 0 : i32
    %c0_i32_0 = arith.constant 0 : i32
    %c0_i32_1 = arith.constant 0 : i32
    %c0_i32_2 = arith.constant 0 : i32
    %c0_i32_3 = arith.constant 0 : i32
    %c0_i32_4 = arith.constant 0 : i32
    %0 = tpu.memref_slice %arg2[%c0_i32, %c0_i32_2, %c0_i32_3, %c0_i32_4] : memref<3x5x512x512xbf16, #tpu.memory_space<any>> -> memref<1x5x512x512xbf16, #tpu.memory_space<any>>
    %1 = tpu.memref_squeeze %0 : memref<1x5x512x512xbf16, #tpu.memory_space<any>> -> memref<5x512x512xbf16, #tpu.memory_space<any>>
    %c0_i32_5 = arith.constant 0 : i32
    %c0_i32_6 = arith.constant 0 : i32
    %c0_i32_7 = arith.constant 0 : i32
    %2 = tpu.memref_slice %arg9[%c0_i32_0, %c0_i32_5, %c0_i32_6, %c0_i32_7] : memref<3x5x512x512xbf16, #tpu.memory_space<vmem>> -> memref<1x5x512x512xbf16, #tpu.memory_space<vmem>>
    %3 = tpu.memref_squeeze %2 : memref<1x5x512x512xbf16, #tpu.memory_space<vmem>> -> memref<5x512x512xbf16, #tpu.memory_space<vmem>>
    %4 = tpu.memref_slice %arg10[%c0_i32_1] : memref<3x!tpu.dma_semaphore, #tpu.memory_space<semaphore_mem>> -> memref<1x!tpu.dma_semaphore, #tpu.memory_space<semaphore_mem>>
    %5 = tpu.memref_squeeze %4 : memref<1x!tpu.dma_semaphore, #tpu.memory_space<semaphore_mem>> -> memref<!tpu.dma_semaphore, #tpu.memory_space<semaphore_mem>>
    tpu.enqueue_dma source(%1 : memref<5x512x512xbf16, #tpu.memory_space<any>>) target(%3 : memref<5x512x512xbf16, #tpu.memory_space<vmem>>) target_semaphore(%5 : memref<!tpu.dma_semaphore, #tpu.memory_space<semaphore_mem>>)
    %c1_i32 = arith.constant 1 : i32
    %c1_i32_8 = arith.constant 1 : i32
    %c1_i32_9 = arith.constant 1 : i32
    %c0_i32_10 = arith.constant 0 : i32
    %c0_i32_11 = arith.constant 0 : i32
    %c0_i32_12 = arith.constant 0 : i32
    %6 = tpu.memref_slice %arg2[%c1_i32, %c0_i32_10, %c0_i32_11, %c0_i32_12] : memref<3x5x512x512xbf16, #tpu.memory_space<any>> -> memref<1x5x512x512xbf16, #tpu.memory_space<any>>
    %7 = tpu.memref_squeeze %6 : memref<1x5x512x512xbf16, #tpu.memory_space<any>> -> memref<5x512x512xbf16, #tpu.memory_space<any>>
    %c0_i32_13 = arith.constant 0 : i32
    %c0_i32_14 = arith.constant 0 : i32
    %c0_i32_15 = arith.constant 0 : i32
    %8 = tpu.memref_slice %arg9[%c1_i32_8, %c0_i32_13, %c0_i32_14, %c0_i32_15] : memref<3x5x512x512xbf16, #tpu.memory_space<vmem>> -> memref<1x5x512x512xbf16, #tpu.memory_space<vmem>>
    %9 = tpu.memref_squeeze %8 : memref<1x5x512x512xbf16, #tpu.memory_space<vmem>> -> memref<5x512x512xbf16, #tpu.memory_space<vmem>>
    %10 = tpu.memref_slice %arg10[%c1_i32_9] : memref<3x!tpu.dma_semaphore, #tpu.memory_space<semaphore_mem>> -> memref<1x!tpu.dma_semaphore, #tpu.memory_space<semaphore_mem>>
    %11 = tpu.memref_squeeze %10 : memref<1x!tpu.dma_semaphore, #tpu.memory_space<semaphore_mem>> -> memref<!tpu.dma_semaphore, #tpu.memory_space<semaphore_mem>>
    tpu.enqueue_dma source(%7 : memref<5x512x512xbf16, #tpu.memory_space<any>>) target(%9 : memref<5x512x512xbf16, #tpu.memory_space<vmem>>) target_semaphore(%11 : memref<!tpu.dma_semaphore, #tpu.memory_space<semaphore_mem>>)
    %c2_i32 = arith.constant 2 : i32
    %c2_i32_16 = arith.constant 2 : i32
    %c2_i32_17 = arith.constant 2 : i32
    %c0_i32_18 = arith.constant 0 : i32
    %c0_i32_19 = arith.constant 0 : i32
    %c0_i32_20 = arith.constant 0 : i32
    %12 = tpu.memref_slice %arg2[%c2_i32, %c0_i32_18, %c0_i32_19, %c0_i32_20] : memref<3x5x512x512xbf16, #tpu.memory_space<any>> -> memref<1x5x512x512xbf16, #tpu.memory_space<any>>
    %13 = tpu.memref_squeeze %12 : memref<1x5x512x512xbf16, #tpu.memory_space<any>> -> memref<5x512x512xbf16, #tpu.memory_space<any>>
    %c0_i32_21 = arith.constant 0 : i32
    %c0_i32_22 = arith.constant 0 : i32
    %c0_i32_23 = arith.constant 0 : i32
    %14 = tpu.memref_slice %arg9[%c2_i32_16, %c0_i32_21, %c0_i32_22, %c0_i32_23] : memref<3x5x512x512xbf16, #tpu.memory_space<vmem>> -> memref<1x5x512x512xbf16, #tpu.memory_space<vmem>>
    %15 = tpu.memref_squeeze %14 : memref<1x5x512x512xbf16, #tpu.memory_space<vmem>> -> memref<5x512x512xbf16, #tpu.memory_space<vmem>>
    %16 = tpu.memref_slice %arg10[%c2_i32_17] : memref<3x!tpu.dma_semaphore, #tpu.memory_space<semaphore_mem>> -> memref<1x!tpu.dma_semaphore, #tpu.memory_space<semaphore_mem>>
    %17 = tpu.memref_squeeze %16 : memref<1x!tpu.dma_semaphore, #tpu.memory_space<semaphore_mem>> -> memref<!tpu.dma_semaphore, #tpu.memory_space<semaphore_mem>>
    tpu.enqueue_dma source(%13 : memref<5x512x512xbf16, #tpu.memory_space<any>>) target(%15 : memref<5x512x512xbf16, #tpu.memory_space<vmem>>) target_semaphore(%17 : memref<!tpu.dma_semaphore, #tpu.memory_space<semaphore_mem>>)
    %cst = arith.constant 0.000000e+00 : bf16
    %18 = vector.broadcast %cst : bf16 to vector<2x16x128xbf16>
    %c0 = arith.constant 0 : index
    %c0_24 = arith.constant 0 : index
    %c0_25 = arith.constant 0 : index
    %19 = vector.load %arg7[%c0, %c0_24, %c0_25] : memref<2x48x128xbf16, #tpu.memory_space<vmem>>, vector<2x16x128xbf16>
    tpu.vector_store %arg7[%c0, %c0_24, %c0_25], %18 {strides = array<i32>} : memref<2x48x128xbf16, #tpu.memory_space<vmem>>, vector<2x16x128xbf16>,
    %cst_26 = arith.constant 0.000000e+00 : bf16
    %20 = vector.broadcast %cst_26 : bf16 to vector<2x16x128xbf16>
    %c0_27 = arith.constant 0 : index
    %c32 = arith.constant 32 : index
    %c0_28 = arith.constant 0 : index
    %21 = vector.load %arg7[%c0_27, %c32, %c0_28] : memref<2x48x128xbf16, #tpu.memory_space<vmem>>, vector<2x16x128xbf16>
    tpu.vector_store %arg7[%c0_27, %c32, %c0_28], %20 {strides = array<i32>} : memref<2x48x128xbf16, #tpu.memory_space<vmem>>, vector<2x16x128xbf16>,
    %cst_29 = arith.constant 0.000000e+00 : bf16
    %22 = vector.broadcast %cst_29 : bf16 to vector<2x16x512xbf16>
    %c0_30 = arith.constant 0 : index
    %c0_31 = arith.constant 0 : index
    %c0_32 = arith.constant 0 : index
    %23 = vector.load %arg8[%c0_30, %c0_31, %c0_32] : memref<2x48x512xbf16, #tpu.memory_space<vmem>>, vector<2x16x512xbf16>
    tpu.vector_store %arg8[%c0_30, %c0_31, %c0_32], %22 {strides = array<i32>} : memref<2x48x512xbf16, #tpu.memory_space<vmem>>, vector<2x16x512xbf16>,
    %cst_33 = arith.constant 0.000000e+00 : bf16
    %24 = vector.broadcast %cst_33 : bf16 to vector<2x16x512xbf16>
    %c0_34 = arith.constant 0 : index
    %c32_35 = arith.constant 32 : index
    %c0_36 = arith.constant 0 : index
    %25 = vector.load %arg8[%c0_34, %c32_35, %c0_36] : memref<2x48x512xbf16, #tpu.memory_space<vmem>>, vector<2x16x512xbf16>
    tpu.vector_store %arg8[%c0_34, %c32_35, %c0_36], %24 {strides = array<i32>} : memref<2x48x512xbf16, #tpu.memory_space<vmem>>, vector<2x16x512xbf16>,
    %c0_37 = arith.constant 0 : index
    %c0_38 = arith.constant 0 : index
    %c0_39 = arith.constant 0 : index
    %26 = vector.load %arg0[%c0_37, %c0_38, %c0_39] : memref<2x16x128xbf16, #tpu.memory_space<vmem>>, vector<2x16x128xbf16>
    %c0_40 = arith.constant 0 : index
    %c16 = arith.constant 16 : index
    %c0_41 = arith.constant 0 : index
    %27 = vector.load %arg7[%c0_40, %c16, %c0_41] : memref<2x48x128xbf16, #tpu.memory_space<vmem>>, vector<2x16x128xbf16>
    tpu.vector_store %arg7[%c0_40, %c16, %c0_41], %26 {strides = array<i32>} : memref<2x48x128xbf16, #tpu.memory_space<vmem>>, vector<2x16x128xbf16>,
    %c0_42 = arith.constant 0 : index
    %c14 = arith.constant 14 : index
    %c0_43 = arith.constant 0 : index
    %28 = vector.load %arg7[%c0_42, %c14, %c0_43] : memref<2x48x128xbf16, #tpu.memory_space<vmem>>, vector<2x16x128xbf16>
    %29 = vector.shape_cast %28 : vector<2x16x128xbf16> to vector<32x128xbf16>
    %c0_44 = arith.constant 0 : index
    %c0_45 = arith.constant 0 : index
    %c0_46 = arith.constant 0 : index
    %30 = vector.load %arg1[%c0_44, %c0_45, %c0_46] : memref<5x128x512xbf16, #tpu.memory_space<vmem>>, vector<1x128x512xbf16>
    %31 = vector.shape_cast %30 : vector<1x128x512xbf16> to vector<128x512xbf16>
    %cst_47 = arith.constant dense<0.000000e+00> : vector<32x512xf32>
    %32 = tpu.matmul %29, %31, %cst_47 {dimension_numbers = #tpu.dot_dimension_numbers<[1], [0], [0], [1], [0, 0, 1, 1], [], []>} : vector<32x128xbf16>, vector<128x512xbf16>, vector<32x512xf32> -> vector<32x512xf32>
    %c0_48 = arith.constant 0 : index
    %c15 = arith.constant 15 : index
    %c0_49 = arith.constant 0 : index
    %33 = vector.load %arg7[%c0_48, %c15, %c0_49] : memref<2x48x128xbf16, #tpu.memory_space<vmem>>, vector<2x16x128xbf16>
    %34 = vector.shape_cast %33 : vector<2x16x128xbf16> to vector<32x128xbf16>
    %c1 = arith.constant 1 : index
    %c0_50 = arith.constant 0 : index
    %c0_51 = arith.constant 0 : index
    %35 = vector.load %arg1[%c1, %c0_50, %c0_51] : memref<5x128x512xbf16, #tpu.memory_space<vmem>>, vector<1x128x512xbf16>
    %36 = vector.shape_cast %35 : vector<1x128x512xbf16> to vector<128x512xbf16>
    %cst_52 = arith.constant dense<0.000000e+00> : vector<32x512xf32>
    %37 = tpu.matmul %34, %36, %cst_52 {dimension_numbers = #tpu.dot_dimension_numbers<[1], [0], [0], [1], [0, 0, 1, 1], [], []>} : vector<32x128xbf16>, vector<128x512xbf16>, vector<32x512xf32> -> vector<32x512xf32>
    %38 = arith.addf %32, %37 : vector<32x512xf32>
    %c0_53 = arith.constant 0 : index
    %c16_54 = arith.constant 16 : index
    %c0_55 = arith.constant 0 : index
    %39 = vector.load %arg7[%c0_53, %c16_54, %c0_55] : memref<2x48x128xbf16, #tpu.memory_space<vmem>>, vector<2x16x128xbf16>
    %40 = vector.shape_cast %39 : vector<2x16x128xbf16> to vector<32x128xbf16>
    %c2 = arith.constant 2 : index
    %c0_56 = arith.constant 0 : index
    %c0_57 = arith.constant 0 : index
    %41 = vector.load %arg1[%c2, %c0_56, %c0_57] : memref<5x128x512xbf16, #tpu.memory_space<vmem>>, vector<1x128x512xbf16>
    %42 = vector.shape_cast %41 : vector<1x128x512xbf16> to vector<128x512xbf16>
    %cst_58 = arith.constant dense<0.000000e+00> : vector<32x512xf32>
    %43 = tpu.matmul %40, %42, %cst_58 {dimension_numbers = #tpu.dot_dimension_numbers<[1], [0], [0], [1], [0, 0, 1, 1], [], []>} : vector<32x128xbf16>, vector<128x512xbf16>, vector<32x512xf32> -> vector<32x512xf32>
    %44 = arith.addf %38, %43 : vector<32x512xf32>
    %c0_59 = arith.constant 0 : index
    %c17 = arith.constant 17 : index
    %c0_60 = arith.constant 0 : index
    %45 = vector.load %arg7[%c0_59, %c17, %c0_60] : memref<2x48x128xbf16, #tpu.memory_space<vmem>>, vector<2x16x128xbf16>
    %46 = vector.shape_cast %45 : vector<2x16x128xbf16> to vector<32x128xbf16>
    %c3 = arith.constant 3 : index
    %c0_61 = arith.constant 0 : index
    %c0_62 = arith.constant 0 : index
    %47 = vector.load %arg1[%c3, %c0_61, %c0_62] : memref<5x128x512xbf16, #tpu.memory_space<vmem>>, vector<1x128x512xbf16>
    %48 = vector.shape_cast %47 : vector<1x128x512xbf16> to vector<128x512xbf16>
    %cst_63 = arith.constant dense<0.000000e+00> : vector<32x512xf32>
    %49 = tpu.matmul %46, %48, %cst_63 {dimension_numbers = #tpu.dot_dimension_numbers<[1], [0], [0], [1], [0, 0, 1, 1], [], []>} : vector<32x128xbf16>, vector<128x512xbf16>, vector<32x512xf32> -> vector<32x512xf32>
    %50 = arith.addf %44, %49 : vector<32x512xf32>
    %c0_64 = arith.constant 0 : index
    %c18 = arith.constant 18 : index
    %c0_65 = arith.constant 0 : index
    %51 = vector.load %arg7[%c0_64, %c18, %c0_65] : memref<2x48x128xbf16, #tpu.memory_space<vmem>>, vector<2x16x128xbf16>
    %52 = vector.shape_cast %51 : vector<2x16x128xbf16> to vector<32x128xbf16>
    %c4 = arith.constant 4 : index
    %c0_66 = arith.constant 0 : index
    %c0_67 = arith.constant 0 : index
    %53 = vector.load %arg1[%c4, %c0_66, %c0_67] : memref<5x128x512xbf16, #tpu.memory_space<vmem>>, vector<1x128x512xbf16>
    %54 = vector.shape_cast %53 : vector<1x128x512xbf16> to vector<128x512xbf16>
    %cst_68 = arith.constant dense<0.000000e+00> : vector<32x512xf32>
    %55 = tpu.matmul %52, %54, %cst_68 {dimension_numbers = #tpu.dot_dimension_numbers<[1], [0], [0], [1], [0, 0, 1, 1], [], []>} : vector<32x128xbf16>, vector<128x512xbf16>, vector<32x512xf32> -> vector<32x512xf32>
    %56 = arith.addf %50, %55 : vector<32x512xf32>
    %c0_69 = arith.constant 0 : index
    %c0_70 = arith.constant 0 : index
    %57 = vector.load %arg4[%c0_69, %c0_70] : memref<4x512xf32, #tpu.memory_space<vmem>>, vector<1x512xf32>
    %58 = vector.broadcast %57 : vector<1x512xf32> to vector<32x512xf32>
    %59 = arith.addf %56, %58 : vector<32x512xf32>
    %60 = math.tanh %59 : vector<32x512xf32>
    %61 = vector.shape_cast %60 : vector<32x512xf32> to vector<2x16x512xf32>
    %62 = arith.truncf %61 : vector<2x16x512xf32> to vector<2x16x512xbf16>
    %c0_71 = arith.constant 0 : index
    %c16_72 = arith.constant 16 : index
    %c0_73 = arith.constant 0 : index
    %63 = vector.load %arg8[%c0_71, %c16_72, %c0_73] : memref<2x48x512xbf16, #tpu.memory_space<vmem>>, vector<2x16x512xbf16>
    tpu.vector_store %arg8[%c0_71, %c16_72, %c0_73], %62 {strides = array<i32>} : memref<2x48x512xbf16, #tpu.memory_space<vmem>>, vector<2x16x512xbf16>,
    %c0_i32_74 = arith.constant 0 : i32
    %c0_i32_75 = arith.constant 0 : i32
    %c0_i32_76 = arith.constant 0 : i32
    %c0_i32_77 = arith.constant 0 : i32
    %c0_i32_78 = arith.constant 0 : i32
    %c0_i32_79 = arith.constant 0 : i32
    %64 = tpu.memref_slice %arg2[%c0_i32_74, %c0_i32_77, %c0_i32_78, %c0_i32_79] : memref<3x5x512x512xbf16, #tpu.memory_space<any>> -> memref<1x5x512x512xbf16, #tpu.memory_space<any>>
    %65 = tpu.memref_squeeze %64 : memref<1x5x512x512xbf16, #tpu.memory_space<any>> -> memref<5x512x512xbf16, #tpu.memory_space<any>>
    %c0_i32_80 = arith.constant 0 : i32
    %c0_i32_81 = arith.constant 0 : i32
    %c0_i32_82 = arith.constant 0 : i32
    %66 = tpu.memref_slice %arg9[%c0_i32_75, %c0_i32_80, %c0_i32_81, %c0_i32_82] : memref<3x5x512x512xbf16, #tpu.memory_space<vmem>> -> memref<1x5x512x512xbf16, #tpu.memory_space<vmem>>
    %67 = tpu.memref_squeeze %66 : memref<1x5x512x512xbf16, #tpu.memory_space<vmem>> -> memref<5x512x512xbf16, #tpu.memory_space<vmem>>
    %68 = tpu.memref_slice %arg10[%c0_i32_76] : memref<3x!tpu.dma_semaphore, #tpu.memory_space<semaphore_mem>> -> memref<1x!tpu.dma_semaphore, #tpu.memory_space<semaphore_mem>>
    %69 = tpu.memref_squeeze %68 : memref<1x!tpu.dma_semaphore, #tpu.memory_space<semaphore_mem>> -> memref<!tpu.dma_semaphore, #tpu.memory_space<semaphore_mem>>
    tpu.wait_dma2 semaphore(%69 : memref<!tpu.dma_semaphore, #tpu.memory_space<semaphore_mem>>) src(%65 : memref<5x512x512xbf16, #tpu.memory_space<any>>) dst(%67 : memref<5x512x512xbf16, #tpu.memory_space<vmem>>)
    %c0_83 = arith.constant 0 : index
    %c14_84 = arith.constant 14 : index
    %c0_85 = arith.constant 0 : index
    %70 = vector.load %arg8[%c0_83, %c14_84, %c0_85] : memref<2x48x512xbf16, #tpu.memory_space<vmem>>, vector<2x16x512xbf16>
    %71 = vector.shape_cast %70 : vector<2x16x512xbf16> to vector<32x512xbf16>
    %c0_86 = arith.constant 0 : index
    %c0_87 = arith.constant 0 : index
    %c0_88 = arith.constant 0 : index
    %c0_89 = arith.constant 0 : index
    %72 = vector.load %arg9[%c0_86, %c0_87, %c0_88, %c0_89] : memref<3x5x512x512xbf16, #tpu.memory_space<vmem>>, vector<1x1x512x512xbf16>
    %73 = vector.shape_cast %72 : vector<1x1x512x512xbf16> to vector<512x512xbf16>
    %cst_90 = arith.constant dense<0.000000e+00> : vector<32x512xf32>
    %74 = tpu.matmul %71, %73, %cst_90 {dimension_numbers = #tpu.dot_dimension_numbers<[1], [0], [0], [1], [0, 0, 1, 1], [], []>} : vector<32x512xbf16>, vector<512x512xbf16>, vector<32x512xf32> -> vector<32x512xf32>
    %c0_91 = arith.constant 0 : index
    %c15_92 = arith.constant 15 : index
    %c0_93 = arith.constant 0 : index
    %75 = vector.load %arg8[%c0_91, %c15_92, %c0_93] : memref<2x48x512xbf16, #tpu.memory_space<vmem>>, vector<2x16x512xbf16>
    %76 = vector.shape_cast %75 : vector<2x16x512xbf16> to vector<32x512xbf16>
    %c0_94 = arith.constant 0 : index
    %c1_95 = arith.constant 1 : index
    %c0_96 = arith.constant 0 : index
    %c0_97 = arith.constant 0 : index
    %77 = vector.load %arg9[%c0_94, %c1_95, %c0_96, %c0_97] : memref<3x5x512x512xbf16, #tpu.memory_space<vmem>>, vector<1x1x512x512xbf16>
    %78 = vector.shape_cast %77 : vector<1x1x512x512xbf16> to vector<512x512xbf16>
    %cst_98 = arith.constant dense<0.000000e+00> : vector<32x512xf32>
    %79 = tpu.matmul %76, %78, %cst_98 {dimension_numbers = #tpu.dot_dimension_numbers<[1], [0], [0], [1], [0, 0, 1, 1], [], []>} : vector<32x512xbf16>, vector<512x512xbf16>, vector<32x512xf32> -> vector<32x512xf32>
    %80 = arith.addf %74, %79 : vector<32x512xf32>
    %c0_99 = arith.constant 0 : index
    %c16_100 = arith.constant 16 : index
    %c0_101 = arith.constant 0 : index
    %81 = vector.load %arg8[%c0_99, %c16_100, %c0_101] : memref<2x48x512xbf16, #tpu.memory_space<vmem>>, vector<2x16x512xbf16>
    %82 = vector.shape_cast %81 : vector<2x16x512xbf16> to vector<32x512xbf16>
    %c0_102 = arith.constant 0 : index
    %c2_103 = arith.constant 2 : index
    %c0_104 = arith.constant 0 : index
    %c0_105 = arith.constant 0 : index
    %83 = vector.load %arg9[%c0_102, %c2_103, %c0_104, %c0_105] : memref<3x5x512x512xbf16, #tpu.memory_space<vmem>>, vector<1x1x512x512xbf16>
    %84 = vector.shape_cast %83 : vector<1x1x512x512xbf16> to vector<512x512xbf16>
    %cst_106 = arith.constant dense<0.000000e+00> : vector<32x512xf32>
    %85 = tpu.matmul %82, %84, %cst_106 {dimension_numbers = #tpu.dot_dimension_numbers<[1], [0], [0], [1], [0, 0, 1, 1], [], []>} : vector<32x512xbf16>, vector<512x512xbf16>, vector<32x512xf32> -> vector<32x512xf32>
    %86 = arith.addf %80, %85 : vector<32x512xf32>
    %c0_107 = arith.constant 0 : index
    %c17_108 = arith.constant 17 : index
    %c0_109 = arith.constant 0 : index
    %87 = vector.load %arg8[%c0_107, %c17_108, %c0_109] : memref<2x48x512xbf16, #tpu.memory_space<vmem>>, vector<2x16x512xbf16>
    %88 = vector.shape_cast %87 : vector<2x16x512xbf16> to vector<32x512xbf16>
    %c0_110 = arith.constant 0 : index
    %c3_111 = arith.constant 3 : index
    %c0_112 = arith.constant 0 : index
    %c0_113 = arith.constant 0 : index
    %89 = vector.load %arg9[%c0_110, %c3_111, %c0_112, %c0_113] : memref<3x5x512x512xbf16, #tpu.memory_space<vmem>>, vector<1x1x512x512xbf16>
    %90 = vector.shape_cast %89 : vector<1x1x512x512xbf16> to vector<512x512xbf16>
    %cst_114 = arith.constant dense<0.000000e+00> : vector<32x512xf32>
    %91 = tpu.matmul %88, %90, %cst_114 {dimension_numbers = #tpu.dot_dimension_numbers<[1], [0], [0], [1], [0, 0, 1, 1], [], []>} : vector<32x512xbf16>, vector<512x512xbf16>, vector<32x512xf32> -> vector<32x512xf32>
    %92 = arith.addf %86, %91 : vector<32x512xf32>
    %c0_115 = arith.constant 0 : index
    %c18_116 = arith.constant 18 : index
    %c0_117 = arith.constant 0 : index
    %93 = vector.load %arg8[%c0_115, %c18_116, %c0_117] : memref<2x48x512xbf16, #tpu.memory_space<vmem>>, vector<2x16x512xbf16>
    %94 = vector.shape_cast %93 : vector<2x16x512xbf16> to vector<32x512xbf16>
    %c0_118 = arith.constant 0 : index
    %c4_119 = arith.constant 4 : index
    %c0_120 = arith.constant 0 : index
    %c0_121 = arith.constant 0 : index
    %95 = vector.load %arg9[%c0_118, %c4_119, %c0_120, %c0_121] : memref<3x5x512x512xbf16, #tpu.memory_space<vmem>>, vector<1x1x512x512xbf16>
    %96 = vector.shape_cast %95 : vector<1x1x512x512xbf16> to vector<512x512xbf16>
    %cst_122 = arith.constant dense<0.000000e+00> : vector<32x512xf32>
    %97 = tpu.matmul %94, %96, %cst_122 {dimension_numbers = #tpu.dot_dimension_numbers<[1], [0], [0], [1], [0, 0, 1, 1], [], []>} : vector<32x512xbf16>, vector<512x512xbf16>, vector<32x512xf32> -> vector<32x512xf32>
    %98 = arith.addf %92, %97 : vector<32x512xf32>
    %c1_123 = arith.constant 1 : index
    %c0_124 = arith.constant 0 : index
    %99 = vector.load %arg4[%c1_123, %c0_124] : memref<4x512xf32, #tpu.memory_space<vmem>>, vector<1x512xf32>
    %100 = vector.broadcast %99 : vector<1x512xf32> to vector<32x512xf32>
    %101 = arith.addf %98, %100 : vector<32x512xf32>
    %102 = math.tanh %101 : vector<32x512xf32>
    %103 = vector.shape_cast %102 : vector<32x512xf32> to vector<2x16x512xf32>
    %104 = arith.truncf %103 : vector<2x16x512xf32> to vector<2x16x512xbf16>
    %c0_125 = arith.constant 0 : index
    %c16_126 = arith.constant 16 : index
    %c0_127 = arith.constant 0 : index
    %105 = vector.load %arg8[%c0_125, %c16_126, %c0_127] : memref<2x48x512xbf16, #tpu.memory_space<vmem>>, vector<2x16x512xbf16>
    tpu.vector_store %arg8[%c0_125, %c16_126, %c0_127], %104 {strides = array<i32>} : memref<2x48x512xbf16, #tpu.memory_space<vmem>>, vector<2x16x512xbf16>,
    %c1_i32_128 = arith.constant 1 : i32
    %c1_i32_129 = arith.constant 1 : i32
    %c1_i32_130 = arith.constant 1 : i32
    %c0_i32_131 = arith.constant 0 : i32
    %c0_i32_132 = arith.constant 0 : i32
    %c0_i32_133 = arith.constant 0 : i32
    %106 = tpu.memref_slice %arg2[%c1_i32_128, %c0_i32_131, %c0_i32_132, %c0_i32_133] : memref<3x5x512x512xbf16, #tpu.memory_space<any>> -> memref<1x5x512x512xbf16, #tpu.memory_space<any>>
    %107 = tpu.memref_squeeze %106 : memref<1x5x512x512xbf16, #tpu.memory_space<any>> -> memref<5x512x512xbf16, #tpu.memory_space<any>>
    %c0_i32_134 = arith.constant 0 : i32
    %c0_i32_135 = arith.constant 0 : i32
    %c0_i32_136 = arith.constant 0 : i32
    %108 = tpu.memref_slice %arg9[%c1_i32_129, %c0_i32_134, %c0_i32_135, %c0_i32_136] : memref<3x5x512x512xbf16, #tpu.memory_space<vmem>> -> memref<1x5x512x512xbf16, #tpu.memory_space<vmem>>
    %109 = tpu.memref_squeeze %108 : memref<1x5x512x512xbf16, #tpu.memory_space<vmem>> -> memref<5x512x512xbf16, #tpu.memory_space<vmem>>
    %110 = tpu.memref_slice %arg10[%c1_i32_130] : memref<3x!tpu.dma_semaphore, #tpu.memory_space<semaphore_mem>> -> memref<1x!tpu.dma_semaphore, #tpu.memory_space<semaphore_mem>>
    %111 = tpu.memref_squeeze %110 : memref<1x!tpu.dma_semaphore, #tpu.memory_space<semaphore_mem>> -> memref<!tpu.dma_semaphore, #tpu.memory_space<semaphore_mem>>
    tpu.wait_dma2 semaphore(%111 : memref<!tpu.dma_semaphore, #tpu.memory_space<semaphore_mem>>) src(%107 : memref<5x512x512xbf16, #tpu.memory_space<any>>) dst(%109 : memref<5x512x512xbf16, #tpu.memory_space<vmem>>)
    %c0_137 = arith.constant 0 : index
    %c14_138 = arith.constant 14 : index
    %c0_139 = arith.constant 0 : index
    %112 = vector.load %arg8[%c0_137, %c14_138, %c0_139] : memref<2x48x512xbf16, #tpu.memory_space<vmem>>, vector<2x16x512xbf16>
    %113 = vector.shape_cast %112 : vector<2x16x512xbf16> to vector<32x512xbf16>
    %c1_140 = arith.constant 1 : index
    %c0_141 = arith.constant 0 : index
    %c0_142 = arith.constant 0 : index
    %c0_143 = arith.constant 0 : index
    %114 = vector.load %arg9[%c1_140, %c0_141, %c0_142, %c0_143] : memref<3x5x512x512xbf16, #tpu.memory_space<vmem>>, vector<1x1x512x512xbf16>
    %115 = vector.shape_cast %114 : vector<1x1x512x512xbf16> to vector<512x512xbf16>
    %cst_144 = arith.constant dense<0.000000e+00> : vector<32x512xf32>
    %116 = tpu.matmul %113, %115, %cst_144 {dimension_numbers = #tpu.dot_dimension_numbers<[1], [0], [0], [1], [0, 0, 1, 1], [], []>} : vector<32x512xbf16>, vector<512x512xbf16>, vector<32x512xf32> -> vector<32x512xf32>
    %c0_145 = arith.constant 0 : index
    %c15_146 = arith.constant 15 : index
    %c0_147 = arith.constant 0 : index
    %117 = vector.load %arg8[%c0_145, %c15_146, %c0_147] : memref<2x48x512xbf16, #tpu.memory_space<vmem>>, vector<2x16x512xbf16>
    %118 = vector.shape_cast %117 : vector<2x16x512xbf16> to vector<32x512xbf16>
    %c1_148 = arith.constant 1 : index
    %c1_149 = arith.constant 1 : index
    %c0_150 = arith.constant 0 : index
    %c0_151 = arith.constant 0 : index
    %119 = vector.load %arg9[%c1_148, %c1_149, %c0_150, %c0_151] : memref<3x5x512x512xbf16, #tpu.memory_space<vmem>>, vector<1x1x512x512xbf16>
    %120 = vector.shape_cast %119 : vector<1x1x512x512xbf16> to vector<512x512xbf16>
    %cst_152 = arith.constant dense<0.000000e+00> : vector<32x512xf32>
    %121 = tpu.matmul %118, %120, %cst_152 {dimension_numbers = #tpu.dot_dimension_numbers<[1], [0], [0], [1], [0, 0, 1, 1], [], []>} : vector<32x512xbf16>, vector<512x512xbf16>, vector<32x512xf32> -> vector<32x512xf32>
    %122 = arith.addf %116, %121 : vector<32x512xf32>
    %c0_153 = arith.constant 0 : index
    %c16_154 = arith.constant 16 : index
    %c0_155 = arith.constant 0 : index
    %123 = vector.load %arg8[%c0_153, %c16_154, %c0_155] : memref<2x48x512xbf16, #tpu.memory_space<vmem>>, vector<2x16x512xbf16>
    %124 = vector.shape_cast %123 : vector<2x16x512xbf16> to vector<32x512xbf16>
    %c1_156 = arith.constant 1 : index
    %c2_157 = arith.constant 2 : index
    %c0_158 = arith.constant 0 : index
    %c0_159 = arith.constant 0 : index
    %125 = vector.load %arg9[%c1_156, %c2_157, %c0_158, %c0_159] : memref<3x5x512x512xbf16, #tpu.memory_space<vmem>>, vector<1x1x512x512xbf16>
    %126 = vector.shape_cast %125 : vector<1x1x512x512xbf16> to vector<512x512xbf16>
    %cst_160 = arith.constant dense<0.000000e+00> : vector<32x512xf32>
    %127 = tpu.matmul %124, %126, %cst_160 {dimension_numbers = #tpu.dot_dimension_numbers<[1], [0], [0], [1], [0, 0, 1, 1], [], []>} : vector<32x512xbf16>, vector<512x512xbf16>, vector<32x512xf32> -> vector<32x512xf32>
    %128 = arith.addf %122, %127 : vector<32x512xf32>
    %c0_161 = arith.constant 0 : index
    %c17_162 = arith.constant 17 : index
    %c0_163 = arith.constant 0 : index
    %129 = vector.load %arg8[%c0_161, %c17_162, %c0_163] : memref<2x48x512xbf16, #tpu.memory_space<vmem>>, vector<2x16x512xbf16>
    %130 = vector.shape_cast %129 : vector<2x16x512xbf16> to vector<32x512xbf16>
    %c1_164 = arith.constant 1 : index
    %c3_165 = arith.constant 3 : index
    %c0_166 = arith.constant 0 : index
    %c0_167 = arith.constant 0 : index
    %131 = vector.load %arg9[%c1_164, %c3_165, %c0_166, %c0_167] : memref<3x5x512x512xbf16, #tpu.memory_space<vmem>>, vector<1x1x512x512xbf16>
    %132 = vector.shape_cast %131 : vector<1x1x512x512xbf16> to vector<512x512xbf16>
    %cst_168 = arith.constant dense<0.000000e+00> : vector<32x512xf32>
    %133 = tpu.matmul %130, %132, %cst_168 {dimension_numbers = #tpu.dot_dimension_numbers<[1], [0], [0], [1], [0, 0, 1, 1], [], []>} : vector<32x512xbf16>, vector<512x512xbf16>, vector<32x512xf32> -> vector<32x512xf32>
    %134 = arith.addf %128, %133 : vector<32x512xf32>
    %c0_169 = arith.constant 0 : index
    %c18_170 = arith.constant 18 : index
    %c0_171 = arith.constant 0 : index
    %135 = vector.load %arg8[%c0_169, %c18_170, %c0_171] : memref<2x48x512xbf16, #tpu.memory_space<vmem>>, vector<2x16x512xbf16>
    %136 = vector.shape_cast %135 : vector<2x16x512xbf16> to vector<32x512xbf16>
    %c1_172 = arith.constant 1 : index
    %c4_173 = arith.constant 4 : index
    %c0_174 = arith.constant 0 : index
    %c0_175 = arith.constant 0 : index
    %137 = vector.load %arg9[%c1_172, %c4_173, %c0_174, %c0_175] : memref<3x5x512x512xbf16, #tpu.memory_space<vmem>>, vector<1x1x512x512xbf16>
    %138 = vector.shape_cast %137 : vector<1x1x512x512xbf16> to vector<512x512xbf16>
    %cst_176 = arith.constant dense<0.000000e+00> : vector<32x512xf32>
    %139 = tpu.matmul %136, %138, %cst_176 {dimension_numbers = #tpu.dot_dimension_numbers<[1], [0], [0], [1], [0, 0, 1, 1], [], []>} : vector<32x512xbf16>, vector<512x512xbf16>, vector<32x512xf32> -> vector<32x512xf32>
    %140 = arith.addf %134, %139 : vector<32x512xf32>
    %c2_177 = arith.constant 2 : index
    %c0_178 = arith.constant 0 : index
    %141 = vector.load %arg4[%c2_177, %c0_178] : memref<4x512xf32, #tpu.memory_space<vmem>>, vector<1x512xf32>
    %142 = vector.broadcast %141 : vector<1x512xf32> to vector<32x512xf32>
    %143 = arith.addf %140, %142 : vector<32x512xf32>
    %144 = math.tanh %143 : vector<32x512xf32>
    %145 = vector.shape_cast %144 : vector<32x512xf32> to vector<2x16x512xf32>
    %146 = arith.truncf %145 : vector<2x16x512xf32> to vector<2x16x512xbf16>
    %c0_179 = arith.constant 0 : index
    %c16_180 = arith.constant 16 : index
    %c0_181 = arith.constant 0 : index
    %147 = vector.load %arg8[%c0_179, %c16_180, %c0_181] : memref<2x48x512xbf16, #tpu.memory_space<vmem>>, vector<2x16x512xbf16>
    tpu.vector_store %arg8[%c0_179, %c16_180, %c0_181], %146 {strides = array<i32>} : memref<2x48x512xbf16, #tpu.memory_space<vmem>>, vector<2x16x512xbf16>,
    %c2_i32_182 = arith.constant 2 : i32
    %c2_i32_183 = arith.constant 2 : i32
    %c2_i32_184 = arith.constant 2 : i32
    %c0_i32_185 = arith.constant 0 : i32
    %c0_i32_186 = arith.constant 0 : i32
    %c0_i32_187 = arith.constant 0 : i32
    %148 = tpu.memref_slice %arg2[%c2_i32_182, %c0_i32_185, %c0_i32_186, %c0_i32_187] : memref<3x5x512x512xbf16, #tpu.memory_space<any>> -> memref<1x5x512x512xbf16, #tpu.memory_space<any>>
    %149 = tpu.memref_squeeze %148 : memref<1x5x512x512xbf16, #tpu.memory_space<any>> -> memref<5x512x512xbf16, #tpu.memory_space<any>>
    %c0_i32_188 = arith.constant 0 : i32
    %c0_i32_189 = arith.constant 0 : i32
    %c0_i32_190 = arith.constant 0 : i32
    %150 = tpu.memref_slice %arg9[%c2_i32_183, %c0_i32_188, %c0_i32_189, %c0_i32_190] : memref<3x5x512x512xbf16, #tpu.memory_space<vmem>> -> memref<1x5x512x512xbf16, #tpu.memory_space<vmem>>
    %151 = tpu.memref_squeeze %150 : memref<1x5x512x512xbf16, #tpu.memory_space<vmem>> -> memref<5x512x512xbf16, #tpu.memory_space<vmem>>
    %152 = tpu.memref_slice %arg10[%c2_i32_184] : memref<3x!tpu.dma_semaphore, #tpu.memory_space<semaphore_mem>> -> memref<1x!tpu.dma_semaphore, #tpu.memory_space<semaphore_mem>>
    %153 = tpu.memref_squeeze %152 : memref<1x!tpu.dma_semaphore, #tpu.memory_space<semaphore_mem>> -> memref<!tpu.dma_semaphore, #tpu.memory_space<semaphore_mem>>
    tpu.wait_dma2 semaphore(%153 : memref<!tpu.dma_semaphore, #tpu.memory_space<semaphore_mem>>) src(%149 : memref<5x512x512xbf16, #tpu.memory_space<any>>) dst(%151 : memref<5x512x512xbf16, #tpu.memory_space<vmem>>)
    %c0_191 = arith.constant 0 : index
    %c14_192 = arith.constant 14 : index
    %c0_193 = arith.constant 0 : index
    %154 = vector.load %arg8[%c0_191, %c14_192, %c0_193] : memref<2x48x512xbf16, #tpu.memory_space<vmem>>, vector<2x16x512xbf16>
    %155 = vector.shape_cast %154 : vector<2x16x512xbf16> to vector<32x512xbf16>
    %c2_194 = arith.constant 2 : index
    %c0_195 = arith.constant 0 : index
    %c0_196 = arith.constant 0 : index
    %c0_197 = arith.constant 0 : index
    %156 = vector.load %arg9[%c2_194, %c0_195, %c0_196, %c0_197] : memref<3x5x512x512xbf16, #tpu.memory_space<vmem>>, vector<1x1x512x512xbf16>
    %157 = vector.shape_cast %156 : vector<1x1x512x512xbf16> to vector<512x512xbf16>
    %cst_198 = arith.constant dense<0.000000e+00> : vector<32x512xf32>
    %158 = tpu.matmul %155, %157, %cst_198 {dimension_numbers = #tpu.dot_dimension_numbers<[1], [0], [0], [1], [0, 0, 1, 1], [], []>} : vector<32x512xbf16>, vector<512x512xbf16>, vector<32x512xf32> -> vector<32x512xf32>
    %c0_199 = arith.constant 0 : index
    %c15_200 = arith.constant 15 : index
    %c0_201 = arith.constant 0 : index
    %159 = vector.load %arg8[%c0_199, %c15_200, %c0_201] : memref<2x48x512xbf16, #tpu.memory_space<vmem>>, vector<2x16x512xbf16>
    %160 = vector.shape_cast %159 : vector<2x16x512xbf16> to vector<32x512xbf16>
    %c2_202 = arith.constant 2 : index
    %c1_203 = arith.constant 1 : index
    %c0_204 = arith.constant 0 : index
    %c0_205 = arith.constant 0 : index
    %161 = vector.load %arg9[%c2_202, %c1_203, %c0_204, %c0_205] : memref<3x5x512x512xbf16, #tpu.memory_space<vmem>>, vector<1x1x512x512xbf16>
    %162 = vector.shape_cast %161 : vector<1x1x512x512xbf16> to vector<512x512xbf16>
    %cst_206 = arith.constant dense<0.000000e+00> : vector<32x512xf32>
    %163 = tpu.matmul %160, %162, %cst_206 {dimension_numbers = #tpu.dot_dimension_numbers<[1], [0], [0], [1], [0, 0, 1, 1], [], []>} : vector<32x512xbf16>, vector<512x512xbf16>, vector<32x512xf32> -> vector<32x512xf32>
    %164 = arith.addf %158, %163 : vector<32x512xf32>
    %c0_207 = arith.constant 0 : index
    %c16_208 = arith.constant 16 : index
    %c0_209 = arith.constant 0 : index
    %165 = vector.load %arg8[%c0_207, %c16_208, %c0_209] : memref<2x48x512xbf16, #tpu.memory_space<vmem>>, vector<2x16x512xbf16>
    %166 = vector.shape_cast %165 : vector<2x16x512xbf16> to vector<32x512xbf16>
    %c2_210 = arith.constant 2 : index
    %c2_211 = arith.constant 2 : index
    %c0_212 = arith.constant 0 : index
    %c0_213 = arith.constant 0 : index
    %167 = vector.load %arg9[%c2_210, %c2_211, %c0_212, %c0_213] : memref<3x5x512x512xbf16, #tpu.memory_space<vmem>>, vector<1x1x512x512xbf16>
    %168 = vector.shape_cast %167 : vector<1x1x512x512xbf16> to vector<512x512xbf16>
    %cst_214 = arith.constant dense<0.000000e+00> : vector<32x512xf32>
    %169 = tpu.matmul %166, %168, %cst_214 {dimension_numbers = #tpu.dot_dimension_numbers<[1], [0], [0], [1], [0, 0, 1, 1], [], []>} : vector<32x512xbf16>, vector<512x512xbf16>, vector<32x512xf32> -> vector<32x512xf32>
    %170 = arith.addf %164, %169 : vector<32x512xf32>
    %c0_215 = arith.constant 0 : index
    %c17_216 = arith.constant 17 : index
    %c0_217 = arith.constant 0 : index
    %171 = vector.load %arg8[%c0_215, %c17_216, %c0_217] : memref<2x48x512xbf16, #tpu.memory_space<vmem>>, vector<2x16x512xbf16>
    %172 = vector.shape_cast %171 : vector<2x16x512xbf16> to vector<32x512xbf16>
    %c2_218 = arith.constant 2 : index
    %c3_219 = arith.constant 3 : index
    %c0_220 = arith.constant 0 : index
    %c0_221 = arith.constant 0 : index
    %173 = vector.load %arg9[%c2_218, %c3_219, %c0_220, %c0_221] : memref<3x5x512x512xbf16, #tpu.memory_space<vmem>>, vector<1x1x512x512xbf16>
    %174 = vector.shape_cast %173 : vector<1x1x512x512xbf16> to vector<512x512xbf16>
    %cst_222 = arith.constant dense<0.000000e+00> : vector<32x512xf32>
    %175 = tpu.matmul %172, %174, %cst_222 {dimension_numbers = #tpu.dot_dimension_numbers<[1], [0], [0], [1], [0, 0, 1, 1], [], []>} : vector<32x512xbf16>, vector<512x512xbf16>, vector<32x512xf32> -> vector<32x512xf32>
    %176 = arith.addf %170, %175 : vector<32x512xf32>
    %c0_223 = arith.constant 0 : index
    %c18_224 = arith.constant 18 : index
    %c0_225 = arith.constant 0 : index
    %177 = vector.load %arg8[%c0_223, %c18_224, %c0_225] : memref<2x48x512xbf16, #tpu.memory_space<vmem>>, vector<2x16x512xbf16>
    %178 = vector.shape_cast %177 : vector<2x16x512xbf16> to vector<32x512xbf16>
    %c2_226 = arith.constant 2 : index
    %c4_227 = arith.constant 4 : index
    %c0_228 = arith.constant 0 : index
    %c0_229 = arith.constant 0 : index
    %179 = vector.load %arg9[%c2_226, %c4_227, %c0_228, %c0_229] : memref<3x5x512x512xbf16, #tpu.memory_space<vmem>>, vector<1x1x512x512xbf16>
    %180 = vector.shape_cast %179 : vector<1x1x512x512xbf16> to vector<512x512xbf16>
    %cst_230 = arith.constant dense<0.000000e+00> : vector<32x512xf32>
    %181 = tpu.matmul %178, %180, %cst_230 {dimension_numbers = #tpu.dot_dimension_numbers<[1], [0], [0], [1], [0, 0, 1, 1], [], []>} : vector<32x512xbf16>, vector<512x512xbf16>, vector<32x512xf32> -> vector<32x512xf32>
    %182 = arith.addf %176, %181 : vector<32x512xf32>
    %c3_231 = arith.constant 3 : index
    %c0_232 = arith.constant 0 : index
    %183 = vector.load %arg4[%c3_231, %c0_232] : memref<4x512xf32, #tpu.memory_space<vmem>>, vector<1x512xf32>
    %184 = vector.broadcast %183 : vector<1x512xf32> to vector<32x512xf32>
    %185 = arith.addf %182, %184 : vector<32x512xf32>
    %186 = math.tanh %185 : vector<32x512xf32>
    %187 = vector.shape_cast %186 : vector<32x512xf32> to vector<2x16x512xf32>
    %188 = arith.truncf %187 : vector<2x16x512xf32> to vector<2x16x512xbf16>
    %c0_233 = arith.constant 0 : index
    %c16_234 = arith.constant 16 : index
    %c0_235 = arith.constant 0 : index
    %189 = vector.load %arg8[%c0_233, %c16_234, %c0_235] : memref<2x48x512xbf16, #tpu.memory_space<vmem>>, vector<2x16x512xbf16>
    tpu.vector_store %arg8[%c0_233, %c16_234, %c0_235], %188 {strides = array<i32>} : memref<2x48x512xbf16, #tpu.memory_space<vmem>>, vector<2x16x512xbf16>,
    %c0_236 = arith.constant 0 : index
    %c14_237 = arith.constant 14 : index
    %c0_238 = arith.constant 0 : index
    %190 = vector.load %arg8[%c0_236, %c14_237, %c0_238] : memref<2x48x512xbf16, #tpu.memory_space<vmem>>, vector<2x16x512xbf16>
    %191 = vector.shape_cast %190 : vector<2x16x512xbf16> to vector<32x512xbf16>
    %c0_239 = arith.constant 0 : index
    %c0_240 = arith.constant 0 : index
    %c0_241 = arith.constant 0 : index
    %192 = vector.load %arg3[%c0_239, %c0_240, %c0_241] : memref<5x512x128xbf16, #tpu.memory_space<vmem>>, vector<1x512x128xbf16>
    %193 = vector.shape_cast %192 : vector<1x512x128xbf16> to vector<512x128xbf16>
    %cst_242 = arith.constant dense<0.000000e+00> : vector<32x128xf32>
    %194 = tpu.matmul %191, %193, %cst_242 {dimension_numbers = #tpu.dot_dimension_numbers<[1], [0], [0], [1], [0, 0, 1, 1], [], []>} : vector<32x512xbf16>, vector<512x128xbf16>, vector<32x128xf32> -> vector<32x128xf32>
    %c0_243 = arith.constant 0 : index
    %c15_244 = arith.constant 15 : index
    %c0_245 = arith.constant 0 : index
    %195 = vector.load %arg8[%c0_243, %c15_244, %c0_245] : memref<2x48x512xbf16, #tpu.memory_space<vmem>>, vector<2x16x512xbf16>
    %196 = vector.shape_cast %195 : vector<2x16x512xbf16> to vector<32x512xbf16>
    %c1_246 = arith.constant 1 : index
    %c0_247 = arith.constant 0 : index
    %c0_248 = arith.constant 0 : index
    %197 = vector.load %arg3[%c1_246, %c0_247, %c0_248] : memref<5x512x128xbf16, #tpu.memory_space<vmem>>, vector<1x512x128xbf16>
    %198 = vector.shape_cast %197 : vector<1x512x128xbf16> to vector<512x128xbf16>
    %cst_249 = arith.constant dense<0.000000e+00> : vector<32x128xf32>
    %199 = tpu.matmul %196, %198, %cst_249 {dimension_numbers = #tpu.dot_dimension_numbers<[1], [0], [0], [1], [0, 0, 1, 1], [], []>} : vector<32x512xbf16>, vector<512x128xbf16>, vector<32x128xf32> -> vector<32x128xf32>
    %200 = arith.addf %194, %199 : vector<32x128xf32>
    %c0_250 = arith.constant 0 : index
    %c16_251 = arith.constant 16 : index
    %c0_252 = arith.constant 0 : index
    %201 = vector.load %arg8[%c0_250, %c16_251, %c0_252] : memref<2x48x512xbf16, #tpu.memory_space<vmem>>, vector<2x16x512xbf16>
    %202 = vector.shape_cast %201 : vector<2x16x512xbf16> to vector<32x512xbf16>
    %c2_253 = arith.constant 2 : index
    %c0_254 = arith.constant 0 : index
    %c0_255 = arith.constant 0 : index
    %203 = vector.load %arg3[%c2_253, %c0_254, %c0_255] : memref<5x512x128xbf16, #tpu.memory_space<vmem>>, vector<1x512x128xbf16>
    %204 = vector.shape_cast %203 : vector<1x512x128xbf16> to vector<512x128xbf16>
    %cst_256 = arith.constant dense<0.000000e+00> : vector<32x128xf32>
    %205 = tpu.matmul %202, %204, %cst_256 {dimension_numbers = #tpu.dot_dimension_numbers<[1], [0], [0], [1], [0, 0, 1, 1], [], []>} : vector<32x512xbf16>, vector<512x128xbf16>, vector<32x128xf32> -> vector<32x128xf32>
    %206 = arith.addf %200, %205 : vector<32x128xf32>
    %c0_257 = arith.constant 0 : index
    %c17_258 = arith.constant 17 : index
    %c0_259 = arith.constant 0 : index
    %207 = vector.load %arg8[%c0_257, %c17_258, %c0_259] : memref<2x48x512xbf16, #tpu.memory_space<vmem>>, vector<2x16x512xbf16>
    %208 = vector.shape_cast %207 : vector<2x16x512xbf16> to vector<32x512xbf16>
    %c3_260 = arith.constant 3 : index
    %c0_261 = arith.constant 0 : index
    %c0_262 = arith.constant 0 : index
    %209 = vector.load %arg3[%c3_260, %c0_261, %c0_262] : memref<5x512x128xbf16, #tpu.memory_space<vmem>>, vector<1x512x128xbf16>
    %210 = vector.shape_cast %209 : vector<1x512x128xbf16> to vector<512x128xbf16>
    %cst_263 = arith.constant dense<0.000000e+00> : vector<32x128xf32>
    %211 = tpu.matmul %208, %210, %cst_263 {dimension_numbers = #tpu.dot_dimension_numbers<[1], [0], [0], [1], [0, 0, 1, 1], [], []>} : vector<32x512xbf16>, vector<512x128xbf16>, vector<32x128xf32> -> vector<32x128xf32>
    %212 = arith.addf %206, %211 : vector<32x128xf32>
    %c0_264 = arith.constant 0 : index
    %c18_265 = arith.constant 18 : index
    %c0_266 = arith.constant 0 : index
    %213 = vector.load %arg8[%c0_264, %c18_265, %c0_266] : memref<2x48x512xbf16, #tpu.memory_space<vmem>>, vector<2x16x512xbf16>
    %214 = vector.shape_cast %213 : vector<2x16x512xbf16> to vector<32x512xbf16>
    %c4_267 = arith.constant 4 : index
    %c0_268 = arith.constant 0 : index
    %c0_269 = arith.constant 0 : index
    %215 = vector.load %arg3[%c4_267, %c0_268, %c0_269] : memref<5x512x128xbf16, #tpu.memory_space<vmem>>, vector<1x512x128xbf16>
    %216 = vector.shape_cast %215 : vector<1x512x128xbf16> to vector<512x128xbf16>
    %cst_270 = arith.constant dense<0.000000e+00> : vector<32x128xf32>
    %217 = tpu.matmul %214, %216, %cst_270 {dimension_numbers = #tpu.dot_dimension_numbers<[1], [0], [0], [1], [0, 0, 1, 1], [], []>} : vector<32x512xbf16>, vector<512x128xbf16>, vector<32x128xf32> -> vector<32x128xf32>
    %218 = arith.addf %212, %217 : vector<32x128xf32>
    %c0_271 = arith.constant 0 : index
    %c0_272 = arith.constant 0 : index
    %219 = vector.load %arg5[%c0_271, %c0_272] : memref<1x128xf32, #tpu.memory_space<vmem>>, vector<1x128xf32>
    %220 = vector.broadcast %219 : vector<1x128xf32> to vector<32x128xf32>
    %221 = arith.addf %218, %220 : vector<32x128xf32>
    %222 = vector.shape_cast %221 : vector<32x128xf32> to vector<2x16x128xf32>
    %c0_273 = arith.constant 0 : index
    %c0_274 = arith.constant 0 : index
    %c0_275 = arith.constant 0 : index
    %223 = vector.load %arg6[%c0_273, %c0_274, %c0_275] : memref<2x16x128xf32, #tpu.memory_space<vmem>>, vector<2x16x128xf32>
    tpu.vector_store %arg6[%c0_273, %c0_274, %c0_275], %222 {strides = array<i32>} : memref<2x16x128xf32, #tpu.memory_space<vmem>>, vector<2x16x128xf32>,
    return
  }
}

</mosaic_0001>

<llo_original>
// kernel: tpu_custom_call.1
$region0: #{tpu_custom_call.1}
  #allocation0 [shape = 'u32[]', space=smem, size = 0x4, offset = 0x4, fixed_abs, tag = 'smem constant byte address 0x4 - core index']
  #allocation1 [shape = 'u32[144,128]{1,0:T(1,128)}', space=vmem, size = 0x12000, scoped, tag = 'internal scratch']
  #allocation2 [shape = 'bf16[2,48,128]{2,1,0:T(16,128)(2,1)}', space=vmem, size = 0x6000, scoped, tag = 'scratch operand']
  #allocation3 [shape = 'bf16[2,48,512]{2,1,0:T(16,128)(2,1)}', space=vmem, size = 0x18000, scoped, tag = 'scratch operand']
  #allocation4 [shape = 'bf16[3,5,512,512]{3,2,1,0:T(16,128)(2,1)}', space=vmem, size = 0x780000, scoped, tag = 'scratch operand']
  #allocation5 [shape = 's32[3]{0}', space=sflag, size = 0xc, scoped, tag = 'scratch operand']
  #allocation16 [shape = 's32[]', space=sflag, size = 0x4, offset = 0, fixed_abs, tag = 'sflag constant byte address 0x0 - dummy sync flag']
  #allocation18 [shape = 's32[]', space=sflag, size = 0x4, offset = 0, fixed_abs, tag = 'sflag constant byte address 0x0 - dummy sync flag']
  #allocation20 [shape = 's32[]', space=sflag, size = 0x4, offset = 0, fixed_abs, tag = 'sflag constant byte address 0x0 - dummy sync flag']
  %s0 = inlined_call_operand.hbm [shape: bf16[2,16,128], index: 0, kind: input, shape index: {}]
  %s1 = inlined_call_operand.hbm [shape: bf16[5,128,512], index: 1, kind: input, shape index: {}]
  %s2 = inlined_call_operand.hbm [shape: bf16[3,5,512,512], index: 2, kind: input, shape index: {}]
  %s3 = inlined_call_operand.hbm [shape: bf16[5,512,128], index: 3, kind: input, shape index: {}]
  %s4 = inlined_call_operand.hbm [shape: f32[4,512], index: 4, kind: input, shape index: {}]
  %s5 = inlined_call_operand.hbm [shape: f32[1,128], index: 5, kind: input, shape index: {}]
  %s6 = inlined_call_operand.hbm [shape: f32[2,16,128], index: 6, kind: output, shape index: {}]
  %s7 = sld [smem:[#allocation0]]
  $region50: #{tpu_custom_call.1} parent=0
    _
  %s9 = ssub.s32 1, %s7
  %s10 = scalar_select 0, %s9, %s7
  $region1: #{tpu_custom_call.1} parent=0
    #allocation6 [shape = 'u8[8192]{0}', space=vmem, size = 0x2000, scoped, tag = 'input window, operand 0, single buffered']
    #allocation7 [shape = 's32[1]{0}', space=sflag, size = 0x4, scoped, tag = 'scoped memory for tpu_custom_call.1']
    #allocation8 [shape = 's32[1]{0}', space=sflag, size = 0x4, scoped, tag = 'scoped memory for tpu_custom_call.1']
    #allocation9 [shape = 'u8[655360]{0}', space=vmem, size = 0xa0000, scoped, tag = 'input window, operand 1, single buffered']
    #allocation10 [shape = 's32[1]{0}', space=sflag, size = 0x4, scoped, tag = 'scoped memory for tpu_custom_call.1']
    #allocation11 [shape = 'u8[655360]{0}', space=vmem, size = 0xa0000, scoped, tag = 'input window, operand 3, single buffered']
    #allocation12 [shape = 'u8[8192]{0}', space=vmem, size = 0x2000, scoped, tag = 'input window, operand 4, single buffered']
    #allocation13 [shape = 's32[1]{0}', space=sflag, size = 0x4, scoped, tag = 'scoped memory for tpu_custom_call.1']
    #allocation14 [shape = 'u8[512]{0}', space=vmem, size = 0x400, scoped, tag = 'input window, operand 5, single buffered']
    #allocation15 [shape = 'u8[16384]{0}', space=vmem, size = 0x4000, scoped, tag = 'output window, operand 0, single buffered']
    #allocation17 [shape = 'u32[9]{0}', space=smem, size = 0x24, scoped, tag = 'DMA stride descriptor']
    #allocation19 [shape = 'u32[9]{0}', space=smem, size = 0x24, scoped, tag = 'DMA stride descriptor']
    #allocation21 [shape = 'u32[9]{0}', space=smem, size = 0x24, scoped, tag = 'DMA stride descriptor']
    %11 = vsyncpa [#allocation7], 0
    %12 = vsyncpa [#allocation10], 0
    %13 = vsyncpa [#allocation13], 0
    %14 = vsyncpa [#allocation8], 0
    // Predicated region
    $region2: #{tpu_custom_call.1} parent=1 // pred_check
      _
    $region3: #{tpu_custom_call.1} parent=1 // pred_check_branch
      %16 = sbr.rel (0) target = $region5
    $region4: #{tpu_custom_call.1} parent=1 // pred_region
      %s18 = ssub.s32 256, 256
      %19 = vsyncadd [#allocation7], %s18
      %s20 = sshll.u32 [#allocation6], 4
      %s21 = int_to_ptr.vmem [resolvable:$true] %s20
      %26 = dma.hbm_to_vmem [thread:$0]  %s0, 256, %s21, [#allocation7], 64, 64, 4
    $region5: #{tpu_custom_call.1} parent=1 // pred_fallthru
      _
    // Predicated region
    $region6: #{tpu_custom_call.1} parent=1 // pred_check
      _
    $region7: #{tpu_custom_call.1} parent=1 // pred_check_branch
      %28 = sbr.rel (0) target = $region9
    $region8: #{tpu_custom_call.1} parent=1 // pred_region
      %s30 = ssub.s32 20480, 20480
      %31 = vsyncadd [#allocation10], %s30
      %s32 = sshll.u32 [#allocation9], 4
      %s33 = int_to_ptr.vmem [resolvable:$true] %s32
      %38 = dma.hbm_to_vmem [thread:$0]  %s1, 20480, %s33, [#allocation10], 256, 256, 16
    $region9: #{tpu_custom_call.1} parent=1 // pred_fallthru
      _
    // Predicated region
    $region10: #{tpu_custom_call.1} parent=1 // pred_check
      _
    $region11: #{tpu_custom_call.1} parent=1 // pred_check_branch
      %40 = sbr.rel (0) target = $region13
    $region12: #{tpu_custom_call.1} parent=1 // pred_region
      %s42 = ssub.s32 20480, 20480
      %43 = vsyncadd [#allocation10], %s42
      %s44 = sshll.u32 [#allocation11], 4
      %s45 = int_to_ptr.vmem [resolvable:$true] %s44
      %50 = dma.hbm_to_vmem [thread:$0]  %s3, 20480, %s45, [#allocation10], 64, 64, 4
    $region13: #{tpu_custom_call.1} parent=1 // pred_fallthru
      _
    // Predicated region
    $region14: #{tpu_custom_call.1} parent=1 // pred_check
      _
    $region15: #{tpu_custom_call.1} parent=1 // pred_check_branch
      %52 = sbr.rel (0) target = $region17
    $region16: #{tpu_custom_call.1} parent=1 // pred_region
      %s54 = ssub.s32 256, 256
      %55 = vsyncadd [#allocation13], %s54
      %s57 = sshll.u32 [#allocation12], 4
      %s58 = int_to_ptr.vmem [resolvable:$true] %s57
      %60 = dma.hbm_to_vmem [thread:$0]  %s4, 256, %s58, [#allocation13]
    $region17: #{tpu_custom_call.1} parent=1 // pred_fallthru
      _
    // Predicated region
    $region18: #{tpu_custom_call.1} parent=1 // pred_check
      _
    $region19: #{tpu_custom_call.1} parent=1 // pred_check_branch
      %62 = sbr.rel (0) target = $region21
    $region20: #{tpu_custom_call.1} parent=1 // pred_region
      %s64 = ssub.s32 16, 16
      %65 = vsyncadd [#allocation13], %s64
      %s67 = sshll.u32 [#allocation14], 4
      %s68 = int_to_ptr.vmem [resolvable:$true] %s67
      %70 = dma.hbm_to_vmem [thread:$0]  %s5, 16, %s68, [#allocation13]
    $region21: #{tpu_custom_call.1} parent=1 // pred_fallthru
      _
    // Predicated region
    $region22: #{tpu_custom_call.1} parent=1 // pred_check
      _
    $region23: #{tpu_custom_call.1} parent=1 // pred_check_branch
      %72 = sbr.rel (0) target = $region25
    $region24: #{tpu_custom_call.1} parent=1 // pred_region
      %73 = dma.done [#allocation7], 256
    $region25: #{tpu_custom_call.1} parent=1 // pred_fallthru
      _
    // Predicated region
    $region26: #{tpu_custom_call.1} parent=1 // pred_check
      _
    $region27: #{tpu_custom_call.1} parent=1 // pred_check_branch
      %75 = sbr.rel (0) target = $region29
    $region28: #{tpu_custom_call.1} parent=1 // pred_region
      %76 = dma.done [#allocation10], 20480
    $region29: #{tpu_custom_call.1} parent=1 // pred_fallthru
      _
    // Predicated region
    $region30: #{tpu_custom_call.1} parent=1 // pred_check
      _
    $region31: #{tpu_custom_call.1} parent=1 // pred_check_branch
      %78 = sbr.rel (0) target = $region33
    $region32: #{tpu_custom_call.1} parent=1 // pred_region
      %79 = dma.done [#allocation10], 20480
    $region33: #{tpu_custom_call.1} parent=1 // pred_fallthru
      _
    // Predicated region
    $region34: #{tpu_custom_call.1} parent=1 // pred_check
      _
    $region35: #{tpu_custom_call.1} parent=1 // pred_check_branch
      %81 = sbr.rel (0) target = $region37
    $region36: #{tpu_custom_call.1} parent=1 // pred_region
      %82 = dma.done [#allocation13], 256
    $region37: #{tpu_custom_call.1} parent=1 // pred_fallthru
      _
    // Predicated region
    $region38: #{tpu_custom_call.1} parent=1 // pred_check
      _
    $region39: #{tpu_custom_call.1} parent=1 // pred_check_branch
      %84 = sbr.rel (0) target = $region41
    $region40: #{tpu_custom_call.1} parent=1 // pred_region
      %85 = dma.done [#allocation13], 16
    $region41: #{tpu_custom_call.1} parent=1 // pred_fallthru
      _
    %s88 = sshll.u32 1, 14
    %s89 = sxor.u32 4294967295, %s88
    %s91 = sld [smem:[#allocation0]]
    %s92 = sadd.s32 2, %s91
    %s94 = sshll.u32 7, 26
    %s95 = sxor.u32 4294967295, %s94
    %s96 = sand.u32 0, %s95
    %s97 = sshll.u32 %s92, 26
    %s98 = sor.u32 %s96, %s97
    %s99 = sshll.u32 [#allocation4], 4
    %s100 = int_to_ptr.vmem [resolvable:$true] %s99
    %103 = sst [smem:[#allocation17]] 512
    %s104 = scalar_lea.smem [#allocation17], 1
    %105 = sst [smem:[%s104]] 512
    %s106 = scalar_lea.smem [#allocation17], 2
    %107 = sst [smem:[%s106]] 4
    %s108 = scalar_lea.smem [#allocation17], 3
    %109 = sst [smem:[%s108]] 64
    %s110 = scalar_lea.smem [#allocation17], 4
    %111 = sst [smem:[%s110]] 128
    %s112 = scalar_lea.smem [#allocation17], 5
    %113 = sst [smem:[%s112]] 2
    %s114 = scalar_lea.smem [#allocation17], 6
    %115 = sst [smem:[%s114]] 256
    %s116 = scalar_lea.smem [#allocation17], 7
    %117 = sst [smem:[%s116]] 64
    %s118 = scalar_lea.smem [#allocation17], 8
    %119 = sst [smem:[%s118]] 4
    %121 = dma.general %s2, 81920, %s100, [#allocation5], [#allocation16], [#allocation17], %s98, 0
    %s122 = scalar_lea.hbm %s2, 81920
    %s123 = scalar_lea.vmem [#allocation4], 5120
    %s124 = scalar_lea.sflag [#allocation5], 1
    %s126 = sshll.u32 1, 14
    %s127 = sxor.u32 4294967295, %s126
    %s129 = sadd.s32 2, %s91
    %s131 = sshll.u32 7, 26
    %s132 = sxor.u32 4294967295, %s131
    %s133 = sand.u32 0, %s132
    %s134 = sshll.u32 %s129, 26
    %s135 = sor.u32 %s133, %s134
    %s136 = sshll.u32 %s123, 4
    %s137 = int_to_ptr.vmem [resolvable:$true] %s136
    %140 = sst [smem:[#allocation19]] 512
    %s141 = scalar_lea.smem [#allocation19], 1
    %142 = sst [smem:[%s141]] 512
    %s143 = scalar_lea.smem [#allocation19], 2
    %144 = sst [smem:[%s143]] 4
    %s145 = scalar_lea.smem [#allocation19], 3
    %146 = sst [smem:[%s145]] 64
    %s147 = scalar_lea.smem [#allocation19], 4
    %148 = sst [smem:[%s147]] 128
    %s149 = scalar_lea.smem [#allocation19], 5
    %150 = sst [smem:[%s149]] 2
    %s151 = scalar_lea.smem [#allocation19], 6
    %152 = sst [smem:[%s151]] 256
    %s153 = scalar_lea.smem [#allocation19], 7
    %154 = sst [smem:[%s153]] 64
    %s155 = scalar_lea.smem [#allocation19], 8
    %156 = sst [smem:[%s155]] 4
    %158 = dma.general %s122, 81920, %s137, %s124, [#allocation18], [#allocation19], %s135, 0
    %s159 = scalar_lea.hbm %s2, 163840
    %s160 = scalar_lea.vmem [#allocation4], 10240
    %s161 = scalar_lea.sflag [#allocation5], 2
    %s163 = sshll.u32 1, 14
    %s164 = sxor.u32 4294967295, %s163
    %s166 = sadd.s32 2, %s91
    %s168 = sshll.u32 7, 26
    %s169 = sxor.u32 4294967295, %s168
    %s170 = sand.u32 0, %s169
    %s171 = sshll.u32 %s166, 26
    %s172 = sor.u32 %s170, %s171
    %s173 = sshll.u32 %s160, 4
    %s174 = int_to_ptr.vmem [resolvable:$true] %s173
    %177 = sst [smem:[#allocation21]] 512
    %s178 = scalar_lea.smem [#allocation21], 1
    %179 = sst [smem:[%s178]] 512
    %s180 = scalar_lea.smem [#allocation21], 2
    %181 = sst [smem:[%s180]] 4
    %s182 = scalar_lea.smem [#allocation21], 3
    %183 = sst [smem:[%s182]] 64
    %s184 = scalar_lea.smem [#allocation21], 4
    %185 = sst [smem:[%s184]] 128
    %s186 = scalar_lea.smem [#allocation21], 5
    %187 = sst [smem:[%s186]] 2
    %s188 = scalar_lea.smem [#allocation21], 6
    %189 = sst [smem:[%s188]] 256
    %s190 = scalar_lea.smem [#allocation21], 7
    %191 = sst [smem:[%s190]] 64
    %s192 = scalar_lea.smem [#allocation21], 8
    %193 = sst [smem:[%s192]] 4
    %195 = dma.general %s159, 81920, %s174, %s161, [#allocation20], [#allocation21], %s172, 0
    %196 = vst [vmem:[#allocation2] sm:$0xff] 0
    %197 = vst [vmem:[#allocation2 + $0x18] sm:$0xff] 0
    %198 = vst [vmem:[#allocation2 + $0x10] sm:$0xff] 0
    %199 = vst [vmem:[#allocation2 + $0x28] sm:$0xff] 0
    %200 = vst [vmem:[#allocation3] sm:$0xff] 0
    %201 = vst [vmem:[#allocation3 + $0x8] sm:$0xff] 0
    %202 = vst [vmem:[#allocation3 + $0x10] sm:$0xff] 0
    %203 = vst [vmem:[#allocation3 + $0x18] sm:$0xff] 0
    %204 = vst [vmem:[#allocation3 + $0x60] sm:$0xff] 0
    %205 = vst [vmem:[#allocation3 + $0x68] sm:$0xff] 0
    %206 = vst [vmem:[#allocation3 + $0x70] sm:$0xff] 0
    %207 = vst [vmem:[#allocation3 + $0x78] sm:$0xff] 0
    %208 = vst [vmem:[#allocation3 + $0x40] sm:$0xff] 0
    %209 = vst [vmem:[#allocation3 + $0x48] sm:$0xff] 0
    %210 = vst [vmem:[#allocation3 + $0x50] sm:$0xff] 0
    %211 = vst [vmem:[#allocation3 + $0x58] sm:$0xff] 0
    %212 = vst [vmem:[#allocation3 + $0xa0] sm:$0xff] 0
    %213 = vst [vmem:[#allocation3 + $0xa8] sm:$0xff] 0
    %214 = vst [vmem:[#allocation3 + $0xb0] sm:$0xff] 0
    %215 = vst [vmem:[#allocation3 + $0xb8] sm:$0xff] 0
    %v216 = vld [vmem:[#allocation6] sm:$0xf]
    %v217 = vld [vmem:[#allocation6 + $0x4] sm:$0xf]
    %v218 = vld [vmem:[#allocation6 + $0x8] sm:$0xf]
    %v219 = vld [vmem:[#allocation6 + $0xc] sm:$0xf]
    %v224 = vunpack.c.l.b16 %v216
    %v225 = vunpack.c.l.b16 %v217
    %v226 = vunpack.c.l.b16 %v218
    %v227 = vunpack.c.l.b16 %v219
    %v228 = vpack.c.b16 %v225, %v224
    %v229 = vpack.c.b16 %v227, %v226
    %232 = vst [vmem:[#allocation2 + $0x8] sm:$0xff] %v228
    %233 = vst [vmem:[#allocation2 + $0x20] sm:$0xff] %v229
    %v234 = vld [vmem:[#allocation2] sm:$0x80]
    %v235 = vld [vmem:[#allocation2 + $0x8] sm:$0x7f]
    %v236 = vld [vmem:[#allocation2 + $0x18] sm:$0x80]
    %v237 = vld [vmem:[#allocation2 + $0x20] sm:$0x7f]
    %vm242 = vcmask 1040384
    %v243 = vrot.slane %v234, 7
    %v244 = vrot.slane %v235, 7
    %v245 = vsel %vm242, %v243, %v244
    %v246 = vrot.slane %v236, 7
    %v247 = vrot.slane %v237, 7
    %v248 = vsel %vm242, %v246, %v247
    %v251 = vld [vmem:[#allocation9] sm:$0xff]
    %v252 = vld [vmem:[#allocation9 + $0x8] sm:$0xff]
    %v253 = vld [vmem:[#allocation9 + $0x10] sm:$0xff]
    %v254 = vld [vmem:[#allocation9 + $0x18] sm:$0xff]
    %v255 = vld [vmem:[#allocation9 + $0x20] sm:$0xff]
    %v256 = vld [vmem:[#allocation9 + $0x28] sm:$0xff]
    %v257 = vld [vmem:[#allocation9 + $0x30] sm:$0xff]
    %v258 = vld [vmem:[#allocation9 + $0x38] sm:$0xff]
    %v259 = vld [vmem:[#allocation9 + $0x40] sm:$0xff]
    %v260 = vld [vmem:[#allocation9 + $0x48] sm:$0xff]
    %v261 = vld [vmem:[#allocation9 + $0x50] sm:$0xff]
    %v262 = vld [vmem:[#allocation9 + $0x58] sm:$0xff]
    %v263 = vld [vmem:[#allocation9 + $0x60] sm:$0xff]
    %v264 = vld [vmem:[#allocation9 + $0x68] sm:$0xff]
    %v265 = vld [vmem:[#allocation9 + $0x70] sm:$0xff]
    %v266 = vld [vmem:[#allocation9 + $0x78] sm:$0xff]
    %v267 = vld [vmem:[#allocation9 + $0x80] sm:$0xff]
    %v268 = vld [vmem:[#allocation9 + $0x88] sm:$0xff]
    %v269 = vld [vmem:[#allocation9 + $0x90] sm:$0xff]
    %v270 = vld [vmem:[#allocation9 + $0x98] sm:$0xff]
    %v271 = vld [vmem:[#allocation9 + $0xa0] sm:$0xff]
    %v272 = vld [vmem:[#allocation9 + $0xa8] sm:$0xff]
    %v273 = vld [vmem:[#allocation9 + $0xb0] sm:$0xff]
    %v274 = vld [vmem:[#allocation9 + $0xb8] sm:$0xff]
    %v275 = vld [vmem:[#allocation9 + $0xc0] sm:$0xff]
    %v276 = vld [vmem:[#allocation9 + $0xc8] sm:$0xff]
    %v277 = vld [vmem:[#allocation9 + $0xd0] sm:$0xff]
    %v278 = vld [vmem:[#allocation9 + $0xd8] sm:$0xff]
    %v279 = vld [vmem:[#allocation9 + $0xe0] sm:$0xff]
    %v280 = vld [vmem:[#allocation9 + $0xe8] sm:$0xff]
    %v281 = vld [vmem:[#allocation9 + $0xf0] sm:$0xff]
    %v282 = vld [vmem:[#allocation9 + $0xf8] sm:$0xff]
    %v283 = vld [vmem:[#allocation2 + $0x8] sm:$0xff]
    %v284 = vld [vmem:[#allocation2 + $0x20] sm:$0xff]
    %vm285 = vsmask.f32 256
    %v287 = vshrl.u32 %v234, 16
    %v289 = vrot.slane %v287, 7
    %v291 = vshrl.u32 %v283, 16
    %v293 = vrot.slane %v291, 7
    %v294 = vshll.u32 %v283, 16
    %v296 = vor.u32 %v293, %v294
    %v297 = vsel %vm285, %v289, %v296
    %v299 = vshrl.u32 %v236, 16
    %v301 = vrot.slane %v299, 7
    %v303 = vshrl.u32 %v284, 16
    %v305 = vrot.slane %v303, 7
    %v306 = vshll.u32 %v284, 16
    %v308 = vor.u32 %v305, %v306
    %v309 = vsel %vm285, %v301, %v308
    %s312 = scalar_lea.vmem [#allocation9], 256
    %v313 = vld [vmem:[%s312] sm:$0xff]
    %v314 = vld [vmem:[%s312 + $0x8] sm:$0xff]
    %v315 = vld [vmem:[%s312 + $0x10] sm:$0xff]
    %v316 = vld [vmem:[%s312 + $0x18] sm:$0xff]
    %v317 = vld [vmem:[%s312 + $0x20] sm:$0xff]
    %v318 = vld [vmem:[%s312 + $0x28] sm:$0xff]
    %v319 = vld [vmem:[%s312 + $0x30] sm:$0xff]
    %v320 = vld [vmem:[%s312 + $0x38] sm:$0xff]
    %v321 = vld [vmem:[%s312 + $0x40] sm:$0xff]
    %v322 = vld [vmem:[%s312 + $0x48] sm:$0xff]
    %v323 = vld [vmem:[%s312 + $0x50] sm:$0xff]
    %v324 = vld [vmem:[%s312 + $0x58] sm:$0xff]
    %v325 = vld [vmem:[%s312 + $0x60] sm:$0xff]
    %v326 = vld [vmem:[%s312 + $0x68] sm:$0xff]
    %v327 = vld [vmem:[%s312 + $0x70] sm:$0xff]
    %v328 = vld [vmem:[%s312 + $0x78] sm:$0xff]
    %v329 = vld [vmem:[%s312 + $0x80] sm:$0xff]
    %v330 = vld [vmem:[%s312 + $0x88] sm:$0xff]
    %v331 = vld [vmem:[%s312 + $0x90] sm:$0xff]
    %v332 = vld [vmem:[%s312 + $0x98] sm:$0xff]
    %v333 = vld [vmem:[%s312 + $0xa0] sm:$0xff]
    %v334 = vld [vmem:[%s312 + $0xa8] sm:$0xff]
    %v335 = vld [vmem:[%s312 + $0xb0] sm:$0xff]
    %v336 = vld [vmem:[%s312 + $0xb8] sm:$0xff]
    %v337 = vld [vmem:[%s312 + $0xc0] sm:$0xff]
    %v338 = vld [vmem:[%s312 + $0xc8] sm:$0xff]
    %v339 = vld [vmem:[%s312 + $0xd0] sm:$0xff]
    %v340 = vld [vmem:[%s312 + $0xd8] sm:$0xff]
    %v341 = vld [vmem:[%s312 + $0xe0] sm:$0xff]
    %v342 = vld [vmem:[%s312 + $0xe8] sm:$0xff]
    %v343 = vld [vmem:[%s312 + $0xf0] sm:$0xff]
    %v344 = vld [vmem:[%s312 + $0xf8] sm:$0xff]
    %v377 = vunpack.c.l.b16 %v313
    %v378 = vunpack.c.h.b16 %v313
    %v379 = vunpack.c.l.b16 %v314
    %v380 = vunpack.c.h.b16 %v314
    %v381 = vunpack.c.l.b16 %v315
    %v382 = vunpack.c.h.b16 %v315
    %v383 = vunpack.c.l.b16 %v316
    %v384 = vunpack.c.h.b16 %v316
    %v385 = vunpack.c.l.b16 %v317
    %v386 = vunpack.c.h.b16 %v317
    %v387 = vunpack.c.l.b16 %v318
    %v388 = vunpack.c.h.b16 %v318
    %v389 = vunpack.c.l.b16 %v319
    %v390 = vunpack.c.h.b16 %v319
    %v391 = vunpack.c.l.b16 %v320
    %v392 = vunpack.c.h.b16 %v320
    %v393 = vunpack.c.l.b16 %v321
    %v394 = vunpack.c.h.b16 %v321
    %v395 = vunpack.c.l.b16 %v322
    %v396 = vunpack.c.h.b16 %v322
    %v397 = vunpack.c.l.b16 %v323
    %v398 = vunpack.c.h.b16 %v323
    %v399 = vunpack.c.l.b16 %v324
    %v400 = vunpack.c.h.b16 %v324
    %v401 = vunpack.c.l.b16 %v325
    %v402 = vunpack.c.h.b16 %v325
    %v403 = vunpack.c.l.b16 %v326
    %v404 = vunpack.c.h.b16 %v326
    %v405 = vunpack.c.l.b16 %v327
    %v406 = vunpack.c.h.b16 %v327
    %v407 = vunpack.c.l.b16 %v328
    %v408 = vunpack.c.h.b16 %v328
    %v409 = vunpack.c.l.b16 %v329
    %v410 = vunpack.c.h.b16 %v329
    %v411 = vunpack.c.l.b16 %v330
    %v412 = vunpack.c.h.b16 %v330
    %v413 = vunpack.c.l.b16 %v331
    %v414 = vunpack.c.h.b16 %v331
    %v415 = vunpack.c.l.b16 %v332
    %v416 = vunpack.c.h.b16 %v332
    %v417 = vunpack.c.l.b16 %v333
    %v418 = vunpack.c.h.b16 %v333
    %v419 = vunpack.c.l.b16 %v334
    %v420 = vunpack.c.h.b16 %v334
    %v421 = vunpack.c.l.b16 %v335
    %v422 = vunpack.c.h.b16 %v335
    %v423 = vunpack.c.l.b16 %v336
    %v424 = vunpack.c.h.b16 %v336
    %v425 = vunpack.c.l.b16 %v337
    %v426 = vunpack.c.h.b16 %v337
    %v427 = vunpack.c.l.b16 %v338
    %v428 = vunpack.c.h.b16 %v338
    %v429 = vunpack.c.l.b16 %v339
    %v430 = vunpack.c.h.b16 %v339
    %v431 = vunpack.c.l.b16 %v340
    %v432 = vunpack.c.h.b16 %v340
    %v433 = vunpack.c.l.b16 %v341
    %v434 = vunpack.c.h.b16 %v341
    %v435 = vunpack.c.l.b16 %v342
    %v436 = vunpack.c.h.b16 %v342
    %v437 = vunpack.c.l.b16 %v343
    %v438 = vunpack.c.h.b16 %v343
    %v439 = vunpack.c.l.b16 %v344
    %v440 = vunpack.c.h.b16 %v344
    %v441 = vpack.c.b16 %v381, %v377
    %v442 = vpack.c.b16 %v382, %v378
    %v443 = vpack.c.b16 %v383, %v379
    %v444 = vpack.c.b16 %v384, %v380
    %v445 = vpack.c.b16 %v389, %v385
    %v446 = vpack.c.b16 %v390, %v386
    %v447 = vpack.c.b16 %v391, %v387
    %v448 = vpack.c.b16 %v392, %v388
    %v449 = vpack.c.b16 %v397, %v393
    %v450 = vpack.c.b16 %v398, %v394
    %v451 = vpack.c.b16 %v399, %v395
    %v452 = vpack.c.b16 %v400, %v396
    %v453 = vpack.c.b16 %v405, %v401
    %v454 = vpack.c.b16 %v406, %v402
    %v455 = vpack.c.b16 %v407, %v403
    %v456 = vpack.c.b16 %v408, %v404
    %v457 = vpack.c.b16 %v413, %v409
    %v458 = vpack.c.b16 %v414, %v410
    %v459 = vpack.c.b16 %v415, %v411
    %v460 = vpack.c.b16 %v416, %v412
    %v461 = vpack.c.b16 %v421, %v417
    %v462 = vpack.c.b16 %v422, %v418
    %v463 = vpack.c.b16 %v423, %v419
    %v464 = vpack.c.b16 %v424, %v420
    %v465 = vpack.c.b16 %v429, %v425
    %v466 = vpack.c.b16 %v430, %v426
    %v467 = vpack.c.b16 %v431, %v427
    %v468 = vpack.c.b16 %v432, %v428
    %v469 = vpack.c.b16 %v437, %v433
    %v470 = vpack.c.b16 %v438, %v434
    %v471 = vpack.c.b16 %v439, %v435
    %v472 = vpack.c.b16 %v440, %v436
    %505 = vmatprep.subr.bf16.mxu0 %v442
    %506 = vmatpush1.bf16.msra.mxu0 %v441
    %507 = vmatprep.subr.bf16.mxu0 %v446
    %508 = vmatpush1.bf16.msra.mxu0 %v445
    %509 = vmatprep.subr.bf16.mxu0 %v450
    %510 = vmatpush1.bf16.msra.mxu0 %v449
    %511 = vmatprep.subr.bf16.mxu0 %v454
    %512 = vmatpush1.bf16.msra.mxu0 %v453
    %513 = vmatprep.subr.bf16.mxu0 %v458
    %514 = vmatpush1.bf16.msra.mxu0 %v457
    %515 = vmatprep.subr.bf16.mxu0 %v462
    %516 = vmatpush1.bf16.msra.mxu0 %v461
    %517 = vmatprep.subr.bf16.mxu0 %v466
    %518 = vmatpush1.bf16.msra.mxu0 %v465
    %519 = vmatprep.subr.bf16.mxu0 %v470
    %520 = vmatpush1.bf16.msra.mxu0 %v469
    %521 = vmatprep.subr.bf16.mxu0 0
    %522 = vmatpush1.bf16.msra.mxu0 0
    %523 = vmatprep.subr.bf16.mxu0 0
    %524 = vmatpush1.bf16.msra.mxu0 0
    %525 = vmatprep.subr.bf16.mxu0 0
    %526 = vmatpush1.bf16.msra.mxu0 0
    %527 = vmatprep.subr.bf16.mxu0 0
    %528 = vmatpush1.bf16.msra.mxu0 0
    %529 = vmatprep.subr.bf16.mxu0 0
    %530 = vmatpush1.bf16.msra.mxu0 0
    %531 = vmatprep.subr.bf16.mxu0 0
    %532 = vmatpush1.bf16.msra.mxu0 0
    %533 = vmatprep.subr.bf16.mxu0 0
    %534 = vmatpush1.bf16.msra.mxu0 0
    %535 = vmatprep.subr.bf16.mxu0 0
    %536 = vmatpush1.bf16.msra.mxu0 0
    %537 = vmatprep.mubr.bf16.mxu0 0
    %538 = vmatmul.mubr.bf16.gmra.mrb[0].mxu0 %v297
    %v539 = vpop.f32.mrb[0].mxu0
    %v540 = vadd.f32 0.0, %v539
    %v541 = vpop.f32.mrb[0].mxu0
    %v542 = vadd.f32 0.0, %v541
    %v543 = vpop.f32.mrb[0].mxu0
    %v544 = vadd.f32 0.0, %v543
    %v545 = vpop.f32.mrb[0].mxu0
    %v546 = vadd.f32 0.0, %v545
    %547 = vmatprep.mubr.bf16.mxu0 0
    %548 = vmatmul.mubr.bf16.gmra.mrb[0].mxu0 %v309
    %v549 = vpop.f32.mrb[0].mxu0
    %v550 = vadd.f32 0.0, %v549
    %v551 = vpop.f32.mrb[0].mxu0
    %v552 = vadd.f32 0.0, %v551
    %v553 = vpop.f32.mrb[0].mxu0
    %v554 = vadd.f32 0.0, %v553
    %v555 = vpop.f32.mrb[0].mxu0
    %v556 = vadd.f32 0.0, %v555
    %557 = vdwg.mxu0
    %558 = vmatprep.subr.bf16.mxu0 %v444
    %559 = vmatpush1.bf16.msra.mxu0 %v443
    %560 = vmatprep.subr.bf16.mxu0 %v448
    %561 = vmatpush1.bf16.msra.mxu0 %v447
    %562 = vmatprep.subr.bf16.mxu0 %v452
    %563 = vmatpush1.bf16.msra.mxu0 %v451
    %564 = vmatprep.subr.bf16.mxu0 %v456
    %565 = vmatpush1.bf16.msra.mxu0 %v455
    %566 = vmatprep.subr.bf16.mxu0 %v460
    %567 = vmatpush1.bf16.msra.mxu0 %v459
    %568 = vmatprep.subr.bf16.mxu0 %v464
    %569 = vmatpush1.bf16.msra.mxu0 %v463
    %570 = vmatprep.subr.bf16.mxu0 %v468
    %571 = vmatpush1.bf16.msra.mxu0 %v467
    %572 = vmatprep.subr.bf16.mxu0 %v472
    %573 = vmatpush1.bf16.msra.mxu0 %v471
    %574 = vmatprep.subr.bf16.mxu0 0
    %575 = vmatpush1.bf16.msra.mxu0 0
    %576 = vmatprep.subr.bf16.mxu0 0
    %577 = vmatpush1.bf16.msra.mxu0 0
    %578 = vmatprep.subr.bf16.mxu0 0
    %579 = vmatpush1.bf16.msra.mxu0 0
    %580 = vmatprep.subr.bf16.mxu0 0
    %581 = vmatpush1.bf16.msra.mxu0 0
    %582 = vmatprep.subr.bf16.mxu0 0
    %583 = vmatpush1.bf16.msra.mxu0 0
    %584 = vmatprep.subr.bf16.mxu0 0
    %585 = vmatpush1.bf16.msra.mxu0 0
    %586 = vmatprep.subr.bf16.mxu0 0
    %587 = vmatpush1.bf16.msra.mxu0 0
    %588 = vmatprep.subr.bf16.mxu0 0
    %589 = vmatpush1.bf16.msra.mxu0 0
    %590 = vmatprep.mubr.bf16.mxu0 0
    %591 = vmatmul.mubr.bf16.gmra.mrb[0].mxu0 %v297
    %v592 = vpop.f32.mrb[0].mxu0
    %v593 = vadd.f32 0.0, %v592
    %v594 = vpop.f32.mrb[0].mxu0
    %v595 = vadd.f32 0.0, %v594
    %v596 = vpop.f32.mrb[0].mxu0
    %v597 = vadd.f32 0.0, %v596
    %v598 = vpop.f32.mrb[0].mxu0
    %v599 = vadd.f32 0.0, %v598
    %600 = vmatprep.mubr.bf16.mxu0 0
    %601 = vmatmul.mubr.bf16.gmra.mrb[0].mxu0 %v309
    %v602 = vpop.f32.mrb[0].mxu0
    %v603 = vadd.f32 0.0, %v602
    %v604 = vpop.f32.mrb[0].mxu0
    %v605 = vadd.f32 0.0, %v604
    %v606 = vpop.f32.mrb[0].mxu0
    %v607 = vadd.f32 0.0, %v606
    %v608 = vpop.f32.mrb[0].mxu0
    %v609 = vadd.f32 0.0, %v608
    %610 = vdwg.mxu0
    %v643 = vunpack.c.l.b16 %v251
    %v644 = vunpack.c.h.b16 %v251
    %v645 = vunpack.c.l.b16 %v252
    %v646 = vunpack.c.h.b16 %v252
    %v647 = vunpack.c.l.b16 %v253
    %v648 = vunpack.c.h.b16 %v253
    %v649 = vunpack.c.l.b16 %v254
    %v650 = vunpack.c.h.b16 %v254
    %v651 = vunpack.c.l.b16 %v255
    %v652 = vunpack.c.h.b16 %v255
    %v653 = vunpack.c.l.b16 %v256
    %v654 = vunpack.c.h.b16 %v256
    %v655 = vunpack.c.l.b16 %v257
    %v656 = vunpack.c.h.b16 %v257
    %v657 = vunpack.c.l.b16 %v258
    %v658 = vunpack.c.h.b16 %v258
    %v659 = vunpack.c.l.b16 %v259
    %v660 = vunpack.c.h.b16 %v259
    %v661 = vunpack.c.l.b16 %v260
    %v662 = vunpack.c.h.b16 %v260
    %v663 = vunpack.c.l.b16 %v261
    %v664 = vunpack.c.h.b16 %v261
    %v665 = vunpack.c.l.b16 %v262
    %v666 = vunpack.c.h.b16 %v262
    %v667 = vunpack.c.l.b16 %v263
    %v668 = vunpack.c.h.b16 %v263
    %v669 = vunpack.c.l.b16 %v264
    %v670 = vunpack.c.h.b16 %v264
    %v671 = vunpack.c.l.b16 %v265
    %v672 = vunpack.c.h.b16 %v265
    %v673 = vunpack.c.l.b16 %v266
    %v674 = vunpack.c.h.b16 %v266
    %v675 = vunpack.c.l.b16 %v267
    %v676 = vunpack.c.h.b16 %v267
    %v677 = vunpack.c.l.b16 %v268
    %v678 = vunpack.c.h.b16 %v268
    %v679 = vunpack.c.l.b16 %v269
    %v680 = vunpack.c.h.b16 %v269
    %v681 = vunpack.c.l.b16 %v270
    %v682 = vunpack.c.h.b16 %v270
    %v683 = vunpack.c.l.b16 %v271
    %v684 = vunpack.c.h.b16 %v271
    %v685 = vunpack.c.l.b16 %v272
    %v686 = vunpack.c.h.b16 %v272
    %v687 = vunpack.c.l.b16 %v273
    %v688 = vunpack.c.h.b16 %v273
    %v689 = vunpack.c.l.b16 %v274
    %v690 = vunpack.c.h.b16 %v274
    %v691 = vunpack.c.l.b16 %v275
    %v692 = vunpack.c.h.b16 %v275
    %v693 = vunpack.c.l.b16 %v276
    %v694 = vunpack.c.h.b16 %v276
    %v695 = vunpack.c.l.b16 %v277
    %v696 = vunpack.c.h.b16 %v277
    %v697 = vunpack.c.l.b16 %v278
    %v698 = vunpack.c.h.b16 %v278
    %v699 = vunpack.c.l.b16 %v279
    %v700 = vunpack.c.h.b16 %v279
    %v701 = vunpack.c.l.b16 %v280
    %v702 = vunpack.c.h.b16 %v280
    %v703 = vunpack.c.l.b16 %v281
    %v704 = vunpack.c.h.b16 %v281
    %v705 = vunpack.c.l.b16 %v282
    %v706 = vunpack.c.h.b16 %v282
    %v707 = vpack.c.b16 %v647, %v643
    %v708 = vpack.c.b16 %v648, %v644
    %v709 = vpack.c.b16 %v649, %v645
    %v710 = vpack.c.b16 %v650, %v646
    %v711 = vpack.c.b16 %v655, %v651
    %v712 = vpack.c.b16 %v656, %v652
    %v713 = vpack.c.b16 %v657, %v653
    %v714 = vpack.c.b16 %v658, %v654
    %v715 = vpack.c.b16 %v663, %v659
    %v716 = vpack.c.b16 %v664, %v660
    %v717 = vpack.c.b16 %v665, %v661
    %v718 = vpack.c.b16 %v666, %v662
    %v719 = vpack.c.b16 %v671, %v667
    %v720 = vpack.c.b16 %v672, %v668
    %v721 = vpack.c.b16 %v673, %v669
    %v722 = vpack.c.b16 %v674, %v670
    %v723 = vpack.c.b16 %v679, %v675
    %v724 = vpack.c.b16 %v680, %v676
    %v725 = vpack.c.b16 %v681, %v677
    %v726 = vpack.c.b16 %v682, %v678
    %v727 = vpack.c.b16 %v687, %v683
    %v728 = vpack.c.b16 %v688, %v684
    %v729 = vpack.c.b16 %v689, %v685
    %v730 = vpack.c.b16 %v690, %v686
    %v731 = vpack.c.b16 %v695, %v691
    %v732 = vpack.c.b16 %v696, %v692
    %v733 = vpack.c.b16 %v697, %v693
    %v734 = vpack.c.b16 %v698, %v694
    %v735 = vpack.c.b16 %v703, %v699
    %v736 = vpack.c.b16 %v704, %v700
    %v737 = vpack.c.b16 %v705, %v701
    %v738 = vpack.c.b16 %v706, %v702
    %771 = vmatprep.subr.bf16.mxu0 %v708
    %772 = vmatpush1.bf16.msra.mxu0 %v707
    %773 = vmatprep.subr.bf16.mxu0 %v712
    %774 = vmatpush1.bf16.msra.mxu0 %v711
    %775 = vmatprep.subr.bf16.mxu0 %v716
    %776 = vmatpush1.bf16.msra.mxu0 %v715
    %777 = vmatprep.subr.bf16.mxu0 %v720
    %778 = vmatpush1.bf16.msra.mxu0 %v719
    %779 = vmatprep.subr.bf16.mxu0 %v724
    %780 = vmatpush1.bf16.msra.mxu0 %v723
    %781 = vmatprep.subr.bf16.mxu0 %v728
    %782 = vmatpush1.bf16.msra.mxu0 %v727
    %783 = vmatprep.subr.bf16.mxu0 %v732
    %784 = vmatpush1.bf16.msra.mxu0 %v731
    %785 = vmatprep.subr.bf16.mxu0 %v736
    %786 = vmatpush1.bf16.msra.mxu0 %v735
    %787 = vmatprep.subr.bf16.mxu0 0
    %788 = vmatpush1.bf16.msra.mxu0 0
    %789 = vmatprep.subr.bf16.mxu0 0
    %790 = vmatpush1.bf16.msra.mxu0 0
    %791 = vmatprep.subr.bf16.mxu0 0
    %792 = vmatpush1.bf16.msra.mxu0 0
    %793 = vmatprep.subr.bf16.mxu0 0
    %794 = vmatpush1.bf16.msra.mxu0 0
    %795 = vmatprep.subr.bf16.mxu0 0
    %796 = vmatpush1.bf16.msra.mxu0 0
    %797 = vmatprep.subr.bf16.mxu0 0
    %798 = vmatpush1.bf16.msra.mxu0 0
    %799 = vmatprep.subr.bf16.mxu0 0
    %800 = vmatpush1.bf16.msra.mxu0 0
    %801 = vmatprep.subr.bf16.mxu0 0
    %802 = vmatpush1.bf16.msra.mxu0 0
    %803 = vmatprep.mubr.bf16.mxu0 0
    %804 = vmatmul.mubr.bf16.gmra.mrb[0].mxu0 %v245
    %v805 = vpop.f32.mrb[0].mxu0
    %v806 = vadd.f32 %v540, %v805
    %v807 = vpop.f32.mrb[0].mxu0
    %v808 = vadd.f32 %v542, %v807
    %v809 = vpop.f32.mrb[0].mxu0
    %v810 = vadd.f32 %v544, %v809
    %v811 = vpop.f32.mrb[0].mxu0
    %v812 = vadd.f32 %v546, %v811
    %813 = vmatprep.mubr.bf16.mxu0 0
    %814 = vmatmul.mubr.bf16.gmra.mrb[0].mxu0 %v248
    %v815 = vpop.f32.mrb[0].mxu0
    %v816 = vadd.f32 %v550, %v815
    %v817 = vpop.f32.mrb[0].mxu0
    %v818 = vadd.f32 %v552, %v817
    %v819 = vpop.f32.mrb[0].mxu0
    %v820 = vadd.f32 %v554, %v819
    %v821 = vpop.f32.mrb[0].mxu0
    %v822 = vadd.f32 %v556, %v821
    %823 = vdwg.mxu0
    %824 = vmatprep.subr.bf16.mxu0 %v710
    %825 = vmatpush1.bf16.msra.mxu0 %v709
    %826 = vmatprep.subr.bf16.mxu0 %v714
    %827 = vmatpush1.bf16.msra.mxu0 %v713
    %828 = vmatprep.subr.bf16.mxu0 %v718
    %829 = vmatpush1.bf16.msra.mxu0 %v717
    %830 = vmatprep.subr.bf16.mxu0 %v722
    %831 = vmatpush1.bf16.msra.mxu0 %v721
    %832 = vmatprep.subr.bf16.mxu0 %v726
    %833 = vmatpush1.bf16.msra.mxu0 %v725
    %834 = vmatprep.subr.bf16.mxu0 %v730
    %835 = vmatpush1.bf16.msra.mxu0 %v729
    %836 = vmatprep.subr.bf16.mxu0 %v734
    %837 = vmatpush1.bf16.msra.mxu0 %v733
    %838 = vmatprep.subr.bf16.mxu0 %v738
    %839 = vmatpush1.bf16.msra.mxu0 %v737
    %840 = vmatprep.subr.bf16.mxu0 0
    %841 = vmatpush1.bf16.msra.mxu0 0
    %842 = vmatprep.subr.bf16.mxu0 0
    %843 = vmatpush1.bf16.msra.mxu0 0
    %844 = vmatprep.subr.bf16.mxu0 0
    %845 = vmatpush1.bf16.msra.mxu0 0
    %846 = vmatprep.subr.bf16.mxu0 0
    %847 = vmatpush1.bf16.msra.mxu0 0
    %848 = vmatprep.subr.bf16.mxu0 0
    %849 = vmatpush1.bf16.msra.mxu0 0
    %850 = vmatprep.subr.bf16.mxu0 0
    %851 = vmatpush1.bf16.msra.mxu0 0
    %852 = vmatprep.subr.bf16.mxu0 0
    %853 = vmatpush1.bf16.msra.mxu0 0
    %854 = vmatprep.subr.bf16.mxu0 0
    %855 = vmatpush1.bf16.msra.mxu0 0
    %856 = vmatprep.mubr.bf16.mxu0 0
    %857 = vmatmul.mubr.bf16.gmra.mrb[0].mxu0 %v245
    %v858 = vpop.f32.mrb[0].mxu0
    %v859 = vadd.f32 %v593, %v858
    %v860 = vpop.f32.mrb[0].mxu0
    %v861 = vadd.f32 %v595, %v860
    %v862 = vpop.f32.mrb[0].mxu0
    %v863 = vadd.f32 %v597, %v862
    %v864 = vpop.f32.mrb[0].mxu0
    %v865 = vadd.f32 %v599, %v864
    %866 = vmatprep.mubr.bf16.mxu0 0
    %867 = vmatmul.mubr.bf16.gmra.mrb[0].mxu0 %v248
    %v868 = vpop.f32.mrb[0].mxu0
    %v869 = vadd.f32 %v603, %v868
    %v870 = vpop.f32.mrb[0].mxu0
    %v871 = vadd.f32 %v605, %v870
    %v872 = vpop.f32.mrb[0].mxu0
    %v873 = vadd.f32 %v607, %v872
    %v874 = vpop.f32.mrb[0].mxu0
    %v875 = vadd.f32 %v609, %v874
    %876 = vdwg.mxu0
    %s877 = scalar_lea.vmem [#allocation9], 512
    %v878 = vld [vmem:[%s877] sm:$0xff]
    %v879 = vld [vmem:[%s877 + $0x8] sm:$0xff]
    %v880 = vld [vmem:[%s877 + $0x10] sm:$0xff]
    %v881 = vld [vmem:[%s877 + $0x18] sm:$0xff]
    %v882 = vld [vmem:[%s877 + $0x20] sm:$0xff]
    %v883 = vld [vmem:[%s877 + $0x28] sm:$0xff]
    %v884 = vld [vmem:[%s877 + $0x30] sm:$0xff]
    %v885 = vld [vmem:[%s877 + $0x38] sm:$0xff]
    %v886 = vld [vmem:[%s877 + $0x40] sm:$0xff]
    %v887 = vld [vmem:[%s877 + $0x48] sm:$0xff]
    %v888 = vld [vmem:[%s877 + $0x50] sm:$0xff]
    %v889 = vld [vmem:[%s877 + $0x58] sm:$0xff]
    %v890 = vld [vmem:[%s877 + $0x60] sm:$0xff]
    %v891 = vld [vmem:[%s877 + $0x68] sm:$0xff]
    %v892 = vld [vmem:[%s877 + $0x70] sm:$0xff]
    %v893 = vld [vmem:[%s877 + $0x78] sm:$0xff]
    %v894 = vld [vmem:[%s877 + $0x80] sm:$0xff]
    %v895 = vld [vmem:[%s877 + $0x88] sm:$0xff]
    %v896 = vld [vmem:[%s877 + $0x90] sm:$0xff]
    %v897 = vld [vmem:[%s877 + $0x98] sm:$0xff]
    %v898 = vld [vmem:[%s877 + $0xa0] sm:$0xff]
    %v899 = vld [vmem:[%s877 + $0xa8] sm:$0xff]
    %v900 = vld [vmem:[%s877 + $0xb0] sm:$0xff]
    %v901 = vld [vmem:[%s877 + $0xb8] sm:$0xff]
    %v902 = vld [vmem:[%s877 + $0xc0] sm:$0xff]
    %v903 = vld [vmem:[%s877 + $0xc8] sm:$0xff]
    %v904 = vld [vmem:[%s877 + $0xd0] sm:$0xff]
    %v905 = vld [vmem:[%s877 + $0xd8] sm:$0xff]
    %v906 = vld [vmem:[%s877 + $0xe0] sm:$0xff]
    %v907 = vld [vmem:[%s877 + $0xe8] sm:$0xff]
    %v908 = vld [vmem:[%s877 + $0xf0] sm:$0xff]
    %v909 = vld [vmem:[%s877 + $0xf8] sm:$0xff]
    %v942 = vunpack.c.l.b16 %v878
    %v943 = vunpack.c.h.b16 %v878
    %v944 = vunpack.c.l.b16 %v879
    %v945 = vunpack.c.h.b16 %v879
    %v946 = vunpack.c.l.b16 %v880
    %v947 = vunpack.c.h.b16 %v880
    %v948 = vunpack.c.l.b16 %v881
    %v949 = vunpack.c.h.b16 %v881
    %v950 = vunpack.c.l.b16 %v882
    %v951 = vunpack.c.h.b16 %v882
    %v952 = vunpack.c.l.b16 %v883
    %v953 = vunpack.c.h.b16 %v883
    %v954 = vunpack.c.l.b16 %v884
    %v955 = vunpack.c.h.b16 %v884
    %v956 = vunpack.c.l.b16 %v885
    %v957 = vunpack.c.h.b16 %v885
    %v958 = vunpack.c.l.b16 %v886
    %v959 = vunpack.c.h.b16 %v886
    %v960 = vunpack.c.l.b16 %v887
    %v961 = vunpack.c.h.b16 %v887
    %v962 = vunpack.c.l.b16 %v888
    %v963 = vunpack.c.h.b16 %v888
    %v964 = vunpack.c.l.b16 %v889
    %v965 = vunpack.c.h.b16 %v889
    %v966 = vunpack.c.l.b16 %v890
    %v967 = vunpack.c.h.b16 %v890
    %v968 = vunpack.c.l.b16 %v891
    %v969 = vunpack.c.h.b16 %v891
    %v970 = vunpack.c.l.b16 %v892
    %v971 = vunpack.c.h.b16 %v892
    %v972 = vunpack.c.l.b16 %v893
    %v973 = vunpack.c.h.b16 %v893
    %v974 = vunpack.c.l.b16 %v894
    %v975 = vunpack.c.h.b16 %v894
    %v976 = vunpack.c.l.b16 %v895
    %v977 = vunpack.c.h.b16 %v895
    %v978 = vunpack.c.l.b16 %v896
    %v979 = vunpack.c.h.b16 %v896
    %v980 = vunpack.c.l.b16 %v897
    %v981 = vunpack.c.h.b16 %v897
    %v982 = vunpack.c.l.b16 %v898
    %v983 = vunpack.c.h.b16 %v898
    %v984 = vunpack.c.l.b16 %v899
    %v985 = vunpack.c.h.b16 %v899
    %v986 = vunpack.c.l.b16 %v900
    %v987 = vunpack.c.h.b16 %v900
    %v988 = vunpack.c.l.b16 %v901
    %v989 = vunpack.c.h.b16 %v901
    %v990 = vunpack.c.l.b16 %v902
    %v991 = vunpack.c.h.b16 %v902
    %v992 = vunpack.c.l.b16 %v903
    %v993 = vunpack.c.h.b16 %v903
    %v994 = vunpack.c.l.b16 %v904
    %v995 = vunpack.c.h.b16 %v904
    %v996 = vunpack.c.l.b16 %v905
    %v997 = vunpack.c.h.b16 %v905
    %v998 = vunpack.c.l.b16 %v906
    %v999 = vunpack.c.h.b16 %v906
    %v1000 = vunpack.c.l.b16 %v907
    %v1001 = vunpack.c.h.b16 %v907
    %v1002 = vunpack.c.l.b16 %v908
    %v1003 = vunpack.c.h.b16 %v908
    %v1004 = vunpack.c.l.b16 %v909
    %v1005 = vunpack.c.h.b16 %v909
    %v1006 = vpack.c.b16 %v946, %v942
    %v1007 = vpack.c.b16 %v947, %v943
    %v1008 = vpack.c.b16 %v948, %v944
    %v1009 = vpack.c.b16 %v949, %v945
    %v1010 = vpack.c.b16 %v954, %v950
    %v1011 = vpack.c.b16 %v955, %v951
    %v1012 = vpack.c.b16 %v956, %v952
    %v1013 = vpack.c.b16 %v957, %v953
    %v1014 = vpack.c.b16 %v962, %v958
    %v1015 = vpack.c.b16 %v963, %v959
    %v1016 = vpack.c.b16 %v964, %v960
    %v1017 = vpack.c.b16 %v965, %v961
    %v1018 = vpack.c.b16 %v970, %v966
    %v1019 = vpack.c.b16 %v971, %v967
    %v1020 = vpack.c.b16 %v972, %v968
    %v1021 = vpack.c.b16 %v973, %v969
    %v1022 = vpack.c.b16 %v978, %v974
    %v1023 = vpack.c.b16 %v979, %v975
    %v1024 = vpack.c.b16 %v980, %v976
    %v1025 = vpack.c.b16 %v981, %v977
    %v1026 = vpack.c.b16 %v986, %v982
    %v1027 = vpack.c.b16 %v987, %v983
    %v1028 = vpack.c.b16 %v988, %v984
    %v1029 = vpack.c.b16 %v989, %v985
    %v1030 = vpack.c.b16 %v994, %v990
    %v1031 = vpack.c.b16 %v995, %v991
    %v1032 = vpack.c.b16 %v996, %v992
    %v1033 = vpack.c.b16 %v997, %v993
    %v1034 = vpack.c.b16 %v1002, %v998
    %v1035 = vpack.c.b16 %v1003, %v999
    %v1036 = vpack.c.b16 %v1004, %v1000
    %v1037 = vpack.c.b16 %v1005, %v1001
    %1070 = vmatprep.subr.bf16.mxu0 %v1007
    %1071 = vmatpush1.bf16.msra.mxu0 %v1006
    %1072 = vmatprep.subr.bf16.mxu0 %v1011
    %1073 = vmatpush1.bf16.msra.mxu0 %v1010
    %1074 = vmatprep.subr.bf16.mxu0 %v1015
    %1075 = vmatpush1.bf16.msra.mxu0 %v1014
    %1076 = vmatprep.subr.bf16.mxu0 %v1019
    %1077 = vmatpush1.bf16.msra.mxu0 %v1018
    %1078 = vmatprep.subr.bf16.mxu0 %v1023
    %1079 = vmatpush1.bf16.msra.mxu0 %v1022
    %1080 = vmatprep.subr.bf16.mxu0 %v1027
    %1081 = vmatpush1.bf16.msra.mxu0 %v1026
    %1082 = vmatprep.subr.bf16.mxu0 %v1031
    %1083 = vmatpush1.bf16.msra.mxu0 %v1030
    %1084 = vmatprep.subr.bf16.mxu0 %v1035
    %1085 = vmatpush1.bf16.msra.mxu0 %v1034
    %1086 = vmatprep.subr.bf16.mxu0 0
    %1087 = vmatpush1.bf16.msra.mxu0 0
    %1088 = vmatprep.subr.bf16.mxu0 0
    %1089 = vmatpush1.bf16.msra.mxu0 0
    %1090 = vmatprep.subr.bf16.mxu0 0
    %1091 = vmatpush1.bf16.msra.mxu0 0
    %1092 = vmatprep.subr.bf16.mxu0 0
    %1093 = vmatpush1.bf16.msra.mxu0 0
    %1094 = vmatprep.subr.bf16.mxu0 0
    %1095 = vmatpush1.bf16.msra.mxu0 0
    %1096 = vmatprep.subr.bf16.mxu0 0
    %1097 = vmatpush1.bf16.msra.mxu0 0
    %1098 = vmatprep.subr.bf16.mxu0 0
    %1099 = vmatpush1.bf16.msra.mxu0 0
    %1100 = vmatprep.subr.bf16.mxu0 0
    %1101 = vmatpush1.bf16.msra.mxu0 0
    %1102 = vmatprep.mubr.bf16.mxu0 0
    %1103 = vmatmul.mubr.bf16.gmra.mrb[0].mxu0 %v283
    %v1104 = vpop.f32.mrb[0].mxu0
    %v1105 = vadd.f32 0.0, %v1104
    %v1106 = vpop.f32.mrb[0].mxu0
    %v1107 = vadd.f32 0.0, %v1106
    %v1108 = vpop.f32.mrb[0].mxu0
    %v1109 = vadd.f32 0.0, %v1108
    %v1110 = vpop.f32.mrb[0].mxu0
    %v1111 = vadd.f32 0.0, %v1110
    %1112 = vmatprep.mubr.bf16.mxu0 0
    %1113 = vmatmul.mubr.bf16.gmra.mrb[0].mxu0 %v284
    %v1114 = vpop.f32.mrb[0].mxu0
    %v1115 = vadd.f32 0.0, %v1114
    %v1116 = vpop.f32.mrb[0].mxu0
    %v1117 = vadd.f32 0.0, %v1116
    %v1118 = vpop.f32.mrb[0].mxu0
    %v1119 = vadd.f32 0.0, %v1118
    %v1120 = vpop.f32.mrb[0].mxu0
    %v1121 = vadd.f32 0.0, %v1120
    %1122 = vdwg.mxu0
    %1123 = vmatprep.subr.bf16.mxu0 %v1009
    %1124 = vmatpush1.bf16.msra.mxu0 %v1008
    %1125 = vmatprep.subr.bf16.mxu0 %v1013
    %1126 = vmatpush1.bf16.msra.mxu0 %v1012
    %1127 = vmatprep.subr.bf16.mxu0 %v1017
    %1128 = vmatpush1.bf16.msra.mxu0 %v1016
    %1129 = vmatprep.subr.bf16.mxu0 %v1021
    %1130 = vmatpush1.bf16.msra.mxu0 %v1020
    %1131 = vmatprep.subr.bf16.mxu0 %v1025
    %1132 = vmatpush1.bf16.msra.mxu0 %v1024
    %1133 = vmatprep.subr.bf16.mxu0 %v1029
    %1134 = vmatpush1.bf16.msra.mxu0 %v1028
    %1135 = vmatprep.subr.bf16.mxu0 %v1033
    %1136 = vmatpush1.bf16.msra.mxu0 %v1032
    %1137 = vmatprep.subr.bf16.mxu0 %v1037
    %1138 = vmatpush1.bf16.msra.mxu0 %v1036
    %1139 = vmatprep.subr.bf16.mxu0 0
    %1140 = vmatpush1.bf16.msra.mxu0 0
    %1141 = vmatprep.subr.bf16.mxu0 0
    %1142 = vmatpush1.bf16.msra.mxu0 0
    %1143 = vmatprep.subr.bf16.mxu0 0
    %1144 = vmatpush1.bf16.msra.mxu0 0
    %1145 = vmatprep.subr.bf16.mxu0 0
    %1146 = vmatpush1.bf16.msra.mxu0 0
    %1147 = vmatprep.subr.bf16.mxu0 0
    %1148 = vmatpush1.bf16.msra.mxu0 0
    %1149 = vmatprep.subr.bf16.mxu0 0
    %1150 = vmatpush1.bf16.msra.mxu0 0
    %1151 = vmatprep.subr.bf16.mxu0 0
    %1152 = vmatpush1.bf16.msra.mxu0 0
    %1153 = vmatprep.subr.bf16.mxu0 0
    %1154 = vmatpush1.bf16.msra.mxu0 0
    %1155 = vmatprep.mubr.bf16.mxu0 0
    %1156 = vmatmul.mubr.bf16.gmra.mrb[0].mxu0 %v283
    %v1157 = vpop.f32.mrb[0].mxu0
    %v1158 = vadd.f32 0.0, %v1157
    %v1159 = vpop.f32.mrb[0].mxu0
    %v1160 = vadd.f32 0.0, %v1159
    %v1161 = vpop.f32.mrb[0].mxu0
    %v1162 = vadd.f32 0.0, %v1161
    %v1163 = vpop.f32.mrb[0].mxu0
    %v1164 = vadd.f32 0.0, %v1163
    %1165 = vmatprep.mubr.bf16.mxu0 0
    %1166 = vmatmul.mubr.bf16.gmra.mrb[0].mxu0 %v284
    %v1167 = vpop.f32.mrb[0].mxu0
    %v1168 = vadd.f32 0.0, %v1167
    %v1169 = vpop.f32.mrb[0].mxu0
    %v1170 = vadd.f32 0.0, %v1169
    %v1171 = vpop.f32.mrb[0].mxu0
    %v1172 = vadd.f32 0.0, %v1171
    %v1173 = vpop.f32.mrb[0].mxu0
    %v1174 = vadd.f32 0.0, %v1173
    %1175 = vdwg.mxu0
    %v1176 = vadd.f32 %v806, %v1105
    %v1177 = vadd.f32 %v808, %v1107
    %v1178 = vadd.f32 %v859, %v1158
    %v1179 = vadd.f32 %v861, %v1160
    %v1180 = vadd.f32 %v810, %v1109
    %v1181 = vadd.f32 %v812, %v1111
    %v1182 = vadd.f32 %v863, %v1162
    %v1183 = vadd.f32 %v865, %v1164
    %v1184 = vadd.f32 %v816, %v1115
    %v1185 = vadd.f32 %v818, %v1117
    %v1186 = vadd.f32 %v869, %v1168
    %v1187 = vadd.f32 %v871, %v1170
    %v1188 = vadd.f32 %v820, %v1119
    %v1189 = vadd.f32 %v822, %v1121
    %v1190 = vadd.f32 %v873, %v1172
    %v1191 = vadd.f32 %v875, %v1174
    %v1192 = vld [vmem:[#allocation2 + $0x8] sm:$0xff]
    %v1193 = vld [vmem:[#allocation2 + $0x10] sm:$0x1]
    %v1194 = vld [vmem:[#allocation2 + $0x20] sm:$0xff]
    %v1195 = vld [vmem:[#allocation2 + $0x28] sm:$0x1]
    %vm1196 = vsmask.f32 7424
    %v1198 = vshrl.u32 %v1192, 16
    %v1200 = vshll.u32 %v1192, 16
    %v1202 = vrot.slane %v1200, 1
    %v1203 = vor.u32 %v1198, %v1202
    %v1205 = vshll.u32 %v1193, 16
    %v1207 = vrot.slane %v1205, 1
    %v1208 = vsel %vm1196, %v1203, %v1207
    %v1210 = vshrl.u32 %v1194, 16
    %v1212 = vshll.u32 %v1194, 16
    %v1214 = vrot.slane %v1212, 1
    %v1215 = vor.u32 %v1210, %v1214
    %v1217 = vshll.u32 %v1195, 16
    %v1219 = vrot.slane %v1217, 1
    %v1220 = vsel %vm1196, %v1215, %v1219
    %s1223 = scalar_lea.vmem [#allocation9], 768
    %v1224 = vld [vmem:[%s1223] sm:$0xff]
    %v1225 = vld [vmem:[%s1223 + $0x8] sm:$0xff]
    %v1226 = vld [vmem:[%s1223 + $0x10] sm:$0xff]
    %v1227 = vld [vmem:[%s1223 + $0x18] sm:$0xff]
    %v1228 = vld [vmem:[%s1223 + $0x20] sm:$0xff]
    %v1229 = vld [vmem:[%s1223 + $0x28] sm:$0xff]
    %v1230 = vld [vmem:[%s1223 + $0x30] sm:$0xff]
    %v1231 = vld [vmem:[%s1223 + $0x38] sm:$0xff]
    %v1232 = vld [vmem:[%s1223 + $0x40] sm:$0xff]
    %v1233 = vld [vmem:[%s1223 + $0x48] sm:$0xff]
    %v1234 = vld [vmem:[%s1223 + $0x50] sm:$0xff]
    %v1235 = vld [vmem:[%s1223 + $0x58] sm:$0xff]
    %v1236 = vld [vmem:[%s1223 + $0x60] sm:$0xff]
    %v1237 = vld [vmem:[%s1223 + $0x68] sm:$0xff]
    %v1238 = vld [vmem:[%s1223 + $0x70] sm:$0xff]
    %v1239 = vld [vmem:[%s1223 + $0x78] sm:$0xff]
    %v1240 = vld [vmem:[%s1223 + $0x80] sm:$0xff]
    %v1241 = vld [vmem:[%s1223 + $0x88] sm:$0xff]
    %v1242 = vld [vmem:[%s1223 + $0x90] sm:$0xff]
    %v1243 = vld [vmem:[%s1223 + $0x98] sm:$0xff]
    %v1244 = vld [vmem:[%s1223 + $0xa0] sm:$0xff]
    %v1245 = vld [vmem:[%s1223 + $0xa8] sm:$0xff]
    %v1246 = vld [vmem:[%s1223 + $0xb0] sm:$0xff]
    %v1247 = vld [vmem:[%s1223 + $0xb8] sm:$0xff]
    %v1248 = vld [vmem:[%s1223 + $0xc0] sm:$0xff]
    %v1249 = vld [vmem:[%s1223 + $0xc8] sm:$0xff]
    %v1250 = vld [vmem:[%s1223 + $0xd0] sm:$0xff]
    %v1251 = vld [vmem:[%s1223 + $0xd8] sm:$0xff]
    %v1252 = vld [vmem:[%s1223 + $0xe0] sm:$0xff]
    %v1253 = vld [vmem:[%s1223 + $0xe8] sm:$0xff]
    %v1254 = vld [vmem:[%s1223 + $0xf0] sm:$0xff]
    %v1255 = vld [vmem:[%s1223 + $0xf8] sm:$0xff]
    %v1288 = vunpack.c.l.b16 %v1224
    %v1289 = vunpack.c.h.b16 %v1224
    %v1290 = vunpack.c.l.b16 %v1225
    %v1291 = vunpack.c.h.b16 %v1225
    %v1292 = vunpack.c.l.b16 %v1226
    %v1293 = vunpack.c.h.b16 %v1226
    %v1294 = vunpack.c.l.b16 %v1227
    %v1295 = vunpack.c.h.b16 %v1227
    %v1296 = vunpack.c.l.b16 %v1228
    %v1297 = vunpack.c.h.b16 %v1228
    %v1298 = vunpack.c.l.b16 %v1229
    %v1299 = vunpack.c.h.b16 %v1229
    %v1300 = vunpack.c.l.b16 %v1230
    %v1301 = vunpack.c.h.b16 %v1230
    %v1302 = vunpack.c.l.b16 %v1231
    %v1303 = vunpack.c.h.b16 %v1231
    %v1304 = vunpack.c.l.b16 %v1232
    %v1305 = vunpack.c.h.b16 %v1232
    %v1306 = vunpack.c.l.b16 %v1233
    %v1307 = vunpack.c.h.b16 %v1233
    %v1308 = vunpack.c.l.b16 %v1234
    %v1309 = vunpack.c.h.b16 %v1234
    %v1310 = vunpack.c.l.b16 %v1235
    %v1311 = vunpack.c.h.b16 %v1235
    %v1312 = vunpack.c.l.b16 %v1236
    %v1313 = vunpack.c.h.b16 %v1236
    %v1314 = vunpack.c.l.b16 %v1237
    %v1315 = vunpack.c.h.b16 %v1237
    %v1316 = vunpack.c.l.b16 %v1238
    %v1317 = vunpack.c.h.b16 %v1238
    %v1318 = vunpack.c.l.b16 %v1239
    %v1319 = vunpack.c.h.b16 %v1239
    %v1320 = vunpack.c.l.b16 %v1240
    %v1321 = vunpack.c.h.b16 %v1240
    %v1322 = vunpack.c.l.b16 %v1241
    %v1323 = vunpack.c.h.b16 %v1241
    %v1324 = vunpack.c.l.b16 %v1242
    %v1325 = vunpack.c.h.b16 %v1242
    %v1326 = vunpack.c.l.b16 %v1243
    %v1327 = vunpack.c.h.b16 %v1243
    %v1328 = vunpack.c.l.b16 %v1244
    %v1329 = vunpack.c.h.b16 %v1244
    %v1330 = vunpack.c.l.b16 %v1245
    %v1331 = vunpack.c.h.b16 %v1245
    %v1332 = vunpack.c.l.b16 %v1246
    %v1333 = vunpack.c.h.b16 %v1246
    %v1334 = vunpack.c.l.b16 %v1247
    %v1335 = vunpack.c.h.b16 %v1247
    %v1336 = vunpack.c.l.b16 %v1248
    %v1337 = vunpack.c.h.b16 %v1248
    %v1338 = vunpack.c.l.b16 %v1249
    %v1339 = vunpack.c.h.b16 %v1249
    %v1340 = vunpack.c.l.b16 %v1250
    %v1341 = vunpack.c.h.b16 %v1250
    %v1342 = vunpack.c.l.b16 %v1251
    %v1343 = vunpack.c.h.b16 %v1251
    %v1344 = vunpack.c.l.b16 %v1252
    %v1345 = vunpack.c.h.b16 %v1252
    %v1346 = vunpack.c.l.b16 %v1253
    %v1347 = vunpack.c.h.b16 %v1253
    %v1348 = vunpack.c.l.b16 %v1254
    %v1349 = vunpack.c.h.b16 %v1254
    %v1350 = vunpack.c.l.b16 %v1255
    %v1351 = vunpack.c.h.b16 %v1255
    %v1352 = vpack.c.b16 %v1292, %v1288
    %v1353 = vpack.c.b16 %v1293, %v1289
    %v1354 = vpack.c.b16 %v1294, %v1290
    %v1355 = vpack.c.b16 %v1295, %v1291
    %v1356 = vpack.c.b16 %v1300, %v1296
    %v1357 = vpack.c.b16 %v1301, %v1297
    %v1358 = vpack.c.b16 %v1302, %v1298
    %v1359 = vpack.c.b16 %v1303, %v1299
    %v1360 = vpack.c.b16 %v1308, %v1304
    %v1361 = vpack.c.b16 %v1309, %v1305
    %v1362 = vpack.c.b16 %v1310, %v1306
    %v1363 = vpack.c.b16 %v1311, %v1307
    %v1364 = vpack.c.b16 %v1316, %v1312
    %v1365 = vpack.c.b16 %v1317, %v1313
    %v1366 = vpack.c.b16 %v1318, %v1314
    %v1367 = vpack.c.b16 %v1319, %v1315
    %v1368 = vpack.c.b16 %v1324, %v1320
    %v1369 = vpack.c.b16 %v1325, %v1321
    %v1370 = vpack.c.b16 %v1326, %v1322
    %v1371 = vpack.c.b16 %v1327, %v1323
    %v1372 = vpack.c.b16 %v1332, %v1328
    %v1373 = vpack.c.b16 %v1333, %v1329
    %v1374 = vpack.c.b16 %v1334, %v1330
    %v1375 = vpack.c.b16 %v1335, %v1331
    %v1376 = vpack.c.b16 %v1340, %v1336
    %v1377 = vpack.c.b16 %v1341, %v1337
    %v1378 = vpack.c.b16 %v1342, %v1338
    %v1379 = vpack.c.b16 %v1343, %v1339
    %v1380 = vpack.c.b16 %v1348, %v1344
    %v1381 = vpack.c.b16 %v1349, %v1345
    %v1382 = vpack.c.b16 %v1350, %v1346
    %v1383 = vpack.c.b16 %v1351, %v1347
    %1416 = vmatprep.subr.bf16.mxu0 %v1353
    %1417 = vmatpush1.bf16.msra.mxu0 %v1352
    %1418 = vmatprep.subr.bf16.mxu0 %v1357
    %1419 = vmatpush1.bf16.msra.mxu0 %v1356
    %1420 = vmatprep.subr.bf16.mxu0 %v1361
    %1421 = vmatpush1.bf16.msra.mxu0 %v1360
    %1422 = vmatprep.subr.bf16.mxu0 %v1365
    %1423 = vmatpush1.bf16.msra.mxu0 %v1364
    %1424 = vmatprep.subr.bf16.mxu0 %v1369
    %1425 = vmatpush1.bf16.msra.mxu0 %v1368
    %1426 = vmatprep.subr.bf16.mxu0 %v1373
    %1427 = vmatpush1.bf16.msra.mxu0 %v1372
    %1428 = vmatprep.subr.bf16.mxu0 %v1377
    %1429 = vmatpush1.bf16.msra.mxu0 %v1376
    %1430 = vmatprep.subr.bf16.mxu0 %v1381
    %1431 = vmatpush1.bf16.msra.mxu0 %v1380
    %1432 = vmatprep.subr.bf16.mxu0 0
    %1433 = vmatpush1.bf16.msra.mxu0 0
    %1434 = vmatprep.subr.bf16.mxu0 0
    %1435 = vmatpush1.bf16.msra.mxu0 0
    %1436 = vmatprep.subr.bf16.mxu0 0
    %1437 = vmatpush1.bf16.msra.mxu0 0
    %1438 = vmatprep.subr.bf16.mxu0 0
    %1439 = vmatpush1.bf16.msra.mxu0 0
    %1440 = vmatprep.subr.bf16.mxu0 0
    %1441 = vmatpush1.bf16.msra.mxu0 0
    %1442 = vmatprep.subr.bf16.mxu0 0
    %1443 = vmatpush1.bf16.msra.mxu0 0
    %1444 = vmatprep.subr.bf16.mxu0 0
    %1445 = vmatpush1.bf16.msra.mxu0 0
    %1446 = vmatprep.subr.bf16.mxu0 0
    %1447 = vmatpush1.bf16.msra.mxu0 0
    %1448 = vmatprep.mubr.bf16.mxu0 0
    %1449 = vmatmul.mubr.bf16.gmra.mrb[0].mxu0 %v1208
    %v1450 = vpop.f32.mrb[0].mxu0
    %v1451 = vadd.f32 0.0, %v1450
    %v1452 = vpop.f32.mrb[0].mxu0
    %v1453 = vadd.f32 0.0, %v1452
    %v1454 = vpop.f32.mrb[0].mxu0
    %v1455 = vadd.f32 0.0, %v1454
    %v1456 = vpop.f32.mrb[0].mxu0
    %v1457 = vadd.f32 0.0, %v1456
    %1458 = vmatprep.mubr.bf16.mxu0 0
    %1459 = vmatmul.mubr.bf16.gmra.mrb[0].mxu0 %v1220
    %v1460 = vpop.f32.mrb[0].mxu0
    %v1461 = vadd.f32 0.0, %v1460
    %v1462 = vpop.f32.mrb[0].mxu0
    %v1463 = vadd.f32 0.0, %v1462
    %v1464 = vpop.f32.mrb[0].mxu0
    %v1465 = vadd.f32 0.0, %v1464
    %v1466 = vpop.f32.mrb[0].mxu0
    %v1467 = vadd.f32 0.0, %v1466
    %1468 = vdwg.mxu0
    %1469 = vmatprep.subr.bf16.mxu0 %v1355
    %1470 = vmatpush1.bf16.msra.mxu0 %v1354
    %1471 = vmatprep.subr.bf16.mxu0 %v1359
    %1472 = vmatpush1.bf16.msra.mxu0 %v1358
    %1473 = vmatprep.subr.bf16.mxu0 %v1363
    %1474 = vmatpush1.bf16.msra.mxu0 %v1362
    %1475 = vmatprep.subr.bf16.mxu0 %v1367
    %1476 = vmatpush1.bf16.msra.mxu0 %v1366
    %1477 = vmatprep.subr.bf16.mxu0 %v1371
    %1478 = vmatpush1.bf16.msra.mxu0 %v1370
    %1479 = vmatprep.subr.bf16.mxu0 %v1375
    %1480 = vmatpush1.bf16.msra.mxu0 %v1374
    %1481 = vmatprep.subr.bf16.mxu0 %v1379
    %1482 = vmatpush1.bf16.msra.mxu0 %v1378
    %1483 = vmatprep.subr.bf16.mxu0 %v1383
    %1484 = vmatpush1.bf16.msra.mxu0 %v1382
    %1485 = vmatprep.subr.bf16.mxu0 0
    %1486 = vmatpush1.bf16.msra.mxu0 0
    %1487 = vmatprep.subr.bf16.mxu0 0
    %1488 = vmatpush1.bf16.msra.mxu0 0
    %1489 = vmatprep.subr.bf16.mxu0 0
    %1490 = vmatpush1.bf16.msra.mxu0 0
    %1491 = vmatprep.subr.bf16.mxu0 0
    %1492 = vmatpush1.bf16.msra.mxu0 0
    %1493 = vmatprep.subr.bf16.mxu0 0
    %1494 = vmatpush1.bf16.msra.mxu0 0
    %1495 = vmatprep.subr.bf16.mxu0 0
    %1496 = vmatpush1.bf16.msra.mxu0 0
    %1497 = vmatprep.subr.bf16.mxu0 0
    %1498 = vmatpush1.bf16.msra.mxu0 0
    %1499 = vmatprep.subr.bf16.mxu0 0
    %1500 = vmatpush1.bf16.msra.mxu0 0
    %1501 = vmatprep.mubr.bf16.mxu0 0
    %1502 = vmatmul.mubr.bf16.gmra.mrb[0].mxu0 %v1208
    %v1503 = vpop.f32.mrb[0].mxu0
    %v1504 = vadd.f32 0.0, %v1503
    %v1505 = vpop.f32.mrb[0].mxu0
    %v1506 = vadd.f32 0.0, %v1505
    %v1507 = vpop.f32.mrb[0].mxu0
    %v1508 = vadd.f32 0.0, %v1507
    %v1509 = vpop.f32.mrb[0].mxu0
    %v1510 = vadd.f32 0.0, %v1509
    %1511 = vmatprep.mubr.bf16.mxu0 0
    %1512 = vmatmul.mubr.bf16.gmra.mrb[0].mxu0 %v1220
    %v1513 = vpop.f32.mrb[0].mxu0
    %v1514 = vadd.f32 0.0, %v1513
    %v1515 = vpop.f32.mrb[0].mxu0
    %v1516 = vadd.f32 0.0, %v1515
    %v1517 = vpop.f32.mrb[0].mxu0
    %v1518 = vadd.f32 0.0, %v1517
    %v1519 = vpop.f32.mrb[0].mxu0
    %v1520 = vadd.f32 0.0, %v1519
    %1521 = vdwg.mxu0
    %v1522 = vadd.f32 %v1176, %v1451
    %v1523 = vadd.f32 %v1177, %v1453
    %v1524 = vadd.f32 %v1178, %v1504
    %v1525 = vadd.f32 %v1179, %v1506
    %v1526 = vadd.f32 %v1180, %v1455
    %v1527 = vadd.f32 %v1181, %v1457
    %v1528 = vadd.f32 %v1182, %v1508
    %v1529 = vadd.f32 %v1183, %v1510
    %v1530 = vadd.f32 %v1184, %v1461
    %v1531 = vadd.f32 %v1185, %v1463
    %v1532 = vadd.f32 %v1186, %v1514
    %v1533 = vadd.f32 %v1187, %v1516
    %v1534 = vadd.f32 %v1188, %v1465
    %v1535 = vadd.f32 %v1189, %v1467
    %v1536 = vadd.f32 %v1190, %v1518
    %v1537 = vadd.f32 %v1191, %v1520
    %v1538 = vld [vmem:[#allocation2 + $0x8] sm:$0xfe]
    %v1539 = vld [vmem:[#allocation2 + $0x20] sm:$0xfe]
    %vm1544 = vcmask 1046528
    %v1545 = vrot.slane %v1538, 1
    %v1546 = vrot.slane %v1193, 1
    %v1547 = vsel %vm1544, %v1545, %v1546
    %v1548 = vrot.slane %v1539, 1
    %v1549 = vrot.slane %v1195, 1
    %v1550 = vsel %vm1544, %v1548, %v1549
    %s1553 = scalar_lea.vmem [#allocation9], 1024
    %v1554 = vld [vmem:[%s1553] sm:$0xff]
    %v1555 = vld [vmem:[%s1553 + $0x8] sm:$0xff]
    %v1556 = vld [vmem:[%s1553 + $0x10] sm:$0xff]
    %v1557 = vld [vmem:[%s1553 + $0x18] sm:$0xff]
    %v1558 = vld [vmem:[%s1553 + $0x20] sm:$0xff]
    %v1559 = vld [vmem:[%s1553 + $0x28] sm:$0xff]
    %v1560 = vld [vmem:[%s1553 + $0x30] sm:$0xff]
    %v1561 = vld [vmem:[%s1553 + $0x38] sm:$0xff]
    %v1562 = vld [vmem:[%s1553 + $0x40] sm:$0xff]
    %v1563 = vld [vmem:[%s1553 + $0x48] sm:$0xff]
    %v1564 = vld [vmem:[%s1553 + $0x50] sm:$0xff]
    %v1565 = vld [vmem:[%s1553 + $0x58] sm:$0xff]
    %v1566 = vld [vmem:[%s1553 + $0x60] sm:$0xff]
    %v1567 = vld [vmem:[%s1553 + $0x68] sm:$0xff]
    %v1568 = vld [vmem:[%s1553 + $0x70] sm:$0xff]
    %v1569 = vld [vmem:[%s1553 + $0x78] sm:$0xff]
    %v1570 = vld [vmem:[%s1553 + $0x80] sm:$0xff]
    %v1571 = vld [vmem:[%s1553 + $0x88] sm:$0xff]
    %v1572 = vld [vmem:[%s1553 + $0x90] sm:$0xff]
    %v1573 = vld [vmem:[%s1553 + $0x98] sm:$0xff]
    %v1574 = vld [vmem:[%s1553 + $0xa0] sm:$0xff]
    %v1575 = vld [vmem:[%s1553 + $0xa8] sm:$0xff]
    %v1576 = vld [vmem:[%s1553 + $0xb0] sm:$0xff]
    %v1577 = vld [vmem:[%s1553 + $0xb8] sm:$0xff]
    %v1578 = vld [vmem:[%s1553 + $0xc0] sm:$0xff]
    %v1579 = vld [vmem:[%s1553 + $0xc8] sm:$0xff]
    %v1580 = vld [vmem:[%s1553 + $0xd0] sm:$0xff]
    %v1581 = vld [vmem:[%s1553 + $0xd8] sm:$0xff]
    %v1582 = vld [vmem:[%s1553 + $0xe0] sm:$0xff]
    %v1583 = vld [vmem:[%s1553 + $0xe8] sm:$0xff]
    %v1584 = vld [vmem:[%s1553 + $0xf0] sm:$0xff]
    %v1585 = vld [vmem:[%s1553 + $0xf8] sm:$0xff]
    %v1618 = vunpack.c.l.b16 %v1554
    %v1619 = vunpack.c.h.b16 %v1554
    %v1620 = vunpack.c.l.b16 %v1555
    %v1621 = vunpack.c.h.b16 %v1555
    %v1622 = vunpack.c.l.b16 %v1556
    %v1623 = vunpack.c.h.b16 %v1556
    %v1624 = vunpack.c.l.b16 %v1557
    %v1625 = vunpack.c.h.b16 %v1557
    %v1626 = vunpack.c.l.b16 %v1558
    %v1627 = vunpack.c.h.b16 %v1558
    %v1628 = vunpack.c.l.b16 %v1559
    %v1629 = vunpack.c.h.b16 %v1559
    %v1630 = vunpack.c.l.b16 %v1560
    %v1631 = vunpack.c.h.b16 %v1560
    %v1632 = vunpack.c.l.b16 %v1561
    %v1633 = vunpack.c.h.b16 %v1561
    %v1634 = vunpack.c.l.b16 %v1562
    %v1635 = vunpack.c.h.b16 %v1562
    %v1636 = vunpack.c.l.b16 %v1563
    %v1637 = vunpack.c.h.b16 %v1563
    %v1638 = vunpack.c.l.b16 %v1564
    %v1639 = vunpack.c.h.b16 %v1564
    %v1640 = vunpack.c.l.b16 %v1565
    %v1641 = vunpack.c.h.b16 %v1565
    %v1642 = vunpack.c.l.b16 %v1566
    %v1643 = vunpack.c.h.b16 %v1566
    %v1644 = vunpack.c.l.b16 %v1567
    %v1645 = vunpack.c.h.b16 %v1567
    %v1646 = vunpack.c.l.b16 %v1568
    %v1647 = vunpack.c.h.b16 %v1568
    %v1648 = vunpack.c.l.b16 %v1569
    %v1649 = vunpack.c.h.b16 %v1569
    %v1650 = vunpack.c.l.b16 %v1570
    %v1651 = vunpack.c.h.b16 %v1570
    %v1652 = vunpack.c.l.b16 %v1571
    %v1653 = vunpack.c.h.b16 %v1571
    %v1654 = vunpack.c.l.b16 %v1572
    %v1655 = vunpack.c.h.b16 %v1572
    %v1656 = vunpack.c.l.b16 %v1573
    %v1657 = vunpack.c.h.b16 %v1573
    %v1658 = vunpack.c.l.b16 %v1574
    %v1659 = vunpack.c.h.b16 %v1574
    %v1660 = vunpack.c.l.b16 %v1575
    %v1661 = vunpack.c.h.b16 %v1575
    %v1662 = vunpack.c.l.b16 %v1576
    %v1663 = vunpack.c.h.b16 %v1576
    %v1664 = vunpack.c.l.b16 %v1577
    %v1665 = vunpack.c.h.b16 %v1577
    %v1666 = vunpack.c.l.b16 %v1578
    %v1667 = vunpack.c.h.b16 %v1578
    %v1668 = vunpack.c.l.b16 %v1579
    %v1669 = vunpack.c.h.b16 %v1579
    %v1670 = vunpack.c.l.b16 %v1580
    %v1671 = vunpack.c.h.b16 %v1580
    %v1672 = vunpack.c.l.b16 %v1581
    %v1673 = vunpack.c.h.b16 %v1581
    %v1674 = vunpack.c.l.b16 %v1582
    %v1675 = vunpack.c.h.b16 %v1582
    %v1676 = vunpack.c.l.b16 %v1583
    %v1677 = vunpack.c.h.b16 %v1583
    %v1678 = vunpack.c.l.b16 %v1584
    %v1679 = vunpack.c.h.b16 %v1584
    %v1680 = vunpack.c.l.b16 %v1585
    %v1681 = vunpack.c.h.b16 %v1585
    %v1682 = vpack.c.b16 %v1622, %v1618
    %v1683 = vpack.c.b16 %v1623, %v1619
    %v1684 = vpack.c.b16 %v1624, %v1620
    %v1685 = vpack.c.b16 %v1625, %v1621
    %v1686 = vpack.c.b16 %v1630, %v1626
    %v1687 = vpack.c.b16 %v1631, %v1627
    %v1688 = vpack.c.b16 %v1632, %v1628
    %v1689 = vpack.c.b16 %v1633, %v1629
    %v1690 = vpack.c.b16 %v1638, %v1634
    %v1691 = vpack.c.b16 %v1639, %v1635
    %v1692 = vpack.c.b16 %v1640, %v1636
    %v1693 = vpack.c.b16 %v1641, %v1637
    %v1694 = vpack.c.b16 %v1646, %v1642
    %v1695 = vpack.c.b16 %v1647, %v1643
    %v1696 = vpack.c.b16 %v1648, %v1644
    %v1697 = vpack.c.b16 %v1649, %v1645
    %v1698 = vpack.c.b16 %v1654, %v1650
    %v1699 = vpack.c.b16 %v1655, %v1651
    %v1700 = vpack.c.b16 %v1656, %v1652
    %v1701 = vpack.c.b16 %v1657, %v1653
    %v1702 = vpack.c.b16 %v1662, %v1658
    %v1703 = vpack.c.b16 %v1663, %v1659
    %v1704 = vpack.c.b16 %v1664, %v1660
    %v1705 = vpack.c.b16 %v1665, %v1661
    %v1706 = vpack.c.b16 %v1670, %v1666
    %v1707 = vpack.c.b16 %v1671, %v1667
    %v1708 = vpack.c.b16 %v1672, %v1668
    %v1709 = vpack.c.b16 %v1673, %v1669
    %v1710 = vpack.c.b16 %v1678, %v1674
    %v1711 = vpack.c.b16 %v1679, %v1675
    %v1712 = vpack.c.b16 %v1680, %v1676
    %v1713 = vpack.c.b16 %v1681, %v1677
    %1746 = vmatprep.subr.bf16.mxu0 %v1683
    %1747 = vmatpush1.bf16.msra.mxu0 %v1682
    %1748 = vmatprep.subr.bf16.mxu0 %v1687
    %1749 = vmatpush1.bf16.msra.mxu0 %v1686
    %1750 = vmatprep.subr.bf16.mxu0 %v1691
    %1751 = vmatpush1.bf16.msra.mxu0 %v1690
    %1752 = vmatprep.subr.bf16.mxu0 %v1695
    %1753 = vmatpush1.bf16.msra.mxu0 %v1694
    %1754 = vmatprep.subr.bf16.mxu0 %v1699
    %1755 = vmatpush1.bf16.msra.mxu0 %v1698
    %1756 = vmatprep.subr.bf16.mxu0 %v1703
    %1757 = vmatpush1.bf16.msra.mxu0 %v1702
    %1758 = vmatprep.subr.bf16.mxu0 %v1707
    %1759 = vmatpush1.bf16.msra.mxu0 %v1706
    %1760 = vmatprep.subr.bf16.mxu0 %v1711
    %1761 = vmatpush1.bf16.msra.mxu0 %v1710
    %1762 = vmatprep.subr.bf16.mxu0 0
    %1763 = vmatpush1.bf16.msra.mxu0 0
    %1764 = vmatprep.subr.bf16.mxu0 0
    %1765 = vmatpush1.bf16.msra.mxu0 0
    %1766 = vmatprep.subr.bf16.mxu0 0
    %1767 = vmatpush1.bf16.msra.mxu0 0
    %1768 = vmatprep.subr.bf16.mxu0 0
    %1769 = vmatpush1.bf16.msra.mxu0 0
    %1770 = vmatprep.subr.bf16.mxu0 0
    %1771 = vmatpush1.bf16.msra.mxu0 0
    %1772 = vmatprep.subr.bf16.mxu0 0
    %1773 = vmatpush1.bf16.msra.mxu0 0
    %1774 = vmatprep.subr.bf16.mxu0 0
    %1775 = vmatpush1.bf16.msra.mxu0 0
    %1776 = vmatprep.subr.bf16.mxu0 0
    %1777 = vmatpush1.bf16.msra.mxu0 0
    %1778 = vmatprep.mubr.bf16.mxu0 0
    %1779 = vmatmul.mubr.bf16.gmra.mrb[0].mxu0 %v1547
    %v1780 = vpop.f32.mrb[0].mxu0
    %v1781 = vadd.f32 0.0, %v1780
    %v1782 = vpop.f32.mrb[0].mxu0
    %v1783 = vadd.f32 0.0, %v1782
    %v1784 = vpop.f32.mrb[0].mxu0
    %v1785 = vadd.f32 0.0, %v1784
    %v1786 = vpop.f32.mrb[0].mxu0
    %v1787 = vadd.f32 0.0, %v1786
    %1788 = vmatprep.mubr.bf16.mxu0 0
    %1789 = vmatmul.mubr.bf16.gmra.mrb[0].mxu0 %v1550
    %v1790 = vpop.f32.mrb[0].mxu0
    %v1791 = vadd.f32 0.0, %v1790
    %v1792 = vpop.f32.mrb[0].mxu0
    %v1793 = vadd.f32 0.0, %v1792
    %v1794 = vpop.f32.mrb[0].mxu0
    %v1795 = vadd.f32 0.0, %v1794
    %v1796 = vpop.f32.mrb[0].mxu0
    %v1797 = vadd.f32 0.0, %v1796
    %1798 = vdwg.mxu0
    %1799 = vmatprep.subr.bf16.mxu0 %v1685
    %1800 = vmatpush1.bf16.msra.mxu0 %v1684
    %1801 = vmatprep.subr.bf16.mxu0 %v1689
    %1802 = vmatpush1.bf16.msra.mxu0 %v1688
    %1803 = vmatprep.subr.bf16.mxu0 %v1693
    %1804 = vmatpush1.bf16.msra.mxu0 %v1692
    %1805 = vmatprep.subr.bf16.mxu0 %v1697
    %1806 = vmatpush1.bf16.msra.mxu0 %v1696
    %1807 = vmatprep.subr.bf16.mxu0 %v1701
    %1808 = vmatpush1.bf16.msra.mxu0 %v1700
    %1809 = vmatprep.subr.bf16.mxu0 %v1705
    %1810 = vmatpush1.bf16.msra.mxu0 %v1704
    %1811 = vmatprep.subr.bf16.mxu0 %v1709
    %1812 = vmatpush1.bf16.msra.mxu0 %v1708
    %1813 = vmatprep.subr.bf16.mxu0 %v1713
    %1814 = vmatpush1.bf16.msra.mxu0 %v1712
    %1815 = vmatprep.subr.bf16.mxu0 0
    %1816 = vmatpush1.bf16.msra.mxu0 0
    %1817 = vmatprep.subr.bf16.mxu0 0
    %1818 = vmatpush1.bf16.msra.mxu0 0
    %1819 = vmatprep.subr.bf16.mxu0 0
    %1820 = vmatpush1.bf16.msra.mxu0 0
    %1821 = vmatprep.subr.bf16.mxu0 0
    %1822 = vmatpush1.bf16.msra.mxu0 0
    %1823 = vmatprep.subr.bf16.mxu0 0
    %1824 = vmatpush1.bf16.msra.mxu0 0
    %1825 = vmatprep.subr.bf16.mxu0 0
    %1826 = vmatpush1.bf16.msra.mxu0 0
    %1827 = vmatprep.subr.bf16.mxu0 0
    %1828 = vmatpush1.bf16.msra.mxu0 0
    %1829 = vmatprep.subr.bf16.mxu0 0
    %1830 = vmatpush1.bf16.msra.mxu0 0
    %1831 = vmatprep.mubr.bf16.mxu0 0
    %1832 = vmatmul.mubr.bf16.gmra.mrb[0].mxu0 %v1547
    %v1833 = vpop.f32.mrb[0].mxu0
    %v1834 = vadd.f32 0.0, %v1833
    %v1835 = vpop.f32.mrb[0].mxu0
    %v1836 = vadd.f32 0.0, %v1835
    %v1837 = vpop.f32.mrb[0].mxu0
    %v1838 = vadd.f32 0.0, %v1837
    %v1839 = vpop.f32.mrb[0].mxu0
    %v1840 = vadd.f32 0.0, %v1839
    %1841 = vmatprep.mubr.bf16.mxu0 0
    %1842 = vmatmul.mubr.bf16.gmra.mrb[0].mxu0 %v1550
    %v1843 = vpop.f32.mrb[0].mxu0
    %v1844 = vadd.f32 0.0, %v1843
    %v1845 = vpop.f32.mrb[0].mxu0
    %v1846 = vadd.f32 0.0, %v1845
    %v1847 = vpop.f32.mrb[0].mxu0
    %v1848 = vadd.f32 0.0, %v1847
    %v1849 = vpop.f32.mrb[0].mxu0
    %v1850 = vadd.f32 0.0, %v1849
    %1851 = vdwg.mxu0
    %v1852 = vadd.f32 %v1522, %v1781
    %v1853 = vadd.f32 %v1523, %v1783
    %v1854 = vadd.f32 %v1524, %v1834
    %v1855 = vadd.f32 %v1525, %v1836
    %v1856 = vadd.f32 %v1526, %v1785
    %v1857 = vadd.f32 %v1527, %v1787
    %v1858 = vadd.f32 %v1528, %v1838
    %v1859 = vadd.f32 %v1529, %v1840
    %v1860 = vadd.f32 %v1530, %v1791
    %v1861 = vadd.f32 %v1531, %v1793
    %v1862 = vadd.f32 %v1532, %v1844
    %v1863 = vadd.f32 %v1533, %v1846
    %v1864 = vadd.f32 %v1534, %v1795
    %v1865 = vadd.f32 %v1535, %v1797
    %v1866 = vadd.f32 %v1536, %v1848
    %v1867 = vadd.f32 %v1537, %v1850
    %v1868 = vld [vmem:[#allocation12] ss:$4 sm:$0xf]
    %v1870 = vlaneseq
    %v1871 = vshrl.u32 %v1870, 7
    %v1872 = vsub.s32 0, %v1871
    %v1873 = vrot.slane %v1868, %v1872
    %v1874 = vlaneseq
    %v1875 = vshrl.u32 %v1874, 7
    %v1876 = vsub.s32 1, %v1875
    %v1877 = vrot.slane %v1868, %v1876
    %v1878 = vlaneseq
    %v1879 = vshrl.u32 %v1878, 7
    %v1880 = vsub.s32 2, %v1879
    %v1881 = vrot.slane %v1868, %v1880
    %v1882 = vlaneseq
    %v1883 = vshrl.u32 %v1882, 7
    %v1884 = vsub.s32 3, %v1883
    %v1885 = vrot.slane %v1868, %v1884
    %v1890 = vadd.f32 %v1852, %v1873
    %v1891 = vadd.f32 %v1853, %v1877
    %v1892 = vadd.f32 %v1854, %v1881
    %v1893 = vadd.f32 %v1855, %v1885
    %v1894 = vadd.f32 %v1856, %v1873
    %v1895 = vadd.f32 %v1857, %v1877
    %v1896 = vadd.f32 %v1858, %v1881
    %v1897 = vadd.f32 %v1859, %v1885
    %v1898 = vadd.f32 %v1860, %v1873
    %v1899 = vadd.f32 %v1861, %v1877
    %v1900 = vadd.f32 %v1862, %v1881
    %v1901 = vadd.f32 %v1863, %v1885
    %v1902 = vadd.f32 %v1864, %v1873
    %v1903 = vadd.f32 %v1865, %v1877
    %v1904 = vadd.f32 %v1866, %v1881
    %v1905 = vadd.f32 %v1867, %v1885
    %v1906 = vtanh.pop %v1890
    %v1907 = vtanh.pop %v1891
    %v1908 = vtanh.pop %v1892
    %v1909 = vtanh.pop %v1893
    %v1910 = vtanh.pop %v1894
    %v1911 = vtanh.pop %v1895
    %v1912 = vtanh.pop %v1896
    %v1913 = vtanh.pop %v1897
    %v1914 = vtanh.pop %v1898
    %v1915 = vtanh.pop %v1899
    %v1916 = vtanh.pop %v1900
    %v1917 = vtanh.pop %v1901
    %v1918 = vtanh.pop %v1902
    %v1919 = vtanh.pop %v1903
    %v1920 = vtanh.pop %v1904
    %v1921 = vtanh.pop %v1905
    %v1922 = vpack.c.bf16 %v1910, %v1906
    %v1923 = vpack.c.bf16 %v1911, %v1907
    %v1924 = vpack.c.bf16 %v1912, %v1908
    %v1925 = vpack.c.bf16 %v1913, %v1909
    %v1926 = vpack.c.bf16 %v1918, %v1914
    %v1927 = vpack.c.bf16 %v1919, %v1915
    %v1928 = vpack.c.bf16 %v1920, %v1916
    %v1929 = vpack.c.bf16 %v1921, %v1917
    %1930 = vst [vmem:[#allocation3 + $0x20] sm:$0xff] %v1922
    %1931 = vst [vmem:[#allocation3 + $0x28] sm:$0xff] %v1923
    %1932 = vst [vmem:[#allocation3 + $0x30] sm:$0xff] %v1924
    %1933 = vst [vmem:[#allocation3 + $0x38] sm:$0xff] %v1925
    %1934 = vst [vmem:[#allocation3 + $0x80] sm:$0xff] %v1926
    %1935 = vst [vmem:[#allocation3 + $0x88] sm:$0xff] %v1927
    %1936 = vst [vmem:[#allocation3 + $0x90] sm:$0xff] %v1928
    %1937 = vst [vmem:[#allocation3 + $0x98] sm:$0xff] %v1929
    %s1938 = smul.u32 4, 5
    %s1939 = smul.u32 %s1938, 64
    %s1940 = smul.u32 %s1939, 4
    %s1941 = sshll.u32 %s1940, 4
    %1942 = dma.done [#allocation5], %s1941
    %v1943 = vld [vmem:[#allocation3] sm:$0x80]
    %v1944 = vld [vmem:[#allocation3 + $0x8] sm:$0x80]
    %v1945 = vld [vmem:[#allocation3 + $0x10] sm:$0x80]
    %v1946 = vld [vmem:[#allocation3 + $0x18] sm:$0x80]
    %v1947 = vld [vmem:[#allocation3 + $0x20] sm:$0x7f]
    %v1948 = vld [vmem:[#allocation3 + $0x28] sm:$0x7f]
    %v1949 = vld [vmem:[#allocation3 + $0x30] sm:$0x7f]
    %v1950 = vld [vmem:[#allocation3 + $0x38] sm:$0x7f]
    %v1951 = vld [vmem:[#allocation3 + $0x60] sm:$0x80]
    %v1952 = vld [vmem:[#allocation3 + $0x68] sm:$0x80]
    %v1953 = vld [vmem:[#allocation3 + $0x70] sm:$0x80]
    %v1954 = vld [vmem:[#allocation3 + $0x78] sm:$0x80]
    %v1955 = vld [vmem:[#allocation3 + $0x80] sm:$0x7f]
    %v1956 = vld [vmem:[#allocation3 + $0x88] sm:$0x7f]
    %v1957 = vld [vmem:[#allocation3 + $0x90] sm:$0x7f]
    %v1958 = vld [vmem:[#allocation3 + $0x98] sm:$0x7f]
    %v1975 = vrot.slane %v1943, 7
    %v1976 = vrot.slane %v1947, 7
    %v1977 = vsel %vm242, %v1975, %v1976
    %v1978 = vrot.slane %v1944, 7
    %v1979 = vrot.slane %v1948, 7
    %v1980 = vsel %vm242, %v1978, %v1979
    %v1981 = vrot.slane %v1945, 7
    %v1982 = vrot.slane %v1949, 7
    %v1983 = vsel %vm242, %v1981, %v1982
    %v1984 = vrot.slane %v1946, 7
    %v1985 = vrot.slane %v1950, 7
    %v1986 = vsel %vm242, %v1984, %v1985
    %v1987 = vrot.slane %v1951, 7
    %v1988 = vrot.slane %v1955, 7
    %v1989 = vsel %vm242, %v1987, %v1988
    %v1990 = vrot.slane %v1952, 7
    %v1991 = vrot.slane %v1956, 7
    %v1992 = vsel %vm242, %v1990, %v1991
    %v1993 = vrot.slane %v1953, 7
    %v1994 = vrot.slane %v1957, 7
    %v1995 = vsel %vm242, %v1993, %v1994
    %v1996 = vrot.slane %v1954, 7
    %v1997 = vrot.slane %v1958, 7
    %v1998 = vsel %vm242, %v1996, %v1997
    %v2007 = vld [vmem:[#allocation4] sm:$0xff]
    %v2008 = vld [vmem:[#allocation4 + $0x8] sm:$0xff]
    %v2009 = vld [vmem:[#allocation4 + $0x10] sm:$0xff]
    %v2010 = vld [vmem:[#allocation4 + $0x18] sm:$0xff]
    %v2011 = vld [vmem:[#allocation4 + $0x20] sm:$0xff]
    %v2012 = vld [vmem:[#allocation4 + $0x28] sm:$0xff]
    %v2013 = vld [vmem:[#allocation4 + $0x30] sm:$0xff]
    %v2014 = vld [vmem:[#allocation4 + $0x38] sm:$0xff]
    %v2015 = vld [vmem:[#allocation4 + $0x40] sm:$0xff]
    %v2016 = vld [vmem:[#allocation4 + $0x48] sm:$0xff]
    %v2017 = vld [vmem:[#allocation4 + $0x50] sm:$0xff]
    %v2018 = vld [vmem:[#allocation4 + $0x58] sm:$0xff]
    %v2019 = vld [vmem:[#allocation4 + $0x60] sm:$0xff]
    %v2020 = vld [vmem:[#allocation4 + $0x68] sm:$0xff]
    %v2021 = vld [vmem:[#allocation4 + $0x70] sm:$0xff]
    %v2022 = vld [vmem:[#allocation4 + $0x78] sm:$0xff]
    %v2023 = vld [vmem:[#allocation4 + $0x80] sm:$0xff]
    %v2024 = vld [vmem:[#allocation4 + $0x88] sm:$0xff]
    %v2025 = vld [vmem:[#allocation4 + $0x90] sm:$0xff]
    %v2026 = vld [vmem:[#allocation4 + $0x98] sm:$0xff]
    %v2027 = vld [vmem:[#allocation4 + $0xa0] sm:$0xff]
    %v2028 = vld [vmem:[#allocation4 + $0xa8] sm:$0xff]
    %v2029 = vld [vmem:[#allocation4 + $0xb0] sm:$0xff]
    %v2030 = vld [vmem:[#allocation4 + $0xb8] sm:$0xff]
    %v2031 = vld [vmem:[#allocation4 + $0xc0] sm:$0xff]
    %v2032 = vld [vmem:[#allocation4 + $0xc8] sm:$0xff]
    %v2033 = vld [vmem:[#allocation4 + $0xd0] sm:$0xff]
    %v2034 = vld [vmem:[#allocation4 + $0xd8] sm:$0xff]
    %v2035 = vld [vmem:[#allocation4 + $0xe0] sm:$0xff]
    %v2036 = vld [vmem:[#allocation4 + $0xe8] sm:$0xff]
    %v2037 = vld [vmem:[#allocation4 + $0xf0] sm:$0xff]
    %v2038 = vld [vmem:[#allocation4 + $0xf8] sm:$0xff]
    %v2039 = vld [vmem:[#allocation4 + $0x100] sm:$0xff]
    %v2040 = vld [vmem:[#allocation4 + $0x108] sm:$0xff]
    %v2041 = vld [vmem:[#allocation4 + $0x110] sm:$0xff]
    %v2042 = vld [vmem:[#allocation4 + $0x118] sm:$0xff]
    %v2043 = vld [vmem:[#allocation4 + $0x120] sm:$0xff]
    %v2044 = vld [vmem:[#allocation4 + $0x128] sm:$0xff]
    %v2045 = vld [vmem:[#allocation4 + $0x130] sm:$0xff]
    %v2046 = vld [vmem:[#allocation4 + $0x138] sm:$0xff]
    %v2047 = vld [vmem:[#allocation4 + $0x140] sm:$0xff]
    %v2048 = vld [vmem:[#allocation4 + $0x148] sm:$0xff]
    %v2049 = vld [vmem:[#allocation4 + $0x150] sm:$0xff]
    %v2050 = vld [vmem:[#allocation4 + $0x158] sm:$0xff]
    %v2051 = vld [vmem:[#allocation4 + $0x160] sm:$0xff]
    %v2052 = vld [vmem:[#allocation4 + $0x168] sm:$0xff]
    %v2053 = vld [vmem:[#allocation4 + $0x170] sm:$0xff]
    %v2054 = vld [vmem:[#allocation4 + $0x178] sm:$0xff]
    %v2055 = vld [vmem:[#allocation4 + $0x180] sm:$0xff]
    %v2056 = vld [vmem:[#allocation4 + $0x188] sm:$0xff]
    %v2057 = vld [vmem:[#allocation4 + $0x190] sm:$0xff]
    %v2058 = vld [vmem:[#allocation4 + $0x198] sm:$0xff]
    %v2059 = vld [vmem:[#allocation4 + $0x1a0] sm:$0xff]
    %v2060 = vld [vmem:[#allocation4 + $0x1a8] sm:$0xff]
    %v2061 = vld [vmem:[#allocation4 + $0x1b0] sm:$0xff]
    %v2062 = vld [vmem:[#allocation4 + $0x1b8] sm:$0xff]
    %v2063 = vld [vmem:[#allocation4 + $0x1c0] sm:$0xff]
    %v2064 = vld [vmem:[#allocation4 + $0x1c8] sm:$0xff]
    %v2065 = vld [vmem:[#allocation4 + $0x1d0] sm:$0xff]
    %v2066 = vld [vmem:[#allocation4 + $0x1d8] sm:$0xff]
    %v2067 = vld [vmem:[#allocation4 + $0x1e0] sm:$0xff]
    %v2068 = vld [vmem:[#allocation4 + $0x1e8] sm:$0xff]
    %v2069 = vld [vmem:[#allocation4 + $0x1f0] sm:$0xff]
    %v2070 = vld [vmem:[#allocation4 + $0x1f8] sm:$0xff]
    %v2071 = vld [vmem:[#allocation4 + $0x200] sm:$0xff]
    %v2072 = vld [vmem:[#allocation4 + $0x208] sm:$0xff]
    %v2073 = vld [vmem:[#allocation4 + $0x210] sm:$0xff]
    %v2074 = vld [vmem:[#allocation4 + $0x218] sm:$0xff]
    %v2075 = vld [vmem:[#allocation4 + $0x220] sm:$0xff]
    %v2076 = vld [vmem:[#allocation4 + $0x228] sm:$0xff]
    %v2077 = vld [vmem:[#allocation4 + $0x230] sm:$0xff]
    %v2078 = vld [vmem:[#allocation4 + $0x238] sm:$0xff]
    %v2079 = vld [vmem:[#allocation4 + $0x240] sm:$0xff]
    %v2080 = vld [vmem:[#allocation4 + $0x248] sm:$0xff]
    %v2081 = vld [vmem:[#allocation4 + $0x250] sm:$0xff]
    %v2082 = vld [vmem:[#allocation4 + $0x258] sm:$0xff]
    %v2083 = vld [vmem:[#allocation4 + $0x260] sm:$0xff]
    %v2084 = vld [vmem:[#allocation4 + $0x268] sm:$0xff]
    %v2085 = vld [vmem:[#allocation4 + $0x270] sm:$0xff]
    %v2086 = vld [vmem:[#allocation4 + $0x278] sm:$0xff]
    %v2087 = vld [vmem:[#allocation4 + $0x280] sm:$0xff]
    %v2088 = vld [vmem:[#allocation4 + $0x288] sm:$0xff]
    %v2089 = vld [vmem:[#allocation4 + $0x290] sm:$0xff]
    %v2090 = vld [vmem:[#allocation4 + $0x298] sm:$0xff]
    %v2091 = vld [vmem:[#allocation4 + $0x2a0] sm:$0xff]
    %v2092 = vld [vmem:[#allocation4 + $0x2a8] sm:$0xff]
    %v2093 = vld [vmem:[#allocation4 + $0x2b0] sm:$0xff]
    %v2094 = vld [vmem:[#allocation4 + $0x2b8] sm:$0xff]
    %v2095 = vld [vmem:[#allocation4 + $0x2c0] sm:$0xff]
    %v2096 = vld [vmem:[#allocation4 + $0x2c8] sm:$0xff]
    %v2097 = vld [vmem:[#allocation4 + $0x2d0] sm:$0xff]
    %v2098 = vld [vmem:[#allocation4 + $0x2d8] sm:$0xff]
    %v2099 = vld [vmem:[#allocation4 + $0x2e0] sm:$0xff]
    %v2100 = vld [vmem:[#allocation4 + $0x2e8] sm:$0xff]
    %v2101 = vld [vmem:[#allocation4 + $0x2f0] sm:$0xff]
    %v2102 = vld [vmem:[#allocation4 + $0x2f8] sm:$0xff]
    %v2103 = vld [vmem:[#allocation4 + $0x300] sm:$0xff]
    %v2104 = vld [vmem:[#allocation4 + $0x308] sm:$0xff]
    %v2105 = vld [vmem:[#allocation4 + $0x310] sm:$0xff]
    %v2106 = vld [vmem:[#allocation4 + $0x318] sm:$0xff]
    %v2107 = vld [vmem:[#allocation4 + $0x320] sm:$0xff]
    %v2108 = vld [vmem:[#allocation4 + $0x328] sm:$0xff]
    %v2109 = vld [vmem:[#allocation4 + $0x330] sm:$0xff]
    %v2110 = vld [vmem:[#allocation4 + $0x338] sm:$0xff]
    %v2111 = vld [vmem:[#allocation4 + $0x340] sm:$0xff]
    %v2112 = vld [vmem:[#allocation4 + $0x348] sm:$0xff]
    %v2113 = vld [vmem:[#allocation4 + $0x350] sm:$0xff]
    %v2114 = vld [vmem:[#allocation4 + $0x358] sm:$0xff]
    %v2115 = vld [vmem:[#allocation4 + $0x360] sm:$0xff]
    %v2116 = vld [vmem:[#allocation4 + $0x368] sm:$0xff]
    %v2117 = vld [vmem:[#allocation4 + $0x370] sm:$0xff]
    %v2118 = vld [vmem:[#allocation4 + $0x378] sm:$0xff]
    %v2119 = vld [vmem:[#allocation4 + $0x380] sm:$0xff]
    %v2120 = vld [vmem:[#allocation4 + $0x388] sm:$0xff]
    %v2121 = vld [vmem:[#allocation4 + $0x390] sm:$0xff]
    %v2122 = vld [vmem:[#allocation4 + $0x398] sm:$0xff]
    %v2123 = vld [vmem:[#allocation4 + $0x3a0] sm:$0xff]
    %v2124 = vld [vmem:[#allocation4 + $0x3a8] sm:$0xff]
    %v2125 = vld [vmem:[#allocation4 + $0x3b0] sm:$0xff]
    %v2126 = vld [vmem:[#allocation4 + $0x3b8] sm:$0xff]
    %v2127 = vld [vmem:[#allocation4 + $0x3c0] sm:$0xff]
    %v2128 = vld [vmem:[#allocation4 + $0x3c8] sm:$0xff]
    %v2129 = vld [vmem:[#allocation4 + $0x3d0] sm:$0xff]
    %v2130 = vld [vmem:[#allocation4 + $0x3d8] sm:$0xff]
    %v2131 = vld [vmem:[#allocation4 + $0x3e0] sm:$0xff]
    %v2132 = vld [vmem:[#allocation4 + $0x3e8] sm:$0xff]
    %v2133 = vld [vmem:[#allocation4 + $0x3f0] sm:$0xff]
    %v2134 = vld [vmem:[#allocation4 + $0x3f8] sm:$0xff]
    %v2135 = vld [vmem:[#allocation3 + $0x20] sm:$0xff]
    %v2136 = vld [vmem:[#allocation3 + $0x28] sm:$0xff]
    %v2137 = vld [vmem:[#allocation3 + $0x30] sm:$0xff]
    %v2138 = vld [vmem:[#allocation3 + $0x38] sm:$0xff]
    %v2139 = vld [vmem:[#allocation3 + $0x80] sm:$0xff]
    %v2140 = vld [vmem:[#allocation3 + $0x88] sm:$0xff]
    %v2141 = vld [vmem:[#allocation3 + $0x90] sm:$0xff]
    %v2142 = vld [vmem:[#allocation3 + $0x98] sm:$0xff]
    %v2144 = vshrl.u32 %v1943, 16
    %v2146 = vrot.slane %v2144, 7
    %v2148 = vshrl.u32 %v2135, 16
    %v2150 = vrot.slane %v2148, 7
    %v2151 = vshll.u32 %v2135, 16
    %v2153 = vor.u32 %v2150, %v2151
    %v2154 = vsel %vm285, %v2146, %v2153
    %v2156 = vshrl.u32 %v1944, 16
    %v2158 = vrot.slane %v2156, 7
    %v2160 = vshrl.u32 %v2136, 16
    %v2162 = vrot.slane %v2160, 7
    %v2163 = vshll.u32 %v2136, 16
    %v2165 = vor.u32 %v2162, %v2163
    %v2166 = vsel %vm285, %v2158, %v2165
    %v2168 = vshrl.u32 %v1945, 16
    %v2170 = vrot.slane %v2168, 7
    %v2172 = vshrl.u32 %v2137, 16
    %v2174 = vrot.slane %v2172, 7
    %v2175 = vshll.u32 %v2137, 16
    %v2177 = vor.u32 %v2174, %v2175
    %v2178 = vsel %vm285, %v2170, %v2177
    %v2180 = vshrl.u32 %v1946, 16
    %v2182 = vrot.slane %v2180, 7
    %v2184 = vshrl.u32 %v2138, 16
    %v2186 = vrot.slane %v2184, 7
    %v2187 = vshll.u32 %v2138, 16
    %v2189 = vor.u32 %v2186, %v2187
    %v2190 = vsel %vm285, %v2182, %v2189
    %v2192 = vshrl.u32 %v1951, 16
    %v2194 = vrot.slane %v2192, 7
    %v2196 = vshrl.u32 %v2139, 16
    %v2198 = vrot.slane %v2196, 7
    %v2199 = vshll.u32 %v2139, 16
    %v2201 = vor.u32 %v2198, %v2199
    %v2202 = vsel %vm285, %v2194, %v2201
    %v2204 = vshrl.u32 %v1952, 16
    %v2206 = vrot.slane %v2204, 7
    %v2208 = vshrl.u32 %v2140, 16
    %v2210 = vrot.slane %v2208, 7
    %v2211 = vshll.u32 %v2140, 16
    %v2213 = vor.u32 %v2210, %v2211
    %v2214 = vsel %vm285, %v2206, %v2213
    %v2216 = vshrl.u32 %v1953, 16
    %v2218 = vrot.slane %v2216, 7
    %v2220 = vshrl.u32 %v2141, 16
    %v2222 = vrot.slane %v2220, 7
    %v2223 = vshll.u32 %v2141, 16
    %v2225 = vor.u32 %v2222, %v2223
    %v2226 = vsel %vm285, %v2218, %v2225
    %v2228 = vshrl.u32 %v1954, 16
    %v2230 = vrot.slane %v2228, 7
    %v2232 = vshrl.u32 %v2142, 16
    %v2234 = vrot.slane %v2232, 7
    %v2235 = vshll.u32 %v2142, 16
    %v2237 = vor.u32 %v2234, %v2235
    %v2238 = vsel %vm285, %v2230, %v2237
    %s2247 = scalar_lea.vmem [#allocation4], 1024
    %v2248 = vld [vmem:[%s2247] sm:$0xff]
    %v2249 = vld [vmem:[%s2247 + $0x8] sm:$0xff]
    %v2250 = vld [vmem:[%s2247 + $0x10] sm:$0xff]
    %v2251 = vld [vmem:[%s2247 + $0x18] sm:$0xff]
    %v2252 = vld [vmem:[%s2247 + $0x20] sm:$0xff]
    %v2253 = vld [vmem:[%s2247 + $0x28] sm:$0xff]
    %v2254 = vld [vmem:[%s2247 + $0x30] sm:$0xff]
    %v2255 = vld [vmem:[%s2247 + $0x38] sm:$0xff]
    %v2256 = vld [vmem:[%s2247 + $0x40] sm:$0xff]
    %v2257 = vld [vmem:[%s2247 + $0x48] sm:$0xff]
    %v2258 = vld [vmem:[%s2247 + $0x50] sm:$0xff]
    %v2259 = vld [vmem:[%s2247 + $0x58] sm:$0xff]
    %v2260 = vld [vmem:[%s2247 + $0x60] sm:$0xff]
    %v2261 = vld [vmem:[%s2247 + $0x68] sm:$0xff]
    %v2262 = vld [vmem:[%s2247 + $0x70] sm:$0xff]
    %v2263 = vld [vmem:[%s2247 + $0x78] sm:$0xff]
    %v2264 = vld [vmem:[%s2247 + $0x80] sm:$0xff]
    %v2265 = vld [vmem:[%s2247 + $0x88] sm:$0xff]
    %v2266 = vld [vmem:[%s2247 + $0x90] sm:$0xff]
    %v2267 = vld [vmem:[%s2247 + $0x98] sm:$0xff]
    %v2268 = vld [vmem:[%s2247 + $0xa0] sm:$0xff]
    %v2269 = vld [vmem:[%s2247 + $0xa8] sm:$0xff]
    %v2270 = vld [vmem:[%s2247 + $0xb0] sm:$0xff]
    %v2271 = vld [vmem:[%s2247 + $0xb8] sm:$0xff]
    %v2272 = vld [vmem:[%s2247 + $0xc0] sm:$0xff]
    %v2273 = vld [vmem:[%s2247 + $0xc8] sm:$0xff]
    %v2274 = vld [vmem:[%s2247 + $0xd0] sm:$0xff]
    %v2275 = vld [vmem:[%s2247 + $0xd8] sm:$0xff]
    %v2276 = vld [vmem:[%s2247 + $0xe0] sm:$0xff]
    %v2277 = vld [vmem:[%s2247 + $0xe8] sm:$0xff]
    %v2278 = vld [vmem:[%s2247 + $0xf0] sm:$0xff]
    %v2279 = vld [vmem:[%s2247 + $0xf8] sm:$0xff]
    %v2280 = vld [vmem:[%s2247 + $0x100] sm:$0xff]
    %v2281 = vld [vmem:[%s2247 + $0x108] sm:$0xff]
    %v2282 = vld [vmem:[%s2247 + $0x110] sm:$0xff]
    %v2283 = vld [vmem:[%s2247 + $0x118] sm:$0xff]
    %v2284 = vld [vmem:[%s2247 + $0x120] sm:$0xff]
    %v2285 = vld [vmem:[%s2247 + $0x128] sm:$0xff]
    %v2286 = vld [vmem:[%s2247 + $0x130] sm:$0xff]
    %v2287 = vld [vmem:[%s2247 + $0x138] sm:$0xff]
    %v2288 = vld [vmem:[%s2247 + $0x140] sm:$0xff]
    %v2289 = vld [vmem:[%s2247 + $0x148] sm:$0xff]
    %v2290 = vld [vmem:[%s2247 + $0x150] sm:$0xff]
    %v2291 = vld [vmem:[%s2247 + $0x158] sm:$0xff]
    %v2292 = vld [vmem:[%s2247 + $0x160] sm:$0xff]
    %v2293 = vld [vmem:[%s2247 + $0x168] sm:$0xff]
    %v2294 = vld [vmem:[%s2247 + $0x170] sm:$0xff]
    %v2295 = vld [vmem:[%s2247 + $0x178] sm:$0xff]
    %v2296 = vld [vmem:[%s2247 + $0x180] sm:$0xff]
    %v2297 = vld [vmem:[%s2247 + $0x188] sm:$0xff]
    %v2298 = vld [vmem:[%s2247 + $0x190] sm:$0xff]
    %v2299 = vld [vmem:[%s2247 + $0x198] sm:$0xff]
    %v2300 = vld [vmem:[%s2247 + $0x1a0] sm:$0xff]
    %v2301 = vld [vmem:[%s2247 + $0x1a8] sm:$0xff]
    %v2302 = vld [vmem:[%s2247 + $0x1b0] sm:$0xff]
    %v2303 = vld [vmem:[%s2247 + $0x1b8] sm:$0xff]
    %v2304 = vld [vmem:[%s2247 + $0x1c0] sm:$0xff]
    %v2305 = vld [vmem:[%s2247 + $0x1c8] sm:$0xff]
    %v2306 = vld [vmem:[%s2247 + $0x1d0] sm:$0xff]
    %v2307 = vld [vmem:[%s2247 + $0x1d8] sm:$0xff]
    %v2308 = vld [vmem:[%s2247 + $0x1e0] sm:$0xff]
    %v2309 = vld [vmem:[%s2247 + $0x1e8] sm:$0xff]
    %v2310 = vld [vmem:[%s2247 + $0x1f0] sm:$0xff]
    %v2311 = vld [vmem:[%s2247 + $0x1f8] sm:$0xff]
    %v2312 = vld [vmem:[%s2247 + $0x200] sm:$0xff]
    %v2313 = vld [vmem:[%s2247 + $0x208] sm:$0xff]
    %v2314 = vld [vmem:[%s2247 + $0x210] sm:$0xff]
    %v2315 = vld [vmem:[%s2247 + $0x218] sm:$0xff]
    %v2316 = vld [vmem:[%s2247 + $0x220] sm:$0xff]
    %v2317 = vld [vmem:[%s2247 + $0x228] sm:$0xff]
    %v2318 = vld [vmem:[%s2247 + $0x230] sm:$0xff]
    %v2319 = vld [vmem:[%s2247 + $0x238] sm:$0xff]
    %v2320 = vld [vmem:[%s2247 + $0x240] sm:$0xff]
    %v2321 = vld [vmem:[%s2247 + $0x248] sm:$0xff]
    %v2322 = vld [vmem:[%s2247 + $0x250] sm:$0xff]
    %v2323 = vld [vmem:[%s2247 + $0x258] sm:$0xff]
    %v2324 = vld [vmem:[%s2247 + $0x260] sm:$0xff]
    %v2325 = vld [vmem:[%s2247 + $0x268] sm:$0xff]
    %v2326 = vld [vmem:[%s2247 + $0x270] sm:$0xff]
    %v2327 = vld [vmem:[%s2247 + $0x278] sm:$0xff]
    %v2328 = vld [vmem:[%s2247 + $0x280] sm:$0xff]
    %v2329 = vld [vmem:[%s2247 + $0x288] sm:$0xff]
    %v2330 = vld [vmem:[%s2247 + $0x290] sm:$0xff]
    %v2331 = vld [vmem:[%s2247 + $0x298] sm:$0xff]
    %v2332 = vld [vmem:[%s2247 + $0x2a0] sm:$0xff]
    %v2333 = vld [vmem:[%s2247 + $0x2a8] sm:$0xff]
    %v2334 = vld [vmem:[%s2247 + $0x2b0] sm:$0xff]
    %v2335 = vld [vmem:[%s2247 + $0x2b8] sm:$0xff]
    %v2336 = vld [vmem:[%s2247 + $0x2c0] sm:$0xff]
    %v2337 = vld [vmem:[%s2247 + $0x2c8] sm:$0xff]
    %v2338 = vld [vmem:[%s2247 + $0x2d0] sm:$0xff]
    %v2339 = vld [vmem:[%s2247 + $0x2d8] sm:$0xff]
    %v2340 = vld [vmem:[%s2247 + $0x2e0] sm:$0xff]
    %v2341 = vld [vmem:[%s2247 + $0x2e8] sm:$0xff]
    %v2342 = vld [vmem:[%s2247 + $0x2f0] sm:$0xff]
    %v2343 = vld [vmem:[%s2247 + $0x2f8] sm:$0xff]
    %v2344 = vld [vmem:[%s2247 + $0x300] sm:$0xff]
    %v2345 = vld [vmem:[%s2247 + $0x308] sm:$0xff]
    %v2346 = vld [vmem:[%s2247 + $0x310] sm:$0xff]
    %v2347 = vld [vmem:[%s2247 + $0x318] sm:$0xff]
    %v2348 = vld [vmem:[%s2247 + $0x320] sm:$0xff]
    %v2349 = vld [vmem:[%s2247 + $0x328] sm:$0xff]
    %v2350 = vld [vmem:[%s2247 + $0x330] sm:$0xff]
    %v2351 = vld [vmem:[%s2247 + $0x338] sm:$0xff]
    %v2352 = vld [vmem:[%s2247 + $0x340] sm:$0xff]
    %v2353 = vld [vmem:[%s2247 + $0x348] sm:$0xff]
    %v2354 = vld [vmem:[%s2247 + $0x350] sm:$0xff]
    %v2355 = vld [vmem:[%s2247 + $0x358] sm:$0xff]
    %v2356 = vld [vmem:[%s2247 + $0x360] sm:$0xff]
    %v2357 = vld [vmem:[%s2247 + $0x368] sm:$0xff]
    %v2358 = vld [vmem:[%s2247 + $0x370] sm:$0xff]
    %v2359 = vld [vmem:[%s2247 + $0x378] sm:$0xff]
    %v2360 = vld [vmem:[%s2247 + $0x380] sm:$0xff]
    %v2361 = vld [vmem:[%s2247 + $0x388] sm:$0xff]
    %v2362 = vld [vmem:[%s2247 + $0x390] sm:$0xff]
    %v2363 = vld [vmem:[%s2247 + $0x398] sm:$0xff]
    %v2364 = vld [vmem:[%s2247 + $0x3a0] sm:$0xff]
    %v2365 = vld [vmem:[%s2247 + $0x3a8] sm:$0xff]
    %v2366 = vld [vmem:[%s2247 + $0x3b0] sm:$0xff]
    %v2367 = vld [vmem:[%s2247 + $0x3b8] sm:$0xff]
    %v2368 = vld [vmem:[%s2247 + $0x3c0] sm:$0xff]
    %v2369 = vld [vmem:[%s2247 + $0x3c8] sm:$0xff]
    %v2370 = vld [vmem:[%s2247 + $0x3d0] sm:$0xff]
    %v2371 = vld [vmem:[%s2247 + $0x3d8] sm:$0xff]
    %v2372 = vld [vmem:[%s2247 + $0x3e0] sm:$0xff]
    %v2373 = vld [vmem:[%s2247 + $0x3e8] sm:$0xff]
    %v2374 = vld [vmem:[%s2247 + $0x3f0] sm:$0xff]
    %v2375 = vld [vmem:[%s2247 + $0x3f8] sm:$0xff]
    %2376 = vmatprep.subr.bf16.mxu0 %v2249
    %2377 = vmatpush1.bf16.msra.mxu0 %v2248
    %2378 = vmatprep.subr.bf16.mxu0 %v2253
    %2379 = vmatpush1.bf16.msra.mxu0 %v2252
    %2380 = vmatprep.subr.bf16.mxu0 %v2257
    %2381 = vmatpush1.bf16.msra.mxu0 %v2256
    %2382 = vmatprep.subr.bf16.mxu0 %v2261
    %2383 = vmatpush1.bf16.msra.mxu0 %v2260
    %2384 = vmatprep.subr.bf16.mxu0 %v2265
    %2385 = vmatpush1.bf16.msra.mxu0 %v2264
    %2386 = vmatprep.subr.bf16.mxu0 %v2269
    %2387 = vmatpush1.bf16.msra.mxu0 %v2268
    %2388 = vmatprep.subr.bf16.mxu0 %v2273
    %2389 = vmatpush1.bf16.msra.mxu0 %v2272
    %2390 = vmatprep.subr.bf16.mxu0 %v2277
    %2391 = vmatpush1.bf16.msra.mxu0 %v2276
    %2392 = vmatprep.subr.bf16.mxu0 %v2281
    %2393 = vmatpush1.bf16.msra.mxu0 %v2280
    %2394 = vmatprep.subr.bf16.mxu0 %v2285
    %2395 = vmatpush1.bf16.msra.mxu0 %v2284
    %2396 = vmatprep.subr.bf16.mxu0 %v2289
    %2397 = vmatpush1.bf16.msra.mxu0 %v2288
    %2398 = vmatprep.subr.bf16.mxu0 %v2293
    %2399 = vmatpush1.bf16.msra.mxu0 %v2292
    %2400 = vmatprep.subr.bf16.mxu0 %v2297
    %2401 = vmatpush1.bf16.msra.mxu0 %v2296
    %2402 = vmatprep.subr.bf16.mxu0 %v2301
    %2403 = vmatpush1.bf16.msra.mxu0 %v2300
    %2404 = vmatprep.subr.bf16.mxu0 %v2305
    %2405 = vmatpush1.bf16.msra.mxu0 %v2304
    %2406 = vmatprep.subr.bf16.mxu0 %v2309
    %2407 = vmatpush1.bf16.msra.mxu0 %v2308
    %2408 = vmatprep.mubr.bf16.mxu0 %v2166
    %2409 = vmatmul.mubr.bf16.gmra.mrb[0].mxu0 %v2154
    %v2410 = vpop.f32.mrb[0].mxu0
    %v2411 = vadd.f32 0.0, %v2410
    %v2412 = vpop.f32.mrb[0].mxu0
    %v2413 = vadd.f32 0.0, %v2412
    %v2414 = vpop.f32.mrb[0].mxu0
    %v2415 = vadd.f32 0.0, %v2414
    %v2416 = vpop.f32.mrb[0].mxu0
    %v2417 = vadd.f32 0.0, %v2416
    %2418 = vmatprep.mubr.bf16.mxu0 %v2214
    %2419 = vmatmul.mubr.bf16.gmra.mrb[0].mxu0 %v2202
    %v2420 = vpop.f32.mrb[0].mxu0
    %v2421 = vadd.f32 0.0, %v2420
    %v2422 = vpop.f32.mrb[0].mxu0
    %v2423 = vadd.f32 0.0, %v2422
    %v2424 = vpop.f32.mrb[0].mxu0
    %v2425 = vadd.f32 0.0, %v2424
    %v2426 = vpop.f32.mrb[0].mxu0
    %v2427 = vadd.f32 0.0, %v2426
    %2428 = vdwg.mxu0
    %2429 = vmatprep.subr.bf16.mxu0 %v2313
    %2430 = vmatpush1.bf16.msra.mxu0 %v2312
    %2431 = vmatprep.subr.bf16.mxu0 %v2317
    %2432 = vmatpush1.bf16.msra.mxu0 %v2316
    %2433 = vmatprep.subr.bf16.mxu0 %v2321
    %2434 = vmatpush1.bf16.msra.mxu0 %v2320
    %2435 = vmatprep.subr.bf16.mxu0 %v2325
    %2436 = vmatpush1.bf16.msra.mxu0 %v2324
    %2437 = vmatprep.subr.bf16.mxu0 %v2329
    %2438 = vmatpush1.bf16.msra.mxu0 %v2328
    %2439 = vmatprep.subr.bf16.mxu0 %v2333
    %2440 = vmatpush1.bf16.msra.mxu0 %v2332
    %2441 = vmatprep.subr.bf16.mxu0 %v2337
    %2442 = vmatpush1.bf16.msra.mxu0 %v2336
    %2443 = vmatprep.subr.bf16.mxu0 %v2341
    %2444 = vmatpush1.bf16.msra.mxu0 %v2340
    %2445 = vmatprep.subr.bf16.mxu0 %v2345
    %2446 = vmatpush1.bf16.msra.mxu0 %v2344
    %2447 = vmatprep.subr.bf16.mxu0 %v2349
    %2448 = vmatpush1.bf16.msra.mxu0 %v2348
    %2449 = vmatprep.subr.bf16.mxu0 %v2353
    %2450 = vmatpush1.bf16.msra.mxu0 %v2352
    %2451 = vmatprep.subr.bf16.mxu0 %v2357
    %2452 = vmatpush1.bf16.msra.mxu0 %v2356
    %2453 = vmatprep.subr.bf16.mxu0 %v2361
    %2454 = vmatpush1.bf16.msra.mxu0 %v2360
    %2455 = vmatprep.subr.bf16.mxu0 %v2365
    %2456 = vmatpush1.bf16.msra.mxu0 %v2364
    %2457 = vmatprep.subr.bf16.mxu0 %v2369
    %2458 = vmatpush1.bf16.msra.mxu0 %v2368
    %2459 = vmatprep.subr.bf16.mxu0 %v2373
    %2460 = vmatpush1.bf16.msra.mxu0 %v2372
    %2461 = vmatprep.mubr.bf16.mxu0 %v2190
    %2462 = vmatmul.mubr.bf16.gmra.mrb[0].mxu0 %v2178
    %v2463 = vpop.f32.mrb[0].mxu0
    %v2464 = vadd.f32 %v2411, %v2463
    %v2465 = vpop.f32.mrb[0].mxu0
    %v2466 = vadd.f32 %v2413, %v2465
    %v2467 = vpop.f32.mrb[0].mxu0
    %v2468 = vadd.f32 %v2415, %v2467
    %v2469 = vpop.f32.mrb[0].mxu0
    %v2470 = vadd.f32 %v2417, %v2469
    %2471 = vmatprep.mubr.bf16.mxu0 %v2238
    %2472 = vmatmul.mubr.bf16.gmra.mrb[0].mxu0 %v2226
    %v2473 = vpop.f32.mrb[0].mxu0
    %v2474 = vadd.f32 %v2421, %v2473
    %v2475 = vpop.f32.mrb[0].mxu0
    %v2476 = vadd.f32 %v2423, %v2475
    %v2477 = vpop.f32.mrb[0].mxu0
    %v2478 = vadd.f32 %v2425, %v2477
    %v2479 = vpop.f32.mrb[0].mxu0
    %v2480 = vadd.f32 %v2427, %v2479
    %2481 = vdwg.mxu0
    %2482 = vmatprep.subr.bf16.mxu0 %v2251
    %2483 = vmatpush1.bf16.msra.mxu0 %v2250
    %2484 = vmatprep.subr.bf16.mxu0 %v2255
    %2485 = vmatpush1.bf16.msra.mxu0 %v2254
    %2486 = vmatprep.subr.bf16.mxu0 %v2259
    %2487 = vmatpush1.bf16.msra.mxu0 %v2258
    %2488 = vmatprep.subr.bf16.mxu0 %v2263
    %2489 = vmatpush1.bf16.msra.mxu0 %v2262
    %2490 = vmatprep.subr.bf16.mxu0 %v2267
    %2491 = vmatpush1.bf16.msra.mxu0 %v2266
    %2492 = vmatprep.subr.bf16.mxu0 %v2271
    %2493 = vmatpush1.bf16.msra.mxu0 %v2270
    %2494 = vmatprep.subr.bf16.mxu0 %v2275
    %2495 = vmatpush1.bf16.msra.mxu0 %v2274
    %2496 = vmatprep.subr.bf16.mxu0 %v2279
    %2497 = vmatpush1.bf16.msra.mxu0 %v2278
    %2498 = vmatprep.subr.bf16.mxu0 %v2283
    %2499 = vmatpush1.bf16.msra.mxu0 %v2282
    %2500 = vmatprep.subr.bf16.mxu0 %v2287
    %2501 = vmatpush1.bf16.msra.mxu0 %v2286
    %2502 = vmatprep.subr.bf16.mxu0 %v2291
    %2503 = vmatpush1.bf16.msra.mxu0 %v2290
    %2504 = vmatprep.subr.bf16.mxu0 %v2295
    %2505 = vmatpush1.bf16.msra.mxu0 %v2294
    %2506 = vmatprep.subr.bf16.mxu0 %v2299
    %2507 = vmatpush1.bf16.msra.mxu0 %v2298
    %2508 = vmatprep.subr.bf16.mxu0 %v2303
    %2509 = vmatpush1.bf16.msra.mxu0 %v2302
    %2510 = vmatprep.subr.bf16.mxu0 %v2307
    %2511 = vmatpush1.bf16.msra.mxu0 %v2306
    %2512 = vmatprep.subr.bf16.mxu0 %v2311
    %2513 = vmatpush1.bf16.msra.mxu0 %v2310
    %2514 = vmatprep.mubr.bf16.mxu0 %v2166
    %2515 = vmatmul.mubr.bf16.gmra.mrb[0].mxu0 %v2154
    %v2516 = vpop.f32.mrb[0].mxu0
    %v2517 = vadd.f32 0.0, %v2516
    %v2518 = vpop.f32.mrb[0].mxu0
    %v2519 = vadd.f32 0.0, %v2518
    %v2520 = vpop.f32.mrb[0].mxu0
    %v2521 = vadd.f32 0.0, %v2520
    %v2522 = vpop.f32.mrb[0].mxu0
    %v2523 = vadd.f32 0.0, %v2522
    %2524 = vmatprep.mubr.bf16.mxu0 %v2214
    %2525 = vmatmul.mubr.bf16.gmra.mrb[0].mxu0 %v2202
    %v2526 = vpop.f32.mrb[0].mxu0
    %v2527 = vadd.f32 0.0, %v2526
    %v2528 = vpop.f32.mrb[0].mxu0
    %v2529 = vadd.f32 0.0, %v2528
    %v2530 = vpop.f32.mrb[0].mxu0
    %v2531 = vadd.f32 0.0, %v2530
    %v2532 = vpop.f32.mrb[0].mxu0
    %v2533 = vadd.f32 0.0, %v2532
    %2534 = vdwg.mxu0
    %2535 = vmatprep.subr.bf16.mxu0 %v2315
    %2536 = vmatpush1.bf16.msra.mxu0 %v2314
    %2537 = vmatprep.subr.bf16.mxu0 %v2319
    %2538 = vmatpush1.bf16.msra.mxu0 %v2318
    %2539 = vmatprep.subr.bf16.mxu0 %v2323
    %2540 = vmatpush1.bf16.msra.mxu0 %v2322
    %2541 = vmatprep.subr.bf16.mxu0 %v2327
    %2542 = vmatpush1.bf16.msra.mxu0 %v2326
    %2543 = vmatprep.subr.bf16.mxu0 %v2331
    %2544 = vmatpush1.bf16.msra.mxu0 %v2330
    %2545 = vmatprep.subr.bf16.mxu0 %v2335
    %2546 = vmatpush1.bf16.msra.mxu0 %v2334
    %2547 = vmatprep.subr.bf16.mxu0 %v2339
    %2548 = vmatpush1.bf16.msra.mxu0 %v2338
    %2549 = vmatprep.subr.bf16.mxu0 %v2343
    %2550 = vmatpush1.bf16.msra.mxu0 %v2342
    %2551 = vmatprep.subr.bf16.mxu0 %v2347
    %2552 = vmatpush1.bf16.msra.mxu0 %v2346
    %2553 = vmatprep.subr.bf16.mxu0 %v2351
    %2554 = vmatpush1.bf16.msra.mxu0 %v2350
    %2555 = vmatprep.subr.bf16.mxu0 %v2355
    %2556 = vmatpush1.bf16.msra.mxu0 %v2354
    %2557 = vmatprep.subr.bf16.mxu0 %v2359
    %2558 = vmatpush1.bf16.msra.mxu0 %v2358
    %2559 = vmatprep.subr.bf16.mxu0 %v2363
    %2560 = vmatpush1.bf16.msra.mxu0 %v2362
    %2561 = vmatprep.subr.bf16.mxu0 %v2367
    %2562 = vmatpush1.bf16.msra.mxu0 %v2366
    %2563 = vmatprep.subr.bf16.mxu0 %v2371
    %2564 = vmatpush1.bf16.msra.mxu0 %v2370
    %2565 = vmatprep.subr.bf16.mxu0 %v2375
    %2566 = vmatpush1.bf16.msra.mxu0 %v2374
    %2567 = vmatprep.mubr.bf16.mxu0 %v2190
    %2568 = vmatmul.mubr.bf16.gmra.mrb[0].mxu0 %v2178
    %v2569 = vpop.f32.mrb[0].mxu0
    %v2570 = vadd.f32 %v2517, %v2569
    %v2571 = vpop.f32.mrb[0].mxu0
    %v2572 = vadd.f32 %v2519, %v2571
    %v2573 = vpop.f32.mrb[0].mxu0
    %v2574 = vadd.f32 %v2521, %v2573
    %v2575 = vpop.f32.mrb[0].mxu0
    %v2576 = vadd.f32 %v2523, %v2575
    %2577 = vmatprep.mubr.bf16.mxu0 %v2238
    %2578 = vmatmul.mubr.bf16.gmra.mrb[0].mxu0 %v2226
    %v2579 = vpop.f32.mrb[0].mxu0
    %v2580 = vadd.f32 %v2527, %v2579
    %v2581 = vpop.f32.mrb[0].mxu0
    %v2582 = vadd.f32 %v2529, %v2581
    %v2583 = vpop.f32.mrb[0].mxu0
    %v2584 = vadd.f32 %v2531, %v2583
    %v2585 = vpop.f32.mrb[0].mxu0
    %v2586 = vadd.f32 %v2533, %v2585
    %2587 = vdwg.mxu0
    %2588 = vmatprep.subr.bf16.mxu0 %v2008
    %2589 = vmatpush1.bf16.msra.mxu0 %v2007
    %2590 = vmatprep.subr.bf16.mxu0 %v2012
    %2591 = vmatpush1.bf16.msra.mxu0 %v2011
    %2592 = vmatprep.subr.bf16.mxu0 %v2016
    %2593 = vmatpush1.bf16.msra.mxu0 %v2015
    %2594 = vmatprep.subr.bf16.mxu0 %v2020
    %2595 = vmatpush1.bf16.msra.mxu0 %v2019
    %2596 = vmatprep.subr.bf16.mxu0 %v2024
    %2597 = vmatpush1.bf16.msra.mxu0 %v2023
    %2598 = vmatprep.subr.bf16.mxu0 %v2028
    %2599 = vmatpush1.bf16.msra.mxu0 %v2027
    %2600 = vmatprep.subr.bf16.mxu0 %v2032
    %2601 = vmatpush1.bf16.msra.mxu0 %v2031
    %2602 = vmatprep.subr.bf16.mxu0 %v2036
    %2603 = vmatpush1.bf16.msra.mxu0 %v2035
    %2604 = vmatprep.subr.bf16.mxu0 %v2040
    %2605 = vmatpush1.bf16.msra.mxu0 %v2039
    %2606 = vmatprep.subr.bf16.mxu0 %v2044
    %2607 = vmatpush1.bf16.msra.mxu0 %v2043
    %2608 = vmatprep.subr.bf16.mxu0 %v2048
    %2609 = vmatpush1.bf16.msra.mxu0 %v2047
    %2610 = vmatprep.subr.bf16.mxu0 %v2052
    %2611 = vmatpush1.bf16.msra.mxu0 %v2051
    %2612 = vmatprep.subr.bf16.mxu0 %v2056
    %2613 = vmatpush1.bf16.msra.mxu0 %v2055
    %2614 = vmatprep.subr.bf16.mxu0 %v2060
    %2615 = vmatpush1.bf16.msra.mxu0 %v2059
    %2616 = vmatprep.subr.bf16.mxu0 %v2064
    %2617 = vmatpush1.bf16.msra.mxu0 %v2063
    %2618 = vmatprep.subr.bf16.mxu0 %v2068
    %2619 = vmatpush1.bf16.msra.mxu0 %v2067
    %2620 = vmatprep.mubr.bf16.mxu0 %v1980
    %2621 = vmatmul.mubr.bf16.gmra.mrb[0].mxu0 %v1977
    %v2622 = vpop.f32.mrb[0].mxu0
    %v2623 = vadd.f32 %v2464, %v2622
    %v2624 = vpop.f32.mrb[0].mxu0
    %v2625 = vadd.f32 %v2466, %v2624
    %v2626 = vpop.f32.mrb[0].mxu0
    %v2627 = vadd.f32 %v2468, %v2626
    %v2628 = vpop.f32.mrb[0].mxu0
    %v2629 = vadd.f32 %v2470, %v2628
    %2630 = vmatprep.mubr.bf16.mxu0 %v1992
    %2631 = vmatmul.mubr.bf16.gmra.mrb[0].mxu0 %v1989
    %v2632 = vpop.f32.mrb[0].mxu0
    %v2633 = vadd.f32 %v2474, %v2632
    %v2634 = vpop.f32.mrb[0].mxu0
    %v2635 = vadd.f32 %v2476, %v2634
    %v2636 = vpop.f32.mrb[0].mxu0
    %v2637 = vadd.f32 %v2478, %v2636
    %v2638 = vpop.f32.mrb[0].mxu0
    %v2639 = vadd.f32 %v2480, %v2638
    %2640 = vdwg.mxu0
    %2641 = vmatprep.subr.bf16.mxu0 %v2072
    %2642 = vmatpush1.bf16.msra.mxu0 %v2071
    %2643 = vmatprep.subr.bf16.mxu0 %v2076
    %2644 = vmatpush1.bf16.msra.mxu0 %v2075
    %2645 = vmatprep.subr.bf16.mxu0 %v2080
    %2646 = vmatpush1.bf16.msra.mxu0 %v2079
    %2647 = vmatprep.subr.bf16.mxu0 %v2084
    %2648 = vmatpush1.bf16.msra.mxu0 %v2083
    %2649 = vmatprep.subr.bf16.mxu0 %v2088
    %2650 = vmatpush1.bf16.msra.mxu0 %v2087
    %2651 = vmatprep.subr.bf16.mxu0 %v2092
    %2652 = vmatpush1.bf16.msra.mxu0 %v2091
    %2653 = vmatprep.subr.bf16.mxu0 %v2096
    %2654 = vmatpush1.bf16.msra.mxu0 %v2095
    %2655 = vmatprep.subr.bf16.mxu0 %v2100
    %2656 = vmatpush1.bf16.msra.mxu0 %v2099
    %2657 = vmatprep.subr.bf16.mxu0 %v2104
    %2658 = vmatpush1.bf16.msra.mxu0 %v2103
    %2659 = vmatprep.subr.bf16.mxu0 %v2108
    %2660 = vmatpush1.bf16.msra.mxu0 %v2107
    %2661 = vmatprep.subr.bf16.mxu0 %v2112
    %2662 = vmatpush1.bf16.msra.mxu0 %v2111
    %2663 = vmatprep.subr.bf16.mxu0 %v2116
    %2664 = vmatpush1.bf16.msra.mxu0 %v2115
    %2665 = vmatprep.subr.bf16.mxu0 %v2120
    %2666 = vmatpush1.bf16.msra.mxu0 %v2119
    %2667 = vmatprep.subr.bf16.mxu0 %v2124
    %2668 = vmatpush1.bf16.msra.mxu0 %v2123
    %2669 = vmatprep.subr.bf16.mxu0 %v2128
    %2670 = vmatpush1.bf16.msra.mxu0 %v2127
    %2671 = vmatprep.subr.bf16.mxu0 %v2132
    %2672 = vmatpush1.bf16.msra.mxu0 %v2131
    %2673 = vmatprep.mubr.bf16.mxu0 %v1986
    %2674 = vmatmul.mubr.bf16.gmra.mrb[0].mxu0 %v1983
    %v2675 = vpop.f32.mrb[0].mxu0
    %v2676 = vadd.f32 %v2623, %v2675
    %v2677 = vpop.f32.mrb[0].mxu0
    %v2678 = vadd.f32 %v2625, %v2677
    %v2679 = vpop.f32.mrb[0].mxu0
    %v2680 = vadd.f32 %v2627, %v2679
    %v2681 = vpop.f32.mrb[0].mxu0
    %v2682 = vadd.f32 %v2629, %v2681
    %2683 = vmatprep.mubr.bf16.mxu0 %v1998
    %2684 = vmatmul.mubr.bf16.gmra.mrb[0].mxu0 %v1995
    %v2685 = vpop.f32.mrb[0].mxu0
    %v2686 = vadd.f32 %v2633, %v2685
    %v2687 = vpop.f32.mrb[0].mxu0
    %v2688 = vadd.f32 %v2635, %v2687
    %v2689 = vpop.f32.mrb[0].mxu0
    %v2690 = vadd.f32 %v2637, %v2689
    %v2691 = vpop.f32.mrb[0].mxu0
    %v2692 = vadd.f32 %v2639, %v2691
    %2693 = vdwg.mxu0
    %2694 = vmatprep.subr.bf16.mxu0 %v2010
    %2695 = vmatpush1.bf16.msra.mxu0 %v2009
    %2696 = vmatprep.subr.bf16.mxu0 %v2014
    %2697 = vmatpush1.bf16.msra.mxu0 %v2013
    %2698 = vmatprep.subr.bf16.mxu0 %v2018
    %2699 = vmatpush1.bf16.msra.mxu0 %v2017
    %2700 = vmatprep.subr.bf16.mxu0 %v2022
    %2701 = vmatpush1.bf16.msra.mxu0 %v2021
    %2702 = vmatprep.subr.bf16.mxu0 %v2026
    %2703 = vmatpush1.bf16.msra.mxu0 %v2025
    %2704 = vmatprep.subr.bf16.mxu0 %v2030
    %2705 = vmatpush1.bf16.msra.mxu0 %v2029
    %2706 = vmatprep.subr.bf16.mxu0 %v2034
    %2707 = vmatpush1.bf16.msra.mxu0 %v2033
    %2708 = vmatprep.subr.bf16.mxu0 %v2038
    %2709 = vmatpush1.bf16.msra.mxu0 %v2037
    %2710 = vmatprep.subr.bf16.mxu0 %v2042
    %2711 = vmatpush1.bf16.msra.mxu0 %v2041
    %2712 = vmatprep.subr.bf16.mxu0 %v2046
    %2713 = vmatpush1.bf16.msra.mxu0 %v2045
    %2714 = vmatprep.subr.bf16.mxu0 %v2050
    %2715 = vmatpush1.bf16.msra.mxu0 %v2049
    %2716 = vmatprep.subr.bf16.mxu0 %v2054
    %2717 = vmatpush1.bf16.msra.mxu0 %v2053
    %2718 = vmatprep.subr.bf16.mxu0 %v2058
    %2719 = vmatpush1.bf16.msra.mxu0 %v2057
    %2720 = vmatprep.subr.bf16.mxu0 %v2062
    %2721 = vmatpush1.bf16.msra.mxu0 %v2061
    %2722 = vmatprep.subr.bf16.mxu0 %v2066
    %2723 = vmatpush1.bf16.msra.mxu0 %v2065
    %2724 = vmatprep.subr.bf16.mxu0 %v2070
    %2725 = vmatpush1.bf16.msra.mxu0 %v2069
    %2726 = vmatprep.mubr.bf16.mxu0 %v1980
    %2727 = vmatmul.mubr.bf16.gmra.mrb[0].mxu0 %v1977
    %v2728 = vpop.f32.mrb[0].mxu0
    %v2729 = vadd.f32 %v2570, %v2728
    %v2730 = vpop.f32.mrb[0].mxu0
    %v2731 = vadd.f32 %v2572, %v2730
    %v2732 = vpop.f32.mrb[0].mxu0
    %v2733 = vadd.f32 %v2574, %v2732
    %v2734 = vpop.f32.mrb[0].mxu0
    %v2735 = vadd.f32 %v2576, %v2734
    %2736 = vmatprep.mubr.bf16.mxu0 %v1992
    %2737 = vmatmul.mubr.bf16.gmra.mrb[0].mxu0 %v1989
    %v2738 = vpop.f32.mrb[0].mxu0
    %v2739 = vadd.f32 %v2580, %v2738
    %v2740 = vpop.f32.mrb[0].mxu0
    %v2741 = vadd.f32 %v2582, %v2740
    %v2742 = vpop.f32.mrb[0].mxu0
    %v2743 = vadd.f32 %v2584, %v2742
    %v2744 = vpop.f32.mrb[0].mxu0
    %v2745 = vadd.f32 %v2586, %v2744
    %2746 = vdwg.mxu0
    %2747 = vmatprep.subr.bf16.mxu0 %v2074
    %2748 = vmatpush1.bf16.msra.mxu0 %v2073
    %2749 = vmatprep.subr.bf16.mxu0 %v2078
    %2750 = vmatpush1.bf16.msra.mxu0 %v2077
    %2751 = vmatprep.subr.bf16.mxu0 %v2082
    %2752 = vmatpush1.bf16.msra.mxu0 %v2081
    %2753 = vmatprep.subr.bf16.mxu0 %v2086
    %2754 = vmatpush1.bf16.msra.mxu0 %v2085
    %2755 = vmatprep.subr.bf16.mxu0 %v2090
    %2756 = vmatpush1.bf16.msra.mxu0 %v2089
    %2757 = vmatprep.subr.bf16.mxu0 %v2094
    %2758 = vmatpush1.bf16.msra.mxu0 %v2093
    %2759 = vmatprep.subr.bf16.mxu0 %v2098
    %2760 = vmatpush1.bf16.msra.mxu0 %v2097
    %2761 = vmatprep.subr.bf16.mxu0 %v2102
    %2762 = vmatpush1.bf16.msra.mxu0 %v2101
    %2763 = vmatprep.subr.bf16.mxu0 %v2106
    %2764 = vmatpush1.bf16.msra.mxu0 %v2105
    %2765 = vmatprep.subr.bf16.mxu0 %v2110
    %2766 = vmatpush1.bf16.msra.mxu0 %v2109
    %2767 = vmatprep.subr.bf16.mxu0 %v2114
    %2768 = vmatpush1.bf16.msra.mxu0 %v2113
    %2769 = vmatprep.subr.bf16.mxu0 %v2118
    %2770 = vmatpush1.bf16.msra.mxu0 %v2117
    %2771 = vmatprep.subr.bf16.mxu0 %v2122
    %2772 = vmatpush1.bf16.msra.mxu0 %v2121
    %2773 = vmatprep.subr.bf16.mxu0 %v2126
    %2774 = vmatpush1.bf16.msra.mxu0 %v2125
    %2775 = vmatprep.subr.bf16.mxu0 %v2130
    %2776 = vmatpush1.bf16.msra.mxu0 %v2129
    %2777 = vmatprep.subr.bf16.mxu0 %v2134
    %2778 = vmatpush1.bf16.msra.mxu0 %v2133
    %2779 = vmatprep.mubr.bf16.mxu0 %v1986
    %2780 = vmatmul.mubr.bf16.gmra.mrb[0].mxu0 %v1983
    %v2781 = vpop.f32.mrb[0].mxu0
    %v2782 = vadd.f32 %v2729, %v2781
    %v2783 = vpop.f32.mrb[0].mxu0
    %v2784 = vadd.f32 %v2731, %v2783
    %v2785 = vpop.f32.mrb[0].mxu0
    %v2786 = vadd.f32 %v2733, %v2785
    %v2787 = vpop.f32.mrb[0].mxu0
    %v2788 = vadd.f32 %v2735, %v2787
    %2789 = vmatprep.mubr.bf16.mxu0 %v1998
    %2790 = vmatmul.mubr.bf16.gmra.mrb[0].mxu0 %v1995
    %v2791 = vpop.f32.mrb[0].mxu0
    %v2792 = vadd.f32 %v2739, %v2791
    %v2793 = vpop.f32.mrb[0].mxu0
    %v2794 = vadd.f32 %v2741, %v2793
    %v2795 = vpop.f32.mrb[0].mxu0
    %v2796 = vadd.f32 %v2743, %v2795
    %v2797 = vpop.f32.mrb[0].mxu0
    %v2798 = vadd.f32 %v2745, %v2797
    %2799 = vdwg.mxu0
    %s2800 = scalar_lea.vmem [#allocation4], 2048
    %v2801 = vld [vmem:[%s2800] sm:$0xff]
    %v2802 = vld [vmem:[%s2800 + $0x8] sm:$0xff]
    %v2803 = vld [vmem:[%s2800 + $0x10] sm:$0xff]
    %v2804 = vld [vmem:[%s2800 + $0x18] sm:$0xff]
    %v2805 = vld [vmem:[%s2800 + $0x20] sm:$0xff]
    %v2806 = vld [vmem:[%s2800 + $0x28] sm:$0xff]
    %v2807 = vld [vmem:[%s2800 + $0x30] sm:$0xff]
    %v2808 = vld [vmem:[%s2800 + $0x38] sm:$0xff]
    %v2809 = vld [vmem:[%s2800 + $0x40] sm:$0xff]
    %v2810 = vld [vmem:[%s2800 + $0x48] sm:$0xff]
    %v2811 = vld [vmem:[%s2800 + $0x50] sm:$0xff]
    %v2812 = vld [vmem:[%s2800 + $0x58] sm:$0xff]
    %v2813 = vld [vmem:[%s2800 + $0x60] sm:$0xff]
    %v2814 = vld [vmem:[%s2800 + $0x68] sm:$0xff]
    %v2815 = vld [vmem:[%s2800 + $0x70] sm:$0xff]
    %v2816 = vld [vmem:[%s2800 + $0x78] sm:$0xff]
    %v2817 = vld [vmem:[%s2800 + $0x80] sm:$0xff]
    %v2818 = vld [vmem:[%s2800 + $0x88] sm:$0xff]
    %v2819 = vld [vmem:[%s2800 + $0x90] sm:$0xff]
    %v2820 = vld [vmem:[%s2800 + $0x98] sm:$0xff]
    %v2821 = vld [vmem:[%s2800 + $0xa0] sm:$0xff]
    %v2822 = vld [vmem:[%s2800 + $0xa8] sm:$0xff]
    %v2823 = vld [vmem:[%s2800 + $0xb0] sm:$0xff]
    %v2824 = vld [vmem:[%s2800 + $0xb8] sm:$0xff]
    %v2825 = vld [vmem:[%s2800 + $0xc0] sm:$0xff]
    %v2826 = vld [vmem:[%s2800 + $0xc8] sm:$0xff]
    %v2827 = vld [vmem:[%s2800 + $0xd0] sm:$0xff]
    %v2828 = vld [vmem:[%s2800 + $0xd8] sm:$0xff]
    %v2829 = vld [vmem:[%s2800 + $0xe0] sm:$0xff]
    %v2830 = vld [vmem:[%s2800 + $0xe8] sm:$0xff]
    %v2831 = vld [vmem:[%s2800 + $0xf0] sm:$0xff]
    %v2832 = vld [vmem:[%s2800 + $0xf8] sm:$0xff]
    %v2833 = vld [vmem:[%s2800 + $0x100] sm:$0xff]
    %v2834 = vld [vmem:[%s2800 + $0x108] sm:$0xff]
    %v2835 = vld [vmem:[%s2800 + $0x110] sm:$0xff]
    %v2836 = vld [vmem:[%s2800 + $0x118] sm:$0xff]
    %v2837 = vld [vmem:[%s2800 + $0x120] sm:$0xff]
    %v2838 = vld [vmem:[%s2800 + $0x128] sm:$0xff]
    %v2839 = vld [vmem:[%s2800 + $0x130] sm:$0xff]
    %v2840 = vld [vmem:[%s2800 + $0x138] sm:$0xff]
    %v2841 = vld [vmem:[%s2800 + $0x140] sm:$0xff]
    %v2842 = vld [vmem:[%s2800 + $0x148] sm:$0xff]
    %v2843 = vld [vmem:[%s2800 + $0x150] sm:$0xff]
    %v2844 = vld [vmem:[%s2800 + $0x158] sm:$0xff]
    %v2845 = vld [vmem:[%s2800 + $0x160] sm:$0xff]
    %v2846 = vld [vmem:[%s2800 + $0x168] sm:$0xff]
    %v2847 = vld [vmem:[%s2800 + $0x170] sm:$0xff]
    %v2848 = vld [vmem:[%s2800 + $0x178] sm:$0xff]
    %v2849 = vld [vmem:[%s2800 + $0x180] sm:$0xff]
    %v2850 = vld [vmem:[%s2800 + $0x188] sm:$0xff]
    %v2851 = vld [vmem:[%s2800 + $0x190] sm:$0xff]
    %v2852 = vld [vmem:[%s2800 + $0x198] sm:$0xff]
    %v2853 = vld [vmem:[%s2800 + $0x1a0] sm:$0xff]
    %v2854 = vld [vmem:[%s2800 + $0x1a8] sm:$0xff]
    %v2855 = vld [vmem:[%s2800 + $0x1b0] sm:$0xff]
    %v2856 = vld [vmem:[%s2800 + $0x1b8] sm:$0xff]
    %v2857 = vld [vmem:[%s2800 + $0x1c0] sm:$0xff]
    %v2858 = vld [vmem:[%s2800 + $0x1c8] sm:$0xff]
    %v2859 = vld [vmem:[%s2800 + $0x1d0] sm:$0xff]
    %v2860 = vld [vmem:[%s2800 + $0x1d8] sm:$0xff]
    %v2861 = vld [vmem:[%s2800 + $0x1e0] sm:$0xff]
    %v2862 = vld [vmem:[%s2800 + $0x1e8] sm:$0xff]
    %v2863 = vld [vmem:[%s2800 + $0x1f0] sm:$0xff]
    %v2864 = vld [vmem:[%s2800 + $0x1f8] sm:$0xff]
    %v2865 = vld [vmem:[%s2800 + $0x200] sm:$0xff]
    %v2866 = vld [vmem:[%s2800 + $0x208] sm:$0xff]
    %v2867 = vld [vmem:[%s2800 + $0x210] sm:$0xff]
    %v2868 = vld [vmem:[%s2800 + $0x218] sm:$0xff]
    %v2869 = vld [vmem:[%s2800 + $0x220] sm:$0xff]
    %v2870 = vld [vmem:[%s2800 + $0x228] sm:$0xff]
    %v2871 = vld [vmem:[%s2800 + $0x230] sm:$0xff]
    %v2872 = vld [vmem:[%s2800 + $0x238] sm:$0xff]
    %v2873 = vld [vmem:[%s2800 + $0x240] sm:$0xff]
    %v2874 = vld [vmem:[%s2800 + $0x248] sm:$0xff]
    %v2875 = vld [vmem:[%s2800 + $0x250] sm:$0xff]
    %v2876 = vld [vmem:[%s2800 + $0x258] sm:$0xff]
    %v2877 = vld [vmem:[%s2800 + $0x260] sm:$0xff]
    %v2878 = vld [vmem:[%s2800 + $0x268] sm:$0xff]
    %v2879 = vld [vmem:[%s2800 + $0x270] sm:$0xff]
    %v2880 = vld [vmem:[%s2800 + $0x278] sm:$0xff]
    %v2881 = vld [vmem:[%s2800 + $0x280] sm:$0xff]
    %v2882 = vld [vmem:[%s2800 + $0x288] sm:$0xff]
    %v2883 = vld [vmem:[%s2800 + $0x290] sm:$0xff]
    %v2884 = vld [vmem:[%s2800 + $0x298] sm:$0xff]
    %v2885 = vld [vmem:[%s2800 + $0x2a0] sm:$0xff]
    %v2886 = vld [vmem:[%s2800 + $0x2a8] sm:$0xff]
    %v2887 = vld [vmem:[%s2800 + $0x2b0] sm:$0xff]
    %v2888 = vld [vmem:[%s2800 + $0x2b8] sm:$0xff]
    %v2889 = vld [vmem:[%s2800 + $0x2c0] sm:$0xff]
    %v2890 = vld [vmem:[%s2800 + $0x2c8] sm:$0xff]
    %v2891 = vld [vmem:[%s2800 + $0x2d0] sm:$0xff]
    %v2892 = vld [vmem:[%s2800 + $0x2d8] sm:$0xff]
    %v2893 = vld [vmem:[%s2800 + $0x2e0] sm:$0xff]
    %v2894 = vld [vmem:[%s2800 + $0x2e8] sm:$0xff]
    %v2895 = vld [vmem:[%s2800 + $0x2f0] sm:$0xff]
    %v2896 = vld [vmem:[%s2800 + $0x2f8] sm:$0xff]
    %v2897 = vld [vmem:[%s2800 + $0x300] sm:$0xff]
    %v2898 = vld [vmem:[%s2800 + $0x308] sm:$0xff]
    %v2899 = vld [vmem:[%s2800 + $0x310] sm:$0xff]
    %v2900 = vld [vmem:[%s2800 + $0x318] sm:$0xff]
    %v2901 = vld [vmem:[%s2800 + $0x320] sm:$0xff]
    %v2902 = vld [vmem:[%s2800 + $0x328] sm:$0xff]
    %v2903 = vld [vmem:[%s2800 + $0x330] sm:$0xff]
    %v2904 = vld [vmem:[%s2800 + $0x338] sm:$0xff]
    %v2905 = vld [vmem:[%s2800 + $0x340] sm:$0xff]
    %v2906 = vld [vmem:[%s2800 + $0x348] sm:$0xff]
    %v2907 = vld [vmem:[%s2800 + $0x350] sm:$0xff]
    %v2908 = vld [vmem:[%s2800 + $0x358] sm:$0xff]
    %v2909 = vld [vmem:[%s2800 + $0x360] sm:$0xff]
    %v2910 = vld [vmem:[%s2800 + $0x368] sm:$0xff]
    %v2911 = vld [vmem:[%s2800 + $0x370] sm:$0xff]
    %v2912 = vld [vmem:[%s2800 + $0x378] sm:$0xff]
    %v2913 = vld [vmem:[%s2800 + $0x380] sm:$0xff]
    %v2914 = vld [vmem:[%s2800 + $0x388] sm:$0xff]
    %v2915 = vld [vmem:[%s2800 + $0x390] sm:$0xff]
    %v2916 = vld [vmem:[%s2800 + $0x398] sm:$0xff]
    %v2917 = vld [vmem:[%s2800 + $0x3a0] sm:$0xff]
    %v2918 = vld [vmem:[%s2800 + $0x3a8] sm:$0xff]
    %v2919 = vld [vmem:[%s2800 + $0x3b0] sm:$0xff]
    %v2920 = vld [vmem:[%s2800 + $0x3b8] sm:$0xff]
    %v2921 = vld [vmem:[%s2800 + $0x3c0] sm:$0xff]
    %v2922 = vld [vmem:[%s2800 + $0x3c8] sm:$0xff]
    %v2923 = vld [vmem:[%s2800 + $0x3d0] sm:$0xff]
    %v2924 = vld [vmem:[%s2800 + $0x3d8] sm:$0xff]
    %v2925 = vld [vmem:[%s2800 + $0x3e0] sm:$0xff]
    %v2926 = vld [vmem:[%s2800 + $0x3e8] sm:$0xff]
    %v2927 = vld [vmem:[%s2800 + $0x3f0] sm:$0xff]
    %v2928 = vld [vmem:[%s2800 + $0x3f8] sm:$0xff]
    %2929 = vmatprep.subr.bf16.mxu0 %v2802
    %2930 = vmatpush1.bf16.msra.mxu0 %v2801
    %2931 = vmatprep.subr.bf16.mxu0 %v2806
    %2932 = vmatpush1.bf16.msra.mxu0 %v2805
    %2933 = vmatprep.subr.bf16.mxu0 %v2810
    %2934 = vmatpush1.bf16.msra.mxu0 %v2809
    %2935 = vmatprep.subr.bf16.mxu0 %v2814
    %2936 = vmatpush1.bf16.msra.mxu0 %v2813
    %2937 = vmatprep.subr.bf16.mxu0 %v2818
    %2938 = vmatpush1.bf16.msra.mxu0 %v2817
    %2939 = vmatprep.subr.bf16.mxu0 %v2822
    %2940 = vmatpush1.bf16.msra.mxu0 %v2821
    %2941 = vmatprep.subr.bf16.mxu0 %v2826
    %2942 = vmatpush1.bf16.msra.mxu0 %v2825
    %2943 = vmatprep.subr.bf16.mxu0 %v2830
    %2944 = vmatpush1.bf16.msra.mxu0 %v2829
    %2945 = vmatprep.subr.bf16.mxu0 %v2834
    %2946 = vmatpush1.bf16.msra.mxu0 %v2833
    %2947 = vmatprep.subr.bf16.mxu0 %v2838
    %2948 = vmatpush1.bf16.msra.mxu0 %v2837
    %2949 = vmatprep.subr.bf16.mxu0 %v2842
    %2950 = vmatpush1.bf16.msra.mxu0 %v2841
    %2951 = vmatprep.subr.bf16.mxu0 %v2846
    %2952 = vmatpush1.bf16.msra.mxu0 %v2845
    %2953 = vmatprep.subr.bf16.mxu0 %v2850
    %2954 = vmatpush1.bf16.msra.mxu0 %v2849
    %2955 = vmatprep.subr.bf16.mxu0 %v2854
    %2956 = vmatpush1.bf16.msra.mxu0 %v2853
    %2957 = vmatprep.subr.bf16.mxu0 %v2858
    %2958 = vmatpush1.bf16.msra.mxu0 %v2857
    %2959 = vmatprep.subr.bf16.mxu0 %v2862
    %2960 = vmatpush1.bf16.msra.mxu0 %v2861
    %2961 = vmatprep.mubr.bf16.mxu0 %v2136
    %2962 = vmatmul.mubr.bf16.gmra.mrb[0].mxu0 %v2135
    %v2963 = vpop.f32.mrb[0].mxu0
    %v2964 = vadd.f32 0.0, %v2963
    %v2965 = vpop.f32.mrb[0].mxu0
    %v2966 = vadd.f32 0.0, %v2965
    %v2967 = vpop.f32.mrb[0].mxu0
    %v2968 = vadd.f32 0.0, %v2967
    %v2969 = vpop.f32.mrb[0].mxu0
    %v2970 = vadd.f32 0.0, %v2969
    %2971 = vmatprep.mubr.bf16.mxu0 %v2140
    %2972 = vmatmul.mubr.bf16.gmra.mrb[0].mxu0 %v2139
    %v2973 = vpop.f32.mrb[0].mxu0
    %v2974 = vadd.f32 0.0, %v2973
    %v2975 = vpop.f32.mrb[0].mxu0
    %v2976 = vadd.f32 0.0, %v2975
    %v2977 = vpop.f32.mrb[0].mxu0
    %v2978 = vadd.f32 0.0, %v2977
    %v2979 = vpop.f32.mrb[0].mxu0
    %v2980 = vadd.f32 0.0, %v2979
    %2981 = vdwg.mxu0
    %2982 = vmatprep.subr.bf16.mxu0 %v2866
    %2983 = vmatpush1.bf16.msra.mxu0 %v2865
    %2984 = vmatprep.subr.bf16.mxu0 %v2870
    %2985 = vmatpush1.bf16.msra.mxu0 %v2869
    %2986 = vmatprep.subr.bf16.mxu0 %v2874
    %2987 = vmatpush1.bf16.msra.mxu0 %v2873
    %2988 = vmatprep.subr.bf16.mxu0 %v2878
    %2989 = vmatpush1.bf16.msra.mxu0 %v2877
    %2990 = vmatprep.subr.bf16.mxu0 %v2882
    %2991 = vmatpush1.bf16.msra.mxu0 %v2881
    %2992 = vmatprep.subr.bf16.mxu0 %v2886
    %2993 = vmatpush1.bf16.msra.mxu0 %v2885
    %2994 = vmatprep.subr.bf16.mxu0 %v2890
    %2995 = vmatpush1.bf16.msra.mxu0 %v2889
    %2996 = vmatprep.subr.bf16.mxu0 %v2894
    %2997 = vmatpush1.bf16.msra.mxu0 %v2893
    %2998 = vmatprep.subr.bf16.mxu0 %v2898
    %2999 = vmatpush1.bf16.msra.mxu0 %v2897
    %3000 = vmatprep.subr.bf16.mxu0 %v2902
    %3001 = vmatpush1.bf16.msra.mxu0 %v2901
    %3002 = vmatprep.subr.bf16.mxu0 %v2906
    %3003 = vmatpush1.bf16.msra.mxu0 %v2905
    %3004 = vmatprep.subr.bf16.mxu0 %v2910
    %3005 = vmatpush1.bf16.msra.mxu0 %v2909
    %3006 = vmatprep.subr.bf16.mxu0 %v2914
    %3007 = vmatpush1.bf16.msra.mxu0 %v2913
    %3008 = vmatprep.subr.bf16.mxu0 %v2918
    %3009 = vmatpush1.bf16.msra.mxu0 %v2917
    %3010 = vmatprep.subr.bf16.mxu0 %v2922
    %3011 = vmatpush1.bf16.msra.mxu0 %v2921
    %3012 = vmatprep.subr.bf16.mxu0 %v2926
    %3013 = vmatpush1.bf16.msra.mxu0 %v2925
    %3014 = vmatprep.mubr.bf16.mxu0 %v2138
    %3015 = vmatmul.mubr.bf16.gmra.mrb[0].mxu0 %v2137
    %v3016 = vpop.f32.mrb[0].mxu0
    %v3017 = vadd.f32 %v2964, %v3016
    %v3018 = vpop.f32.mrb[0].mxu0
    %v3019 = vadd.f32 %v2966, %v3018
    %v3020 = vpop.f32.mrb[0].mxu0
    %v3021 = vadd.f32 %v2968, %v3020
    %v3022 = vpop.f32.mrb[0].mxu0
    %v3023 = vadd.f32 %v2970, %v3022
    %3024 = vmatprep.mubr.bf16.mxu0 %v2142
    %3025 = vmatmul.mubr.bf16.gmra.mrb[0].mxu0 %v2141
    %v3026 = vpop.f32.mrb[0].mxu0
    %v3027 = vadd.f32 %v2974, %v3026
    %v3028 = vpop.f32.mrb[0].mxu0
    %v3029 = vadd.f32 %v2976, %v3028
    %v3030 = vpop.f32.mrb[0].mxu0
    %v3031 = vadd.f32 %v2978, %v3030
    %v3032 = vpop.f32.mrb[0].mxu0
    %v3033 = vadd.f32 %v2980, %v3032
    %3034 = vdwg.mxu0
    %3035 = vmatprep.subr.bf16.mxu0 %v2804
    %3036 = vmatpush1.bf16.msra.mxu0 %v2803
    %3037 = vmatprep.subr.bf16.mxu0 %v2808
    %3038 = vmatpush1.bf16.msra.mxu0 %v2807
    %3039 = vmatprep.subr.bf16.mxu0 %v2812
    %3040 = vmatpush1.bf16.msra.mxu0 %v2811
    %3041 = vmatprep.subr.bf16.mxu0 %v2816
    %3042 = vmatpush1.bf16.msra.mxu0 %v2815
    %3043 = vmatprep.subr.bf16.mxu0 %v2820
    %3044 = vmatpush1.bf16.msra.mxu0 %v2819
    %3045 = vmatprep.subr.bf16.mxu0 %v2824
    %3046 = vmatpush1.bf16.msra.mxu0 %v2823
    %3047 = vmatprep.subr.bf16.mxu0 %v2828
    %3048 = vmatpush1.bf16.msra.mxu0 %v2827
    %3049 = vmatprep.subr.bf16.mxu0 %v2832
    %3050 = vmatpush1.bf16.msra.mxu0 %v2831
    %3051 = vmatprep.subr.bf16.mxu0 %v2836
    %3052 = vmatpush1.bf16.msra.mxu0 %v2835
    %3053 = vmatprep.subr.bf16.mxu0 %v2840
    %3054 = vmatpush1.bf16.msra.mxu0 %v2839
    %3055 = vmatprep.subr.bf16.mxu0 %v2844
    %3056 = vmatpush1.bf16.msra.mxu0 %v2843
    %3057 = vmatprep.subr.bf16.mxu0 %v2848
    %3058 = vmatpush1.bf16.msra.mxu0 %v2847
    %3059 = vmatprep.subr.bf16.mxu0 %v2852
    %3060 = vmatpush1.bf16.msra.mxu0 %v2851
    %3061 = vmatprep.subr.bf16.mxu0 %v2856
    %3062 = vmatpush1.bf16.msra.mxu0 %v2855
    %3063 = vmatprep.subr.bf16.mxu0 %v2860
    %3064 = vmatpush1.bf16.msra.mxu0 %v2859
    %3065 = vmatprep.subr.bf16.mxu0 %v2864
    %3066 = vmatpush1.bf16.msra.mxu0 %v2863
    %3067 = vmatprep.mubr.bf16.mxu0 %v2136
    %3068 = vmatmul.mubr.bf16.gmra.mrb[0].mxu0 %v2135
    %v3069 = vpop.f32.mrb[0].mxu0
    %v3070 = vadd.f32 0.0, %v3069
    %v3071 = vpop.f32.mrb[0].mxu0
    %v3072 = vadd.f32 0.0, %v3071
    %v3073 = vpop.f32.mrb[0].mxu0
    %v3074 = vadd.f32 0.0, %v3073
    %v3075 = vpop.f32.mrb[0].mxu0
    %v3076 = vadd.f32 0.0, %v3075
    %3077 = vmatprep.mubr.bf16.mxu0 %v2140
    %3078 = vmatmul.mubr.bf16.gmra.mrb[0].mxu0 %v2139
    %v3079 = vpop.f32.mrb[0].mxu0
    %v3080 = vadd.f32 0.0, %v3079
    %v3081 = vpop.f32.mrb[0].mxu0
    %v3082 = vadd.f32 0.0, %v3081
    %v3083 = vpop.f32.mrb[0].mxu0
    %v3084 = vadd.f32 0.0, %v3083
    %v3085 = vpop.f32.mrb[0].mxu0
    %v3086 = vadd.f32 0.0, %v3085
    %3087 = vdwg.mxu0
    %3088 = vmatprep.subr.bf16.mxu0 %v2868
    %3089 = vmatpush1.bf16.msra.mxu0 %v2867
    %3090 = vmatprep.subr.bf16.mxu0 %v2872
    %3091 = vmatpush1.bf16.msra.mxu0 %v2871
    %3092 = vmatprep.subr.bf16.mxu0 %v2876
    %3093 = vmatpush1.bf16.msra.mxu0 %v2875
    %3094 = vmatprep.subr.bf16.mxu0 %v2880
    %3095 = vmatpush1.bf16.msra.mxu0 %v2879
    %3096 = vmatprep.subr.bf16.mxu0 %v2884
    %3097 = vmatpush1.bf16.msra.mxu0 %v2883
    %3098 = vmatprep.subr.bf16.mxu0 %v2888
    %3099 = vmatpush1.bf16.msra.mxu0 %v2887
    %3100 = vmatprep.subr.bf16.mxu0 %v2892
    %3101 = vmatpush1.bf16.msra.mxu0 %v2891
    %3102 = vmatprep.subr.bf16.mxu0 %v2896
    %3103 = vmatpush1.bf16.msra.mxu0 %v2895
    %3104 = vmatprep.subr.bf16.mxu0 %v2900
    %3105 = vmatpush1.bf16.msra.mxu0 %v2899
    %3106 = vmatprep.subr.bf16.mxu0 %v2904
    %3107 = vmatpush1.bf16.msra.mxu0 %v2903
    %3108 = vmatprep.subr.bf16.mxu0 %v2908
    %3109 = vmatpush1.bf16.msra.mxu0 %v2907
    %3110 = vmatprep.subr.bf16.mxu0 %v2912
    %3111 = vmatpush1.bf16.msra.mxu0 %v2911
    %3112 = vmatprep.subr.bf16.mxu0 %v2916
    %3113 = vmatpush1.bf16.msra.mxu0 %v2915
    %3114 = vmatprep.subr.bf16.mxu0 %v2920
    %3115 = vmatpush1.bf16.msra.mxu0 %v2919
    %3116 = vmatprep.subr.bf16.mxu0 %v2924
    %3117 = vmatpush1.bf16.msra.mxu0 %v2923
    %3118 = vmatprep.subr.bf16.mxu0 %v2928
    %3119 = vmatpush1.bf16.msra.mxu0 %v2927
    %3120 = vmatprep.mubr.bf16.mxu0 %v2138
    %3121 = vmatmul.mubr.bf16.gmra.mrb[0].mxu0 %v2137
    %v3122 = vpop.f32.mrb[0].mxu0
    %v3123 = vadd.f32 %v3070, %v3122
    %v3124 = vpop.f32.mrb[0].mxu0
    %v3125 = vadd.f32 %v3072, %v3124
    %v3126 = vpop.f32.mrb[0].mxu0
    %v3127 = vadd.f32 %v3074, %v3126
    %v3128 = vpop.f32.mrb[0].mxu0
    %v3129 = vadd.f32 %v3076, %v3128
    %3130 = vmatprep.mubr.bf16.mxu0 %v2142
    %3131 = vmatmul.mubr.bf16.gmra.mrb[0].mxu0 %v2141
    %v3132 = vpop.f32.mrb[0].mxu0
    %v3133 = vadd.f32 %v3080, %v3132
    %v3134 = vpop.f32.mrb[0].mxu0
    %v3135 = vadd.f32 %v3082, %v3134
    %v3136 = vpop.f32.mrb[0].mxu0
    %v3137 = vadd.f32 %v3084, %v3136
    %v3138 = vpop.f32.mrb[0].mxu0
    %v3139 = vadd.f32 %v3086, %v3138
    %3140 = vdwg.mxu0
    %v3141 = vadd.f32 %v2676, %v3017
    %v3142 = vadd.f32 %v2678, %v3019
    %v3143 = vadd.f32 %v2782, %v3123
    %v3144 = vadd.f32 %v2784, %v3125
    %v3145 = vadd.f32 %v2680, %v3021
    %v3146 = vadd.f32 %v2682, %v3023
    %v3147 = vadd.f32 %v2786, %v3127
    %v3148 = vadd.f32 %v2788, %v3129
    %v3149 = vadd.f32 %v2686, %v3027
    %v3150 = vadd.f32 %v2688, %v3029
    %v3151 = vadd.f32 %v2792, %v3133
    %v3152 = vadd.f32 %v2794, %v3135
    %v3153 = vadd.f32 %v2690, %v3031
    %v3154 = vadd.f32 %v2692, %v3033
    %v3155 = vadd.f32 %v2796, %v3137
    %v3156 = vadd.f32 %v2798, %v3139
    %v3157 = vld [vmem:[#allocation3 + $0x20] sm:$0xff]
    %v3158 = vld [vmem:[#allocation3 + $0x28] sm:$0xff]
    %v3159 = vld [vmem:[#allocation3 + $0x30] sm:$0xff]
    %v3160 = vld [vmem:[#allocation3 + $0x38] sm:$0xff]
    %v3161 = vld [vmem:[#allocation3 + $0x40] sm:$0x1]
    %v3162 = vld [vmem:[#allocation3 + $0x48] sm:$0x1]
    %v3163 = vld [vmem:[#allocation3 + $0x50] sm:$0x1]
    %v3164 = vld [vmem:[#allocation3 + $0x58] sm:$0x1]
    %v3165 = vld [vmem:[#allocation3 + $0x80] sm:$0xff]
    %v3166 = vld [vmem:[#allocation3 + $0x88] sm:$0xff]
    %v3167 = vld [vmem:[#allocation3 + $0x90] sm:$0xff]
    %v3168 = vld [vmem:[#allocation3 + $0x98] sm:$0xff]
    %v3169 = vld [vmem:[#allocation3 + $0xa0] sm:$0x1]
    %v3170 = vld [vmem:[#allocation3 + $0xa8] sm:$0x1]
    %v3171 = vld [vmem:[#allocation3 + $0xb0] sm:$0x1]
    %v3172 = vld [vmem:[#allocation3 + $0xb8] sm:$0x1]
    %v3174 = vshrl.u32 %v3157, 16
    %v3176 = vshll.u32 %v3157, 16
    %v3178 = vrot.slane %v3176, 1
    %v3179 = vor.u32 %v3174, %v3178
    %v3181 = vshll.u32 %v3161, 16
    %v3183 = vrot.slane %v3181, 1
    %v3184 = vsel %vm1196, %v3179, %v3183
    %v3186 = vshrl.u32 %v3158, 16
    %v3188 = vshll.u32 %v3158, 16
    %v3190 = vrot.slane %v3188, 1
    %v3191 = vor.u32 %v3186, %v3190
    %v3193 = vshll.u32 %v3162, 16
    %v3195 = vrot.slane %v3193, 1
    %v3196 = vsel %vm1196, %v3191, %v3195
    %v3198 = vshrl.u32 %v3159, 16
    %v3200 = vshll.u32 %v3159, 16
    %v3202 = vrot.slane %v3200, 1
    %v3203 = vor.u32 %v3198, %v3202
    %v3205 = vshll.u32 %v3163, 16
    %v3207 = vrot.slane %v3205, 1
    %v3208 = vsel %vm1196, %v3203, %v3207
    %v3210 = vshrl.u32 %v3160, 16
    %v3212 = vshll.u32 %v3160, 16
    %v3214 = vrot.slane %v3212, 1
    %v3215 = vor.u32 %v3210, %v3214
    %v3217 = vshll.u32 %v3164, 16
    %v3219 = vrot.slane %v3217, 1
    %v3220 = vsel %vm1196, %v3215, %v3219
    %v3222 = vshrl.u32 %v3165, 16
    %v3224 = vshll.u32 %v3165, 16
    %v3226 = vrot.slane %v3224, 1
    %v3227 = vor.u32 %v3222, %v3226
    %v3229 = vshll.u32 %v3169, 16
    %v3231 = vrot.slane %v3229, 1
    %v3232 = vsel %vm1196, %v3227, %v3231
    %v3234 = vshrl.u32 %v3166, 16
    %v3236 = vshll.u32 %v3166, 16
    %v3238 = vrot.slane %v3236, 1
    %v3239 = vor.u32 %v3234, %v3238
    %v3241 = vshll.u32 %v3170, 16
    %v3243 = vrot.slane %v3241, 1
    %v3244 = vsel %vm1196, %v3239, %v3243
    %v3246 = vshrl.u32 %v3167, 16
    %v3248 = vshll.u32 %v3167, 16
    %v3250 = vrot.slane %v3248, 1
    %v3251 = vor.u32 %v3246, %v3250
    %v3253 = vshll.u32 %v3171, 16
    %v3255 = vrot.slane %v3253, 1
    %v3256 = vsel %vm1196, %v3251, %v3255
    %v3258 = vshrl.u32 %v3168, 16
    %v3260 = vshll.u32 %v3168, 16
    %v3262 = vrot.slane %v3260, 1
    %v3263 = vor.u32 %v3258, %v3262
    %v3265 = vshll.u32 %v3172, 16
    %v3267 = vrot.slane %v3265, 1
    %v3268 = vsel %vm1196, %v3263, %v3267
    %s3277 = scalar_lea.vmem [#allocation4], 3072
    %v3278 = vld [vmem:[%s3277] sm:$0xff]
    %v3279 = vld [vmem:[%s3277 + $0x8] sm:$0xff]
    %v3280 = vld [vmem:[%s3277 + $0x10] sm:$0xff]
    %v3281 = vld [vmem:[%s3277 + $0x18] sm:$0xff]
    %v3282 = vld [vmem:[%s3277 + $0x20] sm:$0xff]
    %v3283 = vld [vmem:[%s3277 + $0x28] sm:$0xff]
    %v3284 = vld [vmem:[%s3277 + $0x30] sm:$0xff]
    %v3285 = vld [vmem:[%s3277 + $0x38] sm:$0xff]
    %v3286 = vld [vmem:[%s3277 + $0x40] sm:$0xff]
    %v3287 = vld [vmem:[%s3277 + $0x48] sm:$0xff]
    %v3288 = vld [vmem:[%s3277 + $0x50] sm:$0xff]
    %v3289 = vld [vmem:[%s3277 + $0x58] sm:$0xff]
    %v3290 = vld [vmem:[%s3277 + $0x60] sm:$0xff]
    %v3291 = vld [vmem:[%s3277 + $0x68] sm:$0xff]
    %v3292 = vld [vmem:[%s3277 + $0x70] sm:$0xff]
    %v3293 = vld [vmem:[%s3277 + $0x78] sm:$0xff]
    %v3294 = vld [vmem:[%s3277 + $0x80] sm:$0xff]
    %v3295 = vld [vmem:[%s3277 + $0x88] sm:$0xff]
    %v3296 = vld [vmem:[%s3277 + $0x90] sm:$0xff]
    %v3297 = vld [vmem:[%s3277 + $0x98] sm:$0xff]
    %v3298 = vld [vmem:[%s3277 + $0xa0] sm:$0xff]
    %v3299 = vld [vmem:[%s3277 + $0xa8] sm:$0xff]
    %v3300 = vld [vmem:[%s3277 + $0xb0] sm:$0xff]
    %v3301 = vld [vmem:[%s3277 + $0xb8] sm:$0xff]
    %v3302 = vld [vmem:[%s3277 + $0xc0] sm:$0xff]
    %v3303 = vld [vmem:[%s3277 + $0xc8] sm:$0xff]
    %v3304 = vld [vmem:[%s3277 + $0xd0] sm:$0xff]
    %v3305 = vld [vmem:[%s3277 + $0xd8] sm:$0xff]
    %v3306 = vld [vmem:[%s3277 + $0xe0] sm:$0xff]
    %v3307 = vld [vmem:[%s3277 + $0xe8] sm:$0xff]
    %v3308 = vld [vmem:[%s3277 + $0xf0] sm:$0xff]
    %v3309 = vld [vmem:[%s3277 + $0xf8] sm:$0xff]
    %v3310 = vld [vmem:[%s3277 + $0x100] sm:$0xff]
    %v3311 = vld [vmem:[%s3277 + $0x108] sm:$0xff]
    %v3312 = vld [vmem:[%s3277 + $0x110] sm:$0xff]
    %v3313 = vld [vmem:[%s3277 + $0x118] sm:$0xff]
    %v3314 = vld [vmem:[%s3277 + $0x120] sm:$0xff]
    %v3315 = vld [vmem:[%s3277 + $0x128] sm:$0xff]
    %v3316 = vld [vmem:[%s3277 + $0x130] sm:$0xff]
    %v3317 = vld [vmem:[%s3277 + $0x138] sm:$0xff]
    %v3318 = vld [vmem:[%s3277 + $0x140] sm:$0xff]
    %v3319 = vld [vmem:[%s3277 + $0x148] sm:$0xff]
    %v3320 = vld [vmem:[%s3277 + $0x150] sm:$0xff]
    %v3321 = vld [vmem:[%s3277 + $0x158] sm:$0xff]
    %v3322 = vld [vmem:[%s3277 + $0x160] sm:$0xff]
    %v3323 = vld [vmem:[%s3277 + $0x168] sm:$0xff]
    %v3324 = vld [vmem:[%s3277 + $0x170] sm:$0xff]
    %v3325 = vld [vmem:[%s3277 + $0x178] sm:$0xff]
    %v3326 = vld [vmem:[%s3277 + $0x180] sm:$0xff]
    %v3327 = vld [vmem:[%s3277 + $0x188] sm:$0xff]
    %v3328 = vld [vmem:[%s3277 + $0x190] sm:$0xff]
    %v3329 = vld [vmem:[%s3277 + $0x198] sm:$0xff]
    %v3330 = vld [vmem:[%s3277 + $0x1a0] sm:$0xff]
    %v3331 = vld [vmem:[%s3277 + $0x1a8] sm:$0xff]
    %v3332 = vld [vmem:[%s3277 + $0x1b0] sm:$0xff]
    %v3333 = vld [vmem:[%s3277 + $0x1b8] sm:$0xff]
    %v3334 = vld [vmem:[%s3277 + $0x1c0] sm:$0xff]
    %v3335 = vld [vmem:[%s3277 + $0x1c8] sm:$0xff]
    %v3336 = vld [vmem:[%s3277 + $0x1d0] sm:$0xff]
    %v3337 = vld [vmem:[%s3277 + $0x1d8] sm:$0xff]
    %v3338 = vld [vmem:[%s3277 + $0x1e0] sm:$0xff]
    %v3339 = vld [vmem:[%s3277 + $0x1e8] sm:$0xff]
    %v3340 = vld [vmem:[%s3277 + $0x1f0] sm:$0xff]
    %v3341 = vld [vmem:[%s3277 + $0x1f8] sm:$0xff]
    %v3342 = vld [vmem:[%s3277 + $0x200] sm:$0xff]
    %v3343 = vld [vmem:[%s3277 + $0x208] sm:$0xff]
    %v3344 = vld [vmem:[%s3277 + $0x210] sm:$0xff]
    %v3345 = vld [vmem:[%s3277 + $0x218] sm:$0xff]
    %v3346 = vld [vmem:[%s3277 + $0x220] sm:$0xff]
    %v3347 = vld [vmem:[%s3277 + $0x228] sm:$0xff]
    %v3348 = vld [vmem:[%s3277 + $0x230] sm:$0xff]
    %v3349 = vld [vmem:[%s3277 + $0x238] sm:$0xff]
    %v3350 = vld [vmem:[%s3277 + $0x240] sm:$0xff]
    %v3351 = vld [vmem:[%s3277 + $0x248] sm:$0xff]
    %v3352 = vld [vmem:[%s3277 + $0x250] sm:$0xff]
    %v3353 = vld [vmem:[%s3277 + $0x258] sm:$0xff]
    %v3354 = vld [vmem:[%s3277 + $0x260] sm:$0xff]
    %v3355 = vld [vmem:[%s3277 + $0x268] sm:$0xff]
    %v3356 = vld [vmem:[%s3277 + $0x270] sm:$0xff]
    %v3357 = vld [vmem:[%s3277 + $0x278] sm:$0xff]
    %v3358 = vld [vmem:[%s3277 + $0x280] sm:$0xff]
    %v3359 = vld [vmem:[%s3277 + $0x288] sm:$0xff]
    %v3360 = vld [vmem:[%s3277 + $0x290] sm:$0xff]
    %v3361 = vld [vmem:[%s3277 + $0x298] sm:$0xff]
    %v3362 = vld [vmem:[%s3277 + $0x2a0] sm:$0xff]
    %v3363 = vld [vmem:[%s3277 + $0x2a8] sm:$0xff]
    %v3364 = vld [vmem:[%s3277 + $0x2b0] sm:$0xff]
    %v3365 = vld [vmem:[%s3277 + $0x2b8] sm:$0xff]
    %v3366 = vld [vmem:[%s3277 + $0x2c0] sm:$0xff]
    %v3367 = vld [vmem:[%s3277 + $0x2c8] sm:$0xff]
    %v3368 = vld [vmem:[%s3277 + $0x2d0] sm:$0xff]
    %v3369 = vld [vmem:[%s3277 + $0x2d8] sm:$0xff]
    %v3370 = vld [vmem:[%s3277 + $0x2e0] sm:$0xff]
    %v3371 = vld [vmem:[%s3277 + $0x2e8] sm:$0xff]
    %v3372 = vld [vmem:[%s3277 + $0x2f0] sm:$0xff]
    %v3373 = vld [vmem:[%s3277 + $0x2f8] sm:$0xff]
    %v3374 = vld [vmem:[%s3277 + $0x300] sm:$0xff]
    %v3375 = vld [vmem:[%s3277 + $0x308] sm:$0xff]
    %v3376 = vld [vmem:[%s3277 + $0x310] sm:$0xff]
    %v3377 = vld [vmem:[%s3277 + $0x318] sm:$0xff]
    %v3378 = vld [vmem:[%s3277 + $0x320] sm:$0xff]
    %v3379 = vld [vmem:[%s3277 + $0x328] sm:$0xff]
    %v3380 = vld [vmem:[%s3277 + $0x330] sm:$0xff]
    %v3381 = vld [vmem:[%s3277 + $0x338] sm:$0xff]
    %v3382 = vld [vmem:[%s3277 + $0x340] sm:$0xff]
    %v3383 = vld [vmem:[%s3277 + $0x348] sm:$0xff]
    %v3384 = vld [vmem:[%s3277 + $0x350] sm:$0xff]
    %v3385 = vld [vmem:[%s3277 + $0x358] sm:$0xff]
    %v3386 = vld [vmem:[%s3277 + $0x360] sm:$0xff]
    %v3387 = vld [vmem:[%s3277 + $0x368] sm:$0xff]
    %v3388 = vld [vmem:[%s3277 + $0x370] sm:$0xff]
    %v3389 = vld [vmem:[%s3277 + $0x378] sm:$0xff]
    %v3390 = vld [vmem:[%s3277 + $0x380] sm:$0xff]
    %v3391 = vld [vmem:[%s3277 + $0x388] sm:$0xff]
    %v3392 = vld [vmem:[%s3277 + $0x390] sm:$0xff]
    %v3393 = vld [vmem:[%s3277 + $0x398] sm:$0xff]
    %v3394 = vld [vmem:[%s3277 + $0x3a0] sm:$0xff]
    %v3395 = vld [vmem:[%s3277 + $0x3a8] sm:$0xff]
    %v3396 = vld [vmem:[%s3277 + $0x3b0] sm:$0xff]
    %v3397 = vld [vmem:[%s3277 + $0x3b8] sm:$0xff]
    %v3398 = vld [vmem:[%s3277 + $0x3c0] sm:$0xff]
    %v3399 = vld [vmem:[%s3277 + $0x3c8] sm:$0xff]
    %v3400 = vld [vmem:[%s3277 + $0x3d0] sm:$0xff]
    %v3401 = vld [vmem:[%s3277 + $0x3d8] sm:$0xff]
    %v3402 = vld [vmem:[%s3277 + $0x3e0] sm:$0xff]
    %v3403 = vld [vmem:[%s3277 + $0x3e8] sm:$0xff]
    %v3404 = vld [vmem:[%s3277 + $0x3f0] sm:$0xff]
    %v3405 = vld [vmem:[%s3277 + $0x3f8] sm:$0xff]
    %3406 = vmatprep.subr.bf16.mxu0 %v3279
    %3407 = vmatpush1.bf16.msra.mxu0 %v3278
    %3408 = vmatprep.subr.bf16.mxu0 %v3283
    %3409 = vmatpush1.bf16.msra.mxu0 %v3282
    %3410 = vmatprep.subr.bf16.mxu0 %v3287
    %3411 = vmatpush1.bf16.msra.mxu0 %v3286
    %3412 = vmatprep.subr.bf16.mxu0 %v3291
    %3413 = vmatpush1.bf16.msra.mxu0 %v3290
    %3414 = vmatprep.subr.bf16.mxu0 %v3295
    %3415 = vmatpush1.bf16.msra.mxu0 %v3294
    %3416 = vmatprep.subr.bf16.mxu0 %v3299
    %3417 = vmatpush1.bf16.msra.mxu0 %v3298
    %3418 = vmatprep.subr.bf16.mxu0 %v3303
    %3419 = vmatpush1.bf16.msra.mxu0 %v3302
    %3420 = vmatprep.subr.bf16.mxu0 %v3307
    %3421 = vmatpush1.bf16.msra.mxu0 %v3306
    %3422 = vmatprep.subr.bf16.mxu0 %v3311
    %3423 = vmatpush1.bf16.msra.mxu0 %v3310
    %3424 = vmatprep.subr.bf16.mxu0 %v3315
    %3425 = vmatpush1.bf16.msra.mxu0 %v3314
    %3426 = vmatprep.subr.bf16.mxu0 %v3319
    %3427 = vmatpush1.bf16.msra.mxu0 %v3318
    %3428 = vmatprep.subr.bf16.mxu0 %v3323
    %3429 = vmatpush1.bf16.msra.mxu0 %v3322
    %3430 = vmatprep.subr.bf16.mxu0 %v3327
    %3431 = vmatpush1.bf16.msra.mxu0 %v3326
    %3432 = vmatprep.subr.bf16.mxu0 %v3331
    %3433 = vmatpush1.bf16.msra.mxu0 %v3330
    %3434 = vmatprep.subr.bf16.mxu0 %v3335
    %3435 = vmatpush1.bf16.msra.mxu0 %v3334
    %3436 = vmatprep.subr.bf16.mxu0 %v3339
    %3437 = vmatpush1.bf16.msra.mxu0 %v3338
    %3438 = vmatprep.mubr.bf16.mxu0 %v3196
    %3439 = vmatmul.mubr.bf16.gmra.mrb[0].mxu0 %v3184
    %v3440 = vpop.f32.mrb[0].mxu0
    %v3441 = vadd.f32 0.0, %v3440
    %v3442 = vpop.f32.mrb[0].mxu0
    %v3443 = vadd.f32 0.0, %v3442
    %v3444 = vpop.f32.mrb[0].mxu0
    %v3445 = vadd.f32 0.0, %v3444
    %v3446 = vpop.f32.mrb[0].mxu0
    %v3447 = vadd.f32 0.0, %v3446
    %3448 = vmatprep.mubr.bf16.mxu0 %v3244
    %3449 = vmatmul.mubr.bf16.gmra.mrb[0].mxu0 %v3232
    %v3450 = vpop.f32.mrb[0].mxu0
    %v3451 = vadd.f32 0.0, %v3450
    %v3452 = vpop.f32.mrb[0].mxu0
    %v3453 = vadd.f32 0.0, %v3452
    %v3454 = vpop.f32.mrb[0].mxu0
    %v3455 = vadd.f32 0.0, %v3454
    %v3456 = vpop.f32.mrb[0].mxu0
    %v3457 = vadd.f32 0.0, %v3456
    %3458 = vdwg.mxu0
    %3459 = vmatprep.subr.bf16.mxu0 %v3343
    %3460 = vmatpush1.bf16.msra.mxu0 %v3342
    %3461 = vmatprep.subr.bf16.mxu0 %v3347
    %3462 = vmatpush1.bf16.msra.mxu0 %v3346
    %3463 = vmatprep.subr.bf16.mxu0 %v3351
    %3464 = vmatpush1.bf16.msra.mxu0 %v3350
    %3465 = vmatprep.subr.bf16.mxu0 %v3355
    %3466 = vmatpush1.bf16.msra.mxu0 %v3354
    %3467 = vmatprep.subr.bf16.mxu0 %v3359
    %3468 = vmatpush1.bf16.msra.mxu0 %v3358
    %3469 = vmatprep.subr.bf16.mxu0 %v3363
    %3470 = vmatpush1.bf16.msra.mxu0 %v3362
    %3471 = vmatprep.subr.bf16.mxu0 %v3367
    %3472 = vmatpush1.bf16.msra.mxu0 %v3366
    %3473 = vmatprep.subr.bf16.mxu0 %v3371
    %3474 = vmatpush1.bf16.msra.mxu0 %v3370
    %3475 = vmatprep.subr.bf16.mxu0 %v3375
    %3476 = vmatpush1.bf16.msra.mxu0 %v3374
    %3477 = vmatprep.subr.bf16.mxu0 %v3379
    %3478 = vmatpush1.bf16.msra.mxu0 %v3378
    %3479 = vmatprep.subr.bf16.mxu0 %v3383
    %3480 = vmatpush1.bf16.msra.mxu0 %v3382
    %3481 = vmatprep.subr.bf16.mxu0 %v3387
    %3482 = vmatpush1.bf16.msra.mxu0 %v3386
    %3483 = vmatprep.subr.bf16.mxu0 %v3391
    %3484 = vmatpush1.bf16.msra.mxu0 %v3390
    %3485 = vmatprep.subr.bf16.mxu0 %v3395
    %3486 = vmatpush1.bf16.msra.mxu0 %v3394
    %3487 = vmatprep.subr.bf16.mxu0 %v3399
    %3488 = vmatpush1.bf16.msra.mxu0 %v3398
    %3489 = vmatprep.subr.bf16.mxu0 %v3403
    %3490 = vmatpush1.bf16.msra.mxu0 %v3402
    %3491 = vmatprep.mubr.bf16.mxu0 %v3220
    %3492 = vmatmul.mubr.bf16.gmra.mrb[0].mxu0 %v3208
    %v3493 = vpop.f32.mrb[0].mxu0
    %v3494 = vadd.f32 %v3441, %v3493
    %v3495 = vpop.f32.mrb[0].mxu0
    %v3496 = vadd.f32 %v3443, %v3495
    %v3497 = vpop.f32.mrb[0].mxu0
    %v3498 = vadd.f32 %v3445, %v3497
    %v3499 = vpop.f32.mrb[0].mxu0
    %v3500 = vadd.f32 %v3447, %v3499
    %3501 = vmatprep.mubr.bf16.mxu0 %v3268
    %3502 = vmatmul.mubr.bf16.gmra.mrb[0].mxu0 %v3256
    %v3503 = vpop.f32.mrb[0].mxu0
    %v3504 = vadd.f32 %v3451, %v3503
    %v3505 = vpop.f32.mrb[0].mxu0
    %v3506 = vadd.f32 %v3453, %v3505
    %v3507 = vpop.f32.mrb[0].mxu0
    %v3508 = vadd.f32 %v3455, %v3507
    %v3509 = vpop.f32.mrb[0].mxu0
    %v3510 = vadd.f32 %v3457, %v3509
    %3511 = vdwg.mxu0
    %3512 = vmatprep.subr.bf16.mxu0 %v3281
    %3513 = vmatpush1.bf16.msra.mxu0 %v3280
    %3514 = vmatprep.subr.bf16.mxu0 %v3285
    %3515 = vmatpush1.bf16.msra.mxu0 %v3284
    %3516 = vmatprep.subr.bf16.mxu0 %v3289
    %3517 = vmatpush1.bf16.msra.mxu0 %v3288
    %3518 = vmatprep.subr.bf16.mxu0 %v3293
    %3519 = vmatpush1.bf16.msra.mxu0 %v3292
    %3520 = vmatprep.subr.bf16.mxu0 %v3297
    %3521 = vmatpush1.bf16.msra.mxu0 %v3296
    %3522 = vmatprep.subr.bf16.mxu0 %v3301
    %3523 = vmatpush1.bf16.msra.mxu0 %v3300
    %3524 = vmatprep.subr.bf16.mxu0 %v3305
    %3525 = vmatpush1.bf16.msra.mxu0 %v3304
    %3526 = vmatprep.subr.bf16.mxu0 %v3309
    %3527 = vmatpush1.bf16.msra.mxu0 %v3308
    %3528 = vmatprep.subr.bf16.mxu0 %v3313
    %3529 = vmatpush1.bf16.msra.mxu0 %v3312
    %3530 = vmatprep.subr.bf16.mxu0 %v3317
    %3531 = vmatpush1.bf16.msra.mxu0 %v3316
    %3532 = vmatprep.subr.bf16.mxu0 %v3321
    %3533 = vmatpush1.bf16.msra.mxu0 %v3320
    %3534 = vmatprep.subr.bf16.mxu0 %v3325
    %3535 = vmatpush1.bf16.msra.mxu0 %v3324
    %3536 = vmatprep.subr.bf16.mxu0 %v3329
    %3537 = vmatpush1.bf16.msra.mxu0 %v3328
    %3538 = vmatprep.subr.bf16.mxu0 %v3333
    %3539 = vmatpush1.bf16.msra.mxu0 %v3332
    %3540 = vmatprep.subr.bf16.mxu0 %v3337
    %3541 = vmatpush1.bf16.msra.mxu0 %v3336
    %3542 = vmatprep.subr.bf16.mxu0 %v3341
    %3543 = vmatpush1.bf16.msra.mxu0 %v3340
    %3544 = vmatprep.mubr.bf16.mxu0 %v3196
    %3545 = vmatmul.mubr.bf16.gmra.mrb[0].mxu0 %v3184
    %v3546 = vpop.f32.mrb[0].mxu0
    %v3547 = vadd.f32 0.0, %v3546
    %v3548 = vpop.f32.mrb[0].mxu0
    %v3549 = vadd.f32 0.0, %v3548
    %v3550 = vpop.f32.mrb[0].mxu0
    %v3551 = vadd.f32 0.0, %v3550
    %v3552 = vpop.f32.mrb[0].mxu0
    %v3553 = vadd.f32 0.0, %v3552
    %3554 = vmatprep.mubr.bf16.mxu0 %v3244
    %3555 = vmatmul.mubr.bf16.gmra.mrb[0].mxu0 %v3232
    %v3556 = vpop.f32.mrb[0].mxu0
    %v3557 = vadd.f32 0.0, %v3556
    %v3558 = vpop.f32.mrb[0].mxu0
    %v3559 = vadd.f32 0.0, %v3558
    %v3560 = vpop.f32.mrb[0].mxu0
    %v3561 = vadd.f32 0.0, %v3560
    %v3562 = vpop.f32.mrb[0].mxu0
    %v3563 = vadd.f32 0.0, %v3562
    %3564 = vdwg.mxu0
    %3565 = vmatprep.subr.bf16.mxu0 %v3345
    %3566 = vmatpush1.bf16.msra.mxu0 %v3344
    %3567 = vmatprep.subr.bf16.mxu0 %v3349
    %3568 = vmatpush1.bf16.msra.mxu0 %v3348
    %3569 = vmatprep.subr.bf16.mxu0 %v3353
    %3570 = vmatpush1.bf16.msra.mxu0 %v3352
    %3571 = vmatprep.subr.bf16.mxu0 %v3357
    %3572 = vmatpush1.bf16.msra.mxu0 %v3356
    %3573 = vmatprep.subr.bf16.mxu0 %v3361
    %3574 = vmatpush1.bf16.msra.mxu0 %v3360
    %3575 = vmatprep.subr.bf16.mxu0 %v3365
    %3576 = vmatpush1.bf16.msra.mxu0 %v3364
    %3577 = vmatprep.subr.bf16.mxu0 %v3369
    %3578 = vmatpush1.bf16.msra.mxu0 %v3368
    %3579 = vmatprep.subr.bf16.mxu0 %v3373
    %3580 = vmatpush1.bf16.msra.mxu0 %v3372
    %3581 = vmatprep.subr.bf16.mxu0 %v3377
    %3582 = vmatpush1.bf16.msra.mxu0 %v3376
    %3583 = vmatprep.subr.bf16.mxu0 %v3381
    %3584 = vmatpush1.bf16.msra.mxu0 %v3380
    %3585 = vmatprep.subr.bf16.mxu0 %v3385
    %3586 = vmatpush1.bf16.msra.mxu0 %v3384
    %3587 = vmatprep.subr.bf16.mxu0 %v3389
    %3588 = vmatpush1.bf16.msra.mxu0 %v3388
    %3589 = vmatprep.subr.bf16.mxu0 %v3393
    %3590 = vmatpush1.bf16.msra.mxu0 %v3392
    %3591 = vmatprep.subr.bf16.mxu0 %v3397
    %3592 = vmatpush1.bf16.msra.mxu0 %v3396
    %3593 = vmatprep.subr.bf16.mxu0 %v3401
    %3594 = vmatpush1.bf16.msra.mxu0 %v3400
    %3595 = vmatprep.subr.bf16.mxu0 %v3405
    %3596 = vmatpush1.bf16.msra.mxu0 %v3404
    %3597 = vmatprep.mubr.bf16.mxu0 %v3220
    %3598 = vmatmul.mubr.bf16.gmra.mrb[0].mxu0 %v3208
    %v3599 = vpop.f32.mrb[0].mxu0
    %v3600 = vadd.f32 %v3547, %v3599
    %v3601 = vpop.f32.mrb[0].mxu0
    %v3602 = vadd.f32 %v3549, %v3601
    %v3603 = vpop.f32.mrb[0].mxu0
    %v3604 = vadd.f32 %v3551, %v3603
    %v3605 = vpop.f32.mrb[0].mxu0
    %v3606 = vadd.f32 %v3553, %v3605
    %3607 = vmatprep.mubr.bf16.mxu0 %v3268
    %3608 = vmatmul.mubr.bf16.gmra.mrb[0].mxu0 %v3256
    %v3609 = vpop.f32.mrb[0].mxu0
    %v3610 = vadd.f32 %v3557, %v3609
    %v3611 = vpop.f32.mrb[0].mxu0
    %v3612 = vadd.f32 %v3559, %v3611
    %v3613 = vpop.f32.mrb[0].mxu0
    %v3614 = vadd.f32 %v3561, %v3613
    %v3615 = vpop.f32.mrb[0].mxu0
    %v3616 = vadd.f32 %v3563, %v3615
    %3617 = vdwg.mxu0
    %v3618 = vadd.f32 %v3141, %v3494
    %v3619 = vadd.f32 %v3142, %v3496
    %v3620 = vadd.f32 %v3143, %v3600
    %v3621 = vadd.f32 %v3144, %v3602
    %v3622 = vadd.f32 %v3145, %v3498
    %v3623 = vadd.f32 %v3146, %v3500
    %v3624 = vadd.f32 %v3147, %v3604
    %v3625 = vadd.f32 %v3148, %v3606
    %v3626 = vadd.f32 %v3149, %v3504
    %v3627 = vadd.f32 %v3150, %v3506
    %v3628 = vadd.f32 %v3151, %v3610
    %v3629 = vadd.f32 %v3152, %v3612
    %v3630 = vadd.f32 %v3153, %v3508
    %v3631 = vadd.f32 %v3154, %v3510
    %v3632 = vadd.f32 %v3155, %v3614
    %v3633 = vadd.f32 %v3156, %v3616
    %v3634 = vld [vmem:[#allocation3 + $0x20] sm:$0xfe]
    %v3635 = vld [vmem:[#allocation3 + $0x28] sm:$0xfe]
    %v3636 = vld [vmem:[#allocation3 + $0x30] sm:$0xfe]
    %v3637 = vld [vmem:[#allocation3 + $0x38] sm:$0xfe]
    %v3638 = vld [vmem:[#allocation3 + $0x80] sm:$0xfe]
    %v3639 = vld [vmem:[#allocation3 + $0x88] sm:$0xfe]
    %v3640 = vld [vmem:[#allocation3 + $0x90] sm:$0xfe]
    %v3641 = vld [vmem:[#allocation3 + $0x98] sm:$0xfe]
    %v3658 = vrot.slane %v3634, 1
    %v3659 = vrot.slane %v3161, 1
    %v3660 = vsel %vm1544, %v3658, %v3659
    %v3661 = vrot.slane %v3635, 1
    %v3662 = vrot.slane %v3162, 1
    %v3663 = vsel %vm1544, %v3661, %v3662
    %v3664 = vrot.slane %v3636, 1
    %v3665 = vrot.slane %v3163, 1
    %v3666 = vsel %vm1544, %v3664, %v3665
    %v3667 = vrot.slane %v3637, 1
    %v3668 = vrot.slane %v3164, 1
    %v3669 = vsel %vm1544, %v3667, %v3668
    %v3670 = vrot.slane %v3638, 1
    %v3671 = vrot.slane %v3169, 1
    %v3672 = vsel %vm1544, %v3670, %v3671
    %v3673 = vrot.slane %v3639, 1
    %v3674 = vrot.slane %v3170, 1
    %v3675 = vsel %vm1544, %v3673, %v3674
    %v3676 = vrot.slane %v3640, 1
    %v3677 = vrot.slane %v3171, 1
    %v3678 = vsel %vm1544, %v3676, %v3677
    %v3679 = vrot.slane %v3641, 1
    %v3680 = vrot.slane %v3172, 1
    %v3681 = vsel %vm1544, %v3679, %v3680
    %s3690 = scalar_lea.vmem [#allocation4], 4096
    %v3691 = vld [vmem:[%s3690] sm:$0xff]
    %v3692 = vld [vmem:[%s3690 + $0x8] sm:$0xff]
    %v3693 = vld [vmem:[%s3690 + $0x10] sm:$0xff]
    %v3694 = vld [vmem:[%s3690 + $0x18] sm:$0xff]
    %v3695 = vld [vmem:[%s3690 + $0x20] sm:$0xff]
    %v3696 = vld [vmem:[%s3690 + $0x28] sm:$0xff]
    %v3697 = vld [vmem:[%s3690 + $0x30] sm:$0xff]
    %v3698 = vld [vmem:[%s3690 + $0x38] sm:$0xff]
    %v3699 = vld [vmem:[%s3690 + $0x40] sm:$0xff]
    %v3700 = vld [vmem:[%s3690 + $0x48] sm:$0xff]
    %v3701 = vld [vmem:[%s3690 + $0x50] sm:$0xff]
    %v3702 = vld [vmem:[%s3690 + $0x58] sm:$0xff]
    %v3703 = vld [vmem:[%s3690 + $0x60] sm:$0xff]
    %v3704 = vld [vmem:[%s3690 + $0x68] sm:$0xff]
    %v3705 = vld [vmem:[%s3690 + $0x70] sm:$0xff]
    %v3706 = vld [vmem:[%s3690 + $0x78] sm:$0xff]
    %v3707 = vld [vmem:[%s3690 + $0x80] sm:$0xff]
    %v3708 = vld [vmem:[%s3690 + $0x88] sm:$0xff]
    %v3709 = vld [vmem:[%s3690 + $0x90] sm:$0xff]
    %v3710 = vld [vmem:[%s3690 + $0x98] sm:$0xff]
    %v3711 = vld [vmem:[%s3690 + $0xa0] sm:$0xff]
    %v3712 = vld [vmem:[%s3690 + $0xa8] sm:$0xff]
    %v3713 = vld [vmem:[%s3690 + $0xb0] sm:$0xff]
    %v3714 = vld [vmem:[%s3690 + $0xb8] sm:$0xff]
    %v3715 = vld [vmem:[%s3690 + $0xc0] sm:$0xff]
    %v3716 = vld [vmem:[%s3690 + $0xc8] sm:$0xff]
    %v3717 = vld [vmem:[%s3690 + $0xd0] sm:$0xff]
    %v3718 = vld [vmem:[%s3690 + $0xd8] sm:$0xff]
    %v3719 = vld [vmem:[%s3690 + $0xe0] sm:$0xff]
    %v3720 = vld [vmem:[%s3690 + $0xe8] sm:$0xff]
    %v3721 = vld [vmem:[%s3690 + $0xf0] sm:$0xff]
    %v3722 = vld [vmem:[%s3690 + $0xf8] sm:$0xff]
    %v3723 = vld [vmem:[%s3690 + $0x100] sm:$0xff]
    %v3724 = vld [vmem:[%s3690 + $0x108] sm:$0xff]
    %v3725 = vld [vmem:[%s3690 + $0x110] sm:$0xff]
    %v3726 = vld [vmem:[%s3690 + $0x118] sm:$0xff]
    %v3727 = vld [vmem:[%s3690 + $0x120] sm:$0xff]
    %v3728 = vld [vmem:[%s3690 + $0x128] sm:$0xff]
    %v3729 = vld [vmem:[%s3690 + $0x130] sm:$0xff]
    %v3730 = vld [vmem:[%s3690 + $0x138] sm:$0xff]
    %v3731 = vld [vmem:[%s3690 + $0x140] sm:$0xff]
    %v3732 = vld [vmem:[%s3690 + $0x148] sm:$0xff]
    %v3733 = vld [vmem:[%s3690 + $0x150] sm:$0xff]
    %v3734 = vld [vmem:[%s3690 + $0x158] sm:$0xff]
    %v3735 = vld [vmem:[%s3690 + $0x160] sm:$0xff]
    %v3736 = vld [vmem:[%s3690 + $0x168] sm:$0xff]
    %v3737 = vld [vmem:[%s3690 + $0x170] sm:$0xff]
    %v3738 = vld [vmem:[%s3690 + $0x178] sm:$0xff]
    %v3739 = vld [vmem:[%s3690 + $0x180] sm:$0xff]
    %v3740 = vld [vmem:[%s3690 + $0x188] sm:$0xff]
    %v3741 = vld [vmem:[%s3690 + $0x190] sm:$0xff]
    %v3742 = vld [vmem:[%s3690 + $0x198] sm:$0xff]
    %v3743 = vld [vmem:[%s3690 + $0x1a0] sm:$0xff]
    %v3744 = vld [vmem:[%s3690 + $0x1a8] sm:$0xff]
    %v3745 = vld [vmem:[%s3690 + $0x1b0] sm:$0xff]
    %v3746 = vld [vmem:[%s3690 + $0x1b8] sm:$0xff]
    %v3747 = vld [vmem:[%s3690 + $0x1c0] sm:$0xff]
    %v3748 = vld [vmem:[%s3690 + $0x1c8] sm:$0xff]
    %v3749 = vld [vmem:[%s3690 + $0x1d0] sm:$0xff]
    %v3750 = vld [vmem:[%s3690 + $0x1d8] sm:$0xff]
    %v3751 = vld [vmem:[%s3690 + $0x1e0] sm:$0xff]
    %v3752 = vld [vmem:[%s3690 + $0x1e8] sm:$0xff]
    %v3753 = vld [vmem:[%s3690 + $0x1f0] sm:$0xff]
    %v3754 = vld [vmem:[%s3690 + $0x1f8] sm:$0xff]
    %v3755 = vld [vmem:[%s3690 + $0x200] sm:$0xff]
    %v3756 = vld [vmem:[%s3690 + $0x208] sm:$0xff]
    %v3757 = vld [vmem:[%s3690 + $0x210] sm:$0xff]
    %v3758 = vld [vmem:[%s3690 + $0x218] sm:$0xff]
    %v3759 = vld [vmem:[%s3690 + $0x220] sm:$0xff]
    %v3760 = vld [vmem:[%s3690 + $0x228] sm:$0xff]
    %v3761 = vld [vmem:[%s3690 + $0x230] sm:$0xff]
    %v3762 = vld [vmem:[%s3690 + $0x238] sm:$0xff]
    %v3763 = vld [vmem:[%s3690 + $0x240] sm:$0xff]
    %v3764 = vld [vmem:[%s3690 + $0x248] sm:$0xff]
    %v3765 = vld [vmem:[%s3690 + $0x250] sm:$0xff]
    %v3766 = vld [vmem:[%s3690 + $0x258] sm:$0xff]
    %v3767 = vld [vmem:[%s3690 + $0x260] sm:$0xff]
    %v3768 = vld [vmem:[%s3690 + $0x268] sm:$0xff]
    %v3769 = vld [vmem:[%s3690 + $0x270] sm:$0xff]
    %v3770 = vld [vmem:[%s3690 + $0x278] sm:$0xff]
    %v3771 = vld [vmem:[%s3690 + $0x280] sm:$0xff]
    %v3772 = vld [vmem:[%s3690 + $0x288] sm:$0xff]
    %v3773 = vld [vmem:[%s3690 + $0x290] sm:$0xff]
    %v3774 = vld [vmem:[%s3690 + $0x298] sm:$0xff]
    %v3775 = vld [vmem:[%s3690 + $0x2a0] sm:$0xff]
    %v3776 = vld [vmem:[%s3690 + $0x2a8] sm:$0xff]
    %v3777 = vld [vmem:[%s3690 + $0x2b0] sm:$0xff]
    %v3778 = vld [vmem:[%s3690 + $0x2b8] sm:$0xff]
    %v3779 = vld [vmem:[%s3690 + $0x2c0] sm:$0xff]
    %v3780 = vld [vmem:[%s3690 + $0x2c8] sm:$0xff]
    %v3781 = vld [vmem:[%s3690 + $0x2d0] sm:$0xff]
    %v3782 = vld [vmem:[%s3690 + $0x2d8] sm:$0xff]
    %v3783 = vld [vmem:[%s3690 + $0x2e0] sm:$0xff]
    %v3784 = vld [vmem:[%s3690 + $0x2e8] sm:$0xff]
    %v3785 = vld [vmem:[%s3690 + $0x2f0] sm:$0xff]
    %v3786 = vld [vmem:[%s3690 + $0x2f8] sm:$0xff]
    %v3787 = vld [vmem:[%s3690 + $0x300] sm:$0xff]
    %v3788 = vld [vmem:[%s3690 + $0x308] sm:$0xff]
    %v3789 = vld [vmem:[%s3690 + $0x310] sm:$0xff]
    %v3790 = vld [vmem:[%s3690 + $0x318] sm:$0xff]
    %v3791 = vld [vmem:[%s3690 + $0x320] sm:$0xff]
    %v3792 = vld [vmem:[%s3690 + $0x328] sm:$0xff]
    %v3793 = vld [vmem:[%s3690 + $0x330] sm:$0xff]
    %v3794 = vld [vmem:[%s3690 + $0x338] sm:$0xff]
    %v3795 = vld [vmem:[%s3690 + $0x340] sm:$0xff]
    %v3796 = vld [vmem:[%s3690 + $0x348] sm:$0xff]
    %v3797 = vld [vmem:[%s3690 + $0x350] sm:$0xff]
    %v3798 = vld [vmem:[%s3690 + $0x358] sm:$0xff]
    %v3799 = vld [vmem:[%s3690 + $0x360] sm:$0xff]
    %v3800 = vld [vmem:[%s3690 + $0x368] sm:$0xff]
    %v3801 = vld [vmem:[%s3690 + $0x370] sm:$0xff]
    %v3802 = vld [vmem:[%s3690 + $0x378] sm:$0xff]
    %v3803 = vld [vmem:[%s3690 + $0x380] sm:$0xff]
    %v3804 = vld [vmem:[%s3690 + $0x388] sm:$0xff]
    %v3805 = vld [vmem:[%s3690 + $0x390] sm:$0xff]
    %v3806 = vld [vmem:[%s3690 + $0x398] sm:$0xff]
    %v3807 = vld [vmem:[%s3690 + $0x3a0] sm:$0xff]
    %v3808 = vld [vmem:[%s3690 + $0x3a8] sm:$0xff]
    %v3809 = vld [vmem:[%s3690 + $0x3b0] sm:$0xff]
    %v3810 = vld [vmem:[%s3690 + $0x3b8] sm:$0xff]
    %v3811 = vld [vmem:[%s3690 + $0x3c0] sm:$0xff]
    %v3812 = vld [vmem:[%s3690 + $0x3c8] sm:$0xff]
    %v3813 = vld [vmem:[%s3690 + $0x3d0] sm:$0xff]
    %v3814 = vld [vmem:[%s3690 + $0x3d8] sm:$0xff]
    %v3815 = vld [vmem:[%s3690 + $0x3e0] sm:$0xff]
    %v3816 = vld [vmem:[%s3690 + $0x3e8] sm:$0xff]
    %v3817 = vld [vmem:[%s3690 + $0x3f0] sm:$0xff]
    %v3818 = vld [vmem:[%s3690 + $0x3f8] sm:$0xff]
    %3819 = vmatprep.subr.bf16.mxu0 %v3692
    %3820 = vmatpush1.bf16.msra.mxu0 %v3691
    %3821 = vmatprep.subr.bf16.mxu0 %v3696
    %3822 = vmatpush1.bf16.msra.mxu0 %v3695
    %3823 = vmatprep.subr.bf16.mxu0 %v3700
    %3824 = vmatpush1.bf16.msra.mxu0 %v3699
    %3825 = vmatprep.subr.bf16.mxu0 %v3704
    %3826 = vmatpush1.bf16.msra.mxu0 %v3703
    %3827 = vmatprep.subr.bf16.mxu0 %v3708
    %3828 = vmatpush1.bf16.msra.mxu0 %v3707
    %3829 = vmatprep.subr.bf16.mxu0 %v3712
    %3830 = vmatpush1.bf16.msra.mxu0 %v3711
    %3831 = vmatprep.subr.bf16.mxu0 %v3716
    %3832 = vmatpush1.bf16.msra.mxu0 %v3715
    %3833 = vmatprep.subr.bf16.mxu0 %v3720
    %3834 = vmatpush1.bf16.msra.mxu0 %v3719
    %3835 = vmatprep.subr.bf16.mxu0 %v3724
    %3836 = vmatpush1.bf16.msra.mxu0 %v3723
    %3837 = vmatprep.subr.bf16.mxu0 %v3728
    %3838 = vmatpush1.bf16.msra.mxu0 %v3727
    %3839 = vmatprep.subr.bf16.mxu0 %v3732
    %3840 = vmatpush1.bf16.msra.mxu0 %v3731
    %3841 = vmatprep.subr.bf16.mxu0 %v3736
    %3842 = vmatpush1.bf16.msra.mxu0 %v3735
    %3843 = vmatprep.subr.bf16.mxu0 %v3740
    %3844 = vmatpush1.bf16.msra.mxu0 %v3739
    %3845 = vmatprep.subr.bf16.mxu0 %v3744
    %3846 = vmatpush1.bf16.msra.mxu0 %v3743
    %3847 = vmatprep.subr.bf16.mxu0 %v3748
    %3848 = vmatpush1.bf16.msra.mxu0 %v3747
    %3849 = vmatprep.subr.bf16.mxu0 %v3752
    %3850 = vmatpush1.bf16.msra.mxu0 %v3751
    %3851 = vmatprep.mubr.bf16.mxu0 %v3663
    %3852 = vmatmul.mubr.bf16.gmra.mrb[0].mxu0 %v3660
    %v3853 = vpop.f32.mrb[0].mxu0
    %v3854 = vadd.f32 0.0, %v3853
    %v3855 = vpop.f32.mrb[0].mxu0
    %v3856 = vadd.f32 0.0, %v3855
    %v3857 = vpop.f32.mrb[0].mxu0
    %v3858 = vadd.f32 0.0, %v3857
    %v3859 = vpop.f32.mrb[0].mxu0
    %v3860 = vadd.f32 0.0, %v3859
    %3861 = vmatprep.mubr.bf16.mxu0 %v3675
    %3862 = vmatmul.mubr.bf16.gmra.mrb[0].mxu0 %v3672
    %v3863 = vpop.f32.mrb[0].mxu0
    %v3864 = vadd.f32 0.0, %v3863
    %v3865 = vpop.f32.mrb[0].mxu0
    %v3866 = vadd.f32 0.0, %v3865
    %v3867 = vpop.f32.mrb[0].mxu0
    %v3868 = vadd.f32 0.0, %v3867
    %v3869 = vpop.f32.mrb[0].mxu0
    %v3870 = vadd.f32 0.0, %v3869
    %3871 = vdwg.mxu0
    %3872 = vmatprep.subr.bf16.mxu0 %v3756
    %3873 = vmatpush1.bf16.msra.mxu0 %v3755
    %3874 = vmatprep.subr.bf16.mxu0 %v3760
    %3875 = vmatpush1.bf16.msra.mxu0 %v3759
    %3876 = vmatprep.subr.bf16.mxu0 %v3764
    %3877 = vmatpush1.bf16.msra.mxu0 %v3763
    %3878 = vmatprep.subr.bf16.mxu0 %v3768
    %3879 = vmatpush1.bf16.msra.mxu0 %v3767
    %3880 = vmatprep.subr.bf16.mxu0 %v3772
    %3881 = vmatpush1.bf16.msra.mxu0 %v3771
    %3882 = vmatprep.subr.bf16.mxu0 %v3776
    %3883 = vmatpush1.bf16.msra.mxu0 %v3775
    %3884 = vmatprep.subr.bf16.mxu0 %v3780
    %3885 = vmatpush1.bf16.msra.mxu0 %v3779
    %3886 = vmatprep.subr.bf16.mxu0 %v3784
    %3887 = vmatpush1.bf16.msra.mxu0 %v3783
    %3888 = vmatprep.subr.bf16.mxu0 %v3788
    %3889 = vmatpush1.bf16.msra.mxu0 %v3787
    %3890 = vmatprep.subr.bf16.mxu0 %v3792
    %3891 = vmatpush1.bf16.msra.mxu0 %v3791
    %3892 = vmatprep.subr.bf16.mxu0 %v3796
    %3893 = vmatpush1.bf16.msra.mxu0 %v3795
    %3894 = vmatprep.subr.bf16.mxu0 %v3800
    %3895 = vmatpush1.bf16.msra.mxu0 %v3799
    %3896 = vmatprep.subr.bf16.mxu0 %v3804
    %3897 = vmatpush1.bf16.msra.mxu0 %v3803
    %3898 = vmatprep.subr.bf16.mxu0 %v3808
    %3899 = vmatpush1.bf16.msra.mxu0 %v3807
    %3900 = vmatprep.subr.bf16.mxu0 %v3812
    %3901 = vmatpush1.bf16.msra.mxu0 %v3811
    %3902 = vmatprep.subr.bf16.mxu0 %v3816
    %3903 = vmatpush1.bf16.msra.mxu0 %v3815
    %3904 = vmatprep.mubr.bf16.mxu0 %v3669
    %3905 = vmatmul.mubr.bf16.gmra.mrb[0].mxu0 %v3666
    %v3906 = vpop.f32.mrb[0].mxu0
    %v3907 = vadd.f32 %v3854, %v3906
    %v3908 = vpop.f32.mrb[0].mxu0
    %v3909 = vadd.f32 %v3856, %v3908
    %v3910 = vpop.f32.mrb[0].mxu0
    %v3911 = vadd.f32 %v3858, %v3910
    %v3912 = vpop.f32.mrb[0].mxu0
    %v3913 = vadd.f32 %v3860, %v3912
    %3914 = vmatprep.mubr.bf16.mxu0 %v3681
    %3915 = vmatmul.mubr.bf16.gmra.mrb[0].mxu0 %v3678
    %v3916 = vpop.f32.mrb[0].mxu0
    %v3917 = vadd.f32 %v3864, %v3916
    %v3918 = vpop.f32.mrb[0].mxu0
    %v3919 = vadd.f32 %v3866, %v3918
    %v3920 = vpop.f32.mrb[0].mxu0
    %v3921 = vadd.f32 %v3868, %v3920
    %v3922 = vpop.f32.mrb[0].mxu0
    %v3923 = vadd.f32 %v3870, %v3922
    %3924 = vdwg.mxu0
    %3925 = vmatprep.subr.bf16.mxu0 %v3694
    %3926 = vmatpush1.bf16.msra.mxu0 %v3693
    %3927 = vmatprep.subr.bf16.mxu0 %v3698
    %3928 = vmatpush1.bf16.msra.mxu0 %v3697
    %3929 = vmatprep.subr.bf16.mxu0 %v3702
    %3930 = vmatpush1.bf16.msra.mxu0 %v3701
    %3931 = vmatprep.subr.bf16.mxu0 %v3706
    %3932 = vmatpush1.bf16.msra.mxu0 %v3705
    %3933 = vmatprep.subr.bf16.mxu0 %v3710
    %3934 = vmatpush1.bf16.msra.mxu0 %v3709
    %3935 = vmatprep.subr.bf16.mxu0 %v3714
    %3936 = vmatpush1.bf16.msra.mxu0 %v3713
    %3937 = vmatprep.subr.bf16.mxu0 %v3718
    %3938 = vmatpush1.bf16.msra.mxu0 %v3717
    %3939 = vmatprep.subr.bf16.mxu0 %v3722
    %3940 = vmatpush1.bf16.msra.mxu0 %v3721
    %3941 = vmatprep.subr.bf16.mxu0 %v3726
    %3942 = vmatpush1.bf16.msra.mxu0 %v3725
    %3943 = vmatprep.subr.bf16.mxu0 %v3730
    %3944 = vmatpush1.bf16.msra.mxu0 %v3729
    %3945 = vmatprep.subr.bf16.mxu0 %v3734
    %3946 = vmatpush1.bf16.msra.mxu0 %v3733
    %3947 = vmatprep.subr.bf16.mxu0 %v3738
    %3948 = vmatpush1.bf16.msra.mxu0 %v3737
    %3949 = vmatprep.subr.bf16.mxu0 %v3742
    %3950 = vmatpush1.bf16.msra.mxu0 %v3741
    %3951 = vmatprep.subr.bf16.mxu0 %v3746
    %3952 = vmatpush1.bf16.msra.mxu0 %v3745
    %3953 = vmatprep.subr.bf16.mxu0 %v3750
    %3954 = vmatpush1.bf16.msra.mxu0 %v3749
    %3955 = vmatprep.subr.bf16.mxu0 %v3754
    %3956 = vmatpush1.bf16.msra.mxu0 %v3753
    %3957 = vmatprep.mubr.bf16.mxu0 %v3663
    %3958 = vmatmul.mubr.bf16.gmra.mrb[0].mxu0 %v3660
    %v3959 = vpop.f32.mrb[0].mxu0
    %v3960 = vadd.f32 0.0, %v3959
    %v3961 = vpop.f32.mrb[0].mxu0
    %v3962 = vadd.f32 0.0, %v3961
    %v3963 = vpop.f32.mrb[0].mxu0
    %v3964 = vadd.f32 0.0, %v3963
    %v3965 = vpop.f32.mrb[0].mxu0
    %v3966 = vadd.f32 0.0, %v3965
    %3967 = vmatprep.mubr.bf16.mxu0 %v3675
    %3968 = vmatmul.mubr.bf16.gmra.mrb[0].mxu0 %v3672
    %v3969 = vpop.f32.mrb[0].mxu0
    %v3970 = vadd.f32 0.0, %v3969
    %v3971 = vpop.f32.mrb[0].mxu0
    %v3972 = vadd.f32 0.0, %v3971
    %v3973 = vpop.f32.mrb[0].mxu0
    %v3974 = vadd.f32 0.0, %v3973
    %v3975 = vpop.f32.mrb[0].mxu0
    %v3976 = vadd.f32 0.0, %v3975
    %3977 = vdwg.mxu0
    %3978 = vmatprep.subr.bf16.mxu0 %v3758
    %3979 = vmatpush1.bf16.msra.mxu0 %v3757
    %3980 = vmatprep.subr.bf16.mxu0 %v3762
    %3981 = vmatpush1.bf16.msra.mxu0 %v3761
    %3982 = vmatprep.subr.bf16.mxu0 %v3766
    %3983 = vmatpush1.bf16.msra.mxu0 %v3765
    %3984 = vmatprep.subr.bf16.mxu0 %v3770
    %3985 = vmatpush1.bf16.msra.mxu0 %v3769
    %3986 = vmatprep.subr.bf16.mxu0 %v3774
    %3987 = vmatpush1.bf16.msra.mxu0 %v3773
    %3988 = vmatprep.subr.bf16.mxu0 %v3778
    %3989 = vmatpush1.bf16.msra.mxu0 %v3777
    %3990 = vmatprep.subr.bf16.mxu0 %v3782
    %3991 = vmatpush1.bf16.msra.mxu0 %v3781
    %3992 = vmatprep.subr.bf16.mxu0 %v3786
    %3993 = vmatpush1.bf16.msra.mxu0 %v3785
    %3994 = vmatprep.subr.bf16.mxu0 %v3790
    %3995 = vmatpush1.bf16.msra.mxu0 %v3789
    %3996 = vmatprep.subr.bf16.mxu0 %v3794
    %3997 = vmatpush1.bf16.msra.mxu0 %v3793
    %3998 = vmatprep.subr.bf16.mxu0 %v3798
    %3999 = vmatpush1.bf16.msra.mxu0 %v3797
    %4000 = vmatprep.subr.bf16.mxu0 %v3802
    %4001 = vmatpush1.bf16.msra.mxu0 %v3801
    %4002 = vmatprep.subr.bf16.mxu0 %v3806
    %4003 = vmatpush1.bf16.msra.mxu0 %v3805
    %4004 = vmatprep.subr.bf16.mxu0 %v3810
    %4005 = vmatpush1.bf16.msra.mxu0 %v3809
    %4006 = vmatprep.subr.bf16.mxu0 %v3814
    %4007 = vmatpush1.bf16.msra.mxu0 %v3813
    %4008 = vmatprep.subr.bf16.mxu0 %v3818
    %4009 = vmatpush1.bf16.msra.mxu0 %v3817
    %4010 = vmatprep.mubr.bf16.mxu0 %v3669
    %4011 = vmatmul.mubr.bf16.gmra.mrb[0].mxu0 %v3666
    %v4012 = vpop.f32.mrb[0].mxu0
    %v4013 = vadd.f32 %v3960, %v4012
    %v4014 = vpop.f32.mrb[0].mxu0
    %v4015 = vadd.f32 %v3962, %v4014
    %v4016 = vpop.f32.mrb[0].mxu0
    %v4017 = vadd.f32 %v3964, %v4016
    %v4018 = vpop.f32.mrb[0].mxu0
    %v4019 = vadd.f32 %v3966, %v4018
    %4020 = vmatprep.mubr.bf16.mxu0 %v3681
    %4021 = vmatmul.mubr.bf16.gmra.mrb[0].mxu0 %v3678
    %v4022 = vpop.f32.mrb[0].mxu0
    %v4023 = vadd.f32 %v3970, %v4022
    %v4024 = vpop.f32.mrb[0].mxu0
    %v4025 = vadd.f32 %v3972, %v4024
    %v4026 = vpop.f32.mrb[0].mxu0
    %v4027 = vadd.f32 %v3974, %v4026
    %v4028 = vpop.f32.mrb[0].mxu0
    %v4029 = vadd.f32 %v3976, %v4028
    %4030 = vdwg.mxu0
    %v4031 = vadd.f32 %v3618, %v3907
    %v4032 = vadd.f32 %v3619, %v3909
    %v4033 = vadd.f32 %v3620, %v4013
    %v4034 = vadd.f32 %v3621, %v4015
    %v4035 = vadd.f32 %v3622, %v3911
    %v4036 = vadd.f32 %v3623, %v3913
    %v4037 = vadd.f32 %v3624, %v4017
    %v4038 = vadd.f32 %v3625, %v4019
    %v4039 = vadd.f32 %v3626, %v3917
    %v4040 = vadd.f32 %v3627, %v3919
    %v4041 = vadd.f32 %v3628, %v4023
    %v4042 = vadd.f32 %v3629, %v4025
    %v4043 = vadd.f32 %v3630, %v3921
    %v4044 = vadd.f32 %v3631, %v3923
    %v4045 = vadd.f32 %v3632, %v4027
    %v4046 = vadd.f32 %v3633, %v4029
    %s4047 = scalar_lea.vmem [#allocation12], 1
    %v4048 = vld [vmem:[%s4047] ss:$4 sm:$0xf]
    %v4050 = vlaneseq
    %v4051 = vshrl.u32 %v4050, 7
    %v4052 = vsub.s32 0, %v4051
    %v4053 = vrot.slane %v4048, %v4052
    %v4054 = vlaneseq
    %v4055 = vshrl.u32 %v4054, 7
    %v4056 = vsub.s32 1, %v4055
    %v4057 = vrot.slane %v4048, %v4056
    %v4058 = vlaneseq
    %v4059 = vshrl.u32 %v4058, 7
    %v4060 = vsub.s32 2, %v4059
    %v4061 = vrot.slane %v4048, %v4060
    %v4062 = vlaneseq
    %v4063 = vshrl.u32 %v4062, 7
    %v4064 = vsub.s32 3, %v4063
    %v4065 = vrot.slane %v4048, %v4064
    %v4070 = vadd.f32 %v4031, %v4053
    %v4071 = vadd.f32 %v4032, %v4057
    %v4072 = vadd.f32 %v4033, %v4061
    %v4073 = vadd.f32 %v4034, %v4065
    %v4074 = vadd.f32 %v4035, %v4053
    %v4075 = vadd.f32 %v4036, %v4057
    %v4076 = vadd.f32 %v4037, %v4061
    %v4077 = vadd.f32 %v4038, %v4065
    %v4078 = vadd.f32 %v4039, %v4053
    %v4079 = vadd.f32 %v4040, %v4057
    %v4080 = vadd.f32 %v4041, %v4061
    %v4081 = vadd.f32 %v4042, %v4065
    %v4082 = vadd.f32 %v4043, %v4053
    %v4083 = vadd.f32 %v4044, %v4057
    %v4084 = vadd.f32 %v4045, %v4061
    %v4085 = vadd.f32 %v4046, %v4065
    %v4086 = vtanh.pop %v4070
    %v4087 = vtanh.pop %v4071
    %v4088 = vtanh.pop %v4072
    %v4089 = vtanh.pop %v4073
    %v4090 = vtanh.pop %v4074
    %v4091 = vtanh.pop %v4075
    %v4092 = vtanh.pop %v4076
    %v4093 = vtanh.pop %v4077
    %v4094 = vtanh.pop %v4078
    %v4095 = vtanh.pop %v4079
    %v4096 = vtanh.pop %v4080
    %v4097 = vtanh.pop %v4081
    %v4098 = vtanh.pop %v4082
    %v4099 = vtanh.pop %v4083
    %v4100 = vtanh.pop %v4084
    %v4101 = vtanh.pop %v4085
    %v4102 = vpack.c.bf16 %v4090, %v4086
    %v4103 = vpack.c.bf16 %v4091, %v4087
    %v4104 = vpack.c.bf16 %v4092, %v4088
    %v4105 = vpack.c.bf16 %v4093, %v4089
    %v4106 = vpack.c.bf16 %v4098, %v4094
    %v4107 = vpack.c.bf16 %v4099, %v4095
    %v4108 = vpack.c.bf16 %v4100, %v4096
    %v4109 = vpack.c.bf16 %v4101, %v4097
    %4110 = vst [vmem:[#allocation3 + $0x20] sm:$0xff] %v4102
    %4111 = vst [vmem:[#allocation3 + $0x28] sm:$0xff] %v4103
    %4112 = vst [vmem:[#allocation3 + $0x30] sm:$0xff] %v4104
    %4113 = vst [vmem:[#allocation3 + $0x38] sm:$0xff] %v4105
    %4114 = vst [vmem:[#allocation3 + $0x80] sm:$0xff] %v4106
    %4115 = vst [vmem:[#allocation3 + $0x88] sm:$0xff] %v4107
    %4116 = vst [vmem:[#allocation3 + $0x90] sm:$0xff] %v4108
    %4117 = vst [vmem:[#allocation3 + $0x98] sm:$0xff] %v4109
    %s4118 = sshll.u32 %s1940, 4
    %4119 = dma.done %s124, %s4118
    %v4120 = vld [vmem:[#allocation3] sm:$0x80]
    %v4121 = vld [vmem:[#allocation3 + $0x8] sm:$0x80]
    %v4122 = vld [vmem:[#allocation3 + $0x10] sm:$0x80]
    %v4123 = vld [vmem:[#allocation3 + $0x18] sm:$0x80]
    %v4124 = vld [vmem:[#allocation3 + $0x20] sm:$0x7f]
    %v4125 = vld [vmem:[#allocation3 + $0x28] sm:$0x7f]
    %v4126 = vld [vmem:[#allocation3 + $0x30] sm:$0x7f]
    %v4127 = vld [vmem:[#allocation3 + $0x38] sm:$0x7f]
    %v4128 = vld [vmem:[#allocation3 + $0x60] sm:$0x80]
    %v4129 = vld [vmem:[#allocation3 + $0x68] sm:$0x80]
    %v4130 = vld [vmem:[#allocation3 + $0x70] sm:$0x80]
    %v4131 = vld [vmem:[#allocation3 + $0x78] sm:$0x80]
    %v4132 = vld [vmem:[#allocation3 + $0x80] sm:$0x7f]
    %v4133 = vld [vmem:[#allocation3 + $0x88] sm:$0x7f]
    %v4134 = vld [vmem:[#allocation3 + $0x90] sm:$0x7f]
    %v4135 = vld [vmem:[#allocation3 + $0x98] sm:$0x7f]
    %v4152 = vrot.slane %v4120, 7
    %v4153 = vrot.slane %v4124, 7
    %v4154 = vsel %vm242, %v4152, %v4153
    %v4155 = vrot.slane %v4121, 7
    %v4156 = vrot.slane %v4125, 7
    %v4157 = vsel %vm242, %v4155, %v4156
    %v4158 = vrot.slane %v4122, 7
    %v4159 = vrot.slane %v4126, 7
    %v4160 = vsel %vm242, %v4158, %v4159
    %v4161 = vrot.slane %v4123, 7
    %v4162 = vrot.slane %v4127, 7
    %v4163 = vsel %vm242, %v4161, %v4162
    %v4164 = vrot.slane %v4128, 7
    %v4165 = vrot.slane %v4132, 7
    %v4166 = vsel %vm242, %v4164, %v4165
    %v4167 = vrot.slane %v4129, 7
    %v4168 = vrot.slane %v4133, 7
    %v4169 = vsel %vm242, %v4167, %v4168
    %v4170 = vrot.slane %v4130, 7
    %v4171 = vrot.slane %v4134, 7
    %v4172 = vsel %vm242, %v4170, %v4171
    %v4173 = vrot.slane %v4131, 7
    %v4174 = vrot.slane %v4135, 7
    %v4175 = vsel %vm242, %v4173, %v4174
    %v4184 = vld [vmem:[%s123] sm:$0xff]
    %v4185 = vld [vmem:[%s123 + $0x8] sm:$0xff]
    %v4186 = vld [vmem:[%s123 + $0x10] sm:$0xff]
    %v4187 = vld [vmem:[%s123 + $0x18] sm:$0xff]
    %v4188 = vld [vmem:[%s123 + $0x20] sm:$0xff]
    %v4189 = vld [vmem:[%s123 + $0x28] sm:$0xff]
    %v4190 = vld [vmem:[%s123 + $0x30] sm:$0xff]
    %v4191 = vld [vmem:[%s123 + $0x38] sm:$0xff]
    %v4192 = vld [vmem:[%s123 + $0x40] sm:$0xff]
    %v4193 = vld [vmem:[%s123 + $0x48] sm:$0xff]
    %v4194 = vld [vmem:[%s123 + $0x50] sm:$0xff]
    %v4195 = vld [vmem:[%s123 + $0x58] sm:$0xff]
    %v4196 = vld [vmem:[%s123 + $0x60] sm:$0xff]
    %v4197 = vld [vmem:[%s123 + $0x68] sm:$0xff]
    %v4198 = vld [vmem:[%s123 + $0x70] sm:$0xff]
    %v4199 = vld [vmem:[%s123 + $0x78] sm:$0xff]
    %v4200 = vld [vmem:[%s123 + $0x80] sm:$0xff]
    %v4201 = vld [vmem:[%s123 + $0x88] sm:$0xff]
    %v4202 = vld [vmem:[%s123 + $0x90] sm:$0xff]
    %v4203 = vld [vmem:[%s123 + $0x98] sm:$0xff]
    %v4204 = vld [vmem:[%s123 + $0xa0] sm:$0xff]
    %v4205 = vld [vmem:[%s123 + $0xa8] sm:$0xff]
    %v4206 = vld [vmem:[%s123 + $0xb0] sm:$0xff]
    %v4207 = vld [vmem:[%s123 + $0xb8] sm:$0xff]
    %v4208 = vld [vmem:[%s123 + $0xc0] sm:$0xff]
    %v4209 = vld [vmem:[%s123 + $0xc8] sm:$0xff]
    %v4210 = vld [vmem:[%s123 + $0xd0] sm:$0xff]
    %v4211 = vld [vmem:[%s123 + $0xd8] sm:$0xff]
    %v4212 = vld [vmem:[%s123 + $0xe0] sm:$0xff]
    %v4213 = vld [vmem:[%s123 + $0xe8] sm:$0xff]
    %v4214 = vld [vmem:[%s123 + $0xf0] sm:$0xff]
    %v4215 = vld [vmem:[%s123 + $0xf8] sm:$0xff]
    %v4216 = vld [vmem:[%s123 + $0x100] sm:$0xff]
    %v4217 = vld [vmem:[%s123 + $0x108] sm:$0xff]
    %v4218 = vld [vmem:[%s123 + $0x110] sm:$0xff]
    %v4219 = vld [vmem:[%s123 + $0x118] sm:$0xff]
    %v4220 = vld [vmem:[%s123 + $0x120] sm:$0xff]
    %v4221 = vld [vmem:[%s123 + $0x128] sm:$0xff]
    %v4222 = vld [vmem:[%s123 + $0x130] sm:$0xff]
    %v4223 = vld [vmem:[%s123 + $0x138] sm:$0xff]
    %v4224 = vld [vmem:[%s123 + $0x140] sm:$0xff]
    %v4225 = vld [vmem:[%s123 + $0x148] sm:$0xff]
    %v4226 = vld [vmem:[%s123 + $0x150] sm:$0xff]
    %v4227 = vld [vmem:[%s123 + $0x158] sm:$0xff]
    %v4228 = vld [vmem:[%s123 + $0x160] sm:$0xff]
    %v4229 = vld [vmem:[%s123 + $0x168] sm:$0xff]
    %v4230 = vld [vmem:[%s123 + $0x170] sm:$0xff]
    %v4231 = vld [vmem:[%s123 + $0x178] sm:$0xff]
    %v4232 = vld [vmem:[%s123 + $0x180] sm:$0xff]
    %v4233 = vld [vmem:[%s123 + $0x188] sm:$0xff]
    %v4234 = vld [vmem:[%s123 + $0x190] sm:$0xff]
    %v4235 = vld [vmem:[%s123 + $0x198] sm:$0xff]
    %v4236 = vld [vmem:[%s123 + $0x1a0] sm:$0xff]
    %v4237 = vld [vmem:[%s123 + $0x1a8] sm:$0xff]
    %v4238 = vld [vmem:[%s123 + $0x1b0] sm:$0xff]
    %v4239 = vld [vmem:[%s123 + $0x1b8] sm:$0xff]
    %v4240 = vld [vmem:[%s123 + $0x1c0] sm:$0xff]
    %v4241 = vld [vmem:[%s123 + $0x1c8] sm:$0xff]
    %v4242 = vld [vmem:[%s123 + $0x1d0] sm:$0xff]
    %v4243 = vld [vmem:[%s123 + $0x1d8] sm:$0xff]
    %v4244 = vld [vmem:[%s123 + $0x1e0] sm:$0xff]
    %v4245 = vld [vmem:[%s123 + $0x1e8] sm:$0xff]
    %v4246 = vld [vmem:[%s123 + $0x1f0] sm:$0xff]
    %v4247 = vld [vmem:[%s123 + $0x1f8] sm:$0xff]
    %v4248 = vld [vmem:[%s123 + $0x200] sm:$0xff]
    %v4249 = vld [vmem:[%s123 + $0x208] sm:$0xff]
    %v4250 = vld [vmem:[%s123 + $0x210] sm:$0xff]
    %v4251 = vld [vmem:[%s123 + $0x218] sm:$0xff]
    %v4252 = vld [vmem:[%s123 + $0x220] sm:$0xff]
    %v4253 = vld [vmem:[%s123 + $0x228] sm:$0xff]
    %v4254 = vld [vmem:[%s123 + $0x230] sm:$0xff]
    %v4255 = vld [vmem:[%s123 + $0x238] sm:$0xff]
    %v4256 = vld [vmem:[%s123 + $0x240] sm:$0xff]
    %v4257 = vld [vmem:[%s123 + $0x248] sm:$0xff]
    %v4258 = vld [vmem:[%s123 + $0x250] sm:$0xff]
    %v4259 = vld [vmem:[%s123 + $0x258] sm:$0xff]
    %v4260 = vld [vmem:[%s123 + $0x260] sm:$0xff]
    %v4261 = vld [vmem:[%s123 + $0x268] sm:$0xff]
    %v4262 = vld [vmem:[%s123 + $0x270] sm:$0xff]
    %v4263 = vld [vmem:[%s123 + $0x278] sm:$0xff]
    %v4264 = vld [vmem:[%s123 + $0x280] sm:$0xff]
    %v4265 = vld [vmem:[%s123 + $0x288] sm:$0xff]
    %v4266 = vld [vmem:[%s123 + $0x290] sm:$0xff]
    %v4267 = vld [vmem:[%s123 + $0x298] sm:$0xff]
    %v4268 = vld [vmem:[%s123 + $0x2a0] sm:$0xff]
    %v4269 = vld [vmem:[%s123 + $0x2a8] sm:$0xff]
    %v4270 = vld [vmem:[%s123 + $0x2b0] sm:$0xff]
    %v4271 = vld [vmem:[%s123 + $0x2b8] sm:$0xff]
    %v4272 = vld [vmem:[%s123 + $0x2c0] sm:$0xff]
    %v4273 = vld [vmem:[%s123 + $0x2c8] sm:$0xff]
    %v4274 = vld [vmem:[%s123 + $0x2d0] sm:$0xff]
    %v4275 = vld [vmem:[%s123 + $0x2d8] sm:$0xff]
    %v4276 = vld [vmem:[%s123 + $0x2e0] sm:$0xff]
    %v4277 = vld [vmem:[%s123 + $0x2e8] sm:$0xff]
    %v4278 = vld [vmem:[%s123 + $0x2f0] sm:$0xff]
    %v4279 = vld [vmem:[%s123 + $0x2f8] sm:$0xff]
    %v4280 = vld [vmem:[%s123 + $0x300] sm:$0xff]
    %v4281 = vld [vmem:[%s123 + $0x308] sm:$0xff]
    %v4282 = vld [vmem:[%s123 + $0x310] sm:$0xff]
    %v4283 = vld [vmem:[%s123 + $0x318] sm:$0xff]
    %v4284 = vld [vmem:[%s123 + $0x320] sm:$0xff]
    %v4285 = vld [vmem:[%s123 + $0x328] sm:$0xff]
    %v4286 = vld [vmem:[%s123 + $0x330] sm:$0xff]
    %v4287 = vld [vmem:[%s123 + $0x338] sm:$0xff]
    %v4288 = vld [vmem:[%s123 + $0x340] sm:$0xff]
    %v4289 = vld [vmem:[%s123 + $0x348] sm:$0xff]
    %v4290 = vld [vmem:[%s123 + $0x350] sm:$0xff]
    %v4291 = vld [vmem:[%s123 + $0x358] sm:$0xff]
    %v4292 = vld [vmem:[%s123 + $0x360] sm:$0xff]
    %v4293 = vld [vmem:[%s123 + $0x368] sm:$0xff]
    %v4294 = vld [vmem:[%s123 + $0x370] sm:$0xff]
    %v4295 = vld [vmem:[%s123 + $0x378] sm:$0xff]
    %v4296 = vld [vmem:[%s123 + $0x380] sm:$0xff]
    %v4297 = vld [vmem:[%s123 + $0x388] sm:$0xff]
    %v4298 = vld [vmem:[%s123 + $0x390] sm:$0xff]
    %v4299 = vld [vmem:[%s123 + $0x398] sm:$0xff]
    %v4300 = vld [vmem:[%s123 + $0x3a0] sm:$0xff]
    %v4301 = vld [vmem:[%s123 + $0x3a8] sm:$0xff]
    %v4302 = vld [vmem:[%s123 + $0x3b0] sm:$0xff]
    %v4303 = vld [vmem:[%s123 + $0x3b8] sm:$0xff]
    %v4304 = vld [vmem:[%s123 + $0x3c0] sm:$0xff]
    %v4305 = vld [vmem:[%s123 + $0x3c8] sm:$0xff]
    %v4306 = vld [vmem:[%s123 + $0x3d0] sm:$0xff]
    %v4307 = vld [vmem:[%s123 + $0x3d8] sm:$0xff]
    %v4308 = vld [vmem:[%s123 + $0x3e0] sm:$0xff]
    %v4309 = vld [vmem:[%s123 + $0x3e8] sm:$0xff]
    %v4310 = vld [vmem:[%s123 + $0x3f0] sm:$0xff]
    %v4311 = vld [vmem:[%s123 + $0x3f8] sm:$0xff]
    %v4312 = vld [vmem:[#allocation3 + $0x20] sm:$0xff]
    %v4313 = vld [vmem:[#allocation3 + $0x28] sm:$0xff]
    %v4314 = vld [vmem:[#allocation3 + $0x30] sm:$0xff]
    %v4315 = vld [vmem:[#allocation3 + $0x38] sm:$0xff]
    %v4316 = vld [vmem:[#allocation3 + $0x80] sm:$0xff]
    %v4317 = vld [vmem:[#allocation3 + $0x88] sm:$0xff]
    %v4318 = vld [vmem:[#allocation3 + $0x90] sm:$0xff]
    %v4319 = vld [vmem:[#allocation3 + $0x98] sm:$0xff]
    %v4321 = vshrl.u32 %v4120, 16
    %v4323 = vrot.slane %v4321, 7
    %v4325 = vshrl.u32 %v4312, 16
    %v4327 = vrot.slane %v4325, 7
    %v4328 = vshll.u32 %v4312, 16
    %v4330 = vor.u32 %v4327, %v4328
    %v4331 = vsel %vm285, %v4323, %v4330
    %v4333 = vshrl.u32 %v4121, 16
    %v4335 = vrot.slane %v4333, 7
    %v4337 = vshrl.u32 %v4313, 16
    %v4339 = vrot.slane %v4337, 7
    %v4340 = vshll.u32 %v4313, 16
    %v4342 = vor.u32 %v4339, %v4340
    %v4343 = vsel %vm285, %v4335, %v4342
    %v4345 = vshrl.u32 %v4122, 16
    %v4347 = vrot.slane %v4345, 7
    %v4349 = vshrl.u32 %v4314, 16
    %v4351 = vrot.slane %v4349, 7
    %v4352 = vshll.u32 %v4314, 16
    %v4354 = vor.u32 %v4351, %v4352
    %v4355 = vsel %vm285, %v4347, %v4354
    %v4357 = vshrl.u32 %v4123, 16
    %v4359 = vrot.slane %v4357, 7
    %v4361 = vshrl.u32 %v4315, 16
    %v4363 = vrot.slane %v4361, 7
    %v4364 = vshll.u32 %v4315, 16
    %v4366 = vor.u32 %v4363, %v4364
    %v4367 = vsel %vm285, %v4359, %v4366
    %v4369 = vshrl.u32 %v4128, 16
    %v4371 = vrot.slane %v4369, 7
    %v4373 = vshrl.u32 %v4316, 16
    %v4375 = vrot.slane %v4373, 7
    %v4376 = vshll.u32 %v4316, 16
    %v4378 = vor.u32 %v4375, %v4376
    %v4379 = vsel %vm285, %v4371, %v4378
    %v4381 = vshrl.u32 %v4129, 16
    %v4383 = vrot.slane %v4381, 7
    %v4385 = vshrl.u32 %v4317, 16
    %v4387 = vrot.slane %v4385, 7
    %v4388 = vshll.u32 %v4317, 16
    %v4390 = vor.u32 %v4387, %v4388
    %v4391 = vsel %vm285, %v4383, %v4390
    %v4393 = vshrl.u32 %v4130, 16
    %v4395 = vrot.slane %v4393, 7
    %v4397 = vshrl.u32 %v4318, 16
    %v4399 = vrot.slane %v4397, 7
    %v4400 = vshll.u32 %v4318, 16
    %v4402 = vor.u32 %v4399, %v4400
    %v4403 = vsel %vm285, %v4395, %v4402
    %v4405 = vshrl.u32 %v4131, 16
    %v4407 = vrot.slane %v4405, 7
    %v4409 = vshrl.u32 %v4319, 16
    %v4411 = vrot.slane %v4409, 7
    %v4412 = vshll.u32 %v4319, 16
    %v4414 = vor.u32 %v4411, %v4412
    %v4415 = vsel %vm285, %v4407, %v4414
    %s4424 = scalar_lea.vmem [#allocation4], 6144
    %v4425 = vld [vmem:[%s4424] sm:$0xff]
    %v4426 = vld [vmem:[%s4424 + $0x8] sm:$0xff]
    %v4427 = vld [vmem:[%s4424 + $0x10] sm:$0xff]
    %v4428 = vld [vmem:[%s4424 + $0x18] sm:$0xff]
    %v4429 = vld [vmem:[%s4424 + $0x20] sm:$0xff]
    %v4430 = vld [vmem:[%s4424 + $0x28] sm:$0xff]
    %v4431 = vld [vmem:[%s4424 + $0x30] sm:$0xff]
    %v4432 = vld [vmem:[%s4424 + $0x38] sm:$0xff]
    %v4433 = vld [vmem:[%s4424 + $0x40] sm:$0xff]
    %v4434 = vld [vmem:[%s4424 + $0x48] sm:$0xff]
    %v4435 = vld [vmem:[%s4424 + $0x50] sm:$0xff]
    %v4436 = vld [vmem:[%s4424 + $0x58] sm:$0xff]
    %v4437 = vld [vmem:[%s4424 + $0x60] sm:$0xff]
    %v4438 = vld [vmem:[%s4424 + $0x68] sm:$0xff]
    %v4439 = vld [vmem:[%s4424 + $0x70] sm:$0xff]
    %v4440 = vld [vmem:[%s4424 + $0x78] sm:$0xff]
    %v4441 = vld [vmem:[%s4424 + $0x80] sm:$0xff]
    %v4442 = vld [vmem:[%s4424 + $0x88] sm:$0xff]
    %v4443 = vld [vmem:[%s4424 + $0x90] sm:$0xff]
    %v4444 = vld [vmem:[%s4424 + $0x98] sm:$0xff]
    %v4445 = vld [vmem:[%s4424 + $0xa0] sm:$0xff]
    %v4446 = vld [vmem:[%s4424 + $0xa8] sm:$0xff]
    %v4447 = vld [vmem:[%s4424 + $0xb0] sm:$0xff]
    %v4448 = vld [vmem:[%s4424 + $0xb8] sm:$0xff]
    %v4449 = vld [vmem:[%s4424 + $0xc0] sm:$0xff]
    %v4450 = vld [vmem:[%s4424 + $0xc8] sm:$0xff]
    %v4451 = vld [vmem:[%s4424 + $0xd0] sm:$0xff]
    %v4452 = vld [vmem:[%s4424 + $0xd8] sm:$0xff]
    %v4453 = vld [vmem:[%s4424 + $0xe0] sm:$0xff]
    %v4454 = vld [vmem:[%s4424 + $0xe8] sm:$0xff]
    %v4455 = vld [vmem:[%s4424 + $0xf0] sm:$0xff]
    %v4456 = vld [vmem:[%s4424 + $0xf8] sm:$0xff]
    %v4457 = vld [vmem:[%s4424 + $0x100] sm:$0xff]
    %v4458 = vld [vmem:[%s4424 + $0x108] sm:$0xff]
    %v4459 = vld [vmem:[%s4424 + $0x110] sm:$0xff]
    %v4460 = vld [vmem:[%s4424 + $0x118] sm:$0xff]
    %v4461 = vld [vmem:[%s4424 + $0x120] sm:$0xff]
    %v4462 = vld [vmem:[%s4424 + $0x128] sm:$0xff]
    %v4463 = vld [vmem:[%s4424 + $0x130] sm:$0xff]
    %v4464 = vld [vmem:[%s4424 + $0x138] sm:$0xff]
    %v4465 = vld [vmem:[%s4424 + $0x140] sm:$0xff]
    %v4466 = vld [vmem:[%s4424 + $0x148] sm:$0xff]
    %v4467 = vld [vmem:[%s4424 + $0x150] sm:$0xff]
    %v4468 = vld [vmem:[%s4424 + $0x158] sm:$0xff]
    %v4469 = vld [vmem:[%s4424 + $0x160] sm:$0xff]
    %v4470 = vld [vmem:[%s4424 + $0x168] sm:$0xff]
    %v4471 = vld [vmem:[%s4424 + $0x170] sm:$0xff]
    %v4472 = vld [vmem:[%s4424 + $0x178] sm:$0xff]
    %v4473 = vld [vmem:[%s4424 + $0x180] sm:$0xff]
    %v4474 = vld [vmem:[%s4424 + $0x188] sm:$0xff]
    %v4475 = vld [vmem:[%s4424 + $0x190] sm:$0xff]
    %v4476 = vld [vmem:[%s4424 + $0x198] sm:$0xff]
    %v4477 = vld [vmem:[%s4424 + $0x1a0] sm:$0xff]
    %v4478 = vld [vmem:[%s4424 + $0x1a8] sm:$0xff]
    %v4479 = vld [vmem:[%s4424 + $0x1b0] sm:$0xff]
    %v4480 = vld [vmem:[%s4424 + $0x1b8] sm:$0xff]
    %v4481 = vld [vmem:[%s4424 + $0x1c0] sm:$0xff]
    %v4482 = vld [vmem:[%s4424 + $0x1c8] sm:$0xff]
    %v4483 = vld [vmem:[%s4424 + $0x1d0] sm:$0xff]
    %v4484 = vld [vmem:[%s4424 + $0x1d8] sm:$0xff]
    %v4485 = vld [vmem:[%s4424 + $0x1e0] sm:$0xff]
    %v4486 = vld [vmem:[%s4424 + $0x1e8] sm:$0xff]
    %v4487 = vld [vmem:[%s4424 + $0x1f0] sm:$0xff]
    %v4488 = vld [vmem:[%s4424 + $0x1f8] sm:$0xff]
    %v4489 = vld [vmem:[%s4424 + $0x200] sm:$0xff]
    %v4490 = vld [vmem:[%s4424 + $0x208] sm:$0xff]
    %v4491 = vld [vmem:[%s4424 + $0x210] sm:$0xff]
    %v4492 = vld [vmem:[%s4424 + $0x218] sm:$0xff]
    %v4493 = vld [vmem:[%s4424 + $0x220] sm:$0xff]
    %v4494 = vld [vmem:[%s4424 + $0x228] sm:$0xff]
    %v4495 = vld [vmem:[%s4424 + $0x230] sm:$0xff]
    %v4496 = vld [vmem:[%s4424 + $0x238] sm:$0xff]
    %v4497 = vld [vmem:[%s4424 + $0x240] sm:$0xff]
    %v4498 = vld [vmem:[%s4424 + $0x248] sm:$0xff]
    %v4499 = vld [vmem:[%s4424 + $0x250] sm:$0xff]
    %v4500 = vld [vmem:[%s4424 + $0x258] sm:$0xff]
    %v4501 = vld [vmem:[%s4424 + $0x260] sm:$0xff]
    %v4502 = vld [vmem:[%s4424 + $0x268] sm:$0xff]
    %v4503 = vld [vmem:[%s4424 + $0x270] sm:$0xff]
    %v4504 = vld [vmem:[%s4424 + $0x278] sm:$0xff]
    %v4505 = vld [vmem:[%s4424 + $0x280] sm:$0xff]
    %v4506 = vld [vmem:[%s4424 + $0x288] sm:$0xff]
    %v4507 = vld [vmem:[%s4424 + $0x290] sm:$0xff]
    %v4508 = vld [vmem:[%s4424 + $0x298] sm:$0xff]
    %v4509 = vld [vmem:[%s4424 + $0x2a0] sm:$0xff]
    %v4510 = vld [vmem:[%s4424 + $0x2a8] sm:$0xff]
    %v4511 = vld [vmem:[%s4424 + $0x2b0] sm:$0xff]
    %v4512 = vld [vmem:[%s4424 + $0x2b8] sm:$0xff]
    %v4513 = vld [vmem:[%s4424 + $0x2c0] sm:$0xff]
    %v4514 = vld [vmem:[%s4424 + $0x2c8] sm:$0xff]
    %v4515 = vld [vmem:[%s4424 + $0x2d0] sm:$0xff]
    %v4516 = vld [vmem:[%s4424 + $0x2d8] sm:$0xff]
    %v4517 = vld [vmem:[%s4424 + $0x2e0] sm:$0xff]
    %v4518 = vld [vmem:[%s4424 + $0x2e8] sm:$0xff]
    %v4519 = vld [vmem:[%s4424 + $0x2f0] sm:$0xff]
    %v4520 = vld [vmem:[%s4424 + $0x2f8] sm:$0xff]
    %v4521 = vld [vmem:[%s4424 + $0x300] sm:$0xff]
    %v4522 = vld [vmem:[%s4424 + $0x308] sm:$0xff]
    %v4523 = vld [vmem:[%s4424 + $0x310] sm:$0xff]
    %v4524 = vld [vmem:[%s4424 + $0x318] sm:$0xff]
    %v4525 = vld [vmem:[%s4424 + $0x320] sm:$0xff]
    %v4526 = vld [vmem:[%s4424 + $0x328] sm:$0xff]
    %v4527 = vld [vmem:[%s4424 + $0x330] sm:$0xff]
    %v4528 = vld [vmem:[%s4424 + $0x338] sm:$0xff]
    %v4529 = vld [vmem:[%s4424 + $0x340] sm:$0xff]
    %v4530 = vld [vmem:[%s4424 + $0x348] sm:$0xff]
    %v4531 = vld [vmem:[%s4424 + $0x350] sm:$0xff]
    %v4532 = vld [vmem:[%s4424 + $0x358] sm:$0xff]
    %v4533 = vld [vmem:[%s4424 + $0x360] sm:$0xff]
    %v4534 = vld [vmem:[%s4424 + $0x368] sm:$0xff]
    %v4535 = vld [vmem:[%s4424 + $0x370] sm:$0xff]
    %v4536 = vld [vmem:[%s4424 + $0x378] sm:$0xff]
    %v4537 = vld [vmem:[%s4424 + $0x380] sm:$0xff]
    %v4538 = vld [vmem:[%s4424 + $0x388] sm:$0xff]
    %v4539 = vld [vmem:[%s4424 + $0x390] sm:$0xff]
    %v4540 = vld [vmem:[%s4424 + $0x398] sm:$0xff]
    %v4541 = vld [vmem:[%s4424 + $0x3a0] sm:$0xff]
    %v4542 = vld [vmem:[%s4424 + $0x3a8] sm:$0xff]
    %v4543 = vld [vmem:[%s4424 + $0x3b0] sm:$0xff]
    %v4544 = vld [vmem:[%s4424 + $0x3b8] sm:$0xff]
    %v4545 = vld [vmem:[%s4424 + $0x3c0] sm:$0xff]
    %v4546 = vld [vmem:[%s4424 + $0x3c8] sm:$0xff]
    %v4547 = vld [vmem:[%s4424 + $0x3d0] sm:$0xff]
    %v4548 = vld [vmem:[%s4424 + $0x3d8] sm:$0xff]
    %v4549 = vld [vmem:[%s4424 + $0x3e0] sm:$0xff]
    %v4550 = vld [vmem:[%s4424 + $0x3e8] sm:$0xff]
    %v4551 = vld [vmem:[%s4424 + $0x3f0] sm:$0xff]
    %v4552 = vld [vmem:[%s4424 + $0x3f8] sm:$0xff]
    %4553 = vmatprep.subr.bf16.mxu0 %v4426
    %4554 = vmatpush1.bf16.msra.mxu0 %v4425
    %4555 = vmatprep.subr.bf16.mxu0 %v4430
    %4556 = vmatpush1.bf16.msra.mxu0 %v4429
    %4557 = vmatprep.subr.bf16.mxu0 %v4434
    %4558 = vmatpush1.bf16.msra.mxu0 %v4433
    %4559 = vmatprep.subr.bf16.mxu0 %v4438
    %4560 = vmatpush1.bf16.msra.mxu0 %v4437
    %4561 = vmatprep.subr.bf16.mxu0 %v4442
    %4562 = vmatpush1.bf16.msra.mxu0 %v4441
    %4563 = vmatprep.subr.bf16.mxu0 %v4446
    %4564 = vmatpush1.bf16.msra.mxu0 %v4445
    %4565 = vmatprep.subr.bf16.mxu0 %v4450
    %4566 = vmatpush1.bf16.msra.mxu0 %v4449
    %4567 = vmatprep.subr.bf16.mxu0 %v4454
    %4568 = vmatpush1.bf16.msra.mxu0 %v4453
    %4569 = vmatprep.subr.bf16.mxu0 %v4458
    %4570 = vmatpush1.bf16.msra.mxu0 %v4457
    %4571 = vmatprep.subr.bf16.mxu0 %v4462
    %4572 = vmatpush1.bf16.msra.mxu0 %v4461
    %4573 = vmatprep.subr.bf16.mxu0 %v4466
    %4574 = vmatpush1.bf16.msra.mxu0 %v4465
    %4575 = vmatprep.subr.bf16.mxu0 %v4470
    %4576 = vmatpush1.bf16.msra.mxu0 %v4469
    %4577 = vmatprep.subr.bf16.mxu0 %v4474
    %4578 = vmatpush1.bf16.msra.mxu0 %v4473
    %4579 = vmatprep.subr.bf16.mxu0 %v4478
    %4580 = vmatpush1.bf16.msra.mxu0 %v4477
    %4581 = vmatprep.subr.bf16.mxu0 %v4482
    %4582 = vmatpush1.bf16.msra.mxu0 %v4481
    %4583 = vmatprep.subr.bf16.mxu0 %v4486
    %4584 = vmatpush1.bf16.msra.mxu0 %v4485
    %4585 = vmatprep.mubr.bf16.mxu0 %v4343
    %4586 = vmatmul.mubr.bf16.gmra.mrb[0].mxu0 %v4331
    %v4587 = vpop.f32.mrb[0].mxu0
    %v4588 = vadd.f32 0.0, %v4587
    %v4589 = vpop.f32.mrb[0].mxu0
    %v4590 = vadd.f32 0.0, %v4589
    %v4591 = vpop.f32.mrb[0].mxu0
    %v4592 = vadd.f32 0.0, %v4591
    %v4593 = vpop.f32.mrb[0].mxu0
    %v4594 = vadd.f32 0.0, %v4593
    %4595 = vmatprep.mubr.bf16.mxu0 %v4391
    %4596 = vmatmul.mubr.bf16.gmra.mrb[0].mxu0 %v4379
    %v4597 = vpop.f32.mrb[0].mxu0
    %v4598 = vadd.f32 0.0, %v4597
    %v4599 = vpop.f32.mrb[0].mxu0
    %v4600 = vadd.f32 0.0, %v4599
    %v4601 = vpop.f32.mrb[0].mxu0
    %v4602 = vadd.f32 0.0, %v4601
    %v4603 = vpop.f32.mrb[0].mxu0
    %v4604 = vadd.f32 0.0, %v4603
    %4605 = vdwg.mxu0
    %4606 = vmatprep.subr.bf16.mxu0 %v4490
    %4607 = vmatpush1.bf16.msra.mxu0 %v4489
    %4608 = vmatprep.subr.bf16.mxu0 %v4494
    %4609 = vmatpush1.bf16.msra.mxu0 %v4493
    %4610 = vmatprep.subr.bf16.mxu0 %v4498
    %4611 = vmatpush1.bf16.msra.mxu0 %v4497
    %4612 = vmatprep.subr.bf16.mxu0 %v4502
    %4613 = vmatpush1.bf16.msra.mxu0 %v4501
    %4614 = vmatprep.subr.bf16.mxu0 %v4506
    %4615 = vmatpush1.bf16.msra.mxu0 %v4505
    %4616 = vmatprep.subr.bf16.mxu0 %v4510
    %4617 = vmatpush1.bf16.msra.mxu0 %v4509
    %4618 = vmatprep.subr.bf16.mxu0 %v4514
    %4619 = vmatpush1.bf16.msra.mxu0 %v4513
    %4620 = vmatprep.subr.bf16.mxu0 %v4518
    %4621 = vmatpush1.bf16.msra.mxu0 %v4517
    %4622 = vmatprep.subr.bf16.mxu0 %v4522
    %4623 = vmatpush1.bf16.msra.mxu0 %v4521
    %4624 = vmatprep.subr.bf16.mxu0 %v4526
    %4625 = vmatpush1.bf16.msra.mxu0 %v4525
    %4626 = vmatprep.subr.bf16.mxu0 %v4530
    %4627 = vmatpush1.bf16.msra.mxu0 %v4529
    %4628 = vmatprep.subr.bf16.mxu0 %v4534
    %4629 = vmatpush1.bf16.msra.mxu0 %v4533
    %4630 = vmatprep.subr.bf16.mxu0 %v4538
    %4631 = vmatpush1.bf16.msra.mxu0 %v4537
    %4632 = vmatprep.subr.bf16.mxu0 %v4542
    %4633 = vmatpush1.bf16.msra.mxu0 %v4541
    %4634 = vmatprep.subr.bf16.mxu0 %v4546
    %4635 = vmatpush1.bf16.msra.mxu0 %v4545
    %4636 = vmatprep.subr.bf16.mxu0 %v4550
    %4637 = vmatpush1.bf16.msra.mxu0 %v4549
    %4638 = vmatprep.mubr.bf16.mxu0 %v4367
    %4639 = vmatmul.mubr.bf16.gmra.mrb[0].mxu0 %v4355
    %v4640 = vpop.f32.mrb[0].mxu0
    %v4641 = vadd.f32 %v4588, %v4640
    %v4642 = vpop.f32.mrb[0].mxu0
    %v4643 = vadd.f32 %v4590, %v4642
    %v4644 = vpop.f32.mrb[0].mxu0
    %v4645 = vadd.f32 %v4592, %v4644
    %v4646 = vpop.f32.mrb[0].mxu0
    %v4647 = vadd.f32 %v4594, %v4646
    %4648 = vmatprep.mubr.bf16.mxu0 %v4415
    %4649 = vmatmul.mubr.bf16.gmra.mrb[0].mxu0 %v4403
    %v4650 = vpop.f32.mrb[0].mxu0
    %v4651 = vadd.f32 %v4598, %v4650
    %v4652 = vpop.f32.mrb[0].mxu0
    %v4653 = vadd.f32 %v4600, %v4652
    %v4654 = vpop.f32.mrb[0].mxu0
    %v4655 = vadd.f32 %v4602, %v4654
    %v4656 = vpop.f32.mrb[0].mxu0
    %v4657 = vadd.f32 %v4604, %v4656
    %4658 = vdwg.mxu0
    %4659 = vmatprep.subr.bf16.mxu0 %v4428
    %4660 = vmatpush1.bf16.msra.mxu0 %v4427
    %4661 = vmatprep.subr.bf16.mxu0 %v4432
    %4662 = vmatpush1.bf16.msra.mxu0 %v4431
    %4663 = vmatprep.subr.bf16.mxu0 %v4436
    %4664 = vmatpush1.bf16.msra.mxu0 %v4435
    %4665 = vmatprep.subr.bf16.mxu0 %v4440
    %4666 = vmatpush1.bf16.msra.mxu0 %v4439
    %4667 = vmatprep.subr.bf16.mxu0 %v4444
    %4668 = vmatpush1.bf16.msra.mxu0 %v4443
    %4669 = vmatprep.subr.bf16.mxu0 %v4448
    %4670 = vmatpush1.bf16.msra.mxu0 %v4447
    %4671 = vmatprep.subr.bf16.mxu0 %v4452
    %4672 = vmatpush1.bf16.msra.mxu0 %v4451
    %4673 = vmatprep.subr.bf16.mxu0 %v4456
    %4674 = vmatpush1.bf16.msra.mxu0 %v4455
    %4675 = vmatprep.subr.bf16.mxu0 %v4460
    %4676 = vmatpush1.bf16.msra.mxu0 %v4459
    %4677 = vmatprep.subr.bf16.mxu0 %v4464
    %4678 = vmatpush1.bf16.msra.mxu0 %v4463
    %4679 = vmatprep.subr.bf16.mxu0 %v4468
    %4680 = vmatpush1.bf16.msra.mxu0 %v4467
    %4681 = vmatprep.subr.bf16.mxu0 %v4472
    %4682 = vmatpush1.bf16.msra.mxu0 %v4471
    %4683 = vmatprep.subr.bf16.mxu0 %v4476
    %4684 = vmatpush1.bf16.msra.mxu0 %v4475
    %4685 = vmatprep.subr.bf16.mxu0 %v4480
    %4686 = vmatpush1.bf16.msra.mxu0 %v4479
    %4687 = vmatprep.subr.bf16.mxu0 %v4484
    %4688 = vmatpush1.bf16.msra.mxu0 %v4483
    %4689 = vmatprep.subr.bf16.mxu0 %v4488
    %4690 = vmatpush1.bf16.msra.mxu0 %v4487
    %4691 = vmatprep.mubr.bf16.mxu0 %v4343
    %4692 = vmatmul.mubr.bf16.gmra.mrb[0].mxu0 %v4331
    %v4693 = vpop.f32.mrb[0].mxu0
    %v4694 = vadd.f32 0.0, %v4693
    %v4695 = vpop.f32.mrb[0].mxu0
    %v4696 = vadd.f32 0.0, %v4695
    %v4697 = vpop.f32.mrb[0].mxu0
    %v4698 = vadd.f32 0.0, %v4697
    %v4699 = vpop.f32.mrb[0].mxu0
    %v4700 = vadd.f32 0.0, %v4699
    %4701 = vmatprep.mubr.bf16.mxu0 %v4391
    %4702 = vmatmul.mubr.bf16.gmra.mrb[0].mxu0 %v4379
    %v4703 = vpop.f32.mrb[0].mxu0
    %v4704 = vadd.f32 0.0, %v4703
    %v4705 = vpop.f32.mrb[0].mxu0
    %v4706 = vadd.f32 0.0, %v4705
    %v4707 = vpop.f32.mrb[0].mxu0
    %v4708 = vadd.f32 0.0, %v4707
    %v4709 = vpop.f32.mrb[0].mxu0
    %v4710 = vadd.f32 0.0, %v4709
    %4711 = vdwg.mxu0
    %4712 = vmatprep.subr.bf16.mxu0 %v4492
    %4713 = vmatpush1.bf16.msra.mxu0 %v4491
    %4714 = vmatprep.subr.bf16.mxu0 %v4496
    %4715 = vmatpush1.bf16.msra.mxu0 %v4495
    %4716 = vmatprep.subr.bf16.mxu0 %v4500
    %4717 = vmatpush1.bf16.msra.mxu0 %v4499
    %4718 = vmatprep.subr.bf16.mxu0 %v4504
    %4719 = vmatpush1.bf16.msra.mxu0 %v4503
    %4720 = vmatprep.subr.bf16.mxu0 %v4508
    %4721 = vmatpush1.bf16.msra.mxu0 %v4507
    %4722 = vmatprep.subr.bf16.mxu0 %v4512
    %4723 = vmatpush1.bf16.msra.mxu0 %v4511
    %4724 = vmatprep.subr.bf16.mxu0 %v4516
    %4725 = vmatpush1.bf16.msra.mxu0 %v4515
    %4726 = vmatprep.subr.bf16.mxu0 %v4520
    %4727 = vmatpush1.bf16.msra.mxu0 %v4519
    %4728 = vmatprep.subr.bf16.mxu0 %v4524
    %4729 = vmatpush1.bf16.msra.mxu0 %v4523
    %4730 = vmatprep.subr.bf16.mxu0 %v4528
    %4731 = vmatpush1.bf16.msra.mxu0 %v4527
    %4732 = vmatprep.subr.bf16.mxu0 %v4532
    %4733 = vmatpush1.bf16.msra.mxu0 %v4531
    %4734 = vmatprep.subr.bf16.mxu0 %v4536
    %4735 = vmatpush1.bf16.msra.mxu0 %v4535
    %4736 = vmatprep.subr.bf16.mxu0 %v4540
    %4737 = vmatpush1.bf16.msra.mxu0 %v4539
    %4738 = vmatprep.subr.bf16.mxu0 %v4544
    %4739 = vmatpush1.bf16.msra.mxu0 %v4543
    %4740 = vmatprep.subr.bf16.mxu0 %v4548
    %4741 = vmatpush1.bf16.msra.mxu0 %v4547
    %4742 = vmatprep.subr.bf16.mxu0 %v4552
    %4743 = vmatpush1.bf16.msra.mxu0 %v4551
    %4744 = vmatprep.mubr.bf16.mxu0 %v4367
    %4745 = vmatmul.mubr.bf16.gmra.mrb[0].mxu0 %v4355
    %v4746 = vpop.f32.mrb[0].mxu0
    %v4747 = vadd.f32 %v4694, %v4746
    %v4748 = vpop.f32.mrb[0].mxu0
    %v4749 = vadd.f32 %v4696, %v4748
    %v4750 = vpop.f32.mrb[0].mxu0
    %v4751 = vadd.f32 %v4698, %v4750
    %v4752 = vpop.f32.mrb[0].mxu0
    %v4753 = vadd.f32 %v4700, %v4752
    %4754 = vmatprep.mubr.bf16.mxu0 %v4415
    %4755 = vmatmul.mubr.bf16.gmra.mrb[0].mxu0 %v4403
    %v4756 = vpop.f32.mrb[0].mxu0
    %v4757 = vadd.f32 %v4704, %v4756
    %v4758 = vpop.f32.mrb[0].mxu0
    %v4759 = vadd.f32 %v4706, %v4758
    %v4760 = vpop.f32.mrb[0].mxu0
    %v4761 = vadd.f32 %v4708, %v4760
    %v4762 = vpop.f32.mrb[0].mxu0
    %v4763 = vadd.f32 %v4710, %v4762
    %4764 = vdwg.mxu0
    %4765 = vmatprep.subr.bf16.mxu0 %v4185
    %4766 = vmatpush1.bf16.msra.mxu0 %v4184
    %4767 = vmatprep.subr.bf16.mxu0 %v4189
    %4768 = vmatpush1.bf16.msra.mxu0 %v4188
    %4769 = vmatprep.subr.bf16.mxu0 %v4193
    %4770 = vmatpush1.bf16.msra.mxu0 %v4192
    %4771 = vmatprep.subr.bf16.mxu0 %v4197
    %4772 = vmatpush1.bf16.msra.mxu0 %v4196
    %4773 = vmatprep.subr.bf16.mxu0 %v4201
    %4774 = vmatpush1.bf16.msra.mxu0 %v4200
    %4775 = vmatprep.subr.bf16.mxu0 %v4205
    %4776 = vmatpush1.bf16.msra.mxu0 %v4204
    %4777 = vmatprep.subr.bf16.mxu0 %v4209
    %4778 = vmatpush1.bf16.msra.mxu0 %v4208
    %4779 = vmatprep.subr.bf16.mxu0 %v4213
    %4780 = vmatpush1.bf16.msra.mxu0 %v4212
    %4781 = vmatprep.subr.bf16.mxu0 %v4217
    %4782 = vmatpush1.bf16.msra.mxu0 %v4216
    %4783 = vmatprep.subr.bf16.mxu0 %v4221
    %4784 = vmatpush1.bf16.msra.mxu0 %v4220
    %4785 = vmatprep.subr.bf16.mxu0 %v4225
    %4786 = vmatpush1.bf16.msra.mxu0 %v4224
    %4787 = vmatprep.subr.bf16.mxu0 %v4229
    %4788 = vmatpush1.bf16.msra.mxu0 %v4228
    %4789 = vmatprep.subr.bf16.mxu0 %v4233
    %4790 = vmatpush1.bf16.msra.mxu0 %v4232
    %4791 = vmatprep.subr.bf16.mxu0 %v4237
    %4792 = vmatpush1.bf16.msra.mxu0 %v4236
    %4793 = vmatprep.subr.bf16.mxu0 %v4241
    %4794 = vmatpush1.bf16.msra.mxu0 %v4240
    %4795 = vmatprep.subr.bf16.mxu0 %v4245
    %4796 = vmatpush1.bf16.msra.mxu0 %v4244
    %4797 = vmatprep.mubr.bf16.mxu0 %v4157
    %4798 = vmatmul.mubr.bf16.gmra.mrb[0].mxu0 %v4154
    %v4799 = vpop.f32.mrb[0].mxu0
    %v4800 = vadd.f32 %v4641, %v4799
    %v4801 = vpop.f32.mrb[0].mxu0
    %v4802 = vadd.f32 %v4643, %v4801
    %v4803 = vpop.f32.mrb[0].mxu0
    %v4804 = vadd.f32 %v4645, %v4803
    %v4805 = vpop.f32.mrb[0].mxu0
    %v4806 = vadd.f32 %v4647, %v4805
    %4807 = vmatprep.mubr.bf16.mxu0 %v4169
    %4808 = vmatmul.mubr.bf16.gmra.mrb[0].mxu0 %v4166
    %v4809 = vpop.f32.mrb[0].mxu0
    %v4810 = vadd.f32 %v4651, %v4809
    %v4811 = vpop.f32.mrb[0].mxu0
    %v4812 = vadd.f32 %v4653, %v4811
    %v4813 = vpop.f32.mrb[0].mxu0
    %v4814 = vadd.f32 %v4655, %v4813
    %v4815 = vpop.f32.mrb[0].mxu0
    %v4816 = vadd.f32 %v4657, %v4815
    %4817 = vdwg.mxu0
    %4818 = vmatprep.subr.bf16.mxu0 %v4249
    %4819 = vmatpush1.bf16.msra.mxu0 %v4248
    %4820 = vmatprep.subr.bf16.mxu0 %v4253
    %4821 = vmatpush1.bf16.msra.mxu0 %v4252
    %4822 = vmatprep.subr.bf16.mxu0 %v4257
    %4823 = vmatpush1.bf16.msra.mxu0 %v4256
    %4824 = vmatprep.subr.bf16.mxu0 %v4261
    %4825 = vmatpush1.bf16.msra.mxu0 %v4260
    %4826 = vmatprep.subr.bf16.mxu0 %v4265
    %4827 = vmatpush1.bf16.msra.mxu0 %v4264
    %4828 = vmatprep.subr.bf16.mxu0 %v4269
    %4829 = vmatpush1.bf16.msra.mxu0 %v4268
    %4830 = vmatprep.subr.bf16.mxu0 %v4273
    %4831 = vmatpush1.bf16.msra.mxu0 %v4272
    %4832 = vmatprep.subr.bf16.mxu0 %v4277
    %4833 = vmatpush1.bf16.msra.mxu0 %v4276
    %4834 = vmatprep.subr.bf16.mxu0 %v4281
    %4835 = vmatpush1.bf16.msra.mxu0 %v4280
    %4836 = vmatprep.subr.bf16.mxu0 %v4285
    %4837 = vmatpush1.bf16.msra.mxu0 %v4284
    %4838 = vmatprep.subr.bf16.mxu0 %v4289
    %4839 = vmatpush1.bf16.msra.mxu0 %v4288
    %4840 = vmatprep.subr.bf16.mxu0 %v4293
    %4841 = vmatpush1.bf16.msra.mxu0 %v4292
    %4842 = vmatprep.subr.bf16.mxu0 %v4297
    %4843 = vmatpush1.bf16.msra.mxu0 %v4296
    %4844 = vmatprep.subr.bf16.mxu0 %v4301
    %4845 = vmatpush1.bf16.msra.mxu0 %v4300
    %4846 = vmatprep.subr.bf16.mxu0 %v4305
    %4847 = vmatpush1.bf16.msra.mxu0 %v4304
    %4848 = vmatprep.subr.bf16.mxu0 %v4309
    %4849 = vmatpush1.bf16.msra.mxu0 %v4308
    %4850 = vmatprep.mubr.bf16.mxu0 %v4163
    %4851 = vmatmul.mubr.bf16.gmra.mrb[0].mxu0 %v4160
    %v4852 = vpop.f32.mrb[0].mxu0
    %v4853 = vadd.f32 %v4800, %v4852
    %v4854 = vpop.f32.mrb[0].mxu0
    %v4855 = vadd.f32 %v4802, %v4854
    %v4856 = vpop.f32.mrb[0].mxu0
    %v4857 = vadd.f32 %v4804, %v4856
    %v4858 = vpop.f32.mrb[0].mxu0
    %v4859 = vadd.f32 %v4806, %v4858
    %4860 = vmatprep.mubr.bf16.mxu0 %v4175
    %4861 = vmatmul.mubr.bf16.gmra.mrb[0].mxu0 %v4172
    %v4862 = vpop.f32.mrb[0].mxu0
    %v4863 = vadd.f32 %v4810, %v4862
    %v4864 = vpop.f32.mrb[0].mxu0
    %v4865 = vadd.f32 %v4812, %v4864
    %v4866 = vpop.f32.mrb[0].mxu0
    %v4867 = vadd.f32 %v4814, %v4866
    %v4868 = vpop.f32.mrb[0].mxu0
    %v4869 = vadd.f32 %v4816, %v4868
    %4870 = vdwg.mxu0
    %4871 = vmatprep.subr.bf16.mxu0 %v4187
    %4872 = vmatpush1.bf16.msra.mxu0 %v4186
    %4873 = vmatprep.subr.bf16.mxu0 %v4191
    %4874 = vmatpush1.bf16.msra.mxu0 %v4190
    %4875 = vmatprep.subr.bf16.mxu0 %v4195
    %4876 = vmatpush1.bf16.msra.mxu0 %v4194
    %4877 = vmatprep.subr.bf16.mxu0 %v4199
    %4878 = vmatpush1.bf16.msra.mxu0 %v4198
    %4879 = vmatprep.subr.bf16.mxu0 %v4203
    %4880 = vmatpush1.bf16.msra.mxu0 %v4202
    %4881 = vmatprep.subr.bf16.mxu0 %v4207
    %4882 = vmatpush1.bf16.msra.mxu0 %v4206
    %4883 = vmatprep.subr.bf16.mxu0 %v4211
    %4884 = vmatpush1.bf16.msra.mxu0 %v4210
    %4885 = vmatprep.subr.bf16.mxu0 %v4215
    %4886 = vmatpush1.bf16.msra.mxu0 %v4214
    %4887 = vmatprep.subr.bf16.mxu0 %v4219
    %4888 = vmatpush1.bf16.msra.mxu0 %v4218
    %4889 = vmatprep.subr.bf16.mxu0 %v4223
    %4890 = vmatpush1.bf16.msra.mxu0 %v4222
    %4891 = vmatprep.subr.bf16.mxu0 %v4227
    %4892 = vmatpush1.bf16.msra.mxu0 %v4226
    %4893 = vmatprep.subr.bf16.mxu0 %v4231
    %4894 = vmatpush1.bf16.msra.mxu0 %v4230
    %4895 = vmatprep.subr.bf16.mxu0 %v4235
    %4896 = vmatpush1.bf16.msra.mxu0 %v4234
    %4897 = vmatprep.subr.bf16.mxu0 %v4239
    %4898 = vmatpush1.bf16.msra.mxu0 %v4238
    %4899 = vmatprep.subr.bf16.mxu0 %v4243
    %4900 = vmatpush1.bf16.msra.mxu0 %v4242
    %4901 = vmatprep.subr.bf16.mxu0 %v4247
    %4902 = vmatpush1.bf16.msra.mxu0 %v4246
    %4903 = vmatprep.mubr.bf16.mxu0 %v4157
    %4904 = vmatmul.mubr.bf16.gmra.mrb[0].mxu0 %v4154
    %v4905 = vpop.f32.mrb[0].mxu0
    %v4906 = vadd.f32 %v4747, %v4905
    %v4907 = vpop.f32.mrb[0].mxu0
    %v4908 = vadd.f32 %v4749, %v4907
    %v4909 = vpop.f32.mrb[0].mxu0
    %v4910 = vadd.f32 %v4751, %v4909
    %v4911 = vpop.f32.mrb[0].mxu0
    %v4912 = vadd.f32 %v4753, %v4911
    %4913 = vmatprep.mubr.bf16.mxu0 %v4169
    %4914 = vmatmul.mubr.bf16.gmra.mrb[0].mxu0 %v4166
    %v4915 = vpop.f32.mrb[0].mxu0
    %v4916 = vadd.f32 %v4757, %v4915
    %v4917 = vpop.f32.mrb[0].mxu0
    %v4918 = vadd.f32 %v4759, %v4917
    %v4919 = vpop.f32.mrb[0].mxu0
    %v4920 = vadd.f32 %v4761, %v4919
    %v4921 = vpop.f32.mrb[0].mxu0
    %v4922 = vadd.f32 %v4763, %v4921
    %4923 = vdwg.mxu0
    %4924 = vmatprep.subr.bf16.mxu0 %v4251
    %4925 = vmatpush1.bf16.msra.mxu0 %v4250
    %4926 = vmatprep.subr.bf16.mxu0 %v4255
    %4927 = vmatpush1.bf16.msra.mxu0 %v4254
    %4928 = vmatprep.subr.bf16.mxu0 %v4259
    %4929 = vmatpush1.bf16.msra.mxu0 %v4258
    %4930 = vmatprep.subr.bf16.mxu0 %v4263
    %4931 = vmatpush1.bf16.msra.mxu0 %v4262
    %4932 = vmatprep.subr.bf16.mxu0 %v4267
    %4933 = vmatpush1.bf16.msra.mxu0 %v4266
    %4934 = vmatprep.subr.bf16.mxu0 %v4271
    %4935 = vmatpush1.bf16.msra.mxu0 %v4270
    %4936 = vmatprep.subr.bf16.mxu0 %v4275
    %4937 = vmatpush1.bf16.msra.mxu0 %v4274
    %4938 = vmatprep.subr.bf16.mxu0 %v4279
    %4939 = vmatpush1.bf16.msra.mxu0 %v4278
    %4940 = vmatprep.subr.bf16.mxu0 %v4283
    %4941 = vmatpush1.bf16.msra.mxu0 %v4282
    %4942 = vmatprep.subr.bf16.mxu0 %v4287
    %4943 = vmatpush1.bf16.msra.mxu0 %v4286
    %4944 = vmatprep.subr.bf16.mxu0 %v4291
    %4945 = vmatpush1.bf16.msra.mxu0 %v4290
    %4946 = vmatprep.subr.bf16.mxu0 %v4295
    %4947 = vmatpush1.bf16.msra.mxu0 %v4294
    %4948 = vmatprep.subr.bf16.mxu0 %v4299
    %4949 = vmatpush1.bf16.msra.mxu0 %v4298
    %4950 = vmatprep.subr.bf16.mxu0 %v4303
    %4951 = vmatpush1.bf16.msra.mxu0 %v4302
    %4952 = vmatprep.subr.bf16.mxu0 %v4307
    %4953 = vmatpush1.bf16.msra.mxu0 %v4306
    %4954 = vmatprep.subr.bf16.mxu0 %v4311
    %4955 = vmatpush1.bf16.msra.mxu0 %v4310
    %4956 = vmatprep.mubr.bf16.mxu0 %v4163
    %4957 = vmatmul.mubr.bf16.gmra.mrb[0].mxu0 %v4160
    %v4958 = vpop.f32.mrb[0].mxu0
    %v4959 = vadd.f32 %v4906, %v4958
    %v4960 = vpop.f32.mrb[0].mxu0
    %v4961 = vadd.f32 %v4908, %v4960
    %v4962 = vpop.f32.mrb[0].mxu0
    %v4963 = vadd.f32 %v4910, %v4962
    %v4964 = vpop.f32.mrb[0].mxu0
    %v4965 = vadd.f32 %v4912, %v4964
    %4966 = vmatprep.mubr.bf16.mxu0 %v4175
    %4967 = vmatmul.mubr.bf16.gmra.mrb[0].mxu0 %v4172
    %v4968 = vpop.f32.mrb[0].mxu0
    %v4969 = vadd.f32 %v4916, %v4968
    %v4970 = vpop.f32.mrb[0].mxu0
    %v4971 = vadd.f32 %v4918, %v4970
    %v4972 = vpop.f32.mrb[0].mxu0
    %v4973 = vadd.f32 %v4920, %v4972
    %v4974 = vpop.f32.mrb[0].mxu0
    %v4975 = vadd.f32 %v4922, %v4974
    %4976 = vdwg.mxu0
    %s4977 = scalar_lea.vmem [#allocation4], 7168
    %v4978 = vld [vmem:[%s4977] sm:$0xff]
    %v4979 = vld [vmem:[%s4977 + $0x8] sm:$0xff]
    %v4980 = vld [vmem:[%s4977 + $0x10] sm:$0xff]
    %v4981 = vld [vmem:[%s4977 + $0x18] sm:$0xff]
    %v4982 = vld [vmem:[%s4977 + $0x20] sm:$0xff]
    %v4983 = vld [vmem:[%s4977 + $0x28] sm:$0xff]
    %v4984 = vld [vmem:[%s4977 + $0x30] sm:$0xff]
    %v4985 = vld [vmem:[%s4977 + $0x38] sm:$0xff]
    %v4986 = vld [vmem:[%s4977 + $0x40] sm:$0xff]
    %v4987 = vld [vmem:[%s4977 + $0x48] sm:$0xff]
    %v4988 = vld [vmem:[%s4977 + $0x50] sm:$0xff]
    %v4989 = vld [vmem:[%s4977 + $0x58] sm:$0xff]
    %v4990 = vld [vmem:[%s4977 + $0x60] sm:$0xff]
    %v4991 = vld [vmem:[%s4977 + $0x68] sm:$0xff]
    %v4992 = vld [vmem:[%s4977 + $0x70] sm:$0xff]
    %v4993 = vld [vmem:[%s4977 + $0x78] sm:$0xff]
    %v4994 = vld [vmem:[%s4977 + $0x80] sm:$0xff]
    %v4995 = vld [vmem:[%s4977 + $0x88] sm:$0xff]
    %v4996 = vld [vmem:[%s4977 + $0x90] sm:$0xff]
    %v4997 = vld [vmem:[%s4977 + $0x98] sm:$0xff]
    %v4998 = vld [vmem:[%s4977 + $0xa0] sm:$0xff]
    %v4999 = vld [vmem:[%s4977 + $0xa8] sm:$0xff]
    %v5000 = vld [vmem:[%s4977 + $0xb0] sm:$0xff]
    %v5001 = vld [vmem:[%s4977 + $0xb8] sm:$0xff]
    %v5002 = vld [vmem:[%s4977 + $0xc0] sm:$0xff]
    %v5003 = vld [vmem:[%s4977 + $0xc8] sm:$0xff]
    %v5004 = vld [vmem:[%s4977 + $0xd0] sm:$0xff]
    %v5005 = vld [vmem:[%s4977 + $0xd8] sm:$0xff]
    %v5006 = vld [vmem:[%s4977 + $0xe0] sm:$0xff]
    %v5007 = vld [vmem:[%s4977 + $0xe8] sm:$0xff]
    %v5008 = vld [vmem:[%s4977 + $0xf0] sm:$0xff]
    %v5009 = vld [vmem:[%s4977 + $0xf8] sm:$0xff]
    %v5010 = vld [vmem:[%s4977 + $0x100] sm:$0xff]
    %v5011 = vld [vmem:[%s4977 + $0x108] sm:$0xff]
    %v5012 = vld [vmem:[%s4977 + $0x110] sm:$0xff]
    %v5013 = vld [vmem:[%s4977 + $0x118] sm:$0xff]
    %v5014 = vld [vmem:[%s4977 + $0x120] sm:$0xff]
    %v5015 = vld [vmem:[%s4977 + $0x128] sm:$0xff]
    %v5016 = vld [vmem:[%s4977 + $0x130] sm:$0xff]
    %v5017 = vld [vmem:[%s4977 + $0x138] sm:$0xff]
    %v5018 = vld [vmem:[%s4977 + $0x140] sm:$0xff]
    %v5019 = vld [vmem:[%s4977 + $0x148] sm:$0xff]
    %v5020 = vld [vmem:[%s4977 + $0x150] sm:$0xff]
    %v5021 = vld [vmem:[%s4977 + $0x158] sm:$0xff]
    %v5022 = vld [vmem:[%s4977 + $0x160] sm:$0xff]
    %v5023 = vld [vmem:[%s4977 + $0x168] sm:$0xff]
    %v5024 = vld [vmem:[%s4977 + $0x170] sm:$0xff]
    %v5025 = vld [vmem:[%s4977 + $0x178] sm:$0xff]
    %v5026 = vld [vmem:[%s4977 + $0x180] sm:$0xff]
    %v5027 = vld [vmem:[%s4977 + $0x188] sm:$0xff]
    %v5028 = vld [vmem:[%s4977 + $0x190] sm:$0xff]
    %v5029 = vld [vmem:[%s4977 + $0x198] sm:$0xff]
    %v5030 = vld [vmem:[%s4977 + $0x1a0] sm:$0xff]
    %v5031 = vld [vmem:[%s4977 + $0x1a8] sm:$0xff]
    %v5032 = vld [vmem:[%s4977 + $0x1b0] sm:$0xff]
    %v5033 = vld [vmem:[%s4977 + $0x1b8] sm:$0xff]
    %v5034 = vld [vmem:[%s4977 + $0x1c0] sm:$0xff]
    %v5035 = vld [vmem:[%s4977 + $0x1c8] sm:$0xff]
    %v5036 = vld [vmem:[%s4977 + $0x1d0] sm:$0xff]
    %v5037 = vld [vmem:[%s4977 + $0x1d8] sm:$0xff]
    %v5038 = vld [vmem:[%s4977 + $0x1e0] sm:$0xff]
    %v5039 = vld [vmem:[%s4977 + $0x1e8] sm:$0xff]
    %v5040 = vld [vmem:[%s4977 + $0x1f0] sm:$0xff]
    %v5041 = vld [vmem:[%s4977 + $0x1f8] sm:$0xff]
    %v5042 = vld [vmem:[%s4977 + $0x200] sm:$0xff]
    %v5043 = vld [vmem:[%s4977 + $0x208] sm:$0xff]
    %v5044 = vld [vmem:[%s4977 + $0x210] sm:$0xff]
    %v5045 = vld [vmem:[%s4977 + $0x218] sm:$0xff]
    %v5046 = vld [vmem:[%s4977 + $0x220] sm:$0xff]
    %v5047 = vld [vmem:[%s4977 + $0x228] sm:$0xff]
    %v5048 = vld [vmem:[%s4977 + $0x230] sm:$0xff]
    %v5049 = vld [vmem:[%s4977 + $0x238] sm:$0xff]
    %v5050 = vld [vmem:[%s4977 + $0x240] sm:$0xff]
    %v5051 = vld [vmem:[%s4977 + $0x248] sm:$0xff]
    %v5052 = vld [vmem:[%s4977 + $0x250] sm:$0xff]
    %v5053 = vld [vmem:[%s4977 + $0x258] sm:$0xff]
    %v5054 = vld [vmem:[%s4977 + $0x260] sm:$0xff]
    %v5055 = vld [vmem:[%s4977 + $0x268] sm:$0xff]
    %v5056 = vld [vmem:[%s4977 + $0x270] sm:$0xff]
    %v5057 = vld [vmem:[%s4977 + $0x278] sm:$0xff]
    %v5058 = vld [vmem:[%s4977 + $0x280] sm:$0xff]
    %v5059 = vld [vmem:[%s4977 + $0x288] sm:$0xff]
    %v5060 = vld [vmem:[%s4977 + $0x290] sm:$0xff]
    %v5061 = vld [vmem:[%s4977 + $0x298] sm:$0xff]
    %v5062 = vld [vmem:[%s4977 + $0x2a0] sm:$0xff]
    %v5063 = vld [vmem:[%s4977 + $0x2a8] sm:$0xff]
    %v5064 = vld [vmem:[%s4977 + $0x2b0] sm:$0xff]
    %v5065 = vld [vmem:[%s4977 + $0x2b8] sm:$0xff]
    %v5066 = vld [vmem:[%s4977 + $0x2c0] sm:$0xff]
    %v5067 = vld [vmem:[%s4977 + $0x2c8] sm:$0xff]
    %v5068 = vld [vmem:[%s4977 + $0x2d0] sm:$0xff]
    %v5069 = vld [vmem:[%s4977 + $0x2d8] sm:$0xff]
    %v5070 = vld [vmem:[%s4977 + $0x2e0] sm:$0xff]
    %v5071 = vld [vmem:[%s4977 + $0x2e8] sm:$0xff]
    %v5072 = vld [vmem:[%s4977 + $0x2f0] sm:$0xff]
    %v5073 = vld [vmem:[%s4977 + $0x2f8] sm:$0xff]
    %v5074 = vld [vmem:[%s4977 + $0x300] sm:$0xff]
    %v5075 = vld [vmem:[%s4977 + $0x308] sm:$0xff]
    %v5076 = vld [vmem:[%s4977 + $0x310] sm:$0xff]
    %v5077 = vld [vmem:[%s4977 + $0x318] sm:$0xff]
    %v5078 = vld [vmem:[%s4977 + $0x320] sm:$0xff]
    %v5079 = vld [vmem:[%s4977 + $0x328] sm:$0xff]
    %v5080 = vld [vmem:[%s4977 + $0x330] sm:$0xff]
    %v5081 = vld [vmem:[%s4977 + $0x338] sm:$0xff]
    %v5082 = vld [vmem:[%s4977 + $0x340] sm:$0xff]
    %v5083 = vld [vmem:[%s4977 + $0x348] sm:$0xff]
    %v5084 = vld [vmem:[%s4977 + $0x350] sm:$0xff]
    %v5085 = vld [vmem:[%s4977 + $0x358] sm:$0xff]
    %v5086 = vld [vmem:[%s4977 + $0x360] sm:$0xff]
    %v5087 = vld [vmem:[%s4977 + $0x368] sm:$0xff]
    %v5088 = vld [vmem:[%s4977 + $0x370] sm:$0xff]
    %v5089 = vld [vmem:[%s4977 + $0x378] sm:$0xff]
    %v5090 = vld [vmem:[%s4977 + $0x380] sm:$0xff]
    %v5091 = vld [vmem:[%s4977 + $0x388] sm:$0xff]
    %v5092 = vld [vmem:[%s4977 + $0x390] sm:$0xff]
    %v5093 = vld [vmem:[%s4977 + $0x398] sm:$0xff]
    %v5094 = vld [vmem:[%s4977 + $0x3a0] sm:$0xff]
    %v5095 = vld [vmem:[%s4977 + $0x3a8] sm:$0xff]
    %v5096 = vld [vmem:[%s4977 + $0x3b0] sm:$0xff]
    %v5097 = vld [vmem:[%s4977 + $0x3b8] sm:$0xff]
    %v5098 = vld [vmem:[%s4977 + $0x3c0] sm:$0xff]
    %v5099 = vld [vmem:[%s4977 + $0x3c8] sm:$0xff]
    %v5100 = vld [vmem:[%s4977 + $0x3d0] sm:$0xff]
    %v5101 = vld [vmem:[%s4977 + $0x3d8] sm:$0xff]
    %v5102 = vld [vmem:[%s4977 + $0x3e0] sm:$0xff]
    %v5103 = vld [vmem:[%s4977 + $0x3e8] sm:$0xff]
    %v5104 = vld [vmem:[%s4977 + $0x3f0] sm:$0xff]
    %v5105 = vld [vmem:[%s4977 + $0x3f8] sm:$0xff]
    %5106 = vmatprep.subr.bf16.mxu0 %v4979
    %5107 = vmatpush1.bf16.msra.mxu0 %v4978
    %5108 = vmatprep.subr.bf16.mxu0 %v4983
    %5109 = vmatpush1.bf16.msra.mxu0 %v4982
    %5110 = vmatprep.subr.bf16.mxu0 %v4987
    %5111 = vmatpush1.bf16.msra.mxu0 %v4986
    %5112 = vmatprep.subr.bf16.mxu0 %v4991
    %5113 = vmatpush1.bf16.msra.mxu0 %v4990
    %5114 = vmatprep.subr.bf16.mxu0 %v4995
    %5115 = vmatpush1.bf16.msra.mxu0 %v4994
    %5116 = vmatprep.subr.bf16.mxu0 %v4999
    %5117 = vmatpush1.bf16.msra.mxu0 %v4998
    %5118 = vmatprep.subr.bf16.mxu0 %v5003
    %5119 = vmatpush1.bf16.msra.mxu0 %v5002
    %5120 = vmatprep.subr.bf16.mxu0 %v5007
    %5121 = vmatpush1.bf16.msra.mxu0 %v5006
    %5122 = vmatprep.subr.bf16.mxu0 %v5011
    %5123 = vmatpush1.bf16.msra.mxu0 %v5010
    %5124 = vmatprep.subr.bf16.mxu0 %v5015
    %5125 = vmatpush1.bf16.msra.mxu0 %v5014
    %5126 = vmatprep.subr.bf16.mxu0 %v5019
    %5127 = vmatpush1.bf16.msra.mxu0 %v5018
    %5128 = vmatprep.subr.bf16.mxu0 %v5023
    %5129 = vmatpush1.bf16.msra.mxu0 %v5022
    %5130 = vmatprep.subr.bf16.mxu0 %v5027
    %5131 = vmatpush1.bf16.msra.mxu0 %v5026
    %5132 = vmatprep.subr.bf16.mxu0 %v5031
    %5133 = vmatpush1.bf16.msra.mxu0 %v5030
    %5134 = vmatprep.subr.bf16.mxu0 %v5035
    %5135 = vmatpush1.bf16.msra.mxu0 %v5034
    %5136 = vmatprep.subr.bf16.mxu0 %v5039
    %5137 = vmatpush1.bf16.msra.mxu0 %v5038
    %5138 = vmatprep.mubr.bf16.mxu0 %v4313
    %5139 = vmatmul.mubr.bf16.gmra.mrb[0].mxu0 %v4312
    %v5140 = vpop.f32.mrb[0].mxu0
    %v5141 = vadd.f32 0.0, %v5140
    %v5142 = vpop.f32.mrb[0].mxu0
    %v5143 = vadd.f32 0.0, %v5142
    %v5144 = vpop.f32.mrb[0].mxu0
    %v5145 = vadd.f32 0.0, %v5144
    %v5146 = vpop.f32.mrb[0].mxu0
    %v5147 = vadd.f32 0.0, %v5146
    %5148 = vmatprep.mubr.bf16.mxu0 %v4317
    %5149 = vmatmul.mubr.bf16.gmra.mrb[0].mxu0 %v4316
    %v5150 = vpop.f32.mrb[0].mxu0
    %v5151 = vadd.f32 0.0, %v5150
    %v5152 = vpop.f32.mrb[0].mxu0
    %v5153 = vadd.f32 0.0, %v5152
    %v5154 = vpop.f32.mrb[0].mxu0
    %v5155 = vadd.f32 0.0, %v5154
    %v5156 = vpop.f32.mrb[0].mxu0
    %v5157 = vadd.f32 0.0, %v5156
    %5158 = vdwg.mxu0
    %5159 = vmatprep.subr.bf16.mxu0 %v5043
    %5160 = vmatpush1.bf16.msra.mxu0 %v5042
    %5161 = vmatprep.subr.bf16.mxu0 %v5047
    %5162 = vmatpush1.bf16.msra.mxu0 %v5046
    %5163 = vmatprep.subr.bf16.mxu0 %v5051
    %5164 = vmatpush1.bf16.msra.mxu0 %v5050
    %5165 = vmatprep.subr.bf16.mxu0 %v5055
    %5166 = vmatpush1.bf16.msra.mxu0 %v5054
    %5167 = vmatprep.subr.bf16.mxu0 %v5059
    %5168 = vmatpush1.bf16.msra.mxu0 %v5058
    %5169 = vmatprep.subr.bf16.mxu0 %v5063
    %5170 = vmatpush1.bf16.msra.mxu0 %v5062
    %5171 = vmatprep.subr.bf16.mxu0 %v5067
    %5172 = vmatpush1.bf16.msra.mxu0 %v5066
    %5173 = vmatprep.subr.bf16.mxu0 %v5071
    %5174 = vmatpush1.bf16.msra.mxu0 %v5070
    %5175 = vmatprep.subr.bf16.mxu0 %v5075
    %5176 = vmatpush1.bf16.msra.mxu0 %v5074
    %5177 = vmatprep.subr.bf16.mxu0 %v5079
    %5178 = vmatpush1.bf16.msra.mxu0 %v5078
    %5179 = vmatprep.subr.bf16.mxu0 %v5083
    %5180 = vmatpush1.bf16.msra.mxu0 %v5082
    %5181 = vmatprep.subr.bf16.mxu0 %v5087
    %5182 = vmatpush1.bf16.msra.mxu0 %v5086
    %5183 = vmatprep.subr.bf16.mxu0 %v5091
    %5184 = vmatpush1.bf16.msra.mxu0 %v5090
    %5185 = vmatprep.subr.bf16.mxu0 %v5095
    %5186 = vmatpush1.bf16.msra.mxu0 %v5094
    %5187 = vmatprep.subr.bf16.mxu0 %v5099
    %5188 = vmatpush1.bf16.msra.mxu0 %v5098
    %5189 = vmatprep.subr.bf16.mxu0 %v5103
    %5190 = vmatpush1.bf16.msra.mxu0 %v5102
    %5191 = vmatprep.mubr.bf16.mxu0 %v4315
    %5192 = vmatmul.mubr.bf16.gmra.mrb[0].mxu0 %v4314
    %v5193 = vpop.f32.mrb[0].mxu0
    %v5194 = vadd.f32 %v5141, %v5193
    %v5195 = vpop.f32.mrb[0].mxu0
    %v5196 = vadd.f32 %v5143, %v5195
    %v5197 = vpop.f32.mrb[0].mxu0
    %v5198 = vadd.f32 %v5145, %v5197
    %v5199 = vpop.f32.mrb[0].mxu0
    %v5200 = vadd.f32 %v5147, %v5199
    %5201 = vmatprep.mubr.bf16.mxu0 %v4319
    %5202 = vmatmul.mubr.bf16.gmra.mrb[0].mxu0 %v4318
    %v5203 = vpop.f32.mrb[0].mxu0
    %v5204 = vadd.f32 %v5151, %v5203
    %v5205 = vpop.f32.mrb[0].mxu0
    %v5206 = vadd.f32 %v5153, %v5205
    %v5207 = vpop.f32.mrb[0].mxu0
    %v5208 = vadd.f32 %v5155, %v5207
    %v5209 = vpop.f32.mrb[0].mxu0
    %v5210 = vadd.f32 %v5157, %v5209
    %5211 = vdwg.mxu0
    %5212 = vmatprep.subr.bf16.mxu0 %v4981
    %5213 = vmatpush1.bf16.msra.mxu0 %v4980
    %5214 = vmatprep.subr.bf16.mxu0 %v4985
    %5215 = vmatpush1.bf16.msra.mxu0 %v4984
    %5216 = vmatprep.subr.bf16.mxu0 %v4989
    %5217 = vmatpush1.bf16.msra.mxu0 %v4988
    %5218 = vmatprep.subr.bf16.mxu0 %v4993
    %5219 = vmatpush1.bf16.msra.mxu0 %v4992
    %5220 = vmatprep.subr.bf16.mxu0 %v4997
    %5221 = vmatpush1.bf16.msra.mxu0 %v4996
    %5222 = vmatprep.subr.bf16.mxu0 %v5001
    %5223 = vmatpush1.bf16.msra.mxu0 %v5000
    %5224 = vmatprep.subr.bf16.mxu0 %v5005
    %5225 = vmatpush1.bf16.msra.mxu0 %v5004
    %5226 = vmatprep.subr.bf16.mxu0 %v5009
    %5227 = vmatpush1.bf16.msra.mxu0 %v5008
    %5228 = vmatprep.subr.bf16.mxu0 %v5013
    %5229 = vmatpush1.bf16.msra.mxu0 %v5012
    %5230 = vmatprep.subr.bf16.mxu0 %v5017
    %5231 = vmatpush1.bf16.msra.mxu0 %v5016
    %5232 = vmatprep.subr.bf16.mxu0 %v5021
    %5233 = vmatpush1.bf16.msra.mxu0 %v5020
    %5234 = vmatprep.subr.bf16.mxu0 %v5025
    %5235 = vmatpush1.bf16.msra.mxu0 %v5024
    %5236 = vmatprep.subr.bf16.mxu0 %v5029
    %5237 = vmatpush1.bf16.msra.mxu0 %v5028
    %5238 = vmatprep.subr.bf16.mxu0 %v5033
    %5239 = vmatpush1.bf16.msra.mxu0 %v5032
    %5240 = vmatprep.subr.bf16.mxu0 %v5037
    %5241 = vmatpush1.bf16.msra.mxu0 %v5036
    %5242 = vmatprep.subr.bf16.mxu0 %v5041
    %5243 = vmatpush1.bf16.msra.mxu0 %v5040
    %5244 = vmatprep.mubr.bf16.mxu0 %v4313
    %5245 = vmatmul.mubr.bf16.gmra.mrb[0].mxu0 %v4312
    %v5246 = vpop.f32.mrb[0].mxu0
    %v5247 = vadd.f32 0.0, %v5246
    %v5248 = vpop.f32.mrb[0].mxu0
    %v5249 = vadd.f32 0.0, %v5248
    %v5250 = vpop.f32.mrb[0].mxu0
    %v5251 = vadd.f32 0.0, %v5250
    %v5252 = vpop.f32.mrb[0].mxu0
    %v5253 = vadd.f32 0.0, %v5252
    %5254 = vmatprep.mubr.bf16.mxu0 %v4317
    %5255 = vmatmul.mubr.bf16.gmra.mrb[0].mxu0 %v4316
    %v5256 = vpop.f32.mrb[0].mxu0
    %v5257 = vadd.f32 0.0, %v5256
    %v5258 = vpop.f32.mrb[0].mxu0
    %v5259 = vadd.f32 0.0, %v5258
    %v5260 = vpop.f32.mrb[0].mxu0
    %v5261 = vadd.f32 0.0, %v5260
    %v5262 = vpop.f32.mrb[0].mxu0
    %v5263 = vadd.f32 0.0, %v5262
    %5264 = vdwg.mxu0
    %5265 = vmatprep.subr.bf16.mxu0 %v5045
    %5266 = vmatpush1.bf16.msra.mxu0 %v5044
    %5267 = vmatprep.subr.bf16.mxu0 %v5049
    %5268 = vmatpush1.bf16.msra.mxu0 %v5048
    %5269 = vmatprep.subr.bf16.mxu0 %v5053
    %5270 = vmatpush1.bf16.msra.mxu0 %v5052
    %5271 = vmatprep.subr.bf16.mxu0 %v5057
    %5272 = vmatpush1.bf16.msra.mxu0 %v5056
    %5273 = vmatprep.subr.bf16.mxu0 %v5061
    %5274 = vmatpush1.bf16.msra.mxu0 %v5060
    %5275 = vmatprep.subr.bf16.mxu0 %v5065
    %5276 = vmatpush1.bf16.msra.mxu0 %v5064
    %5277 = vmatprep.subr.bf16.mxu0 %v5069
    %5278 = vmatpush1.bf16.msra.mxu0 %v5068
    %5279 = vmatprep.subr.bf16.mxu0 %v5073
    %5280 = vmatpush1.bf16.msra.mxu0 %v5072
    %5281 = vmatprep.subr.bf16.mxu0 %v5077
    %5282 = vmatpush1.bf16.msra.mxu0 %v5076
    %5283 = vmatprep.subr.bf16.mxu0 %v5081
    %5284 = vmatpush1.bf16.msra.mxu0 %v5080
    %5285 = vmatprep.subr.bf16.mxu0 %v5085
    %5286 = vmatpush1.bf16.msra.mxu0 %v5084
    %5287 = vmatprep.subr.bf16.mxu0 %v5089
    %5288 = vmatpush1.bf16.msra.mxu0 %v5088
    %5289 = vmatprep.subr.bf16.mxu0 %v5093
    %5290 = vmatpush1.bf16.msra.mxu0 %v5092
    %5291 = vmatprep.subr.bf16.mxu0 %v5097
    %5292 = vmatpush1.bf16.msra.mxu0 %v5096
    %5293 = vmatprep.subr.bf16.mxu0 %v5101
    %5294 = vmatpush1.bf16.msra.mxu0 %v5100
    %5295 = vmatprep.subr.bf16.mxu0 %v5105
    %5296 = vmatpush1.bf16.msra.mxu0 %v5104
    %5297 = vmatprep.mubr.bf16.mxu0 %v4315
    %5298 = vmatmul.mubr.bf16.gmra.mrb[0].mxu0 %v4314
    %v5299 = vpop.f32.mrb[0].mxu0
    %v5300 = vadd.f32 %v5247, %v5299
    %v5301 = vpop.f32.mrb[0].mxu0
    %v5302 = vadd.f32 %v5249, %v5301
    %v5303 = vpop.f32.mrb[0].mxu0
    %v5304 = vadd.f32 %v5251, %v5303
    %v5305 = vpop.f32.mrb[0].mxu0
    %v5306 = vadd.f32 %v5253, %v5305
    %5307 = vmatprep.mubr.bf16.mxu0 %v4319
    %5308 = vmatmul.mubr.bf16.gmra.mrb[0].mxu0 %v4318
    %v5309 = vpop.f32.mrb[0].mxu0
    %v5310 = vadd.f32 %v5257, %v5309
    %v5311 = vpop.f32.mrb[0].mxu0
    %v5312 = vadd.f32 %v5259, %v5311
    %v5313 = vpop.f32.mrb[0].mxu0
    %v5314 = vadd.f32 %v5261, %v5313
    %v5315 = vpop.f32.mrb[0].mxu0
    %v5316 = vadd.f32 %v5263, %v5315
    %5317 = vdwg.mxu0
    %v5318 = vadd.f32 %v4853, %v5194
    %v5319 = vadd.f32 %v4855, %v5196
    %v5320 = vadd.f32 %v4959, %v5300
    %v5321 = vadd.f32 %v4961, %v5302
    %v5322 = vadd.f32 %v4857, %v5198
    %v5323 = vadd.f32 %v4859, %v5200
    %v5324 = vadd.f32 %v4963, %v5304
    %v5325 = vadd.f32 %v4965, %v5306
    %v5326 = vadd.f32 %v4863, %v5204
    %v5327 = vadd.f32 %v4865, %v5206
    %v5328 = vadd.f32 %v4969, %v5310
    %v5329 = vadd.f32 %v4971, %v5312
    %v5330 = vadd.f32 %v4867, %v5208
    %v5331 = vadd.f32 %v4869, %v5210
    %v5332 = vadd.f32 %v4973, %v5314
    %v5333 = vadd.f32 %v4975, %v5316
    %v5334 = vld [vmem:[#allocation3 + $0x20] sm:$0xff]
    %v5335 = vld [vmem:[#allocation3 + $0x28] sm:$0xff]
    %v5336 = vld [vmem:[#allocation3 + $0x30] sm:$0xff]
    %v5337 = vld [vmem:[#allocation3 + $0x38] sm:$0xff]
    %v5338 = vld [vmem:[#allocation3 + $0x40] sm:$0x1]
    %v5339 = vld [vmem:[#allocation3 + $0x48] sm:$0x1]
    %v5340 = vld [vmem:[#allocation3 + $0x50] sm:$0x1]
    %v5341 = vld [vmem:[#allocation3 + $0x58] sm:$0x1]
    %v5342 = vld [vmem:[#allocation3 + $0x80] sm:$0xff]
    %v5343 = vld [vmem:[#allocation3 + $0x88] sm:$0xff]
    %v5344 = vld [vmem:[#allocation3 + $0x90] sm:$0xff]
    %v5345 = vld [vmem:[#allocation3 + $0x98] sm:$0xff]
    %v5346 = vld [vmem:[#allocation3 + $0xa0] sm:$0x1]
    %v5347 = vld [vmem:[#allocation3 + $0xa8] sm:$0x1]
    %v5348 = vld [vmem:[#allocation3 + $0xb0] sm:$0x1]
    %v5349 = vld [vmem:[#allocation3 + $0xb8] sm:$0x1]
    %v5351 = vshrl.u32 %v5334, 16
    %v5353 = vshll.u32 %v5334, 16
    %v5355 = vrot.slane %v5353, 1
    %v5356 = vor.u32 %v5351, %v5355
    %v5358 = vshll.u32 %v5338, 16
    %v5360 = vrot.slane %v5358, 1
    %v5361 = vsel %vm1196, %v5356, %v5360
    %v5363 = vshrl.u32 %v5335, 16
    %v5365 = vshll.u32 %v5335, 16
    %v5367 = vrot.slane %v5365, 1
    %v5368 = vor.u32 %v5363, %v5367
    %v5370 = vshll.u32 %v5339, 16
    %v5372 = vrot.slane %v5370, 1
    %v5373 = vsel %vm1196, %v5368, %v5372
    %v5375 = vshrl.u32 %v5336, 16
    %v5377 = vshll.u32 %v5336, 16
    %v5379 = vrot.slane %v5377, 1
    %v5380 = vor.u32 %v5375, %v5379
    %v5382 = vshll.u32 %v5340, 16
    %v5384 = vrot.slane %v5382, 1
    %v5385 = vsel %vm1196, %v5380, %v5384
    %v5387 = vshrl.u32 %v5337, 16
    %v5389 = vshll.u32 %v5337, 16
    %v5391 = vrot.slane %v5389, 1
    %v5392 = vor.u32 %v5387, %v5391
    %v5394 = vshll.u32 %v5341, 16
    %v5396 = vrot.slane %v5394, 1
    %v5397 = vsel %vm1196, %v5392, %v5396
    %v5399 = vshrl.u32 %v5342, 16
    %v5401 = vshll.u32 %v5342, 16
    %v5403 = vrot.slane %v5401, 1
    %v5404 = vor.u32 %v5399, %v5403
    %v5406 = vshll.u32 %v5346, 16
    %v5408 = vrot.slane %v5406, 1
    %v5409 = vsel %vm1196, %v5404, %v5408
    %v5411 = vshrl.u32 %v5343, 16
    %v5413 = vshll.u32 %v5343, 16
    %v5415 = vrot.slane %v5413, 1
    %v5416 = vor.u32 %v5411, %v5415
    %v5418 = vshll.u32 %v5347, 16
    %v5420 = vrot.slane %v5418, 1
    %v5421 = vsel %vm1196, %v5416, %v5420
    %v5423 = vshrl.u32 %v5344, 16
    %v5425 = vshll.u32 %v5344, 16
    %v5427 = vrot.slane %v5425, 1
    %v5428 = vor.u32 %v5423, %v5427
    %v5430 = vshll.u32 %v5348, 16
    %v5432 = vrot.slane %v5430, 1
    %v5433 = vsel %vm1196, %v5428, %v5432
    %v5435 = vshrl.u32 %v5345, 16
    %v5437 = vshll.u32 %v5345, 16
    %v5439 = vrot.slane %v5437, 1
    %v5440 = vor.u32 %v5435, %v5439
    %v5442 = vshll.u32 %v5349, 16
    %v5444 = vrot.slane %v5442, 1
    %v5445 = vsel %vm1196, %v5440, %v5444
    %s5454 = scalar_lea.vmem [#allocation4], 8192
    %v5455 = vld [vmem:[%s5454] sm:$0xff]
    %v5456 = vld [vmem:[%s5454 + $0x8] sm:$0xff]
    %v5457 = vld [vmem:[%s5454 + $0x10] sm:$0xff]
    %v5458 = vld [vmem:[%s5454 + $0x18] sm:$0xff]
    %v5459 = vld [vmem:[%s5454 + $0x20] sm:$0xff]
    %v5460 = vld [vmem:[%s5454 + $0x28] sm:$0xff]
    %v5461 = vld [vmem:[%s5454 + $0x30] sm:$0xff]
    %v5462 = vld [vmem:[%s5454 + $0x38] sm:$0xff]
    %v5463 = vld [vmem:[%s5454 + $0x40] sm:$0xff]
    %v5464 = vld [vmem:[%s5454 + $0x48] sm:$0xff]
    %v5465 = vld [vmem:[%s5454 + $0x50] sm:$0xff]
    %v5466 = vld [vmem:[%s5454 + $0x58] sm:$0xff]
    %v5467 = vld [vmem:[%s5454 + $0x60] sm:$0xff]
    %v5468 = vld [vmem:[%s5454 + $0x68] sm:$0xff]
    %v5469 = vld [vmem:[%s5454 + $0x70] sm:$0xff]
    %v5470 = vld [vmem:[%s5454 + $0x78] sm:$0xff]
    %v5471 = vld [vmem:[%s5454 + $0x80] sm:$0xff]
    %v5472 = vld [vmem:[%s5454 + $0x88] sm:$0xff]
    %v5473 = vld [vmem:[%s5454 + $0x90] sm:$0xff]
    %v5474 = vld [vmem:[%s5454 + $0x98] sm:$0xff]
    %v5475 = vld [vmem:[%s5454 + $0xa0] sm:$0xff]
    %v5476 = vld [vmem:[%s5454 + $0xa8] sm:$0xff]
    %v5477 = vld [vmem:[%s5454 + $0xb0] sm:$0xff]
    %v5478 = vld [vmem:[%s5454 + $0xb8] sm:$0xff]
    %v5479 = vld [vmem:[%s5454 + $0xc0] sm:$0xff]
    %v5480 = vld [vmem:[%s5454 + $0xc8] sm:$0xff]
    %v5481 = vld [vmem:[%s5454 + $0xd0] sm:$0xff]
    %v5482 = vld [vmem:[%s5454 + $0xd8] sm:$0xff]
    %v5483 = vld [vmem:[%s5454 + $0xe0] sm:$0xff]
    %v5484 = vld [vmem:[%s5454 + $0xe8] sm:$0xff]
    %v5485 = vld [vmem:[%s5454 + $0xf0] sm:$0xff]
    %v5486 = vld [vmem:[%s5454 + $0xf8] sm:$0xff]
    %v5487 = vld [vmem:[%s5454 + $0x100] sm:$0xff]
    %v5488 = vld [vmem:[%s5454 + $0x108] sm:$0xff]
    %v5489 = vld [vmem:[%s5454 + $0x110] sm:$0xff]
    %v5490 = vld [vmem:[%s5454 + $0x118] sm:$0xff]
    %v5491 = vld [vmem:[%s5454 + $0x120] sm:$0xff]
    %v5492 = vld [vmem:[%s5454 + $0x128] sm:$0xff]
    %v5493 = vld [vmem:[%s5454 + $0x130] sm:$0xff]
    %v5494 = vld [vmem:[%s5454 + $0x138] sm:$0xff]
    %v5495 = vld [vmem:[%s5454 + $0x140] sm:$0xff]
    %v5496 = vld [vmem:[%s5454 + $0x148] sm:$0xff]
    %v5497 = vld [vmem:[%s5454 + $0x150] sm:$0xff]
    %v5498 = vld [vmem:[%s5454 + $0x158] sm:$0xff]
    %v5499 = vld [vmem:[%s5454 + $0x160] sm:$0xff]
    %v5500 = vld [vmem:[%s5454 + $0x168] sm:$0xff]
    %v5501 = vld [vmem:[%s5454 + $0x170] sm:$0xff]
    %v5502 = vld [vmem:[%s5454 + $0x178] sm:$0xff]
    %v5503 = vld [vmem:[%s5454 + $0x180] sm:$0xff]
    %v5504 = vld [vmem:[%s5454 + $0x188] sm:$0xff]
    %v5505 = vld [vmem:[%s5454 + $0x190] sm:$0xff]
    %v5506 = vld [vmem:[%s5454 + $0x198] sm:$0xff]
    %v5507 = vld [vmem:[%s5454 + $0x1a0] sm:$0xff]
    %v5508 = vld [vmem:[%s5454 + $0x1a8] sm:$0xff]
    %v5509 = vld [vmem:[%s5454 + $0x1b0] sm:$0xff]
    %v5510 = vld [vmem:[%s5454 + $0x1b8] sm:$0xff]
    %v5511 = vld [vmem:[%s5454 + $0x1c0] sm:$0xff]
    %v5512 = vld [vmem:[%s5454 + $0x1c8] sm:$0xff]
    %v5513 = vld [vmem:[%s5454 + $0x1d0] sm:$0xff]
    %v5514 = vld [vmem:[%s5454 + $0x1d8] sm:$0xff]
    %v5515 = vld [vmem:[%s5454 + $0x1e0] sm:$0xff]
    %v5516 = vld [vmem:[%s5454 + $0x1e8] sm:$0xff]
    %v5517 = vld [vmem:[%s5454 + $0x1f0] sm:$0xff]
    %v5518 = vld [vmem:[%s5454 + $0x1f8] sm:$0xff]
    %v5519 = vld [vmem:[%s5454 + $0x200] sm:$0xff]
    %v5520 = vld [vmem:[%s5454 + $0x208] sm:$0xff]
    %v5521 = vld [vmem:[%s5454 + $0x210] sm:$0xff]
    %v5522 = vld [vmem:[%s5454 + $0x218] sm:$0xff]
    %v5523 = vld [vmem:[%s5454 + $0x220] sm:$0xff]
    %v5524 = vld [vmem:[%s5454 + $0x228] sm:$0xff]
    %v5525 = vld [vmem:[%s5454 + $0x230] sm:$0xff]
    %v5526 = vld [vmem:[%s5454 + $0x238] sm:$0xff]
    %v5527 = vld [vmem:[%s5454 + $0x240] sm:$0xff]
    %v5528 = vld [vmem:[%s5454 + $0x248] sm:$0xff]
    %v5529 = vld [vmem:[%s5454 + $0x250] sm:$0xff]
    %v5530 = vld [vmem:[%s5454 + $0x258] sm:$0xff]
    %v5531 = vld [vmem:[%s5454 + $0x260] sm:$0xff]
    %v5532 = vld [vmem:[%s5454 + $0x268] sm:$0xff]
    %v5533 = vld [vmem:[%s5454 + $0x270] sm:$0xff]
    %v5534 = vld [vmem:[%s5454 + $0x278] sm:$0xff]
    %v5535 = vld [vmem:[%s5454 + $0x280] sm:$0xff]
    %v5536 = vld [vmem:[%s5454 + $0x288] sm:$0xff]
    %v5537 = vld [vmem:[%s5454 + $0x290] sm:$0xff]
    %v5538 = vld [vmem:[%s5454 + $0x298] sm:$0xff]
    %v5539 = vld [vmem:[%s5454 + $0x2a0] sm:$0xff]
    %v5540 = vld [vmem:[%s5454 + $0x2a8] sm:$0xff]
    %v5541 = vld [vmem:[%s5454 + $0x2b0] sm:$0xff]
    %v5542 = vld [vmem:[%s5454 + $0x2b8] sm:$0xff]
    %v5543 = vld [vmem:[%s5454 + $0x2c0] sm:$0xff]
    %v5544 = vld [vmem:[%s5454 + $0x2c8] sm:$0xff]
    %v5545 = vld [vmem:[%s5454 + $0x2d0] sm:$0xff]
    %v5546 = vld [vmem:[%s5454 + $0x2d8] sm:$0xff]
    %v5547 = vld [vmem:[%s5454 + $0x2e0] sm:$0xff]
    %v5548 = vld [vmem:[%s5454 + $0x2e8] sm:$0xff]
    %v5549 = vld [vmem:[%s5454 + $0x2f0] sm:$0xff]
    %v5550 = vld [vmem:[%s5454 + $0x2f8] sm:$0xff]
    %v5551 = vld [vmem:[%s5454 + $0x300] sm:$0xff]
    %v5552 = vld [vmem:[%s5454 + $0x308] sm:$0xff]
    %v5553 = vld [vmem:[%s5454 + $0x310] sm:$0xff]
    %v5554 = vld [vmem:[%s5454 + $0x318] sm:$0xff]
    %v5555 = vld [vmem:[%s5454 + $0x320] sm:$0xff]
    %v5556 = vld [vmem:[%s5454 + $0x328] sm:$0xff]
    %v5557 = vld [vmem:[%s5454 + $0x330] sm:$0xff]
    %v5558 = vld [vmem:[%s5454 + $0x338] sm:$0xff]
    %v5559 = vld [vmem:[%s5454 + $0x340] sm:$0xff]
    %v5560 = vld [vmem:[%s5454 + $0x348] sm:$0xff]
    %v5561 = vld [vmem:[%s5454 + $0x350] sm:$0xff]
    %v5562 = vld [vmem:[%s5454 + $0x358] sm:$0xff]
    %v5563 = vld [vmem:[%s5454 + $0x360] sm:$0xff]
    %v5564 = vld [vmem:[%s5454 + $0x368] sm:$0xff]
    %v5565 = vld [vmem:[%s5454 + $0x370] sm:$0xff]
    %v5566 = vld [vmem:[%s5454 + $0x378] sm:$0xff]
    %v5567 = vld [vmem:[%s5454 + $0x380] sm:$0xff]
    %v5568 = vld [vmem:[%s5454 + $0x388] sm:$0xff]
    %v5569 = vld [vmem:[%s5454 + $0x390] sm:$0xff]
    %v5570 = vld [vmem:[%s5454 + $0x398] sm:$0xff]
    %v5571 = vld [vmem:[%s5454 + $0x3a0] sm:$0xff]
    %v5572 = vld [vmem:[%s5454 + $0x3a8] sm:$0xff]
    %v5573 = vld [vmem:[%s5454 + $0x3b0] sm:$0xff]
    %v5574 = vld [vmem:[%s5454 + $0x3b8] sm:$0xff]
    %v5575 = vld [vmem:[%s5454 + $0x3c0] sm:$0xff]
    %v5576 = vld [vmem:[%s5454 + $0x3c8] sm:$0xff]
    %v5577 = vld [vmem:[%s5454 + $0x3d0] sm:$0xff]
    %v5578 = vld [vmem:[%s5454 + $0x3d8] sm:$0xff]
    %v5579 = vld [vmem:[%s5454 + $0x3e0] sm:$0xff]
    %v5580 = vld [vmem:[%s5454 + $0x3e8] sm:$0xff]
    %v5581 = vld [vmem:[%s5454 + $0x3f0] sm:$0xff]
    %v5582 = vld [vmem:[%s5454 + $0x3f8] sm:$0xff]
    %5583 = vmatprep.subr.bf16.mxu0 %v5456
    %5584 = vmatpush1.bf16.msra.mxu0 %v5455
    %5585 = vmatprep.subr.bf16.mxu0 %v5460
    %5586 = vmatpush1.bf16.msra.mxu0 %v5459
    %5587 = vmatprep.subr.bf16.mxu0 %v5464
    %5588 = vmatpush1.bf16.msra.mxu0 %v5463
    %5589 = vmatprep.subr.bf16.mxu0 %v5468
    %5590 = vmatpush1.bf16.msra.mxu0 %v5467
    %5591 = vmatprep.subr.bf16.mxu0 %v5472
    %5592 = vmatpush1.bf16.msra.mxu0 %v5471
    %5593 = vmatprep.subr.bf16.mxu0 %v5476
    %5594 = vmatpush1.bf16.msra.mxu0 %v5475
    %5595 = vmatprep.subr.bf16.mxu0 %v5480
    %5596 = vmatpush1.bf16.msra.mxu0 %v5479
    %5597 = vmatprep.subr.bf16.mxu0 %v5484
    %5598 = vmatpush1.bf16.msra.mxu0 %v5483
    %5599 = vmatprep.subr.bf16.mxu0 %v5488
    %5600 = vmatpush1.bf16.msra.mxu0 %v5487
    %5601 = vmatprep.subr.bf16.mxu0 %v5492
    %5602 = vmatpush1.bf16.msra.mxu0 %v5491
    %5603 = vmatprep.subr.bf16.mxu0 %v5496
    %5604 = vmatpush1.bf16.msra.mxu0 %v5495
    %5605 = vmatprep.subr.bf16.mxu0 %v5500
    %5606 = vmatpush1.bf16.msra.mxu0 %v5499
    %5607 = vmatprep.subr.bf16.mxu0 %v5504
    %5608 = vmatpush1.bf16.msra.mxu0 %v5503
    %5609 = vmatprep.subr.bf16.mxu0 %v5508
    %5610 = vmatpush1.bf16.msra.mxu0 %v5507
    %5611 = vmatprep.subr.bf16.mxu0 %v5512
    %5612 = vmatpush1.bf16.msra.mxu0 %v5511
    %5613 = vmatprep.subr.bf16.mxu0 %v5516
    %5614 = vmatpush1.bf16.msra.mxu0 %v5515
    %5615 = vmatprep.mubr.bf16.mxu0 %v5373
    %5616 = vmatmul.mubr.bf16.gmra.mrb[0].mxu0 %v5361
    %v5617 = vpop.f32.mrb[0].mxu0
    %v5618 = vadd.f32 0.0, %v5617
    %v5619 = vpop.f32.mrb[0].mxu0
    %v5620 = vadd.f32 0.0, %v5619
    %v5621 = vpop.f32.mrb[0].mxu0
    %v5622 = vadd.f32 0.0, %v5621
    %v5623 = vpop.f32.mrb[0].mxu0
    %v5624 = vadd.f32 0.0, %v5623
    %5625 = vmatprep.mubr.bf16.mxu0 %v5421
    %5626 = vmatmul.mubr.bf16.gmra.mrb[0].mxu0 %v5409
    %v5627 = vpop.f32.mrb[0].mxu0
    %v5628 = vadd.f32 0.0, %v5627
    %v5629 = vpop.f32.mrb[0].mxu0
    %v5630 = vadd.f32 0.0, %v5629
    %v5631 = vpop.f32.mrb[0].mxu0
    %v5632 = vadd.f32 0.0, %v5631
    %v5633 = vpop.f32.mrb[0].mxu0
    %v5634 = vadd.f32 0.0, %v5633
    %5635 = vdwg.mxu0
    %5636 = vmatprep.subr.bf16.mxu0 %v5520
    %5637 = vmatpush1.bf16.msra.mxu0 %v5519
    %5638 = vmatprep.subr.bf16.mxu0 %v5524
    %5639 = vmatpush1.bf16.msra.mxu0 %v5523
    %5640 = vmatprep.subr.bf16.mxu0 %v5528
    %5641 = vmatpush1.bf16.msra.mxu0 %v5527
    %5642 = vmatprep.subr.bf16.mxu0 %v5532
    %5643 = vmatpush1.bf16.msra.mxu0 %v5531
    %5644 = vmatprep.subr.bf16.mxu0 %v5536
    %5645 = vmatpush1.bf16.msra.mxu0 %v5535
    %5646 = vmatprep.subr.bf16.mxu0 %v5540
    %5647 = vmatpush1.bf16.msra.mxu0 %v5539
    %5648 = vmatprep.subr.bf16.mxu0 %v5544
    %5649 = vmatpush1.bf16.msra.mxu0 %v5543
    %5650 = vmatprep.subr.bf16.mxu0 %v5548
    %5651 = vmatpush1.bf16.msra.mxu0 %v5547
    %5652 = vmatprep.subr.bf16.mxu0 %v5552
    %5653 = vmatpush1.bf16.msra.mxu0 %v5551
    %5654 = vmatprep.subr.bf16.mxu0 %v5556
    %5655 = vmatpush1.bf16.msra.mxu0 %v5555
    %5656 = vmatprep.subr.bf16.mxu0 %v5560
    %5657 = vmatpush1.bf16.msra.mxu0 %v5559
    %5658 = vmatprep.subr.bf16.mxu0 %v5564
    %5659 = vmatpush1.bf16.msra.mxu0 %v5563
    %5660 = vmatprep.subr.bf16.mxu0 %v5568
    %5661 = vmatpush1.bf16.msra.mxu0 %v5567
    %5662 = vmatprep.subr.bf16.mxu0 %v5572
    %5663 = vmatpush1.bf16.msra.mxu0 %v5571
    %5664 = vmatprep.subr.bf16.mxu0 %v5576
    %5665 = vmatpush1.bf16.msra.mxu0 %v5575
    %5666 = vmatprep.subr.bf16.mxu0 %v5580
    %5667 = vmatpush1.bf16.msra.mxu0 %v5579
    %5668 = vmatprep.mubr.bf16.mxu0 %v5397
    %5669 = vmatmul.mubr.bf16.gmra.mrb[0].mxu0 %v5385
    %v5670 = vpop.f32.mrb[0].mxu0
    %v5671 = vadd.f32 %v5618, %v5670
    %v5672 = vpop.f32.mrb[0].mxu0
    %v5673 = vadd.f32 %v5620, %v5672
    %v5674 = vpop.f32.mrb[0].mxu0
    %v5675 = vadd.f32 %v5622, %v5674
    %v5676 = vpop.f32.mrb[0].mxu0
    %v5677 = vadd.f32 %v5624, %v5676
    %5678 = vmatprep.mubr.bf16.mxu0 %v5445
    %5679 = vmatmul.mubr.bf16.gmra.mrb[0].mxu0 %v5433
    %v5680 = vpop.f32.mrb[0].mxu0
    %v5681 = vadd.f32 %v5628, %v5680
    %v5682 = vpop.f32.mrb[0].mxu0
    %v5683 = vadd.f32 %v5630, %v5682
    %v5684 = vpop.f32.mrb[0].mxu0
    %v5685 = vadd.f32 %v5632, %v5684
    %v5686 = vpop.f32.mrb[0].mxu0
    %v5687 = vadd.f32 %v5634, %v5686
    %5688 = vdwg.mxu0
    %5689 = vmatprep.subr.bf16.mxu0 %v5458
    %5690 = vmatpush1.bf16.msra.mxu0 %v5457
    %5691 = vmatprep.subr.bf16.mxu0 %v5462
    %5692 = vmatpush1.bf16.msra.mxu0 %v5461
    %5693 = vmatprep.subr.bf16.mxu0 %v5466
    %5694 = vmatpush1.bf16.msra.mxu0 %v5465
    %5695 = vmatprep.subr.bf16.mxu0 %v5470
    %5696 = vmatpush1.bf16.msra.mxu0 %v5469
    %5697 = vmatprep.subr.bf16.mxu0 %v5474
    %5698 = vmatpush1.bf16.msra.mxu0 %v5473
    %5699 = vmatprep.subr.bf16.mxu0 %v5478
    %5700 = vmatpush1.bf16.msra.mxu0 %v5477
    %5701 = vmatprep.subr.bf16.mxu0 %v5482
    %5702 = vmatpush1.bf16.msra.mxu0 %v5481
    %5703 = vmatprep.subr.bf16.mxu0 %v5486
    %5704 = vmatpush1.bf16.msra.mxu0 %v5485
    %5705 = vmatprep.subr.bf16.mxu0 %v5490
    %5706 = vmatpush1.bf16.msra.mxu0 %v5489
    %5707 = vmatprep.subr.bf16.mxu0 %v5494
    %5708 = vmatpush1.bf16.msra.mxu0 %v5493
    %5709 = vmatprep.subr.bf16.mxu0 %v5498
    %5710 = vmatpush1.bf16.msra.mxu0 %v5497
    %5711 = vmatprep.subr.bf16.mxu0 %v5502
    %5712 = vmatpush1.bf16.msra.mxu0 %v5501
    %5713 = vmatprep.subr.bf16.mxu0 %v5506
    %5714 = vmatpush1.bf16.msra.mxu0 %v5505
    %5715 = vmatprep.subr.bf16.mxu0 %v5510
    %5716 = vmatpush1.bf16.msra.mxu0 %v5509
    %5717 = vmatprep.subr.bf16.mxu0 %v5514
    %5718 = vmatpush1.bf16.msra.mxu0 %v5513
    %5719 = vmatprep.subr.bf16.mxu0 %v5518
    %5720 = vmatpush1.bf16.msra.mxu0 %v5517
    %5721 = vmatprep.mubr.bf16.mxu0 %v5373
    %5722 = vmatmul.mubr.bf16.gmra.mrb[0].mxu0 %v5361
    %v5723 = vpop.f32.mrb[0].mxu0
    %v5724 = vadd.f32 0.0, %v5723
    %v5725 = vpop.f32.mrb[0].mxu0
    %v5726 = vadd.f32 0.0, %v5725
    %v5727 = vpop.f32.mrb[0].mxu0
    %v5728 = vadd.f32 0.0, %v5727
    %v5729 = vpop.f32.mrb[0].mxu0
    %v5730 = vadd.f32 0.0, %v5729
    %5731 = vmatprep.mubr.bf16.mxu0 %v5421
    %5732 = vmatmul.mubr.bf16.gmra.mrb[0].mxu0 %v5409
    %v5733 = vpop.f32.mrb[0].mxu0
    %v5734 = vadd.f32 0.0, %v5733
    %v5735 = vpop.f32.mrb[0].mxu0
    %v5736 = vadd.f32 0.0, %v5735
    %v5737 = vpop.f32.mrb[0].mxu0
    %v5738 = vadd.f32 0.0, %v5737
    %v5739 = vpop.f32.mrb[0].mxu0
    %v5740 = vadd.f32 0.0, %v5739
    %5741 = vdwg.mxu0
    %5742 = vmatprep.subr.bf16.mxu0 %v5522
    %5743 = vmatpush1.bf16.msra.mxu0 %v5521
    %5744 = vmatprep.subr.bf16.mxu0 %v5526
    %5745 = vmatpush1.bf16.msra.mxu0 %v5525
    %5746 = vmatprep.subr.bf16.mxu0 %v5530
    %5747 = vmatpush1.bf16.msra.mxu0 %v5529
    %5748 = vmatprep.subr.bf16.mxu0 %v5534
    %5749 = vmatpush1.bf16.msra.mxu0 %v5533
    %5750 = vmatprep.subr.bf16.mxu0 %v5538
    %5751 = vmatpush1.bf16.msra.mxu0 %v5537
    %5752 = vmatprep.subr.bf16.mxu0 %v5542
    %5753 = vmatpush1.bf16.msra.mxu0 %v5541
    %5754 = vmatprep.subr.bf16.mxu0 %v5546
    %5755 = vmatpush1.bf16.msra.mxu0 %v5545
    %5756 = vmatprep.subr.bf16.mxu0 %v5550
    %5757 = vmatpush1.bf16.msra.mxu0 %v5549
    %5758 = vmatprep.subr.bf16.mxu0 %v5554
    %5759 = vmatpush1.bf16.msra.mxu0 %v5553
    %5760 = vmatprep.subr.bf16.mxu0 %v5558
    %5761 = vmatpush1.bf16.msra.mxu0 %v5557
    %5762 = vmatprep.subr.bf16.mxu0 %v5562
    %5763 = vmatpush1.bf16.msra.mxu0 %v5561
    %5764 = vmatprep.subr.bf16.mxu0 %v5566
    %5765 = vmatpush1.bf16.msra.mxu0 %v5565
    %5766 = vmatprep.subr.bf16.mxu0 %v5570
    %5767 = vmatpush1.bf16.msra.mxu0 %v5569
    %5768 = vmatprep.subr.bf16.mxu0 %v5574
    %5769 = vmatpush1.bf16.msra.mxu0 %v5573
    %5770 = vmatprep.subr.bf16.mxu0 %v5578
    %5771 = vmatpush1.bf16.msra.mxu0 %v5577
    %5772 = vmatprep.subr.bf16.mxu0 %v5582
    %5773 = vmatpush1.bf16.msra.mxu0 %v5581
    %5774 = vmatprep.mubr.bf16.mxu0 %v5397
    %5775 = vmatmul.mubr.bf16.gmra.mrb[0].mxu0 %v5385
    %v5776 = vpop.f32.mrb[0].mxu0
    %v5777 = vadd.f32 %v5724, %v5776
    %v5778 = vpop.f32.mrb[0].mxu0
    %v5779 = vadd.f32 %v5726, %v5778
    %v5780 = vpop.f32.mrb[0].mxu0
    %v5781 = vadd.f32 %v5728, %v5780
    %v5782 = vpop.f32.mrb[0].mxu0
    %v5783 = vadd.f32 %v5730, %v5782
    %5784 = vmatprep.mubr.bf16.mxu0 %v5445
    %5785 = vmatmul.mubr.bf16.gmra.mrb[0].mxu0 %v5433
    %v5786 = vpop.f32.mrb[0].mxu0
    %v5787 = vadd.f32 %v5734, %v5786
    %v5788 = vpop.f32.mrb[0].mxu0
    %v5789 = vadd.f32 %v5736, %v5788
    %v5790 = vpop.f32.mrb[0].mxu0
    %v5791 = vadd.f32 %v5738, %v5790
    %v5792 = vpop.f32.mrb[0].mxu0
    %v5793 = vadd.f32 %v5740, %v5792
    %5794 = vdwg.mxu0
    %v5795 = vadd.f32 %v5318, %v5671
    %v5796 = vadd.f32 %v5319, %v5673
    %v5797 = vadd.f32 %v5320, %v5777
    %v5798 = vadd.f32 %v5321, %v5779
    %v5799 = vadd.f32 %v5322, %v5675
    %v5800 = vadd.f32 %v5323, %v5677
    %v5801 = vadd.f32 %v5324, %v5781
    %v5802 = vadd.f32 %v5325, %v5783
    %v5803 = vadd.f32 %v5326, %v5681
    %v5804 = vadd.f32 %v5327, %v5683
    %v5805 = vadd.f32 %v5328, %v5787
    %v5806 = vadd.f32 %v5329, %v5789
    %v5807 = vadd.f32 %v5330, %v5685
    %v5808 = vadd.f32 %v5331, %v5687
    %v5809 = vadd.f32 %v5332, %v5791
    %v5810 = vadd.f32 %v5333, %v5793
    %v5811 = vld [vmem:[#allocation3 + $0x20] sm:$0xfe]
    %v5812 = vld [vmem:[#allocation3 + $0x28] sm:$0xfe]
    %v5813 = vld [vmem:[#allocation3 + $0x30] sm:$0xfe]
    %v5814 = vld [vmem:[#allocation3 + $0x38] sm:$0xfe]
    %v5815 = vld [vmem:[#allocation3 + $0x80] sm:$0xfe]
    %v5816 = vld [vmem:[#allocation3 + $0x88] sm:$0xfe]
    %v5817 = vld [vmem:[#allocation3 + $0x90] sm:$0xfe]
    %v5818 = vld [vmem:[#allocation3 + $0x98] sm:$0xfe]
    %v5835 = vrot.slane %v5811, 1
    %v5836 = vrot.slane %v5338, 1
    %v5837 = vsel %vm1544, %v5835, %v5836
    %v5838 = vrot.slane %v5812, 1
    %v5839 = vrot.slane %v5339, 1
    %v5840 = vsel %vm1544, %v5838, %v5839
    %v5841 = vrot.slane %v5813, 1
    %v5842 = vrot.slane %v5340, 1
    %v5843 = vsel %vm1544, %v5841, %v5842
    %v5844 = vrot.slane %v5814, 1
    %v5845 = vrot.slane %v5341, 1
    %v5846 = vsel %vm1544, %v5844, %v5845
    %v5847 = vrot.slane %v5815, 1
    %v5848 = vrot.slane %v5346, 1
    %v5849 = vsel %vm1544, %v5847, %v5848
    %v5850 = vrot.slane %v5816, 1
    %v5851 = vrot.slane %v5347, 1
    %v5852 = vsel %vm1544, %v5850, %v5851
    %v5853 = vrot.slane %v5817, 1
    %v5854 = vrot.slane %v5348, 1
    %v5855 = vsel %vm1544, %v5853, %v5854
    %v5856 = vrot.slane %v5818, 1
    %v5857 = vrot.slane %v5349, 1
    %v5858 = vsel %vm1544, %v5856, %v5857
    %s5867 = scalar_lea.vmem [#allocation4], 9216
    %v5868 = vld [vmem:[%s5867] sm:$0xff]
    %v5869 = vld [vmem:[%s5867 + $0x8] sm:$0xff]
    %v5870 = vld [vmem:[%s5867 + $0x10] sm:$0xff]
    %v5871 = vld [vmem:[%s5867 + $0x18] sm:$0xff]
    %v5872 = vld [vmem:[%s5867 + $0x20] sm:$0xff]
    %v5873 = vld [vmem:[%s5867 + $0x28] sm:$0xff]
    %v5874 = vld [vmem:[%s5867 + $0x30] sm:$0xff]
    %v5875 = vld [vmem:[%s5867 + $0x38] sm:$0xff]
    %v5876 = vld [vmem:[%s5867 + $0x40] sm:$0xff]
    %v5877 = vld [vmem:[%s5867 + $0x48] sm:$0xff]
    %v5878 = vld [vmem:[%s5867 + $0x50] sm:$0xff]
    %v5879 = vld [vmem:[%s5867 + $0x58] sm:$0xff]
    %v5880 = vld [vmem:[%s5867 + $0x60] sm:$0xff]
    %v5881 = vld [vmem:[%s5867 + $0x68] sm:$0xff]
    %v5882 = vld [vmem:[%s5867 + $0x70] sm:$0xff]
    %v5883 = vld [vmem:[%s5867 + $0x78] sm:$0xff]
    %v5884 = vld [vmem:[%s5867 + $0x80] sm:$0xff]
    %v5885 = vld [vmem:[%s5867 + $0x88] sm:$0xff]
    %v5886 = vld [vmem:[%s5867 + $0x90] sm:$0xff]
    %v5887 = vld [vmem:[%s5867 + $0x98] sm:$0xff]
    %v5888 = vld [vmem:[%s5867 + $0xa0] sm:$0xff]
    %v5889 = vld [vmem:[%s5867 + $0xa8] sm:$0xff]
    %v5890 = vld [vmem:[%s5867 + $0xb0] sm:$0xff]
    %v5891 = vld [vmem:[%s5867 + $0xb8] sm:$0xff]
    %v5892 = vld [vmem:[%s5867 + $0xc0] sm:$0xff]
    %v5893 = vld [vmem:[%s5867 + $0xc8] sm:$0xff]
    %v5894 = vld [vmem:[%s5867 + $0xd0] sm:$0xff]
    %v5895 = vld [vmem:[%s5867 + $0xd8] sm:$0xff]
    %v5896 = vld [vmem:[%s5867 + $0xe0] sm:$0xff]
    %v5897 = vld [vmem:[%s5867 + $0xe8] sm:$0xff]
    %v5898 = vld [vmem:[%s5867 + $0xf0] sm:$0xff]
    %v5899 = vld [vmem:[%s5867 + $0xf8] sm:$0xff]
    %v5900 = vld [vmem:[%s5867 + $0x100] sm:$0xff]
    %v5901 = vld [vmem:[%s5867 + $0x108] sm:$0xff]
    %v5902 = vld [vmem:[%s5867 + $0x110] sm:$0xff]
    %v5903 = vld [vmem:[%s5867 + $0x118] sm:$0xff]
    %v5904 = vld [vmem:[%s5867 + $0x120] sm:$0xff]
    %v5905 = vld [vmem:[%s5867 + $0x128] sm:$0xff]
    %v5906 = vld [vmem:[%s5867 + $0x130] sm:$0xff]
    %v5907 = vld [vmem:[%s5867 + $0x138] sm:$0xff]
    %v5908 = vld [vmem:[%s5867 + $0x140] sm:$0xff]
    %v5909 = vld [vmem:[%s5867 + $0x148] sm:$0xff]
    %v5910 = vld [vmem:[%s5867 + $0x150] sm:$0xff]
    %v5911 = vld [vmem:[%s5867 + $0x158] sm:$0xff]
    %v5912 = vld [vmem:[%s5867 + $0x160] sm:$0xff]
    %v5913 = vld [vmem:[%s5867 + $0x168] sm:$0xff]
    %v5914 = vld [vmem:[%s5867 + $0x170] sm:$0xff]
    %v5915 = vld [vmem:[%s5867 + $0x178] sm:$0xff]
    %v5916 = vld [vmem:[%s5867 + $0x180] sm:$0xff]
    %v5917 = vld [vmem:[%s5867 + $0x188] sm:$0xff]
    %v5918 = vld [vmem:[%s5867 + $0x190] sm:$0xff]
    %v5919 = vld [vmem:[%s5867 + $0x198] sm:$0xff]
    %v5920 = vld [vmem:[%s5867 + $0x1a0] sm:$0xff]
    %v5921 = vld [vmem:[%s5867 + $0x1a8] sm:$0xff]
    %v5922 = vld [vmem:[%s5867 + $0x1b0] sm:$0xff]
    %v5923 = vld [vmem:[%s5867 + $0x1b8] sm:$0xff]
    %v5924 = vld [vmem:[%s5867 + $0x1c0] sm:$0xff]
    %v5925 = vld [vmem:[%s5867 + $0x1c8] sm:$0xff]
    %v5926 = vld [vmem:[%s5867 + $0x1d0] sm:$0xff]
    %v5927 = vld [vmem:[%s5867 + $0x1d8] sm:$0xff]
    %v5928 = vld [vmem:[%s5867 + $0x1e0] sm:$0xff]
    %v5929 = vld [vmem:[%s5867 + $0x1e8] sm:$0xff]
    %v5930 = vld [vmem:[%s5867 + $0x1f0] sm:$0xff]
    %v5931 = vld [vmem:[%s5867 + $0x1f8] sm:$0xff]
    %v5932 = vld [vmem:[%s5867 + $0x200] sm:$0xff]
    %v5933 = vld [vmem:[%s5867 + $0x208] sm:$0xff]
    %v5934 = vld [vmem:[%s5867 + $0x210] sm:$0xff]
    %v5935 = vld [vmem:[%s5867 + $0x218] sm:$0xff]
    %v5936 = vld [vmem:[%s5867 + $0x220] sm:$0xff]
    %v5937 = vld [vmem:[%s5867 + $0x228] sm:$0xff]
    %v5938 = vld [vmem:[%s5867 + $0x230] sm:$0xff]
    %v5939 = vld [vmem:[%s5867 + $0x238] sm:$0xff]
    %v5940 = vld [vmem:[%s5867 + $0x240] sm:$0xff]
    %v5941 = vld [vmem:[%s5867 + $0x248] sm:$0xff]
    %v5942 = vld [vmem:[%s5867 + $0x250] sm:$0xff]
    %v5943 = vld [vmem:[%s5867 + $0x258] sm:$0xff]
    %v5944 = vld [vmem:[%s5867 + $0x260] sm:$0xff]
    %v5945 = vld [vmem:[%s5867 + $0x268] sm:$0xff]
    %v5946 = vld [vmem:[%s5867 + $0x270] sm:$0xff]
    %v5947 = vld [vmem:[%s5867 + $0x278] sm:$0xff]
    %v5948 = vld [vmem:[%s5867 + $0x280] sm:$0xff]
    %v5949 = vld [vmem:[%s5867 + $0x288] sm:$0xff]
    %v5950 = vld [vmem:[%s5867 + $0x290] sm:$0xff]
    %v5951 = vld [vmem:[%s5867 + $0x298] sm:$0xff]
    %v5952 = vld [vmem:[%s5867 + $0x2a0] sm:$0xff]
    %v5953 = vld [vmem:[%s5867 + $0x2a8] sm:$0xff]
    %v5954 = vld [vmem:[%s5867 + $0x2b0] sm:$0xff]
    %v5955 = vld [vmem:[%s5867 + $0x2b8] sm:$0xff]
    %v5956 = vld [vmem:[%s5867 + $0x2c0] sm:$0xff]
    %v5957 = vld [vmem:[%s5867 + $0x2c8] sm:$0xff]
    %v5958 = vld [vmem:[%s5867 + $0x2d0] sm:$0xff]
    %v5959 = vld [vmem:[%s5867 + $0x2d8] sm:$0xff]
    %v5960 = vld [vmem:[%s5867 + $0x2e0] sm:$0xff]
    %v5961 = vld [vmem:[%s5867 + $0x2e8] sm:$0xff]
    %v5962 = vld [vmem:[%s5867 + $0x2f0] sm:$0xff]
    %v5963 = vld [vmem:[%s5867 + $0x2f8] sm:$0xff]
    %v5964 = vld [vmem:[%s5867 + $0x300] sm:$0xff]
    %v5965 = vld [vmem:[%s5867 + $0x308] sm:$0xff]
    %v5966 = vld [vmem:[%s5867 + $0x310] sm:$0xff]
    %v5967 = vld [vmem:[%s5867 + $0x318] sm:$0xff]
    %v5968 = vld [vmem:[%s5867 + $0x320] sm:$0xff]
    %v5969 = vld [vmem:[%s5867 + $0x328] sm:$0xff]
    %v5970 = vld [vmem:[%s5867 + $0x330] sm:$0xff]
    %v5971 = vld [vmem:[%s5867 + $0x338] sm:$0xff]
    %v5972 = vld [vmem:[%s5867 + $0x340] sm:$0xff]
    %v5973 = vld [vmem:[%s5867 + $0x348] sm:$0xff]
    %v5974 = vld [vmem:[%s5867 + $0x350] sm:$0xff]
    %v5975 = vld [vmem:[%s5867 + $0x358] sm:$0xff]
    %v5976 = vld [vmem:[%s5867 + $0x360] sm:$0xff]
    %v5977 = vld [vmem:[%s5867 + $0x368] sm:$0xff]
    %v5978 = vld [vmem:[%s5867 + $0x370] sm:$0xff]
    %v5979 = vld [vmem:[%s5867 + $0x378] sm:$0xff]
    %v5980 = vld [vmem:[%s5867 + $0x380] sm:$0xff]
    %v5981 = vld [vmem:[%s5867 + $0x388] sm:$0xff]
    %v5982 = vld [vmem:[%s5867 + $0x390] sm:$0xff]
    %v5983 = vld [vmem:[%s5867 + $0x398] sm:$0xff]
    %v5984 = vld [vmem:[%s5867 + $0x3a0] sm:$0xff]
    %v5985 = vld [vmem:[%s5867 + $0x3a8] sm:$0xff]
    %v5986 = vld [vmem:[%s5867 + $0x3b0] sm:$0xff]
    %v5987 = vld [vmem:[%s5867 + $0x3b8] sm:$0xff]
    %v5988 = vld [vmem:[%s5867 + $0x3c0] sm:$0xff]
    %v5989 = vld [vmem:[%s5867 + $0x3c8] sm:$0xff]
    %v5990 = vld [vmem:[%s5867 + $0x3d0] sm:$0xff]
    %v5991 = vld [vmem:[%s5867 + $0x3d8] sm:$0xff]
    %v5992 = vld [vmem:[%s5867 + $0x3e0] sm:$0xff]
    %v5993 = vld [vmem:[%s5867 + $0x3e8] sm:$0xff]
    %v5994 = vld [vmem:[%s5867 + $0x3f0] sm:$0xff]
    %v5995 = vld [vmem:[%s5867 + $0x3f8] sm:$0xff]
    %5996 = vmatprep.subr.bf16.mxu0 %v5869
    %5997 = vmatpush1.bf16.msra.mxu0 %v5868
    %5998 = vmatprep.subr.bf16.mxu0 %v5873
    %5999 = vmatpush1.bf16.msra.mxu0 %v5872
    %6000 = vmatprep.subr.bf16.mxu0 %v5877
    %6001 = vmatpush1.bf16.msra.mxu0 %v5876
    %6002 = vmatprep.subr.bf16.mxu0 %v5881
    %6003 = vmatpush1.bf16.msra.mxu0 %v5880
    %6004 = vmatprep.subr.bf16.mxu0 %v5885
    %6005 = vmatpush1.bf16.msra.mxu0 %v5884
    %6006 = vmatprep.subr.bf16.mxu0 %v5889
    %6007 = vmatpush1.bf16.msra.mxu0 %v5888
    %6008 = vmatprep.subr.bf16.mxu0 %v5893
    %6009 = vmatpush1.bf16.msra.mxu0 %v5892
    %6010 = vmatprep.subr.bf16.mxu0 %v5897
    %6011 = vmatpush1.bf16.msra.mxu0 %v5896
    %6012 = vmatprep.subr.bf16.mxu0 %v5901
    %6013 = vmatpush1.bf16.msra.mxu0 %v5900
    %6014 = vmatprep.subr.bf16.mxu0 %v5905
    %6015 = vmatpush1.bf16.msra.mxu0 %v5904
    %6016 = vmatprep.subr.bf16.mxu0 %v5909
    %6017 = vmatpush1.bf16.msra.mxu0 %v5908
    %6018 = vmatprep.subr.bf16.mxu0 %v5913
    %6019 = vmatpush1.bf16.msra.mxu0 %v5912
    %6020 = vmatprep.subr.bf16.mxu0 %v5917
    %6021 = vmatpush1.bf16.msra.mxu0 %v5916
    %6022 = vmatprep.subr.bf16.mxu0 %v5921
    %6023 = vmatpush1.bf16.msra.mxu0 %v5920
    %6024 = vmatprep.subr.bf16.mxu0 %v5925
    %6025 = vmatpush1.bf16.msra.mxu0 %v5924
    %6026 = vmatprep.subr.bf16.mxu0 %v5929
    %6027 = vmatpush1.bf16.msra.mxu0 %v5928
    %6028 = vmatprep.mubr.bf16.mxu0 %v5840
    %6029 = vmatmul.mubr.bf16.gmra.mrb[0].mxu0 %v5837
    %v6030 = vpop.f32.mrb[0].mxu0
    %v6031 = vadd.f32 0.0, %v6030
    %v6032 = vpop.f32.mrb[0].mxu0
    %v6033 = vadd.f32 0.0, %v6032
    %v6034 = vpop.f32.mrb[0].mxu0
    %v6035 = vadd.f32 0.0, %v6034
    %v6036 = vpop.f32.mrb[0].mxu0
    %v6037 = vadd.f32 0.0, %v6036
    %6038 = vmatprep.mubr.bf16.mxu0 %v5852
    %6039 = vmatmul.mubr.bf16.gmra.mrb[0].mxu0 %v5849
    %v6040 = vpop.f32.mrb[0].mxu0
    %v6041 = vadd.f32 0.0, %v6040
    %v6042 = vpop.f32.mrb[0].mxu0
    %v6043 = vadd.f32 0.0, %v6042
    %v6044 = vpop.f32.mrb[0].mxu0
    %v6045 = vadd.f32 0.0, %v6044
    %v6046 = vpop.f32.mrb[0].mxu0
    %v6047 = vadd.f32 0.0, %v6046
    %6048 = vdwg.mxu0
    %6049 = vmatprep.subr.bf16.mxu0 %v5933
    %6050 = vmatpush1.bf16.msra.mxu0 %v5932
    %6051 = vmatprep.subr.bf16.mxu0 %v5937
    %6052 = vmatpush1.bf16.msra.mxu0 %v5936
    %6053 = vmatprep.subr.bf16.mxu0 %v5941
    %6054 = vmatpush1.bf16.msra.mxu0 %v5940
    %6055 = vmatprep.subr.bf16.mxu0 %v5945
    %6056 = vmatpush1.bf16.msra.mxu0 %v5944
    %6057 = vmatprep.subr.bf16.mxu0 %v5949
    %6058 = vmatpush1.bf16.msra.mxu0 %v5948
    %6059 = vmatprep.subr.bf16.mxu0 %v5953
    %6060 = vmatpush1.bf16.msra.mxu0 %v5952
    %6061 = vmatprep.subr.bf16.mxu0 %v5957
    %6062 = vmatpush1.bf16.msra.mxu0 %v5956
    %6063 = vmatprep.subr.bf16.mxu0 %v5961
    %6064 = vmatpush1.bf16.msra.mxu0 %v5960
    %6065 = vmatprep.subr.bf16.mxu0 %v5965
    %6066 = vmatpush1.bf16.msra.mxu0 %v5964
    %6067 = vmatprep.subr.bf16.mxu0 %v5969
    %6068 = vmatpush1.bf16.msra.mxu0 %v5968
    %6069 = vmatprep.subr.bf16.mxu0 %v5973
    %6070 = vmatpush1.bf16.msra.mxu0 %v5972
    %6071 = vmatprep.subr.bf16.mxu0 %v5977
    %6072 = vmatpush1.bf16.msra.mxu0 %v5976
    %6073 = vmatprep.subr.bf16.mxu0 %v5981
    %6074 = vmatpush1.bf16.msra.mxu0 %v5980
    %6075 = vmatprep.subr.bf16.mxu0 %v5985
    %6076 = vmatpush1.bf16.msra.mxu0 %v5984
    %6077 = vmatprep.subr.bf16.mxu0 %v5989
    %6078 = vmatpush1.bf16.msra.mxu0 %v5988
    %6079 = vmatprep.subr.bf16.mxu0 %v5993
    %6080 = vmatpush1.bf16.msra.mxu0 %v5992
    %6081 = vmatprep.mubr.bf16.mxu0 %v5846
    %6082 = vmatmul.mubr.bf16.gmra.mrb[0].mxu0 %v5843
    %v6083 = vpop.f32.mrb[0].mxu0
    %v6084 = vadd.f32 %v6031, %v6083
    %v6085 = vpop.f32.mrb[0].mxu0
    %v6086 = vadd.f32 %v6033, %v6085
    %v6087 = vpop.f32.mrb[0].mxu0
    %v6088 = vadd.f32 %v6035, %v6087
    %v6089 = vpop.f32.mrb[0].mxu0
    %v6090 = vadd.f32 %v6037, %v6089
    %6091 = vmatprep.mubr.bf16.mxu0 %v5858
    %6092 = vmatmul.mubr.bf16.gmra.mrb[0].mxu0 %v5855
    %v6093 = vpop.f32.mrb[0].mxu0
    %v6094 = vadd.f32 %v6041, %v6093
    %v6095 = vpop.f32.mrb[0].mxu0
    %v6096 = vadd.f32 %v6043, %v6095
    %v6097 = vpop.f32.mrb[0].mxu0
    %v6098 = vadd.f32 %v6045, %v6097
    %v6099 = vpop.f32.mrb[0].mxu0
    %v6100 = vadd.f32 %v6047, %v6099
    %6101 = vdwg.mxu0
    %6102 = vmatprep.subr.bf16.mxu0 %v5871
    %6103 = vmatpush1.bf16.msra.mxu0 %v5870
    %6104 = vmatprep.subr.bf16.mxu0 %v5875
    %6105 = vmatpush1.bf16.msra.mxu0 %v5874
    %6106 = vmatprep.subr.bf16.mxu0 %v5879
    %6107 = vmatpush1.bf16.msra.mxu0 %v5878
    %6108 = vmatprep.subr.bf16.mxu0 %v5883
    %6109 = vmatpush1.bf16.msra.mxu0 %v5882
    %6110 = vmatprep.subr.bf16.mxu0 %v5887
    %6111 = vmatpush1.bf16.msra.mxu0 %v5886
    %6112 = vmatprep.subr.bf16.mxu0 %v5891
    %6113 = vmatpush1.bf16.msra.mxu0 %v5890
    %6114 = vmatprep.subr.bf16.mxu0 %v5895
    %6115 = vmatpush1.bf16.msra.mxu0 %v5894
    %6116 = vmatprep.subr.bf16.mxu0 %v5899
    %6117 = vmatpush1.bf16.msra.mxu0 %v5898
    %6118 = vmatprep.subr.bf16.mxu0 %v5903
    %6119 = vmatpush1.bf16.msra.mxu0 %v5902
    %6120 = vmatprep.subr.bf16.mxu0 %v5907
    %6121 = vmatpush1.bf16.msra.mxu0 %v5906
    %6122 = vmatprep.subr.bf16.mxu0 %v5911
    %6123 = vmatpush1.bf16.msra.mxu0 %v5910
    %6124 = vmatprep.subr.bf16.mxu0 %v5915
    %6125 = vmatpush1.bf16.msra.mxu0 %v5914
    %6126 = vmatprep.subr.bf16.mxu0 %v5919
    %6127 = vmatpush1.bf16.msra.mxu0 %v5918
    %6128 = vmatprep.subr.bf16.mxu0 %v5923
    %6129 = vmatpush1.bf16.msra.mxu0 %v5922
    %6130 = vmatprep.subr.bf16.mxu0 %v5927
    %6131 = vmatpush1.bf16.msra.mxu0 %v5926
    %6132 = vmatprep.subr.bf16.mxu0 %v5931
    %6133 = vmatpush1.bf16.msra.mxu0 %v5930
    %6134 = vmatprep.mubr.bf16.mxu0 %v5840
    %6135 = vmatmul.mubr.bf16.gmra.mrb[0].mxu0 %v5837
    %v6136 = vpop.f32.mrb[0].mxu0
    %v6137 = vadd.f32 0.0, %v6136
    %v6138 = vpop.f32.mrb[0].mxu0
    %v6139 = vadd.f32 0.0, %v6138
    %v6140 = vpop.f32.mrb[0].mxu0
    %v6141 = vadd.f32 0.0, %v6140
    %v6142 = vpop.f32.mrb[0].mxu0
    %v6143 = vadd.f32 0.0, %v6142
    %6144 = vmatprep.mubr.bf16.mxu0 %v5852
    %6145 = vmatmul.mubr.bf16.gmra.mrb[0].mxu0 %v5849
    %v6146 = vpop.f32.mrb[0].mxu0
    %v6147 = vadd.f32 0.0, %v6146
    %v6148 = vpop.f32.mrb[0].mxu0
    %v6149 = vadd.f32 0.0, %v6148
    %v6150 = vpop.f32.mrb[0].mxu0
    %v6151 = vadd.f32 0.0, %v6150
    %v6152 = vpop.f32.mrb[0].mxu0
    %v6153 = vadd.f32 0.0, %v6152
    %6154 = vdwg.mxu0
    %6155 = vmatprep.subr.bf16.mxu0 %v5935
    %6156 = vmatpush1.bf16.msra.mxu0 %v5934
    %6157 = vmatprep.subr.bf16.mxu0 %v5939
    %6158 = vmatpush1.bf16.msra.mxu0 %v5938
    %6159 = vmatprep.subr.bf16.mxu0 %v5943
    %6160 = vmatpush1.bf16.msra.mxu0 %v5942
    %6161 = vmatprep.subr.bf16.mxu0 %v5947
    %6162 = vmatpush1.bf16.msra.mxu0 %v5946
    %6163 = vmatprep.subr.bf16.mxu0 %v5951
    %6164 = vmatpush1.bf16.msra.mxu0 %v5950
    %6165 = vmatprep.subr.bf16.mxu0 %v5955
    %6166 = vmatpush1.bf16.msra.mxu0 %v5954
    %6167 = vmatprep.subr.bf16.mxu0 %v5959
    %6168 = vmatpush1.bf16.msra.mxu0 %v5958
    %6169 = vmatprep.subr.bf16.mxu0 %v5963
    %6170 = vmatpush1.bf16.msra.mxu0 %v5962
    %6171 = vmatprep.subr.bf16.mxu0 %v5967
    %6172 = vmatpush1.bf16.msra.mxu0 %v5966
    %6173 = vmatprep.subr.bf16.mxu0 %v5971
    %6174 = vmatpush1.bf16.msra.mxu0 %v5970
    %6175 = vmatprep.subr.bf16.mxu0 %v5975
    %6176 = vmatpush1.bf16.msra.mxu0 %v5974
    %6177 = vmatprep.subr.bf16.mxu0 %v5979
    %6178 = vmatpush1.bf16.msra.mxu0 %v5978
    %6179 = vmatprep.subr.bf16.mxu0 %v5983
    %6180 = vmatpush1.bf16.msra.mxu0 %v5982
    %6181 = vmatprep.subr.bf16.mxu0 %v5987
    %6182 = vmatpush1.bf16.msra.mxu0 %v5986
    %6183 = vmatprep.subr.bf16.mxu0 %v5991
    %6184 = vmatpush1.bf16.msra.mxu0 %v5990
    %6185 = vmatprep.subr.bf16.mxu0 %v5995
    %6186 = vmatpush1.bf16.msra.mxu0 %v5994
    %6187 = vmatprep.mubr.bf16.mxu0 %v5846
    %6188 = vmatmul.mubr.bf16.gmra.mrb[0].mxu0 %v5843
    %v6189 = vpop.f32.mrb[0].mxu0
    %v6190 = vadd.f32 %v6137, %v6189
    %v6191 = vpop.f32.mrb[0].mxu0
    %v6192 = vadd.f32 %v6139, %v6191
    %v6193 = vpop.f32.mrb[0].mxu0
    %v6194 = vadd.f32 %v6141, %v6193
    %v6195 = vpop.f32.mrb[0].mxu0
    %v6196 = vadd.f32 %v6143, %v6195
    %6197 = vmatprep.mubr.bf16.mxu0 %v5858
    %6198 = vmatmul.mubr.bf16.gmra.mrb[0].mxu0 %v5855
    %v6199 = vpop.f32.mrb[0].mxu0
    %v6200 = vadd.f32 %v6147, %v6199
    %v6201 = vpop.f32.mrb[0].mxu0
    %v6202 = vadd.f32 %v6149, %v6201
    %v6203 = vpop.f32.mrb[0].mxu0
    %v6204 = vadd.f32 %v6151, %v6203
    %v6205 = vpop.f32.mrb[0].mxu0
    %v6206 = vadd.f32 %v6153, %v6205
    %6207 = vdwg.mxu0
    %v6208 = vadd.f32 %v5795, %v6084
    %v6209 = vadd.f32 %v5796, %v6086
    %v6210 = vadd.f32 %v5797, %v6190
    %v6211 = vadd.f32 %v5798, %v6192
    %v6212 = vadd.f32 %v5799, %v6088
    %v6213 = vadd.f32 %v5800, %v6090
    %v6214 = vadd.f32 %v5801, %v6194
    %v6215 = vadd.f32 %v5802, %v6196
    %v6216 = vadd.f32 %v5803, %v6094
    %v6217 = vadd.f32 %v5804, %v6096
    %v6218 = vadd.f32 %v5805, %v6200
    %v6219 = vadd.f32 %v5806, %v6202
    %v6220 = vadd.f32 %v5807, %v6098
    %v6221 = vadd.f32 %v5808, %v6100
    %v6222 = vadd.f32 %v5809, %v6204
    %v6223 = vadd.f32 %v5810, %v6206
    %s6224 = scalar_lea.vmem [#allocation12], 2
    %v6225 = vld [vmem:[%s6224] ss:$4 sm:$0xf]
    %v6227 = vlaneseq
    %v6228 = vshrl.u32 %v6227, 7
    %v6229 = vsub.s32 0, %v6228
    %v6230 = vrot.slane %v6225, %v6229
    %v6231 = vlaneseq
    %v6232 = vshrl.u32 %v6231, 7
    %v6233 = vsub.s32 1, %v6232
    %v6234 = vrot.slane %v6225, %v6233
    %v6235 = vlaneseq
    %v6236 = vshrl.u32 %v6235, 7
    %v6237 = vsub.s32 2, %v6236
    %v6238 = vrot.slane %v6225, %v6237
    %v6239 = vlaneseq
    %v6240 = vshrl.u32 %v6239, 7
    %v6241 = vsub.s32 3, %v6240
    %v6242 = vrot.slane %v6225, %v6241
    %v6247 = vadd.f32 %v6208, %v6230
    %v6248 = vadd.f32 %v6209, %v6234
    %v6249 = vadd.f32 %v6210, %v6238
    %v6250 = vadd.f32 %v6211, %v6242
    %v6251 = vadd.f32 %v6212, %v6230
    %v6252 = vadd.f32 %v6213, %v6234
    %v6253 = vadd.f32 %v6214, %v6238
    %v6254 = vadd.f32 %v6215, %v6242
    %v6255 = vadd.f32 %v6216, %v6230
    %v6256 = vadd.f32 %v6217, %v6234
    %v6257 = vadd.f32 %v6218, %v6238
    %v6258 = vadd.f32 %v6219, %v6242
    %v6259 = vadd.f32 %v6220, %v6230
    %v6260 = vadd.f32 %v6221, %v6234
    %v6261 = vadd.f32 %v6222, %v6238
    %v6262 = vadd.f32 %v6223, %v6242
    %v6263 = vtanh.pop %v6247
    %v6264 = vtanh.pop %v6248
    %v6265 = vtanh.pop %v6249
    %v6266 = vtanh.pop %v6250
    %v6267 = vtanh.pop %v6251
    %v6268 = vtanh.pop %v6252
    %v6269 = vtanh.pop %v6253
    %v6270 = vtanh.pop %v6254
    %v6271 = vtanh.pop %v6255
    %v6272 = vtanh.pop %v6256
    %v6273 = vtanh.pop %v6257
    %v6274 = vtanh.pop %v6258
    %v6275 = vtanh.pop %v6259
    %v6276 = vtanh.pop %v6260
    %v6277 = vtanh.pop %v6261
    %v6278 = vtanh.pop %v6262
    %v6279 = vpack.c.bf16 %v6267, %v6263
    %v6280 = vpack.c.bf16 %v6268, %v6264
    %v6281 = vpack.c.bf16 %v6269, %v6265
    %v6282 = vpack.c.bf16 %v6270, %v6266
    %v6283 = vpack.c.bf16 %v6275, %v6271
    %v6284 = vpack.c.bf16 %v6276, %v6272
    %v6285 = vpack.c.bf16 %v6277, %v6273
    %v6286 = vpack.c.bf16 %v6278, %v6274
    %6287 = vst [vmem:[#allocation3 + $0x20] sm:$0xff] %v6279
    %6288 = vst [vmem:[#allocation3 + $0x28] sm:$0xff] %v6280
    %6289 = vst [vmem:[#allocation3 + $0x30] sm:$0xff] %v6281
    %6290 = vst [vmem:[#allocation3 + $0x38] sm:$0xff] %v6282
    %6291 = vst [vmem:[#allocation3 + $0x80] sm:$0xff] %v6283
    %6292 = vst [vmem:[#allocation3 + $0x88] sm:$0xff] %v6284
    %6293 = vst [vmem:[#allocation3 + $0x90] sm:$0xff] %v6285
    %6294 = vst [vmem:[#allocation3 + $0x98] sm:$0xff] %v6286
    %s6295 = sshll.u32 %s1940, 4
    %6296 = dma.done %s161, %s6295
    %v6297 = vld [vmem:[#allocation3] sm:$0x80]
    %v6298 = vld [vmem:[#allocation3 + $0x8] sm:$0x80]
    %v6299 = vld [vmem:[#allocation3 + $0x10] sm:$0x80]
    %v6300 = vld [vmem:[#allocation3 + $0x18] sm:$0x80]
    %v6301 = vld [vmem:[#allocation3 + $0x20] sm:$0x7f]
    %v6302 = vld [vmem:[#allocation3 + $0x28] sm:$0x7f]
    %v6303 = vld [vmem:[#allocation3 + $0x30] sm:$0x7f]
    %v6304 = vld [vmem:[#allocation3 + $0x38] sm:$0x7f]
    %v6305 = vld [vmem:[#allocation3 + $0x60] sm:$0x80]
    %v6306 = vld [vmem:[#allocation3 + $0x68] sm:$0x80]
    %v6307 = vld [vmem:[#allocation3 + $0x70] sm:$0x80]
    %v6308 = vld [vmem:[#allocation3 + $0x78] sm:$0x80]
    %v6309 = vld [vmem:[#allocation3 + $0x80] sm:$0x7f]
    %v6310 = vld [vmem:[#allocation3 + $0x88] sm:$0x7f]
    %v6311 = vld [vmem:[#allocation3 + $0x90] sm:$0x7f]
    %v6312 = vld [vmem:[#allocation3 + $0x98] sm:$0x7f]
    %v6329 = vrot.slane %v6297, 7
    %v6330 = vrot.slane %v6301, 7
    %v6331 = vsel %vm242, %v6329, %v6330
    %v6332 = vrot.slane %v6298, 7
    %v6333 = vrot.slane %v6302, 7
    %v6334 = vsel %vm242, %v6332, %v6333
    %v6335 = vrot.slane %v6299, 7
    %v6336 = vrot.slane %v6303, 7
    %v6337 = vsel %vm242, %v6335, %v6336
    %v6338 = vrot.slane %v6300, 7
    %v6339 = vrot.slane %v6304, 7
    %v6340 = vsel %vm242, %v6338, %v6339
    %v6341 = vrot.slane %v6305, 7
    %v6342 = vrot.slane %v6309, 7
    %v6343 = vsel %vm242, %v6341, %v6342
    %v6344 = vrot.slane %v6306, 7
    %v6345 = vrot.slane %v6310, 7
    %v6346 = vsel %vm242, %v6344, %v6345
    %v6347 = vrot.slane %v6307, 7
    %v6348 = vrot.slane %v6311, 7
    %v6349 = vsel %vm242, %v6347, %v6348
    %v6350 = vrot.slane %v6308, 7
    %v6351 = vrot.slane %v6312, 7
    %v6352 = vsel %vm242, %v6350, %v6351
    %v6361 = vld [vmem:[%s160] sm:$0xff]
    %v6362 = vld [vmem:[%s160 + $0x8] sm:$0xff]
    %v6363 = vld [vmem:[%s160 + $0x10] sm:$0xff]
    %v6364 = vld [vmem:[%s160 + $0x18] sm:$0xff]
    %v6365 = vld [vmem:[%s160 + $0x20] sm:$0xff]
    %v6366 = vld [vmem:[%s160 + $0x28] sm:$0xff]
    %v6367 = vld [vmem:[%s160 + $0x30] sm:$0xff]
    %v6368 = vld [vmem:[%s160 + $0x38] sm:$0xff]
    %v6369 = vld [vmem:[%s160 + $0x40] sm:$0xff]
    %v6370 = vld [vmem:[%s160 + $0x48] sm:$0xff]
    %v6371 = vld [vmem:[%s160 + $0x50] sm:$0xff]
    %v6372 = vld [vmem:[%s160 + $0x58] sm:$0xff]
    %v6373 = vld [vmem:[%s160 + $0x60] sm:$0xff]
    %v6374 = vld [vmem:[%s160 + $0x68] sm:$0xff]
    %v6375 = vld [vmem:[%s160 + $0x70] sm:$0xff]
    %v6376 = vld [vmem:[%s160 + $0x78] sm:$0xff]
    %v6377 = vld [vmem:[%s160 + $0x80] sm:$0xff]
    %v6378 = vld [vmem:[%s160 + $0x88] sm:$0xff]
    %v6379 = vld [vmem:[%s160 + $0x90] sm:$0xff]
    %v6380 = vld [vmem:[%s160 + $0x98] sm:$0xff]
    %v6381 = vld [vmem:[%s160 + $0xa0] sm:$0xff]
    %v6382 = vld [vmem:[%s160 + $0xa8] sm:$0xff]
    %v6383 = vld [vmem:[%s160 + $0xb0] sm:$0xff]
    %v6384 = vld [vmem:[%s160 + $0xb8] sm:$0xff]
    %v6385 = vld [vmem:[%s160 + $0xc0] sm:$0xff]
    %v6386 = vld [vmem:[%s160 + $0xc8] sm:$0xff]
    %v6387 = vld [vmem:[%s160 + $0xd0] sm:$0xff]
    %v6388 = vld [vmem:[%s160 + $0xd8] sm:$0xff]
    %v6389 = vld [vmem:[%s160 + $0xe0] sm:$0xff]
    %v6390 = vld [vmem:[%s160 + $0xe8] sm:$0xff]
    %v6391 = vld [vmem:[%s160 + $0xf0] sm:$0xff]
    %v6392 = vld [vmem:[%s160 + $0xf8] sm:$0xff]
    %v6393 = vld [vmem:[%s160 + $0x100] sm:$0xff]
    %v6394 = vld [vmem:[%s160 + $0x108] sm:$0xff]
    %v6395 = vld [vmem:[%s160 + $0x110] sm:$0xff]
    %v6396 = vld [vmem:[%s160 + $0x118] sm:$0xff]
    %v6397 = vld [vmem:[%s160 + $0x120] sm:$0xff]
    %v6398 = vld [vmem:[%s160 + $0x128] sm:$0xff]
    %v6399 = vld [vmem:[%s160 + $0x130] sm:$0xff]
    %v6400 = vld [vmem:[%s160 + $0x138] sm:$0xff]
    %v6401 = vld [vmem:[%s160 + $0x140] sm:$0xff]
    %v6402 = vld [vmem:[%s160 + $0x148] sm:$0xff]
    %v6403 = vld [vmem:[%s160 + $0x150] sm:$0xff]
    %v6404 = vld [vmem:[%s160 + $0x158] sm:$0xff]
    %v6405 = vld [vmem:[%s160 + $0x160] sm:$0xff]
    %v6406 = vld [vmem:[%s160 + $0x168] sm:$0xff]
    %v6407 = vld [vmem:[%s160 + $0x170] sm:$0xff]
    %v6408 = vld [vmem:[%s160 + $0x178] sm:$0xff]
    %v6409 = vld [vmem:[%s160 + $0x180] sm:$0xff]
    %v6410 = vld [vmem:[%s160 + $0x188] sm:$0xff]
    %v6411 = vld [vmem:[%s160 + $0x190] sm:$0xff]
    %v6412 = vld [vmem:[%s160 + $0x198] sm:$0xff]
    %v6413 = vld [vmem:[%s160 + $0x1a0] sm:$0xff]
    %v6414 = vld [vmem:[%s160 + $0x1a8] sm:$0xff]
    %v6415 = vld [vmem:[%s160 + $0x1b0] sm:$0xff]
    %v6416 = vld [vmem:[%s160 + $0x1b8] sm:$0xff]
    %v6417 = vld [vmem:[%s160 + $0x1c0] sm:$0xff]
    %v6418 = vld [vmem:[%s160 + $0x1c8] sm:$0xff]
    %v6419 = vld [vmem:[%s160 + $0x1d0] sm:$0xff]
    %v6420 = vld [vmem:[%s160 + $0x1d8] sm:$0xff]
    %v6421 = vld [vmem:[%s160 + $0x1e0] sm:$0xff]
    %v6422 = vld [vmem:[%s160 + $0x1e8] sm:$0xff]
    %v6423 = vld [vmem:[%s160 + $0x1f0] sm:$0xff]
    %v6424 = vld [vmem:[%s160 + $0x1f8] sm:$0xff]
    %v6425 = vld [vmem:[%s160 + $0x200] sm:$0xff]
    %v6426 = vld [vmem:[%s160 + $0x208] sm:$0xff]
    %v6427 = vld [vmem:[%s160 + $0x210] sm:$0xff]
    %v6428 = vld [vmem:[%s160 + $0x218] sm:$0xff]
    %v6429 = vld [vmem:[%s160 + $0x220] sm:$0xff]
    %v6430 = vld [vmem:[%s160 + $0x228] sm:$0xff]
    %v6431 = vld [vmem:[%s160 + $0x230] sm:$0xff]
    %v6432 = vld [vmem:[%s160 + $0x238] sm:$0xff]
    %v6433 = vld [vmem:[%s160 + $0x240] sm:$0xff]
    %v6434 = vld [vmem:[%s160 + $0x248] sm:$0xff]
    %v6435 = vld [vmem:[%s160 + $0x250] sm:$0xff]
    %v6436 = vld [vmem:[%s160 + $0x258] sm:$0xff]
    %v6437 = vld [vmem:[%s160 + $0x260] sm:$0xff]
    %v6438 = vld [vmem:[%s160 + $0x268] sm:$0xff]
    %v6439 = vld [vmem:[%s160 + $0x270] sm:$0xff]
    %v6440 = vld [vmem:[%s160 + $0x278] sm:$0xff]
    %v6441 = vld [vmem:[%s160 + $0x280] sm:$0xff]
    %v6442 = vld [vmem:[%s160 + $0x288] sm:$0xff]
    %v6443 = vld [vmem:[%s160 + $0x290] sm:$0xff]
    %v6444 = vld [vmem:[%s160 + $0x298] sm:$0xff]
    %v6445 = vld [vmem:[%s160 + $0x2a0] sm:$0xff]
    %v6446 = vld [vmem:[%s160 + $0x2a8] sm:$0xff]
    %v6447 = vld [vmem:[%s160 + $0x2b0] sm:$0xff]
    %v6448 = vld [vmem:[%s160 + $0x2b8] sm:$0xff]
    %v6449 = vld [vmem:[%s160 + $0x2c0] sm:$0xff]
    %v6450 = vld [vmem:[%s160 + $0x2c8] sm:$0xff]
    %v6451 = vld [vmem:[%s160 + $0x2d0] sm:$0xff]
    %v6452 = vld [vmem:[%s160 + $0x2d8] sm:$0xff]
    %v6453 = vld [vmem:[%s160 + $0x2e0] sm:$0xff]
    %v6454 = vld [vmem:[%s160 + $0x2e8] sm:$0xff]
    %v6455 = vld [vmem:[%s160 + $0x2f0] sm:$0xff]
    %v6456 = vld [vmem:[%s160 + $0x2f8] sm:$0xff]
    %v6457 = vld [vmem:[%s160 + $0x300] sm:$0xff]
    %v6458 = vld [vmem:[%s160 + $0x308] sm:$0xff]
    %v6459 = vld [vmem:[%s160 + $0x310] sm:$0xff]
    %v6460 = vld [vmem:[%s160 + $0x318] sm:$0xff]
    %v6461 = vld [vmem:[%s160 + $0x320] sm:$0xff]
    %v6462 = vld [vmem:[%s160 + $0x328] sm:$0xff]
    %v6463 = vld [vmem:[%s160 + $0x330] sm:$0xff]
    %v6464 = vld [vmem:[%s160 + $0x338] sm:$0xff]
    %v6465 = vld [vmem:[%s160 + $0x340] sm:$0xff]
    %v6466 = vld [vmem:[%s160 + $0x348] sm:$0xff]
    %v6467 = vld [vmem:[%s160 + $0x350] sm:$0xff]
    %v6468 = vld [vmem:[%s160 + $0x358] sm:$0xff]
    %v6469 = vld [vmem:[%s160 + $0x360] sm:$0xff]
    %v6470 = vld [vmem:[%s160 + $0x368] sm:$0xff]
    %v6471 = vld [vmem:[%s160 + $0x370] sm:$0xff]
    %v6472 = vld [vmem:[%s160 + $0x378] sm:$0xff]
    %v6473 = vld [vmem:[%s160 + $0x380] sm:$0xff]
    %v6474 = vld [vmem:[%s160 + $0x388] sm:$0xff]
    %v6475 = vld [vmem:[%s160 + $0x390] sm:$0xff]
    %v6476 = vld [vmem:[%s160 + $0x398] sm:$0xff]
    %v6477 = vld [vmem:[%s160 + $0x3a0] sm:$0xff]
    %v6478 = vld [vmem:[%s160 + $0x3a8] sm:$0xff]
    %v6479 = vld [vmem:[%s160 + $0x3b0] sm:$0xff]
    %v6480 = vld [vmem:[%s160 + $0x3b8] sm:$0xff]
    %v6481 = vld [vmem:[%s160 + $0x3c0] sm:$0xff]
    %v6482 = vld [vmem:[%s160 + $0x3c8] sm:$0xff]
    %v6483 = vld [vmem:[%s160 + $0x3d0] sm:$0xff]
    %v6484 = vld [vmem:[%s160 + $0x3d8] sm:$0xff]
    %v6485 = vld [vmem:[%s160 + $0x3e0] sm:$0xff]
    %v6486 = vld [vmem:[%s160 + $0x3e8] sm:$0xff]
    %v6487 = vld [vmem:[%s160 + $0x3f0] sm:$0xff]
    %v6488 = vld [vmem:[%s160 + $0x3f8] sm:$0xff]
    %v6489 = vld [vmem:[#allocation3 + $0x20] sm:$0xff]
    %v6490 = vld [vmem:[#allocation3 + $0x28] sm:$0xff]
    %v6491 = vld [vmem:[#allocation3 + $0x30] sm:$0xff]
    %v6492 = vld [vmem:[#allocation3 + $0x38] sm:$0xff]
    %v6493 = vld [vmem:[#allocation3 + $0x80] sm:$0xff]
    %v6494 = vld [vmem:[#allocation3 + $0x88] sm:$0xff]
    %v6495 = vld [vmem:[#allocation3 + $0x90] sm:$0xff]
    %v6496 = vld [vmem:[#allocation3 + $0x98] sm:$0xff]
    %v6498 = vshrl.u32 %v6297, 16
    %v6500 = vrot.slane %v6498, 7
    %v6502 = vshrl.u32 %v6489, 16
    %v6504 = vrot.slane %v6502, 7
    %v6505 = vshll.u32 %v6489, 16
    %v6507 = vor.u32 %v6504, %v6505
    %v6508 = vsel %vm285, %v6500, %v6507
    %v6510 = vshrl.u32 %v6298, 16
    %v6512 = vrot.slane %v6510, 7
    %v6514 = vshrl.u32 %v6490, 16
    %v6516 = vrot.slane %v6514, 7
    %v6517 = vshll.u32 %v6490, 16
    %v6519 = vor.u32 %v6516, %v6517
    %v6520 = vsel %vm285, %v6512, %v6519
    %v6522 = vshrl.u32 %v6299, 16
    %v6524 = vrot.slane %v6522, 7
    %v6526 = vshrl.u32 %v6491, 16
    %v6528 = vrot.slane %v6526, 7
    %v6529 = vshll.u32 %v6491, 16
    %v6531 = vor.u32 %v6528, %v6529
    %v6532 = vsel %vm285, %v6524, %v6531
    %v6534 = vshrl.u32 %v6300, 16
    %v6536 = vrot.slane %v6534, 7
    %v6538 = vshrl.u32 %v6492, 16
    %v6540 = vrot.slane %v6538, 7
    %v6541 = vshll.u32 %v6492, 16
    %v6543 = vor.u32 %v6540, %v6541
    %v6544 = vsel %vm285, %v6536, %v6543
    %v6546 = vshrl.u32 %v6305, 16
    %v6548 = vrot.slane %v6546, 7
    %v6550 = vshrl.u32 %v6493, 16
    %v6552 = vrot.slane %v6550, 7
    %v6553 = vshll.u32 %v6493, 16
    %v6555 = vor.u32 %v6552, %v6553
    %v6556 = vsel %vm285, %v6548, %v6555
    %v6558 = vshrl.u32 %v6306, 16
    %v6560 = vrot.slane %v6558, 7
    %v6562 = vshrl.u32 %v6494, 16
    %v6564 = vrot.slane %v6562, 7
    %v6565 = vshll.u32 %v6494, 16
    %v6567 = vor.u32 %v6564, %v6565
    %v6568 = vsel %vm285, %v6560, %v6567
    %v6570 = vshrl.u32 %v6307, 16
    %v6572 = vrot.slane %v6570, 7
    %v6574 = vshrl.u32 %v6495, 16
    %v6576 = vrot.slane %v6574, 7
    %v6577 = vshll.u32 %v6495, 16
    %v6579 = vor.u32 %v6576, %v6577
    %v6580 = vsel %vm285, %v6572, %v6579
    %v6582 = vshrl.u32 %v6308, 16
    %v6584 = vrot.slane %v6582, 7
    %v6586 = vshrl.u32 %v6496, 16
    %v6588 = vrot.slane %v6586, 7
    %v6589 = vshll.u32 %v6496, 16
    %v6591 = vor.u32 %v6588, %v6589
    %v6592 = vsel %vm285, %v6584, %v6591
    %s6601 = scalar_lea.vmem [#allocation4], 11264
    %v6602 = vld [vmem:[%s6601] sm:$0xff]
    %v6603 = vld [vmem:[%s6601 + $0x8] sm:$0xff]
    %v6604 = vld [vmem:[%s6601 + $0x10] sm:$0xff]
    %v6605 = vld [vmem:[%s6601 + $0x18] sm:$0xff]
    %v6606 = vld [vmem:[%s6601 + $0x20] sm:$0xff]
    %v6607 = vld [vmem:[%s6601 + $0x28] sm:$0xff]
    %v6608 = vld [vmem:[%s6601 + $0x30] sm:$0xff]
    %v6609 = vld [vmem:[%s6601 + $0x38] sm:$0xff]
    %v6610 = vld [vmem:[%s6601 + $0x40] sm:$0xff]
    %v6611 = vld [vmem:[%s6601 + $0x48] sm:$0xff]
    %v6612 = vld [vmem:[%s6601 + $0x50] sm:$0xff]
    %v6613 = vld [vmem:[%s6601 + $0x58] sm:$0xff]
    %v6614 = vld [vmem:[%s6601 + $0x60] sm:$0xff]
    %v6615 = vld [vmem:[%s6601 + $0x68] sm:$0xff]
    %v6616 = vld [vmem:[%s6601 + $0x70] sm:$0xff]
    %v6617 = vld [vmem:[%s6601 + $0x78] sm:$0xff]
    %v6618 = vld [vmem:[%s6601 + $0x80] sm:$0xff]
    %v6619 = vld [vmem:[%s6601 + $0x88] sm:$0xff]
    %v6620 = vld [vmem:[%s6601 + $0x90] sm:$0xff]
    %v6621 = vld [vmem:[%s6601 + $0x98] sm:$0xff]
    %v6622 = vld [vmem:[%s6601 + $0xa0] sm:$0xff]
    %v6623 = vld [vmem:[%s6601 + $0xa8] sm:$0xff]
    %v6624 = vld [vmem:[%s6601 + $0xb0] sm:$0xff]
    %v6625 = vld [vmem:[%s6601 + $0xb8] sm:$0xff]
    %v6626 = vld [vmem:[%s6601 + $0xc0] sm:$0xff]
    %v6627 = vld [vmem:[%s6601 + $0xc8] sm:$0xff]
    %v6628 = vld [vmem:[%s6601 + $0xd0] sm:$0xff]
    %v6629 = vld [vmem:[%s6601 + $0xd8] sm:$0xff]
    %v6630 = vld [vmem:[%s6601 + $0xe0] sm:$0xff]
    %v6631 = vld [vmem:[%s6601 + $0xe8] sm:$0xff]
    %v6632 = vld [vmem:[%s6601 + $0xf0] sm:$0xff]
    %v6633 = vld [vmem:[%s6601 + $0xf8] sm:$0xff]
    %v6634 = vld [vmem:[%s6601 + $0x100] sm:$0xff]
    %v6635 = vld [vmem:[%s6601 + $0x108] sm:$0xff]
    %v6636 = vld [vmem:[%s6601 + $0x110] sm:$0xff]
    %v6637 = vld [vmem:[%s6601 + $0x118] sm:$0xff]
    %v6638 = vld [vmem:[%s6601 + $0x120] sm:$0xff]
    %v6639 = vld [vmem:[%s6601 + $0x128] sm:$0xff]
    %v6640 = vld [vmem:[%s6601 + $0x130] sm:$0xff]
    %v6641 = vld [vmem:[%s6601 + $0x138] sm:$0xff]
    %v6642 = vld [vmem:[%s6601 + $0x140] sm:$0xff]
    %v6643 = vld [vmem:[%s6601 + $0x148] sm:$0xff]
    %v6644 = vld [vmem:[%s6601 + $0x150] sm:$0xff]
    %v6645 = vld [vmem:[%s6601 + $0x158] sm:$0xff]
    %v6646 = vld [vmem:[%s6601 + $0x160] sm:$0xff]
    %v6647 = vld [vmem:[%s6601 + $0x168] sm:$0xff]
    %v6648 = vld [vmem:[%s6601 + $0x170] sm:$0xff]
    %v6649 = vld [vmem:[%s6601 + $0x178] sm:$0xff]
    %v6650 = vld [vmem:[%s6601 + $0x180] sm:$0xff]
    %v6651 = vld [vmem:[%s6601 + $0x188] sm:$0xff]
    %v6652 = vld [vmem:[%s6601 + $0x190] sm:$0xff]
    %v6653 = vld [vmem:[%s6601 + $0x198] sm:$0xff]
    %v6654 = vld [vmem:[%s6601 + $0x1a0] sm:$0xff]
    %v6655 = vld [vmem:[%s6601 + $0x1a8] sm:$0xff]
    %v6656 = vld [vmem:[%s6601 + $0x1b0] sm:$0xff]
    %v6657 = vld [vmem:[%s6601 + $0x1b8] sm:$0xff]
    %v6658 = vld [vmem:[%s6601 + $0x1c0] sm:$0xff]
    %v6659 = vld [vmem:[%s6601 + $0x1c8] sm:$0xff]
    %v6660 = vld [vmem:[%s6601 + $0x1d0] sm:$0xff]
    %v6661 = vld [vmem:[%s6601 + $0x1d8] sm:$0xff]
    %v6662 = vld [vmem:[%s6601 + $0x1e0] sm:$0xff]
    %v6663 = vld [vmem:[%s6601 + $0x1e8] sm:$0xff]
    %v6664 = vld [vmem:[%s6601 + $0x1f0] sm:$0xff]
    %v6665 = vld [vmem:[%s6601 + $0x1f8] sm:$0xff]
    %v6666 = vld [vmem:[%s6601 + $0x200] sm:$0xff]
    %v6667 = vld [vmem:[%s6601 + $0x208] sm:$0xff]
    %v6668 = vld [vmem:[%s6601 + $0x210] sm:$0xff]
    %v6669 = vld [vmem:[%s6601 + $0x218] sm:$0xff]
    %v6670 = vld [vmem:[%s6601 + $0x220] sm:$0xff]
    %v6671 = vld [vmem:[%s6601 + $0x228] sm:$0xff]
    %v6672 = vld [vmem:[%s6601 + $0x230] sm:$0xff]
    %v6673 = vld [vmem:[%s6601 + $0x238] sm:$0xff]
    %v6674 = vld [vmem:[%s6601 + $0x240] sm:$0xff]
    %v6675 = vld [vmem:[%s6601 + $0x248] sm:$0xff]
    %v6676 = vld [vmem:[%s6601 + $0x250] sm:$0xff]
    %v6677 = vld [vmem:[%s6601 + $0x258] sm:$0xff]
    %v6678 = vld [vmem:[%s6601 + $0x260] sm:$0xff]
    %v6679 = vld [vmem:[%s6601 + $0x268] sm:$0xff]
    %v6680 = vld [vmem:[%s6601 + $0x270] sm:$0xff]
    %v6681 = vld [vmem:[%s6601 + $0x278] sm:$0xff]
    %v6682 = vld [vmem:[%s6601 + $0x280] sm:$0xff]
    %v6683 = vld [vmem:[%s6601 + $0x288] sm:$0xff]
    %v6684 = vld [vmem:[%s6601 + $0x290] sm:$0xff]
    %v6685 = vld [vmem:[%s6601 + $0x298] sm:$0xff]
    %v6686 = vld [vmem:[%s6601 + $0x2a0] sm:$0xff]
    %v6687 = vld [vmem:[%s6601 + $0x2a8] sm:$0xff]
    %v6688 = vld [vmem:[%s6601 + $0x2b0] sm:$0xff]
    %v6689 = vld [vmem:[%s6601 + $0x2b8] sm:$0xff]
    %v6690 = vld [vmem:[%s6601 + $0x2c0] sm:$0xff]
    %v6691 = vld [vmem:[%s6601 + $0x2c8] sm:$0xff]
    %v6692 = vld [vmem:[%s6601 + $0x2d0] sm:$0xff]
    %v6693 = vld [vmem:[%s6601 + $0x2d8] sm:$0xff]
    %v6694 = vld [vmem:[%s6601 + $0x2e0] sm:$0xff]
    %v6695 = vld [vmem:[%s6601 + $0x2e8] sm:$0xff]
    %v6696 = vld [vmem:[%s6601 + $0x2f0] sm:$0xff]
    %v6697 = vld [vmem:[%s6601 + $0x2f8] sm:$0xff]
    %v6698 = vld [vmem:[%s6601 + $0x300] sm:$0xff]
    %v6699 = vld [vmem:[%s6601 + $0x308] sm:$0xff]
    %v6700 = vld [vmem:[%s6601 + $0x310] sm:$0xff]
    %v6701 = vld [vmem:[%s6601 + $0x318] sm:$0xff]
    %v6702 = vld [vmem:[%s6601 + $0x320] sm:$0xff]
    %v6703 = vld [vmem:[%s6601 + $0x328] sm:$0xff]
    %v6704 = vld [vmem:[%s6601 + $0x330] sm:$0xff]
    %v6705 = vld [vmem:[%s6601 + $0x338] sm:$0xff]
    %v6706 = vld [vmem:[%s6601 + $0x340] sm:$0xff]
    %v6707 = vld [vmem:[%s6601 + $0x348] sm:$0xff]
    %v6708 = vld [vmem:[%s6601 + $0x350] sm:$0xff]
    %v6709 = vld [vmem:[%s6601 + $0x358] sm:$0xff]
    %v6710 = vld [vmem:[%s6601 + $0x360] sm:$0xff]
    %v6711 = vld [vmem:[%s6601 + $0x368] sm:$0xff]
    %v6712 = vld [vmem:[%s6601 + $0x370] sm:$0xff]
    %v6713 = vld [vmem:[%s6601 + $0x378] sm:$0xff]
    %v6714 = vld [vmem:[%s6601 + $0x380] sm:$0xff]
    %v6715 = vld [vmem:[%s6601 + $0x388] sm:$0xff]
    %v6716 = vld [vmem:[%s6601 + $0x390] sm:$0xff]
    %v6717 = vld [vmem:[%s6601 + $0x398] sm:$0xff]
    %v6718 = vld [vmem:[%s6601 + $0x3a0] sm:$0xff]
    %v6719 = vld [vmem:[%s6601 + $0x3a8] sm:$0xff]
    %v6720 = vld [vmem:[%s6601 + $0x3b0] sm:$0xff]
    %v6721 = vld [vmem:[%s6601 + $0x3b8] sm:$0xff]
    %v6722 = vld [vmem:[%s6601 + $0x3c0] sm:$0xff]
    %v6723 = vld [vmem:[%s6601 + $0x3c8] sm:$0xff]
    %v6724 = vld [vmem:[%s6601 + $0x3d0] sm:$0xff]
    %v6725 = vld [vmem:[%s6601 + $0x3d8] sm:$0xff]
    %v6726 = vld [vmem:[%s6601 + $0x3e0] sm:$0xff]
    %v6727 = vld [vmem:[%s6601 + $0x3e8] sm:$0xff]
    %v6728 = vld [vmem:[%s6601 + $0x3f0] sm:$0xff]
    %v6729 = vld [vmem:[%s6601 + $0x3f8] sm:$0xff]
    %6730 = vmatprep.subr.bf16.mxu0 %v6603
    %6731 = vmatpush1.bf16.msra.mxu0 %v6602
    %6732 = vmatprep.subr.bf16.mxu0 %v6607
    %6733 = vmatpush1.bf16.msra.mxu0 %v6606
    %6734 = vmatprep.subr.bf16.mxu0 %v6611
    %6735 = vmatpush1.bf16.msra.mxu0 %v6610
    %6736 = vmatprep.subr.bf16.mxu0 %v6615
    %6737 = vmatpush1.bf16.msra.mxu0 %v6614
    %6738 = vmatprep.subr.bf16.mxu0 %v6619
    %6739 = vmatpush1.bf16.msra.mxu0 %v6618
    %6740 = vmatprep.subr.bf16.mxu0 %v6623
    %6741 = vmatpush1.bf16.msra.mxu0 %v6622
    %6742 = vmatprep.subr.bf16.mxu0 %v6627
    %6743 = vmatpush1.bf16.msra.mxu0 %v6626
    %6744 = vmatprep.subr.bf16.mxu0 %v6631
    %6745 = vmatpush1.bf16.msra.mxu0 %v6630
    %6746 = vmatprep.subr.bf16.mxu0 %v6635
    %6747 = vmatpush1.bf16.msra.mxu0 %v6634
    %6748 = vmatprep.subr.bf16.mxu0 %v6639
    %6749 = vmatpush1.bf16.msra.mxu0 %v6638
    %6750 = vmatprep.subr.bf16.mxu0 %v6643
    %6751 = vmatpush1.bf16.msra.mxu0 %v6642
    %6752 = vmatprep.subr.bf16.mxu0 %v6647
    %6753 = vmatpush1.bf16.msra.mxu0 %v6646
    %6754 = vmatprep.subr.bf16.mxu0 %v6651
    %6755 = vmatpush1.bf16.msra.mxu0 %v6650
    %6756 = vmatprep.subr.bf16.mxu0 %v6655
    %6757 = vmatpush1.bf16.msra.mxu0 %v6654
    %6758 = vmatprep.subr.bf16.mxu0 %v6659
    %6759 = vmatpush1.bf16.msra.mxu0 %v6658
    %6760 = vmatprep.subr.bf16.mxu0 %v6663
    %6761 = vmatpush1.bf16.msra.mxu0 %v6662
    %6762 = vmatprep.mubr.bf16.mxu0 %v6520
    %6763 = vmatmul.mubr.bf16.gmra.mrb[0].mxu0 %v6508
    %v6764 = vpop.f32.mrb[0].mxu0
    %v6765 = vadd.f32 0.0, %v6764
    %v6766 = vpop.f32.mrb[0].mxu0
    %v6767 = vadd.f32 0.0, %v6766
    %v6768 = vpop.f32.mrb[0].mxu0
    %v6769 = vadd.f32 0.0, %v6768
    %v6770 = vpop.f32.mrb[0].mxu0
    %v6771 = vadd.f32 0.0, %v6770
    %6772 = vmatprep.mubr.bf16.mxu0 %v6568
    %6773 = vmatmul.mubr.bf16.gmra.mrb[0].mxu0 %v6556
    %v6774 = vpop.f32.mrb[0].mxu0
    %v6775 = vadd.f32 0.0, %v6774
    %v6776 = vpop.f32.mrb[0].mxu0
    %v6777 = vadd.f32 0.0, %v6776
    %v6778 = vpop.f32.mrb[0].mxu0
    %v6779 = vadd.f32 0.0, %v6778
    %v6780 = vpop.f32.mrb[0].mxu0
    %v6781 = vadd.f32 0.0, %v6780
    %6782 = vdwg.mxu0
    %6783 = vmatprep.subr.bf16.mxu0 %v6667
    %6784 = vmatpush1.bf16.msra.mxu0 %v6666
    %6785 = vmatprep.subr.bf16.mxu0 %v6671
    %6786 = vmatpush1.bf16.msra.mxu0 %v6670
    %6787 = vmatprep.subr.bf16.mxu0 %v6675
    %6788 = vmatpush1.bf16.msra.mxu0 %v6674
    %6789 = vmatprep.subr.bf16.mxu0 %v6679
    %6790 = vmatpush1.bf16.msra.mxu0 %v6678
    %6791 = vmatprep.subr.bf16.mxu0 %v6683
    %6792 = vmatpush1.bf16.msra.mxu0 %v6682
    %6793 = vmatprep.subr.bf16.mxu0 %v6687
    %6794 = vmatpush1.bf16.msra.mxu0 %v6686
    %6795 = vmatprep.subr.bf16.mxu0 %v6691
    %6796 = vmatpush1.bf16.msra.mxu0 %v6690
    %6797 = vmatprep.subr.bf16.mxu0 %v6695
    %6798 = vmatpush1.bf16.msra.mxu0 %v6694
    %6799 = vmatprep.subr.bf16.mxu0 %v6699
    %6800 = vmatpush1.bf16.msra.mxu0 %v6698
    %6801 = vmatprep.subr.bf16.mxu0 %v6703
    %6802 = vmatpush1.bf16.msra.mxu0 %v6702
    %6803 = vmatprep.subr.bf16.mxu0 %v6707
    %6804 = vmatpush1.bf16.msra.mxu0 %v6706
    %6805 = vmatprep.subr.bf16.mxu0 %v6711
    %6806 = vmatpush1.bf16.msra.mxu0 %v6710
    %6807 = vmatprep.subr.bf16.mxu0 %v6715
    %6808 = vmatpush1.bf16.msra.mxu0 %v6714
    %6809 = vmatprep.subr.bf16.mxu0 %v6719
    %6810 = vmatpush1.bf16.msra.mxu0 %v6718
    %6811 = vmatprep.subr.bf16.mxu0 %v6723
    %6812 = vmatpush1.bf16.msra.mxu0 %v6722
    %6813 = vmatprep.subr.bf16.mxu0 %v6727
    %6814 = vmatpush1.bf16.msra.mxu0 %v6726
    %6815 = vmatprep.mubr.bf16.mxu0 %v6544
    %6816 = vmatmul.mubr.bf16.gmra.mrb[0].mxu0 %v6532
    %v6817 = vpop.f32.mrb[0].mxu0
    %v6818 = vadd.f32 %v6765, %v6817
    %v6819 = vpop.f32.mrb[0].mxu0
    %v6820 = vadd.f32 %v6767, %v6819
    %v6821 = vpop.f32.mrb[0].mxu0
    %v6822 = vadd.f32 %v6769, %v6821
    %v6823 = vpop.f32.mrb[0].mxu0
    %v6824 = vadd.f32 %v6771, %v6823
    %6825 = vmatprep.mubr.bf16.mxu0 %v6592
    %6826 = vmatmul.mubr.bf16.gmra.mrb[0].mxu0 %v6580
    %v6827 = vpop.f32.mrb[0].mxu0
    %v6828 = vadd.f32 %v6775, %v6827
    %v6829 = vpop.f32.mrb[0].mxu0
    %v6830 = vadd.f32 %v6777, %v6829
    %v6831 = vpop.f32.mrb[0].mxu0
    %v6832 = vadd.f32 %v6779, %v6831
    %v6833 = vpop.f32.mrb[0].mxu0
    %v6834 = vadd.f32 %v6781, %v6833
    %6835 = vdwg.mxu0
    %6836 = vmatprep.subr.bf16.mxu0 %v6605
    %6837 = vmatpush1.bf16.msra.mxu0 %v6604
    %6838 = vmatprep.subr.bf16.mxu0 %v6609
    %6839 = vmatpush1.bf16.msra.mxu0 %v6608
    %6840 = vmatprep.subr.bf16.mxu0 %v6613
    %6841 = vmatpush1.bf16.msra.mxu0 %v6612
    %6842 = vmatprep.subr.bf16.mxu0 %v6617
    %6843 = vmatpush1.bf16.msra.mxu0 %v6616
    %6844 = vmatprep.subr.bf16.mxu0 %v6621
    %6845 = vmatpush1.bf16.msra.mxu0 %v6620
    %6846 = vmatprep.subr.bf16.mxu0 %v6625
    %6847 = vmatpush1.bf16.msra.mxu0 %v6624
    %6848 = vmatprep.subr.bf16.mxu0 %v6629
    %6849 = vmatpush1.bf16.msra.mxu0 %v6628
    %6850 = vmatprep.subr.bf16.mxu0 %v6633
    %6851 = vmatpush1.bf16.msra.mxu0 %v6632
    %6852 = vmatprep.subr.bf16.mxu0 %v6637
    %6853 = vmatpush1.bf16.msra.mxu0 %v6636
    %6854 = vmatprep.subr.bf16.mxu0 %v6641
    %6855 = vmatpush1.bf16.msra.mxu0 %v6640
    %6856 = vmatprep.subr.bf16.mxu0 %v6645
    %6857 = vmatpush1.bf16.msra.mxu0 %v6644
    %6858 = vmatprep.subr.bf16.mxu0 %v6649
    %6859 = vmatpush1.bf16.msra.mxu0 %v6648
    %6860 = vmatprep.subr.bf16.mxu0 %v6653
    %6861 = vmatpush1.bf16.msra.mxu0 %v6652
    %6862 = vmatprep.subr.bf16.mxu0 %v6657
    %6863 = vmatpush1.bf16.msra.mxu0 %v6656
    %6864 = vmatprep.subr.bf16.mxu0 %v6661
    %6865 = vmatpush1.bf16.msra.mxu0 %v6660
    %6866 = vmatprep.subr.bf16.mxu0 %v6665
    %6867 = vmatpush1.bf16.msra.mxu0 %v6664
    %6868 = vmatprep.mubr.bf16.mxu0 %v6520
    %6869 = vmatmul.mubr.bf16.gmra.mrb[0].mxu0 %v6508
    %v6870 = vpop.f32.mrb[0].mxu0
    %v6871 = vadd.f32 0.0, %v6870
    %v6872 = vpop.f32.mrb[0].mxu0
    %v6873 = vadd.f32 0.0, %v6872
    %v6874 = vpop.f32.mrb[0].mxu0
    %v6875 = vadd.f32 0.0, %v6874
    %v6876 = vpop.f32.mrb[0].mxu0
    %v6877 = vadd.f32 0.0, %v6876
    %6878 = vmatprep.mubr.bf16.mxu0 %v6568
    %6879 = vmatmul.mubr.bf16.gmra.mrb[0].mxu0 %v6556
    %v6880 = vpop.f32.mrb[0].mxu0
    %v6881 = vadd.f32 0.0, %v6880
    %v6882 = vpop.f32.mrb[0].mxu0
    %v6883 = vadd.f32 0.0, %v6882
    %v6884 = vpop.f32.mrb[0].mxu0
    %v6885 = vadd.f32 0.0, %v6884
    %v6886 = vpop.f32.mrb[0].mxu0
    %v6887 = vadd.f32 0.0, %v6886
    %6888 = vdwg.mxu0
    %6889 = vmatprep.subr.bf16.mxu0 %v6669
    %6890 = vmatpush1.bf16.msra.mxu0 %v6668
    %6891 = vmatprep.subr.bf16.mxu0 %v6673
    %6892 = vmatpush1.bf16.msra.mxu0 %v6672
    %6893 = vmatprep.subr.bf16.mxu0 %v6677
    %6894 = vmatpush1.bf16.msra.mxu0 %v6676
    %6895 = vmatprep.subr.bf16.mxu0 %v6681
    %6896 = vmatpush1.bf16.msra.mxu0 %v6680
    %6897 = vmatprep.subr.bf16.mxu0 %v6685
    %6898 = vmatpush1.bf16.msra.mxu0 %v6684
    %6899 = vmatprep.subr.bf16.mxu0 %v6689
    %6900 = vmatpush1.bf16.msra.mxu0 %v6688
    %6901 = vmatprep.subr.bf16.mxu0 %v6693
    %6902 = vmatpush1.bf16.msra.mxu0 %v6692
    %6903 = vmatprep.subr.bf16.mxu0 %v6697
    %6904 = vmatpush1.bf16.msra.mxu0 %v6696
    %6905 = vmatprep.subr.bf16.mxu0 %v6701
    %6906 = vmatpush1.bf16.msra.mxu0 %v6700
    %6907 = vmatprep.subr.bf16.mxu0 %v6705
    %6908 = vmatpush1.bf16.msra.mxu0 %v6704
    %6909 = vmatprep.subr.bf16.mxu0 %v6709
    %6910 = vmatpush1.bf16.msra.mxu0 %v6708
    %6911 = vmatprep.subr.bf16.mxu0 %v6713
    %6912 = vmatpush1.bf16.msra.mxu0 %v6712
    %6913 = vmatprep.subr.bf16.mxu0 %v6717
    %6914 = vmatpush1.bf16.msra.mxu0 %v6716
    %6915 = vmatprep.subr.bf16.mxu0 %v6721
    %6916 = vmatpush1.bf16.msra.mxu0 %v6720
    %6917 = vmatprep.subr.bf16.mxu0 %v6725
    %6918 = vmatpush1.bf16.msra.mxu0 %v6724
    %6919 = vmatprep.subr.bf16.mxu0 %v6729
    %6920 = vmatpush1.bf16.msra.mxu0 %v6728
    %6921 = vmatprep.mubr.bf16.mxu0 %v6544
    %6922 = vmatmul.mubr.bf16.gmra.mrb[0].mxu0 %v6532
    %v6923 = vpop.f32.mrb[0].mxu0
    %v6924 = vadd.f32 %v6871, %v6923
    %v6925 = vpop.f32.mrb[0].mxu0
    %v6926 = vadd.f32 %v6873, %v6925
    %v6927 = vpop.f32.mrb[0].mxu0
    %v6928 = vadd.f32 %v6875, %v6927
    %v6929 = vpop.f32.mrb[0].mxu0
    %v6930 = vadd.f32 %v6877, %v6929
    %6931 = vmatprep.mubr.bf16.mxu0 %v6592
    %6932 = vmatmul.mubr.bf16.gmra.mrb[0].mxu0 %v6580
    %v6933 = vpop.f32.mrb[0].mxu0
    %v6934 = vadd.f32 %v6881, %v6933
    %v6935 = vpop.f32.mrb[0].mxu0
    %v6936 = vadd.f32 %v6883, %v6935
    %v6937 = vpop.f32.mrb[0].mxu0
    %v6938 = vadd.f32 %v6885, %v6937
    %v6939 = vpop.f32.mrb[0].mxu0
    %v6940 = vadd.f32 %v6887, %v6939
    %6941 = vdwg.mxu0
    %6942 = vmatprep.subr.bf16.mxu0 %v6362
    %6943 = vmatpush1.bf16.msra.mxu0 %v6361
    %6944 = vmatprep.subr.bf16.mxu0 %v6366
    %6945 = vmatpush1.bf16.msra.mxu0 %v6365
    %6946 = vmatprep.subr.bf16.mxu0 %v6370
    %6947 = vmatpush1.bf16.msra.mxu0 %v6369
    %6948 = vmatprep.subr.bf16.mxu0 %v6374
    %6949 = vmatpush1.bf16.msra.mxu0 %v6373
    %6950 = vmatprep.subr.bf16.mxu0 %v6378
    %6951 = vmatpush1.bf16.msra.mxu0 %v6377
    %6952 = vmatprep.subr.bf16.mxu0 %v6382
    %6953 = vmatpush1.bf16.msra.mxu0 %v6381
    %6954 = vmatprep.subr.bf16.mxu0 %v6386
    %6955 = vmatpush1.bf16.msra.mxu0 %v6385
    %6956 = vmatprep.subr.bf16.mxu0 %v6390
    %6957 = vmatpush1.bf16.msra.mxu0 %v6389
    %6958 = vmatprep.subr.bf16.mxu0 %v6394
    %6959 = vmatpush1.bf16.msra.mxu0 %v6393
    %6960 = vmatprep.subr.bf16.mxu0 %v6398
    %6961 = vmatpush1.bf16.msra.mxu0 %v6397
    %6962 = vmatprep.subr.bf16.mxu0 %v6402
    %6963 = vmatpush1.bf16.msra.mxu0 %v6401
    %6964 = vmatprep.subr.bf16.mxu0 %v6406
    %6965 = vmatpush1.bf16.msra.mxu0 %v6405
    %6966 = vmatprep.subr.bf16.mxu0 %v6410
    %6967 = vmatpush1.bf16.msra.mxu0 %v6409
    %6968 = vmatprep.subr.bf16.mxu0 %v6414
    %6969 = vmatpush1.bf16.msra.mxu0 %v6413
    %6970 = vmatprep.subr.bf16.mxu0 %v6418
    %6971 = vmatpush1.bf16.msra.mxu0 %v6417
    %6972 = vmatprep.subr.bf16.mxu0 %v6422
    %6973 = vmatpush1.bf16.msra.mxu0 %v6421
    %6974 = vmatprep.mubr.bf16.mxu0 %v6334
    %6975 = vmatmul.mubr.bf16.gmra.mrb[0].mxu0 %v6331
    %v6976 = vpop.f32.mrb[0].mxu0
    %v6977 = vadd.f32 %v6818, %v6976
    %v6978 = vpop.f32.mrb[0].mxu0
    %v6979 = vadd.f32 %v6820, %v6978
    %v6980 = vpop.f32.mrb[0].mxu0
    %v6981 = vadd.f32 %v6822, %v6980
    %v6982 = vpop.f32.mrb[0].mxu0
    %v6983 = vadd.f32 %v6824, %v6982
    %6984 = vmatprep.mubr.bf16.mxu0 %v6346
    %6985 = vmatmul.mubr.bf16.gmra.mrb[0].mxu0 %v6343
    %v6986 = vpop.f32.mrb[0].mxu0
    %v6987 = vadd.f32 %v6828, %v6986
    %v6988 = vpop.f32.mrb[0].mxu0
    %v6989 = vadd.f32 %v6830, %v6988
    %v6990 = vpop.f32.mrb[0].mxu0
    %v6991 = vadd.f32 %v6832, %v6990
    %v6992 = vpop.f32.mrb[0].mxu0
    %v6993 = vadd.f32 %v6834, %v6992
    %6994 = vdwg.mxu0
    %6995 = vmatprep.subr.bf16.mxu0 %v6426
    %6996 = vmatpush1.bf16.msra.mxu0 %v6425
    %6997 = vmatprep.subr.bf16.mxu0 %v6430
    %6998 = vmatpush1.bf16.msra.mxu0 %v6429
    %6999 = vmatprep.subr.bf16.mxu0 %v6434
    %7000 = vmatpush1.bf16.msra.mxu0 %v6433
    %7001 = vmatprep.subr.bf16.mxu0 %v6438
    %7002 = vmatpush1.bf16.msra.mxu0 %v6437
    %7003 = vmatprep.subr.bf16.mxu0 %v6442
    %7004 = vmatpush1.bf16.msra.mxu0 %v6441
    %7005 = vmatprep.subr.bf16.mxu0 %v6446
    %7006 = vmatpush1.bf16.msra.mxu0 %v6445
    %7007 = vmatprep.subr.bf16.mxu0 %v6450
    %7008 = vmatpush1.bf16.msra.mxu0 %v6449
    %7009 = vmatprep.subr.bf16.mxu0 %v6454
    %7010 = vmatpush1.bf16.msra.mxu0 %v6453
    %7011 = vmatprep.subr.bf16.mxu0 %v6458
    %7012 = vmatpush1.bf16.msra.mxu0 %v6457
    %7013 = vmatprep.subr.bf16.mxu0 %v6462
    %7014 = vmatpush1.bf16.msra.mxu0 %v6461
    %7015 = vmatprep.subr.bf16.mxu0 %v6466
    %7016 = vmatpush1.bf16.msra.mxu0 %v6465
    %7017 = vmatprep.subr.bf16.mxu0 %v6470
    %7018 = vmatpush1.bf16.msra.mxu0 %v6469
    %7019 = vmatprep.subr.bf16.mxu0 %v6474
    %7020 = vmatpush1.bf16.msra.mxu0 %v6473
    %7021 = vmatprep.subr.bf16.mxu0 %v6478
    %7022 = vmatpush1.bf16.msra.mxu0 %v6477
    %7023 = vmatprep.subr.bf16.mxu0 %v6482
    %7024 = vmatpush1.bf16.msra.mxu0 %v6481
    %7025 = vmatprep.subr.bf16.mxu0 %v6486
    %7026 = vmatpush1.bf16.msra.mxu0 %v6485
    %7027 = vmatprep.mubr.bf16.mxu0 %v6340
    %7028 = vmatmul.mubr.bf16.gmra.mrb[0].mxu0 %v6337
    %v7029 = vpop.f32.mrb[0].mxu0
    %v7030 = vadd.f32 %v6977, %v7029
    %v7031 = vpop.f32.mrb[0].mxu0
    %v7032 = vadd.f32 %v6979, %v7031
    %v7033 = vpop.f32.mrb[0].mxu0
    %v7034 = vadd.f32 %v6981, %v7033
    %v7035 = vpop.f32.mrb[0].mxu0
    %v7036 = vadd.f32 %v6983, %v7035
    %7037 = vmatprep.mubr.bf16.mxu0 %v6352
    %7038 = vmatmul.mubr.bf16.gmra.mrb[0].mxu0 %v6349
    %v7039 = vpop.f32.mrb[0].mxu0
    %v7040 = vadd.f32 %v6987, %v7039
    %v7041 = vpop.f32.mrb[0].mxu0
    %v7042 = vadd.f32 %v6989, %v7041
    %v7043 = vpop.f32.mrb[0].mxu0
    %v7044 = vadd.f32 %v6991, %v7043
    %v7045 = vpop.f32.mrb[0].mxu0
    %v7046 = vadd.f32 %v6993, %v7045
    %7047 = vdwg.mxu0
    %7048 = vmatprep.subr.bf16.mxu0 %v6364
    %7049 = vmatpush1.bf16.msra.mxu0 %v6363
    %7050 = vmatprep.subr.bf16.mxu0 %v6368
    %7051 = vmatpush1.bf16.msra.mxu0 %v6367
    %7052 = vmatprep.subr.bf16.mxu0 %v6372
    %7053 = vmatpush1.bf16.msra.mxu0 %v6371
    %7054 = vmatprep.subr.bf16.mxu0 %v6376
    %7055 = vmatpush1.bf16.msra.mxu0 %v6375
    %7056 = vmatprep.subr.bf16.mxu0 %v6380
    %7057 = vmatpush1.bf16.msra.mxu0 %v6379
    %7058 = vmatprep.subr.bf16.mxu0 %v6384
    %7059 = vmatpush1.bf16.msra.mxu0 %v6383
    %7060 = vmatprep.subr.bf16.mxu0 %v6388
    %7061 = vmatpush1.bf16.msra.mxu0 %v6387
    %7062 = vmatprep.subr.bf16.mxu0 %v6392
    %7063 = vmatpush1.bf16.msra.mxu0 %v6391
    %7064 = vmatprep.subr.bf16.mxu0 %v6396
    %7065 = vmatpush1.bf16.msra.mxu0 %v6395
    %7066 = vmatprep.subr.bf16.mxu0 %v6400
    %7067 = vmatpush1.bf16.msra.mxu0 %v6399
    %7068 = vmatprep.subr.bf16.mxu0 %v6404
    %7069 = vmatpush1.bf16.msra.mxu0 %v6403
    %7070 = vmatprep.subr.bf16.mxu0 %v6408
    %7071 = vmatpush1.bf16.msra.mxu0 %v6407
    %7072 = vmatprep.subr.bf16.mxu0 %v6412
    %7073 = vmatpush1.bf16.msra.mxu0 %v6411
    %7074 = vmatprep.subr.bf16.mxu0 %v6416
    %7075 = vmatpush1.bf16.msra.mxu0 %v6415
    %7076 = vmatprep.subr.bf16.mxu0 %v6420
    %7077 = vmatpush1.bf16.msra.mxu0 %v6419
    %7078 = vmatprep.subr.bf16.mxu0 %v6424
    %7079 = vmatpush1.bf16.msra.mxu0 %v6423
    %7080 = vmatprep.mubr.bf16.mxu0 %v6334
    %7081 = vmatmul.mubr.bf16.gmra.mrb[0].mxu0 %v6331
    %v7082 = vpop.f32.mrb[0].mxu0
    %v7083 = vadd.f32 %v6924, %v7082
    %v7084 = vpop.f32.mrb[0].mxu0
    %v7085 = vadd.f32 %v6926, %v7084
    %v7086 = vpop.f32.mrb[0].mxu0
    %v7087 = vadd.f32 %v6928, %v7086
    %v7088 = vpop.f32.mrb[0].mxu0
    %v7089 = vadd.f32 %v6930, %v7088
    %7090 = vmatprep.mubr.bf16.mxu0 %v6346
    %7091 = vmatmul.mubr.bf16.gmra.mrb[0].mxu0 %v6343
    %v7092 = vpop.f32.mrb[0].mxu0
    %v7093 = vadd.f32 %v6934, %v7092
    %v7094 = vpop.f32.mrb[0].mxu0
    %v7095 = vadd.f32 %v6936, %v7094
    %v7096 = vpop.f32.mrb[0].mxu0
    %v7097 = vadd.f32 %v6938, %v7096
    %v7098 = vpop.f32.mrb[0].mxu0
    %v7099 = vadd.f32 %v6940, %v7098
    %7100 = vdwg.mxu0
    %7101 = vmatprep.subr.bf16.mxu0 %v6428
    %7102 = vmatpush1.bf16.msra.mxu0 %v6427
    %7103 = vmatprep.subr.bf16.mxu0 %v6432
    %7104 = vmatpush1.bf16.msra.mxu0 %v6431
    %7105 = vmatprep.subr.bf16.mxu0 %v6436
    %7106 = vmatpush1.bf16.msra.mxu0 %v6435
    %7107 = vmatprep.subr.bf16.mxu0 %v6440
    %7108 = vmatpush1.bf16.msra.mxu0 %v6439
    %7109 = vmatprep.subr.bf16.mxu0 %v6444
    %7110 = vmatpush1.bf16.msra.mxu0 %v6443
    %7111 = vmatprep.subr.bf16.mxu0 %v6448
    %7112 = vmatpush1.bf16.msra.mxu0 %v6447
    %7113 = vmatprep.subr.bf16.mxu0 %v6452
    %7114 = vmatpush1.bf16.msra.mxu0 %v6451
    %7115 = vmatprep.subr.bf16.mxu0 %v6456
    %7116 = vmatpush1.bf16.msra.mxu0 %v6455
    %7117 = vmatprep.subr.bf16.mxu0 %v6460
    %7118 = vmatpush1.bf16.msra.mxu0 %v6459
    %7119 = vmatprep.subr.bf16.mxu0 %v6464
    %7120 = vmatpush1.bf16.msra.mxu0 %v6463
    %7121 = vmatprep.subr.bf16.mxu0 %v6468
    %7122 = vmatpush1.bf16.msra.mxu0 %v6467
    %7123 = vmatprep.subr.bf16.mxu0 %v6472
    %7124 = vmatpush1.bf16.msra.mxu0 %v6471
    %7125 = vmatprep.subr.bf16.mxu0 %v6476
    %7126 = vmatpush1.bf16.msra.mxu0 %v6475
    %7127 = vmatprep.subr.bf16.mxu0 %v6480
    %7128 = vmatpush1.bf16.msra.mxu0 %v6479
    %7129 = vmatprep.subr.bf16.mxu0 %v6484
    %7130 = vmatpush1.bf16.msra.mxu0 %v6483
    %7131 = vmatprep.subr.bf16.mxu0 %v6488
    %7132 = vmatpush1.bf16.msra.mxu0 %v6487
    %7133 = vmatprep.mubr.bf16.mxu0 %v6340
    %7134 = vmatmul.mubr.bf16.gmra.mrb[0].mxu0 %v6337
    %v7135 = vpop.f32.mrb[0].mxu0
    %v7136 = vadd.f32 %v7083, %v7135
    %v7137 = vpop.f32.mrb[0].mxu0
    %v7138 = vadd.f32 %v7085, %v7137
    %v7139 = vpop.f32.mrb[0].mxu0
    %v7140 = vadd.f32 %v7087, %v7139
    %v7141 = vpop.f32.mrb[0].mxu0
    %v7142 = vadd.f32 %v7089, %v7141
    %7143 = vmatprep.mubr.bf16.mxu0 %v6352
    %7144 = vmatmul.mubr.bf16.gmra.mrb[0].mxu0 %v6349
    %v7145 = vpop.f32.mrb[0].mxu0
    %v7146 = vadd.f32 %v7093, %v7145
    %v7147 = vpop.f32.mrb[0].mxu0
    %v7148 = vadd.f32 %v7095, %v7147
    %v7149 = vpop.f32.mrb[0].mxu0
    %v7150 = vadd.f32 %v7097, %v7149
    %v7151 = vpop.f32.mrb[0].mxu0
    %v7152 = vadd.f32 %v7099, %v7151
    %7153 = vdwg.mxu0
    %s7154 = scalar_lea.vmem [#allocation4], 12288
    %v7155 = vld [vmem:[%s7154] sm:$0xff]
    %v7156 = vld [vmem:[%s7154 + $0x8] sm:$0xff]
    %v7157 = vld [vmem:[%s7154 + $0x10] sm:$0xff]
    %v7158 = vld [vmem:[%s7154 + $0x18] sm:$0xff]
    %v7159 = vld [vmem:[%s7154 + $0x20] sm:$0xff]
    %v7160 = vld [vmem:[%s7154 + $0x28] sm:$0xff]
    %v7161 = vld [vmem:[%s7154 + $0x30] sm:$0xff]
    %v7162 = vld [vmem:[%s7154 + $0x38] sm:$0xff]
    %v7163 = vld [vmem:[%s7154 + $0x40] sm:$0xff]
    %v7164 = vld [vmem:[%s7154 + $0x48] sm:$0xff]
    %v7165 = vld [vmem:[%s7154 + $0x50] sm:$0xff]
    %v7166 = vld [vmem:[%s7154 + $0x58] sm:$0xff]
    %v7167 = vld [vmem:[%s7154 + $0x60] sm:$0xff]
    %v7168 = vld [vmem:[%s7154 + $0x68] sm:$0xff]
    %v7169 = vld [vmem:[%s7154 + $0x70] sm:$0xff]
    %v7170 = vld [vmem:[%s7154 + $0x78] sm:$0xff]
    %v7171 = vld [vmem:[%s7154 + $0x80] sm:$0xff]
    %v7172 = vld [vmem:[%s7154 + $0x88] sm:$0xff]
    %v7173 = vld [vmem:[%s7154 + $0x90] sm:$0xff]
    %v7174 = vld [vmem:[%s7154 + $0x98] sm:$0xff]
    %v7175 = vld [vmem:[%s7154 + $0xa0] sm:$0xff]
    %v7176 = vld [vmem:[%s7154 + $0xa8] sm:$0xff]
    %v7177 = vld [vmem:[%s7154 + $0xb0] sm:$0xff]
    %v7178 = vld [vmem:[%s7154 + $0xb8] sm:$0xff]
    %v7179 = vld [vmem:[%s7154 + $0xc0] sm:$0xff]
    %v7180 = vld [vmem:[%s7154 + $0xc8] sm:$0xff]
    %v7181 = vld [vmem:[%s7154 + $0xd0] sm:$0xff]
    %v7182 = vld [vmem:[%s7154 + $0xd8] sm:$0xff]
    %v7183 = vld [vmem:[%s7154 + $0xe0] sm:$0xff]
    %v7184 = vld [vmem:[%s7154 + $0xe8] sm:$0xff]
    %v7185 = vld [vmem:[%s7154 + $0xf0] sm:$0xff]
    %v7186 = vld [vmem:[%s7154 + $0xf8] sm:$0xff]
    %v7187 = vld [vmem:[%s7154 + $0x100] sm:$0xff]
    %v7188 = vld [vmem:[%s7154 + $0x108] sm:$0xff]
    %v7189 = vld [vmem:[%s7154 + $0x110] sm:$0xff]
    %v7190 = vld [vmem:[%s7154 + $0x118] sm:$0xff]
    %v7191 = vld [vmem:[%s7154 + $0x120] sm:$0xff]
    %v7192 = vld [vmem:[%s7154 + $0x128] sm:$0xff]
    %v7193 = vld [vmem:[%s7154 + $0x130] sm:$0xff]
    %v7194 = vld [vmem:[%s7154 + $0x138] sm:$0xff]
    %v7195 = vld [vmem:[%s7154 + $0x140] sm:$0xff]
    %v7196 = vld [vmem:[%s7154 + $0x148] sm:$0xff]
    %v7197 = vld [vmem:[%s7154 + $0x150] sm:$0xff]
    %v7198 = vld [vmem:[%s7154 + $0x158] sm:$0xff]
    %v7199 = vld [vmem:[%s7154 + $0x160] sm:$0xff]
    %v7200 = vld [vmem:[%s7154 + $0x168] sm:$0xff]
    %v7201 = vld [vmem:[%s7154 + $0x170] sm:$0xff]
    %v7202 = vld [vmem:[%s7154 + $0x178] sm:$0xff]
    %v7203 = vld [vmem:[%s7154 + $0x180] sm:$0xff]
    %v7204 = vld [vmem:[%s7154 + $0x188] sm:$0xff]
    %v7205 = vld [vmem:[%s7154 + $0x190] sm:$0xff]
    %v7206 = vld [vmem:[%s7154 + $0x198] sm:$0xff]
    %v7207 = vld [vmem:[%s7154 + $0x1a0] sm:$0xff]
    %v7208 = vld [vmem:[%s7154 + $0x1a8] sm:$0xff]
    %v7209 = vld [vmem:[%s7154 + $0x1b0] sm:$0xff]
    %v7210 = vld [vmem:[%s7154 + $0x1b8] sm:$0xff]
    %v7211 = vld [vmem:[%s7154 + $0x1c0] sm:$0xff]
    %v7212 = vld [vmem:[%s7154 + $0x1c8] sm:$0xff]
    %v7213 = vld [vmem:[%s7154 + $0x1d0] sm:$0xff]
    %v7214 = vld [vmem:[%s7154 + $0x1d8] sm:$0xff]
    %v7215 = vld [vmem:[%s7154 + $0x1e0] sm:$0xff]
    %v7216 = vld [vmem:[%s7154 + $0x1e8] sm:$0xff]
    %v7217 = vld [vmem:[%s7154 + $0x1f0] sm:$0xff]
    %v7218 = vld [vmem:[%s7154 + $0x1f8] sm:$0xff]
    %v7219 = vld [vmem:[%s7154 + $0x200] sm:$0xff]
    %v7220 = vld [vmem:[%s7154 + $0x208] sm:$0xff]
    %v7221 = vld [vmem:[%s7154 + $0x210] sm:$0xff]
    %v7222 = vld [vmem:[%s7154 + $0x218] sm:$0xff]
    %v7223 = vld [vmem:[%s7154 + $0x220] sm:$0xff]
    %v7224 = vld [vmem:[%s7154 + $0x228] sm:$0xff]
    %v7225 = vld [vmem:[%s7154 + $0x230] sm:$0xff]
    %v7226 = vld [vmem:[%s7154 + $0x238] sm:$0xff]
    %v7227 = vld [vmem:[%s7154 + $0x240] sm:$0xff]
    %v7228 = vld [vmem:[%s7154 + $0x248] sm:$0xff]
    %v7229 = vld [vmem:[%s7154 + $0x250] sm:$0xff]
    %v7230 = vld [vmem:[%s7154 + $0x258] sm:$0xff]
    %v7231 = vld [vmem:[%s7154 + $0x260] sm:$0xff]
    %v7232 = vld [vmem:[%s7154 + $0x268] sm:$0xff]
    %v7233 = vld [vmem:[%s7154 + $0x270] sm:$0xff]
    %v7234 = vld [vmem:[%s7154 + $0x278] sm:$0xff]
    %v7235 = vld [vmem:[%s7154 + $0x280] sm:$0xff]
    %v7236 = vld [vmem:[%s7154 + $0x288] sm:$0xff]
    %v7237 = vld [vmem:[%s7154 + $0x290] sm:$0xff]
    %v7238 = vld [vmem:[%s7154 + $0x298] sm:$0xff]
    %v7239 = vld [vmem:[%s7154 + $0x2a0] sm:$0xff]
    %v7240 = vld [vmem:[%s7154 + $0x2a8] sm:$0xff]
    %v7241 = vld [vmem:[%s7154 + $0x2b0] sm:$0xff]
    %v7242 = vld [vmem:[%s7154 + $0x2b8] sm:$0xff]
    %v7243 = vld [vmem:[%s7154 + $0x2c0] sm:$0xff]
    %v7244 = vld [vmem:[%s7154 + $0x2c8] sm:$0xff]
    %v7245 = vld [vmem:[%s7154 + $0x2d0] sm:$0xff]
    %v7246 = vld [vmem:[%s7154 + $0x2d8] sm:$0xff]
    %v7247 = vld [vmem:[%s7154 + $0x2e0] sm:$0xff]
    %v7248 = vld [vmem:[%s7154 + $0x2e8] sm:$0xff]
    %v7249 = vld [vmem:[%s7154 + $0x2f0] sm:$0xff]
    %v7250 = vld [vmem:[%s7154 + $0x2f8] sm:$0xff]
    %v7251 = vld [vmem:[%s7154 + $0x300] sm:$0xff]
    %v7252 = vld [vmem:[%s7154 + $0x308] sm:$0xff]
    %v7253 = vld [vmem:[%s7154 + $0x310] sm:$0xff]
    %v7254 = vld [vmem:[%s7154 + $0x318] sm:$0xff]
    %v7255 = vld [vmem:[%s7154 + $0x320] sm:$0xff]
    %v7256 = vld [vmem:[%s7154 + $0x328] sm:$0xff]
    %v7257 = vld [vmem:[%s7154 + $0x330] sm:$0xff]
    %v7258 = vld [vmem:[%s7154 + $0x338] sm:$0xff]
    %v7259 = vld [vmem:[%s7154 + $0x340] sm:$0xff]
    %v7260 = vld [vmem:[%s7154 + $0x348] sm:$0xff]
    %v7261 = vld [vmem:[%s7154 + $0x350] sm:$0xff]
    %v7262 = vld [vmem:[%s7154 + $0x358] sm:$0xff]
    %v7263 = vld [vmem:[%s7154 + $0x360] sm:$0xff]
    %v7264 = vld [vmem:[%s7154 + $0x368] sm:$0xff]
    %v7265 = vld [vmem:[%s7154 + $0x370] sm:$0xff]
    %v7266 = vld [vmem:[%s7154 + $0x378] sm:$0xff]
    %v7267 = vld [vmem:[%s7154 + $0x380] sm:$0xff]
    %v7268 = vld [vmem:[%s7154 + $0x388] sm:$0xff]
    %v7269 = vld [vmem:[%s7154 + $0x390] sm:$0xff]
    %v7270 = vld [vmem:[%s7154 + $0x398] sm:$0xff]
    %v7271 = vld [vmem:[%s7154 + $0x3a0] sm:$0xff]
    %v7272 = vld [vmem:[%s7154 + $0x3a8] sm:$0xff]
    %v7273 = vld [vmem:[%s7154 + $0x3b0] sm:$0xff]
    %v7274 = vld [vmem:[%s7154 + $0x3b8] sm:$0xff]
    %v7275 = vld [vmem:[%s7154 + $0x3c0] sm:$0xff]
    %v7276 = vld [vmem:[%s7154 + $0x3c8] sm:$0xff]
    %v7277 = vld [vmem:[%s7154 + $0x3d0] sm:$0xff]
    %v7278 = vld [vmem:[%s7154 + $0x3d8] sm:$0xff]
    %v7279 = vld [vmem:[%s7154 + $0x3e0] sm:$0xff]
    %v7280 = vld [vmem:[%s7154 + $0x3e8] sm:$0xff]
    %v7281 = vld [vmem:[%s7154 + $0x3f0] sm:$0xff]
    %v7282 = vld [vmem:[%s7154 + $0x3f8] sm:$0xff]
    %7283 = vmatprep.subr.bf16.mxu0 %v7156
    %7284 = vmatpush1.bf16.msra.mxu0 %v7155
    %7285 = vmatprep.subr.bf16.mxu0 %v7160
    %7286 = vmatpush1.bf16.msra.mxu0 %v7159
    %7287 = vmatprep.subr.bf16.mxu0 %v7164
    %7288 = vmatpush1.bf16.msra.mxu0 %v7163
    %7289 = vmatprep.subr.bf16.mxu0 %v7168
    %7290 = vmatpush1.bf16.msra.mxu0 %v7167
    %7291 = vmatprep.subr.bf16.mxu0 %v7172
    %7292 = vmatpush1.bf16.msra.mxu0 %v7171
    %7293 = vmatprep.subr.bf16.mxu0 %v7176
    %7294 = vmatpush1.bf16.msra.mxu0 %v7175
    %7295 = vmatprep.subr.bf16.mxu0 %v7180
    %7296 = vmatpush1.bf16.msra.mxu0 %v7179
    %7297 = vmatprep.subr.bf16.mxu0 %v7184
    %7298 = vmatpush1.bf16.msra.mxu0 %v7183
    %7299 = vmatprep.subr.bf16.mxu0 %v7188
    %7300 = vmatpush1.bf16.msra.mxu0 %v7187
    %7301 = vmatprep.subr.bf16.mxu0 %v7192
    %7302 = vmatpush1.bf16.msra.mxu0 %v7191
    %7303 = vmatprep.subr.bf16.mxu0 %v7196
    %7304 = vmatpush1.bf16.msra.mxu0 %v7195
    %7305 = vmatprep.subr.bf16.mxu0 %v7200
    %7306 = vmatpush1.bf16.msra.mxu0 %v7199
    %7307 = vmatprep.subr.bf16.mxu0 %v7204
    %7308 = vmatpush1.bf16.msra.mxu0 %v7203
    %7309 = vmatprep.subr.bf16.mxu0 %v7208
    %7310 = vmatpush1.bf16.msra.mxu0 %v7207
    %7311 = vmatprep.subr.bf16.mxu0 %v7212
    %7312 = vmatpush1.bf16.msra.mxu0 %v7211
    %7313 = vmatprep.subr.bf16.mxu0 %v7216
    %7314 = vmatpush1.bf16.msra.mxu0 %v7215
    %7315 = vmatprep.mubr.bf16.mxu0 %v6490
    %7316 = vmatmul.mubr.bf16.gmra.mrb[0].mxu0 %v6489
    %v7317 = vpop.f32.mrb[0].mxu0
    %v7318 = vadd.f32 0.0, %v7317
    %v7319 = vpop.f32.mrb[0].mxu0
    %v7320 = vadd.f32 0.0, %v7319
    %v7321 = vpop.f32.mrb[0].mxu0
    %v7322 = vadd.f32 0.0, %v7321
    %v7323 = vpop.f32.mrb[0].mxu0
    %v7324 = vadd.f32 0.0, %v7323
    %7325 = vmatprep.mubr.bf16.mxu0 %v6494
    %7326 = vmatmul.mubr.bf16.gmra.mrb[0].mxu0 %v6493
    %v7327 = vpop.f32.mrb[0].mxu0
    %v7328 = vadd.f32 0.0, %v7327
    %v7329 = vpop.f32.mrb[0].mxu0
    %v7330 = vadd.f32 0.0, %v7329
    %v7331 = vpop.f32.mrb[0].mxu0
    %v7332 = vadd.f32 0.0, %v7331
    %v7333 = vpop.f32.mrb[0].mxu0
    %v7334 = vadd.f32 0.0, %v7333
    %7335 = vdwg.mxu0
    %7336 = vmatprep.subr.bf16.mxu0 %v7220
    %7337 = vmatpush1.bf16.msra.mxu0 %v7219
    %7338 = vmatprep.subr.bf16.mxu0 %v7224
    %7339 = vmatpush1.bf16.msra.mxu0 %v7223
    %7340 = vmatprep.subr.bf16.mxu0 %v7228
    %7341 = vmatpush1.bf16.msra.mxu0 %v7227
    %7342 = vmatprep.subr.bf16.mxu0 %v7232
    %7343 = vmatpush1.bf16.msra.mxu0 %v7231
    %7344 = vmatprep.subr.bf16.mxu0 %v7236
    %7345 = vmatpush1.bf16.msra.mxu0 %v7235
    %7346 = vmatprep.subr.bf16.mxu0 %v7240
    %7347 = vmatpush1.bf16.msra.mxu0 %v7239
    %7348 = vmatprep.subr.bf16.mxu0 %v7244
    %7349 = vmatpush1.bf16.msra.mxu0 %v7243
    %7350 = vmatprep.subr.bf16.mxu0 %v7248
    %7351 = vmatpush1.bf16.msra.mxu0 %v7247
    %7352 = vmatprep.subr.bf16.mxu0 %v7252
    %7353 = vmatpush1.bf16.msra.mxu0 %v7251
    %7354 = vmatprep.subr.bf16.mxu0 %v7256
    %7355 = vmatpush1.bf16.msra.mxu0 %v7255
    %7356 = vmatprep.subr.bf16.mxu0 %v7260
    %7357 = vmatpush1.bf16.msra.mxu0 %v7259
    %7358 = vmatprep.subr.bf16.mxu0 %v7264
    %7359 = vmatpush1.bf16.msra.mxu0 %v7263
    %7360 = vmatprep.subr.bf16.mxu0 %v7268
    %7361 = vmatpush1.bf16.msra.mxu0 %v7267
    %7362 = vmatprep.subr.bf16.mxu0 %v7272
    %7363 = vmatpush1.bf16.msra.mxu0 %v7271
    %7364 = vmatprep.subr.bf16.mxu0 %v7276
    %7365 = vmatpush1.bf16.msra.mxu0 %v7275
    %7366 = vmatprep.subr.bf16.mxu0 %v7280
    %7367 = vmatpush1.bf16.msra.mxu0 %v7279
    %7368 = vmatprep.mubr.bf16.mxu0 %v6492
    %7369 = vmatmul.mubr.bf16.gmra.mrb[0].mxu0 %v6491
    %v7370 = vpop.f32.mrb[0].mxu0
    %v7371 = vadd.f32 %v7318, %v7370
    %v7372 = vpop.f32.mrb[0].mxu0
    %v7373 = vadd.f32 %v7320, %v7372
    %v7374 = vpop.f32.mrb[0].mxu0
    %v7375 = vadd.f32 %v7322, %v7374
    %v7376 = vpop.f32.mrb[0].mxu0
    %v7377 = vadd.f32 %v7324, %v7376
    %7378 = vmatprep.mubr.bf16.mxu0 %v6496
    %7379 = vmatmul.mubr.bf16.gmra.mrb[0].mxu0 %v6495
    %v7380 = vpop.f32.mrb[0].mxu0
    %v7381 = vadd.f32 %v7328, %v7380
    %v7382 = vpop.f32.mrb[0].mxu0
    %v7383 = vadd.f32 %v7330, %v7382
    %v7384 = vpop.f32.mrb[0].mxu0
    %v7385 = vadd.f32 %v7332, %v7384
    %v7386 = vpop.f32.mrb[0].mxu0
    %v7387 = vadd.f32 %v7334, %v7386
    %7388 = vdwg.mxu0
    %7389 = vmatprep.subr.bf16.mxu0 %v7158
    %7390 = vmatpush1.bf16.msra.mxu0 %v7157
    %7391 = vmatprep.subr.bf16.mxu0 %v7162
    %7392 = vmatpush1.bf16.msra.mxu0 %v7161
    %7393 = vmatprep.subr.bf16.mxu0 %v7166
    %7394 = vmatpush1.bf16.msra.mxu0 %v7165
    %7395 = vmatprep.subr.bf16.mxu0 %v7170
    %7396 = vmatpush1.bf16.msra.mxu0 %v7169
    %7397 = vmatprep.subr.bf16.mxu0 %v7174
    %7398 = vmatpush1.bf16.msra.mxu0 %v7173
    %7399 = vmatprep.subr.bf16.mxu0 %v7178
    %7400 = vmatpush1.bf16.msra.mxu0 %v7177
    %7401 = vmatprep.subr.bf16.mxu0 %v7182
    %7402 = vmatpush1.bf16.msra.mxu0 %v7181
    %7403 = vmatprep.subr.bf16.mxu0 %v7186
    %7404 = vmatpush1.bf16.msra.mxu0 %v7185
    %7405 = vmatprep.subr.bf16.mxu0 %v7190
    %7406 = vmatpush1.bf16.msra.mxu0 %v7189
    %7407 = vmatprep.subr.bf16.mxu0 %v7194
    %7408 = vmatpush1.bf16.msra.mxu0 %v7193
    %7409 = vmatprep.subr.bf16.mxu0 %v7198
    %7410 = vmatpush1.bf16.msra.mxu0 %v7197
    %7411 = vmatprep.subr.bf16.mxu0 %v7202
    %7412 = vmatpush1.bf16.msra.mxu0 %v7201
    %7413 = vmatprep.subr.bf16.mxu0 %v7206
    %7414 = vmatpush1.bf16.msra.mxu0 %v7205
    %7415 = vmatprep.subr.bf16.mxu0 %v7210
    %7416 = vmatpush1.bf16.msra.mxu0 %v7209
    %7417 = vmatprep.subr.bf16.mxu0 %v7214
    %7418 = vmatpush1.bf16.msra.mxu0 %v7213
    %7419 = vmatprep.subr.bf16.mxu0 %v7218
    %7420 = vmatpush1.bf16.msra.mxu0 %v7217
    %7421 = vmatprep.mubr.bf16.mxu0 %v6490
    %7422 = vmatmul.mubr.bf16.gmra.mrb[0].mxu0 %v6489
    %v7423 = vpop.f32.mrb[0].mxu0
    %v7424 = vadd.f32 0.0, %v7423
    %v7425 = vpop.f32.mrb[0].mxu0
    %v7426 = vadd.f32 0.0, %v7425
    %v7427 = vpop.f32.mrb[0].mxu0
    %v7428 = vadd.f32 0.0, %v7427
    %v7429 = vpop.f32.mrb[0].mxu0
    %v7430 = vadd.f32 0.0, %v7429
    %7431 = vmatprep.mubr.bf16.mxu0 %v6494
    %7432 = vmatmul.mubr.bf16.gmra.mrb[0].mxu0 %v6493
    %v7433 = vpop.f32.mrb[0].mxu0
    %v7434 = vadd.f32 0.0, %v7433
    %v7435 = vpop.f32.mrb[0].mxu0
    %v7436 = vadd.f32 0.0, %v7435
    %v7437 = vpop.f32.mrb[0].mxu0
    %v7438 = vadd.f32 0.0, %v7437
    %v7439 = vpop.f32.mrb[0].mxu0
    %v7440 = vadd.f32 0.0, %v7439
    %7441 = vdwg.mxu0
    %7442 = vmatprep.subr.bf16.mxu0 %v7222
    %7443 = vmatpush1.bf16.msra.mxu0 %v7221
    %7444 = vmatprep.subr.bf16.mxu0 %v7226
    %7445 = vmatpush1.bf16.msra.mxu0 %v7225
    %7446 = vmatprep.subr.bf16.mxu0 %v7230
    %7447 = vmatpush1.bf16.msra.mxu0 %v7229
    %7448 = vmatprep.subr.bf16.mxu0 %v7234
    %7449 = vmatpush1.bf16.msra.mxu0 %v7233
    %7450 = vmatprep.subr.bf16.mxu0 %v7238
    %7451 = vmatpush1.bf16.msra.mxu0 %v7237
    %7452 = vmatprep.subr.bf16.mxu0 %v7242
    %7453 = vmatpush1.bf16.msra.mxu0 %v7241
    %7454 = vmatprep.subr.bf16.mxu0 %v7246
    %7455 = vmatpush1.bf16.msra.mxu0 %v7245
    %7456 = vmatprep.subr.bf16.mxu0 %v7250
    %7457 = vmatpush1.bf16.msra.mxu0 %v7249
    %7458 = vmatprep.subr.bf16.mxu0 %v7254
    %7459 = vmatpush1.bf16.msra.mxu0 %v7253
    %7460 = vmatprep.subr.bf16.mxu0 %v7258
    %7461 = vmatpush1.bf16.msra.mxu0 %v7257
    %7462 = vmatprep.subr.bf16.mxu0 %v7262
    %7463 = vmatpush1.bf16.msra.mxu0 %v7261
    %7464 = vmatprep.subr.bf16.mxu0 %v7266
    %7465 = vmatpush1.bf16.msra.mxu0 %v7265
    %7466 = vmatprep.subr.bf16.mxu0 %v7270
    %7467 = vmatpush1.bf16.msra.mxu0 %v7269
    %7468 = vmatprep.subr.bf16.mxu0 %v7274
    %7469 = vmatpush1.bf16.msra.mxu0 %v7273
    %7470 = vmatprep.subr.bf16.mxu0 %v7278
    %7471 = vmatpush1.bf16.msra.mxu0 %v7277
    %7472 = vmatprep.subr.bf16.mxu0 %v7282
    %7473 = vmatpush1.bf16.msra.mxu0 %v7281
    %7474 = vmatprep.mubr.bf16.mxu0 %v6492
    %7475 = vmatmul.mubr.bf16.gmra.mrb[0].mxu0 %v6491
    %v7476 = vpop.f32.mrb[0].mxu0
    %v7477 = vadd.f32 %v7424, %v7476
    %v7478 = vpop.f32.mrb[0].mxu0
    %v7479 = vadd.f32 %v7426, %v7478
    %v7480 = vpop.f32.mrb[0].mxu0
    %v7481 = vadd.f32 %v7428, %v7480
    %v7482 = vpop.f32.mrb[0].mxu0
    %v7483 = vadd.f32 %v7430, %v7482
    %7484 = vmatprep.mubr.bf16.mxu0 %v6496
    %7485 = vmatmul.mubr.bf16.gmra.mrb[0].mxu0 %v6495
    %v7486 = vpop.f32.mrb[0].mxu0
    %v7487 = vadd.f32 %v7434, %v7486
    %v7488 = vpop.f32.mrb[0].mxu0
    %v7489 = vadd.f32 %v7436, %v7488
    %v7490 = vpop.f32.mrb[0].mxu0
    %v7491 = vadd.f32 %v7438, %v7490
    %v7492 = vpop.f32.mrb[0].mxu0
    %v7493 = vadd.f32 %v7440, %v7492
    %7494 = vdwg.mxu0
    %v7495 = vadd.f32 %v7030, %v7371
    %v7496 = vadd.f32 %v7032, %v7373
    %v7497 = vadd.f32 %v7136, %v7477
    %v7498 = vadd.f32 %v7138, %v7479
    %v7499 = vadd.f32 %v7034, %v7375
    %v7500 = vadd.f32 %v7036, %v7377
    %v7501 = vadd.f32 %v7140, %v7481
    %v7502 = vadd.f32 %v7142, %v7483
    %v7503 = vadd.f32 %v7040, %v7381
    %v7504 = vadd.f32 %v7042, %v7383
    %v7505 = vadd.f32 %v7146, %v7487
    %v7506 = vadd.f32 %v7148, %v7489
    %v7507 = vadd.f32 %v7044, %v7385
    %v7508 = vadd.f32 %v7046, %v7387
    %v7509 = vadd.f32 %v7150, %v7491
    %v7510 = vadd.f32 %v7152, %v7493
    %v7511 = vld [vmem:[#allocation3 + $0x20] sm:$0xff]
    %v7512 = vld [vmem:[#allocation3 + $0x28] sm:$0xff]
    %v7513 = vld [vmem:[#allocation3 + $0x30] sm:$0xff]
    %v7514 = vld [vmem:[#allocation3 + $0x38] sm:$0xff]
    %v7515 = vld [vmem:[#allocation3 + $0x40] sm:$0x1]
    %v7516 = vld [vmem:[#allocation3 + $0x48] sm:$0x1]
    %v7517 = vld [vmem:[#allocation3 + $0x50] sm:$0x1]
    %v7518 = vld [vmem:[#allocation3 + $0x58] sm:$0x1]
    %v7519 = vld [vmem:[#allocation3 + $0x80] sm:$0xff]
    %v7520 = vld [vmem:[#allocation3 + $0x88] sm:$0xff]
    %v7521 = vld [vmem:[#allocation3 + $0x90] sm:$0xff]
    %v7522 = vld [vmem:[#allocation3 + $0x98] sm:$0xff]
    %v7523 = vld [vmem:[#allocation3 + $0xa0] sm:$0x1]
    %v7524 = vld [vmem:[#allocation3 + $0xa8] sm:$0x1]
    %v7525 = vld [vmem:[#allocation3 + $0xb0] sm:$0x1]
    %v7526 = vld [vmem:[#allocation3 + $0xb8] sm:$0x1]
    %v7528 = vshrl.u32 %v7511, 16
    %v7530 = vshll.u32 %v7511, 16
    %v7532 = vrot.slane %v7530, 1
    %v7533 = vor.u32 %v7528, %v7532
    %v7535 = vshll.u32 %v7515, 16
    %v7537 = vrot.slane %v7535, 1
    %v7538 = vsel %vm1196, %v7533, %v7537
    %v7540 = vshrl.u32 %v7512, 16
    %v7542 = vshll.u32 %v7512, 16
    %v7544 = vrot.slane %v7542, 1
    %v7545 = vor.u32 %v7540, %v7544
    %v7547 = vshll.u32 %v7516, 16
    %v7549 = vrot.slane %v7547, 1
    %v7550 = vsel %vm1196, %v7545, %v7549
    %v7552 = vshrl.u32 %v7513, 16
    %v7554 = vshll.u32 %v7513, 16
    %v7556 = vrot.slane %v7554, 1
    %v7557 = vor.u32 %v7552, %v7556
    %v7559 = vshll.u32 %v7517, 16
    %v7561 = vrot.slane %v7559, 1
    %v7562 = vsel %vm1196, %v7557, %v7561
    %v7564 = vshrl.u32 %v7514, 16
    %v7566 = vshll.u32 %v7514, 16
    %v7568 = vrot.slane %v7566, 1
    %v7569 = vor.u32 %v7564, %v7568
    %v7571 = vshll.u32 %v7518, 16
    %v7573 = vrot.slane %v7571, 1
    %v7574 = vsel %vm1196, %v7569, %v7573
    %v7576 = vshrl.u32 %v7519, 16
    %v7578 = vshll.u32 %v7519, 16
    %v7580 = vrot.slane %v7578, 1
    %v7581 = vor.u32 %v7576, %v7580
    %v7583 = vshll.u32 %v7523, 16
    %v7585 = vrot.slane %v7583, 1
    %v7586 = vsel %vm1196, %v7581, %v7585
    %v7588 = vshrl.u32 %v7520, 16
    %v7590 = vshll.u32 %v7520, 16
    %v7592 = vrot.slane %v7590, 1
    %v7593 = vor.u32 %v7588, %v7592
    %v7595 = vshll.u32 %v7524, 16
    %v7597 = vrot.slane %v7595, 1
    %v7598 = vsel %vm1196, %v7593, %v7597
    %v7600 = vshrl.u32 %v7521, 16
    %v7602 = vshll.u32 %v7521, 16
    %v7604 = vrot.slane %v7602, 1
    %v7605 = vor.u32 %v7600, %v7604
    %v7607 = vshll.u32 %v7525, 16
    %v7609 = vrot.slane %v7607, 1
    %v7610 = vsel %vm1196, %v7605, %v7609
    %v7612 = vshrl.u32 %v7522, 16
    %v7614 = vshll.u32 %v7522, 16
    %v7616 = vrot.slane %v7614, 1
    %v7617 = vor.u32 %v7612, %v7616
    %v7619 = vshll.u32 %v7526, 16
    %v7621 = vrot.slane %v7619, 1
    %v7622 = vsel %vm1196, %v7617, %v7621
    %s7631 = scalar_lea.vmem [#allocation4], 13312
    %v7632 = vld [vmem:[%s7631] sm:$0xff]
    %v7633 = vld [vmem:[%s7631 + $0x8] sm:$0xff]
    %v7634 = vld [vmem:[%s7631 + $0x10] sm:$0xff]
    %v7635 = vld [vmem:[%s7631 + $0x18] sm:$0xff]
    %v7636 = vld [vmem:[%s7631 + $0x20] sm:$0xff]
    %v7637 = vld [vmem:[%s7631 + $0x28] sm:$0xff]
    %v7638 = vld [vmem:[%s7631 + $0x30] sm:$0xff]
    %v7639 = vld [vmem:[%s7631 + $0x38] sm:$0xff]
    %v7640 = vld [vmem:[%s7631 + $0x40] sm:$0xff]
    %v7641 = vld [vmem:[%s7631 + $0x48] sm:$0xff]
    %v7642 = vld [vmem:[%s7631 + $0x50] sm:$0xff]
    %v7643 = vld [vmem:[%s7631 + $0x58] sm:$0xff]
    %v7644 = vld [vmem:[%s7631 + $0x60] sm:$0xff]
    %v7645 = vld [vmem:[%s7631 + $0x68] sm:$0xff]
    %v7646 = vld [vmem:[%s7631 + $0x70] sm:$0xff]
    %v7647 = vld [vmem:[%s7631 + $0x78] sm:$0xff]
    %v7648 = vld [vmem:[%s7631 + $0x80] sm:$0xff]
    %v7649 = vld [vmem:[%s7631 + $0x88] sm:$0xff]
    %v7650 = vld [vmem:[%s7631 + $0x90] sm:$0xff]
    %v7651 = vld [vmem:[%s7631 + $0x98] sm:$0xff]
    %v7652 = vld [vmem:[%s7631 + $0xa0] sm:$0xff]
    %v7653 = vld [vmem:[%s7631 + $0xa8] sm:$0xff]
    %v7654 = vld [vmem:[%s7631 + $0xb0] sm:$0xff]
    %v7655 = vld [vmem:[%s7631 + $0xb8] sm:$0xff]
    %v7656 = vld [vmem:[%s7631 + $0xc0] sm:$0xff]
    %v7657 = vld [vmem:[%s7631 + $0xc8] sm:$0xff]
    %v7658 = vld [vmem:[%s7631 + $0xd0] sm:$0xff]
    %v7659 = vld [vmem:[%s7631 + $0xd8] sm:$0xff]
    %v7660 = vld [vmem:[%s7631 + $0xe0] sm:$0xff]
    %v7661 = vld [vmem:[%s7631 + $0xe8] sm:$0xff]
    %v7662 = vld [vmem:[%s7631 + $0xf0] sm:$0xff]
    %v7663 = vld [vmem:[%s7631 + $0xf8] sm:$0xff]
    %v7664 = vld [vmem:[%s7631 + $0x100] sm:$0xff]
    %v7665 = vld [vmem:[%s7631 + $0x108] sm:$0xff]
    %v7666 = vld [vmem:[%s7631 + $0x110] sm:$0xff]
    %v7667 = vld [vmem:[%s7631 + $0x118] sm:$0xff]
    %v7668 = vld [vmem:[%s7631 + $0x120] sm:$0xff]
    %v7669 = vld [vmem:[%s7631 + $0x128] sm:$0xff]
    %v7670 = vld [vmem:[%s7631 + $0x130] sm:$0xff]
    %v7671 = vld [vmem:[%s7631 + $0x138] sm:$0xff]
    %v7672 = vld [vmem:[%s7631 + $0x140] sm:$0xff]
    %v7673 = vld [vmem:[%s7631 + $0x148] sm:$0xff]
    %v7674 = vld [vmem:[%s7631 + $0x150] sm:$0xff]
    %v7675 = vld [vmem:[%s7631 + $0x158] sm:$0xff]
    %v7676 = vld [vmem:[%s7631 + $0x160] sm:$0xff]
    %v7677 = vld [vmem:[%s7631 + $0x168] sm:$0xff]
    %v7678 = vld [vmem:[%s7631 + $0x170] sm:$0xff]
    %v7679 = vld [vmem:[%s7631 + $0x178] sm:$0xff]
    %v7680 = vld [vmem:[%s7631 + $0x180] sm:$0xff]
    %v7681 = vld [vmem:[%s7631 + $0x188] sm:$0xff]
    %v7682 = vld [vmem:[%s7631 + $0x190] sm:$0xff]
    %v7683 = vld [vmem:[%s7631 + $0x198] sm:$0xff]
    %v7684 = vld [vmem:[%s7631 + $0x1a0] sm:$0xff]
    %v7685 = vld [vmem:[%s7631 + $0x1a8] sm:$0xff]
    %v7686 = vld [vmem:[%s7631 + $0x1b0] sm:$0xff]
    %v7687 = vld [vmem:[%s7631 + $0x1b8] sm:$0xff]
    %v7688 = vld [vmem:[%s7631 + $0x1c0] sm:$0xff]
    %v7689 = vld [vmem:[%s7631 + $0x1c8] sm:$0xff]
    %v7690 = vld [vmem:[%s7631 + $0x1d0] sm:$0xff]
    %v7691 = vld [vmem:[%s7631 + $0x1d8] sm:$0xff]
    %v7692 = vld [vmem:[%s7631 + $0x1e0] sm:$0xff]
    %v7693 = vld [vmem:[%s7631 + $0x1e8] sm:$0xff]
    %v7694 = vld [vmem:[%s7631 + $0x1f0] sm:$0xff]
    %v7695 = vld [vmem:[%s7631 + $0x1f8] sm:$0xff]
    %v7696 = vld [vmem:[%s7631 + $0x200] sm:$0xff]
    %v7697 = vld [vmem:[%s7631 + $0x208] sm:$0xff]
    %v7698 = vld [vmem:[%s7631 + $0x210] sm:$0xff]
    %v7699 = vld [vmem:[%s7631 + $0x218] sm:$0xff]
    %v7700 = vld [vmem:[%s7631 + $0x220] sm:$0xff]
    %v7701 = vld [vmem:[%s7631 + $0x228] sm:$0xff]
    %v7702 = vld [vmem:[%s7631 + $0x230] sm:$0xff]
    %v7703 = vld [vmem:[%s7631 + $0x238] sm:$0xff]
    %v7704 = vld [vmem:[%s7631 + $0x240] sm:$0xff]
    %v7705 = vld [vmem:[%s7631 + $0x248] sm:$0xff]
    %v7706 = vld [vmem:[%s7631 + $0x250] sm:$0xff]
    %v7707 = vld [vmem:[%s7631 + $0x258] sm:$0xff]
    %v7708 = vld [vmem:[%s7631 + $0x260] sm:$0xff]
    %v7709 = vld [vmem:[%s7631 + $0x268] sm:$0xff]
    %v7710 = vld [vmem:[%s7631 + $0x270] sm:$0xff]
    %v7711 = vld [vmem:[%s7631 + $0x278] sm:$0xff]
    %v7712 = vld [vmem:[%s7631 + $0x280] sm:$0xff]
    %v7713 = vld [vmem:[%s7631 + $0x288] sm:$0xff]
    %v7714 = vld [vmem:[%s7631 + $0x290] sm:$0xff]
    %v7715 = vld [vmem:[%s7631 + $0x298] sm:$0xff]
    %v7716 = vld [vmem:[%s7631 + $0x2a0] sm:$0xff]
    %v7717 = vld [vmem:[%s7631 + $0x2a8] sm:$0xff]
    %v7718 = vld [vmem:[%s7631 + $0x2b0] sm:$0xff]
    %v7719 = vld [vmem:[%s7631 + $0x2b8] sm:$0xff]
    %v7720 = vld [vmem:[%s7631 + $0x2c0] sm:$0xff]
    %v7721 = vld [vmem:[%s7631 + $0x2c8] sm:$0xff]
    %v7722 = vld [vmem:[%s7631 + $0x2d0] sm:$0xff]
    %v7723 = vld [vmem:[%s7631 + $0x2d8] sm:$0xff]
    %v7724 = vld [vmem:[%s7631 + $0x2e0] sm:$0xff]
    %v7725 = vld [vmem:[%s7631 + $0x2e8] sm:$0xff]
    %v7726 = vld [vmem:[%s7631 + $0x2f0] sm:$0xff]
    %v7727 = vld [vmem:[%s7631 + $0x2f8] sm:$0xff]
    %v7728 = vld [vmem:[%s7631 + $0x300] sm:$0xff]
    %v7729 = vld [vmem:[%s7631 + $0x308] sm:$0xff]
    %v7730 = vld [vmem:[%s7631 + $0x310] sm:$0xff]
    %v7731 = vld [vmem:[%s7631 + $0x318] sm:$0xff]
    %v7732 = vld [vmem:[%s7631 + $0x320] sm:$0xff]
    %v7733 = vld [vmem:[%s7631 + $0x328] sm:$0xff]
    %v7734 = vld [vmem:[%s7631 + $0x330] sm:$0xff]
    %v7735 = vld [vmem:[%s7631 + $0x338] sm:$0xff]
    %v7736 = vld [vmem:[%s7631 + $0x340] sm:$0xff]
    %v7737 = vld [vmem:[%s7631 + $0x348] sm:$0xff]
    %v7738 = vld [vmem:[%s7631 + $0x350] sm:$0xff]
    %v7739 = vld [vmem:[%s7631 + $0x358] sm:$0xff]
    %v7740 = vld [vmem:[%s7631 + $0x360] sm:$0xff]
    %v7741 = vld [vmem:[%s7631 + $0x368] sm:$0xff]
    %v7742 = vld [vmem:[%s7631 + $0x370] sm:$0xff]
    %v7743 = vld [vmem:[%s7631 + $0x378] sm:$0xff]
    %v7744 = vld [vmem:[%s7631 + $0x380] sm:$0xff]
    %v7745 = vld [vmem:[%s7631 + $0x388] sm:$0xff]
    %v7746 = vld [vmem:[%s7631 + $0x390] sm:$0xff]
    %v7747 = vld [vmem:[%s7631 + $0x398] sm:$0xff]
    %v7748 = vld [vmem:[%s7631 + $0x3a0] sm:$0xff]
    %v7749 = vld [vmem:[%s7631 + $0x3a8] sm:$0xff]
    %v7750 = vld [vmem:[%s7631 + $0x3b0] sm:$0xff]
    %v7751 = vld [vmem:[%s7631 + $0x3b8] sm:$0xff]
    %v7752 = vld [vmem:[%s7631 + $0x3c0] sm:$0xff]
    %v7753 = vld [vmem:[%s7631 + $0x3c8] sm:$0xff]
    %v7754 = vld [vmem:[%s7631 + $0x3d0] sm:$0xff]
    %v7755 = vld [vmem:[%s7631 + $0x3d8] sm:$0xff]
    %v7756 = vld [vmem:[%s7631 + $0x3e0] sm:$0xff]
    %v7757 = vld [vmem:[%s7631 + $0x3e8] sm:$0xff]
    %v7758 = vld [vmem:[%s7631 + $0x3f0] sm:$0xff]
    %v7759 = vld [vmem:[%s7631 + $0x3f8] sm:$0xff]
    %7760 = vmatprep.subr.bf16.mxu0 %v7633
    %7761 = vmatpush1.bf16.msra.mxu0 %v7632
    %7762 = vmatprep.subr.bf16.mxu0 %v7637
    %7763 = vmatpush1.bf16.msra.mxu0 %v7636
    %7764 = vmatprep.subr.bf16.mxu0 %v7641
    %7765 = vmatpush1.bf16.msra.mxu0 %v7640
    %7766 = vmatprep.subr.bf16.mxu0 %v7645
    %7767 = vmatpush1.bf16.msra.mxu0 %v7644
    %7768 = vmatprep.subr.bf16.mxu0 %v7649
    %7769 = vmatpush1.bf16.msra.mxu0 %v7648
    %7770 = vmatprep.subr.bf16.mxu0 %v7653
    %7771 = vmatpush1.bf16.msra.mxu0 %v7652
    %7772 = vmatprep.subr.bf16.mxu0 %v7657
    %7773 = vmatpush1.bf16.msra.mxu0 %v7656
    %7774 = vmatprep.subr.bf16.mxu0 %v7661
    %7775 = vmatpush1.bf16.msra.mxu0 %v7660
    %7776 = vmatprep.subr.bf16.mxu0 %v7665
    %7777 = vmatpush1.bf16.msra.mxu0 %v7664
    %7778 = vmatprep.subr.bf16.mxu0 %v7669
    %7779 = vmatpush1.bf16.msra.mxu0 %v7668
    %7780 = vmatprep.subr.bf16.mxu0 %v7673
    %7781 = vmatpush1.bf16.msra.mxu0 %v7672
    %7782 = vmatprep.subr.bf16.mxu0 %v7677
    %7783 = vmatpush1.bf16.msra.mxu0 %v7676
    %7784 = vmatprep.subr.bf16.mxu0 %v7681
    %7785 = vmatpush1.bf16.msra.mxu0 %v7680
    %7786 = vmatprep.subr.bf16.mxu0 %v7685
    %7787 = vmatpush1.bf16.msra.mxu0 %v7684
    %7788 = vmatprep.subr.bf16.mxu0 %v7689
    %7789 = vmatpush1.bf16.msra.mxu0 %v7688
    %7790 = vmatprep.subr.bf16.mxu0 %v7693
    %7791 = vmatpush1.bf16.msra.mxu0 %v7692
    %7792 = vmatprep.mubr.bf16.mxu0 %v7550
    %7793 = vmatmul.mubr.bf16.gmra.mrb[0].mxu0 %v7538
    %v7794 = vpop.f32.mrb[0].mxu0
    %v7795 = vadd.f32 0.0, %v7794
    %v7796 = vpop.f32.mrb[0].mxu0
    %v7797 = vadd.f32 0.0, %v7796
    %v7798 = vpop.f32.mrb[0].mxu0
    %v7799 = vadd.f32 0.0, %v7798
    %v7800 = vpop.f32.mrb[0].mxu0
    %v7801 = vadd.f32 0.0, %v7800
    %7802 = vmatprep.mubr.bf16.mxu0 %v7598
    %7803 = vmatmul.mubr.bf16.gmra.mrb[0].mxu0 %v7586
    %v7804 = vpop.f32.mrb[0].mxu0
    %v7805 = vadd.f32 0.0, %v7804
    %v7806 = vpop.f32.mrb[0].mxu0
    %v7807 = vadd.f32 0.0, %v7806
    %v7808 = vpop.f32.mrb[0].mxu0
    %v7809 = vadd.f32 0.0, %v7808
    %v7810 = vpop.f32.mrb[0].mxu0
    %v7811 = vadd.f32 0.0, %v7810
    %7812 = vdwg.mxu0
    %7813 = vmatprep.subr.bf16.mxu0 %v7697
    %7814 = vmatpush1.bf16.msra.mxu0 %v7696
    %7815 = vmatprep.subr.bf16.mxu0 %v7701
    %7816 = vmatpush1.bf16.msra.mxu0 %v7700
    %7817 = vmatprep.subr.bf16.mxu0 %v7705
    %7818 = vmatpush1.bf16.msra.mxu0 %v7704
    %7819 = vmatprep.subr.bf16.mxu0 %v7709
    %7820 = vmatpush1.bf16.msra.mxu0 %v7708
    %7821 = vmatprep.subr.bf16.mxu0 %v7713
    %7822 = vmatpush1.bf16.msra.mxu0 %v7712
    %7823 = vmatprep.subr.bf16.mxu0 %v7717
    %7824 = vmatpush1.bf16.msra.mxu0 %v7716
    %7825 = vmatprep.subr.bf16.mxu0 %v7721
    %7826 = vmatpush1.bf16.msra.mxu0 %v7720
    %7827 = vmatprep.subr.bf16.mxu0 %v7725
    %7828 = vmatpush1.bf16.msra.mxu0 %v7724
    %7829 = vmatprep.subr.bf16.mxu0 %v7729
    %7830 = vmatpush1.bf16.msra.mxu0 %v7728
    %7831 = vmatprep.subr.bf16.mxu0 %v7733
    %7832 = vmatpush1.bf16.msra.mxu0 %v7732
    %7833 = vmatprep.subr.bf16.mxu0 %v7737
    %7834 = vmatpush1.bf16.msra.mxu0 %v7736
    %7835 = vmatprep.subr.bf16.mxu0 %v7741
    %7836 = vmatpush1.bf16.msra.mxu0 %v7740
    %7837 = vmatprep.subr.bf16.mxu0 %v7745
    %7838 = vmatpush1.bf16.msra.mxu0 %v7744
    %7839 = vmatprep.subr.bf16.mxu0 %v7749
    %7840 = vmatpush1.bf16.msra.mxu0 %v7748
    %7841 = vmatprep.subr.bf16.mxu0 %v7753
    %7842 = vmatpush1.bf16.msra.mxu0 %v7752
    %7843 = vmatprep.subr.bf16.mxu0 %v7757
    %7844 = vmatpush1.bf16.msra.mxu0 %v7756
    %7845 = vmatprep.mubr.bf16.mxu0 %v7574
    %7846 = vmatmul.mubr.bf16.gmra.mrb[0].mxu0 %v7562
    %v7847 = vpop.f32.mrb[0].mxu0
    %v7848 = vadd.f32 %v7795, %v7847
    %v7849 = vpop.f32.mrb[0].mxu0
    %v7850 = vadd.f32 %v7797, %v7849
    %v7851 = vpop.f32.mrb[0].mxu0
    %v7852 = vadd.f32 %v7799, %v7851
    %v7853 = vpop.f32.mrb[0].mxu0
    %v7854 = vadd.f32 %v7801, %v7853
    %7855 = vmatprep.mubr.bf16.mxu0 %v7622
    %7856 = vmatmul.mubr.bf16.gmra.mrb[0].mxu0 %v7610
    %v7857 = vpop.f32.mrb[0].mxu0
    %v7858 = vadd.f32 %v7805, %v7857
    %v7859 = vpop.f32.mrb[0].mxu0
    %v7860 = vadd.f32 %v7807, %v7859
    %v7861 = vpop.f32.mrb[0].mxu0
    %v7862 = vadd.f32 %v7809, %v7861
    %v7863 = vpop.f32.mrb[0].mxu0
    %v7864 = vadd.f32 %v7811, %v7863
    %7865 = vdwg.mxu0
    %7866 = vmatprep.subr.bf16.mxu0 %v7635
    %7867 = vmatpush1.bf16.msra.mxu0 %v7634
    %7868 = vmatprep.subr.bf16.mxu0 %v7639
    %7869 = vmatpush1.bf16.msra.mxu0 %v7638
    %7870 = vmatprep.subr.bf16.mxu0 %v7643
    %7871 = vmatpush1.bf16.msra.mxu0 %v7642
    %7872 = vmatprep.subr.bf16.mxu0 %v7647
    %7873 = vmatpush1.bf16.msra.mxu0 %v7646
    %7874 = vmatprep.subr.bf16.mxu0 %v7651
    %7875 = vmatpush1.bf16.msra.mxu0 %v7650
    %7876 = vmatprep.subr.bf16.mxu0 %v7655
    %7877 = vmatpush1.bf16.msra.mxu0 %v7654
    %7878 = vmatprep.subr.bf16.mxu0 %v7659
    %7879 = vmatpush1.bf16.msra.mxu0 %v7658
    %7880 = vmatprep.subr.bf16.mxu0 %v7663
    %7881 = vmatpush1.bf16.msra.mxu0 %v7662
    %7882 = vmatprep.subr.bf16.mxu0 %v7667
    %7883 = vmatpush1.bf16.msra.mxu0 %v7666
    %7884 = vmatprep.subr.bf16.mxu0 %v7671
    %7885 = vmatpush1.bf16.msra.mxu0 %v7670
    %7886 = vmatprep.subr.bf16.mxu0 %v7675
    %7887 = vmatpush1.bf16.msra.mxu0 %v7674
    %7888 = vmatprep.subr.bf16.mxu0 %v7679
    %7889 = vmatpush1.bf16.msra.mxu0 %v7678
    %7890 = vmatprep.subr.bf16.mxu0 %v7683
    %7891 = vmatpush1.bf16.msra.mxu0 %v7682
    %7892 = vmatprep.subr.bf16.mxu0 %v7687
    %7893 = vmatpush1.bf16.msra.mxu0 %v7686
    %7894 = vmatprep.subr.bf16.mxu0 %v7691
    %7895 = vmatpush1.bf16.msra.mxu0 %v7690
    %7896 = vmatprep.subr.bf16.mxu0 %v7695
    %7897 = vmatpush1.bf16.msra.mxu0 %v7694
    %7898 = vmatprep.mubr.bf16.mxu0 %v7550
    %7899 = vmatmul.mubr.bf16.gmra.mrb[0].mxu0 %v7538
    %v7900 = vpop.f32.mrb[0].mxu0
    %v7901 = vadd.f32 0.0, %v7900
    %v7902 = vpop.f32.mrb[0].mxu0
    %v7903 = vadd.f32 0.0, %v7902
    %v7904 = vpop.f32.mrb[0].mxu0
    %v7905 = vadd.f32 0.0, %v7904
    %v7906 = vpop.f32.mrb[0].mxu0
    %v7907 = vadd.f32 0.0, %v7906
    %7908 = vmatprep.mubr.bf16.mxu0 %v7598
    %7909 = vmatmul.mubr.bf16.gmra.mrb[0].mxu0 %v7586
    %v7910 = vpop.f32.mrb[0].mxu0
    %v7911 = vadd.f32 0.0, %v7910
    %v7912 = vpop.f32.mrb[0].mxu0
    %v7913 = vadd.f32 0.0, %v7912
    %v7914 = vpop.f32.mrb[0].mxu0
    %v7915 = vadd.f32 0.0, %v7914
    %v7916 = vpop.f32.mrb[0].mxu0
    %v7917 = vadd.f32 0.0, %v7916
    %7918 = vdwg.mxu0
    %7919 = vmatprep.subr.bf16.mxu0 %v7699
    %7920 = vmatpush1.bf16.msra.mxu0 %v7698
    %7921 = vmatprep.subr.bf16.mxu0 %v7703
    %7922 = vmatpush1.bf16.msra.mxu0 %v7702
    %7923 = vmatprep.subr.bf16.mxu0 %v7707
    %7924 = vmatpush1.bf16.msra.mxu0 %v7706
    %7925 = vmatprep.subr.bf16.mxu0 %v7711
    %7926 = vmatpush1.bf16.msra.mxu0 %v7710
    %7927 = vmatprep.subr.bf16.mxu0 %v7715
    %7928 = vmatpush1.bf16.msra.mxu0 %v7714
    %7929 = vmatprep.subr.bf16.mxu0 %v7719
    %7930 = vmatpush1.bf16.msra.mxu0 %v7718
    %7931 = vmatprep.subr.bf16.mxu0 %v7723
    %7932 = vmatpush1.bf16.msra.mxu0 %v7722
    %7933 = vmatprep.subr.bf16.mxu0 %v7727
    %7934 = vmatpush1.bf16.msra.mxu0 %v7726
    %7935 = vmatprep.subr.bf16.mxu0 %v7731
    %7936 = vmatpush1.bf16.msra.mxu0 %v7730
    %7937 = vmatprep.subr.bf16.mxu0 %v7735
    %7938 = vmatpush1.bf16.msra.mxu0 %v7734
    %7939 = vmatprep.subr.bf16.mxu0 %v7739
    %7940 = vmatpush1.bf16.msra.mxu0 %v7738
    %7941 = vmatprep.subr.bf16.mxu0 %v7743
    %7942 = vmatpush1.bf16.msra.mxu0 %v7742
    %7943 = vmatprep.subr.bf16.mxu0 %v7747
    %7944 = vmatpush1.bf16.msra.mxu0 %v7746
    %7945 = vmatprep.subr.bf16.mxu0 %v7751
    %7946 = vmatpush1.bf16.msra.mxu0 %v7750
    %7947 = vmatprep.subr.bf16.mxu0 %v7755
    %7948 = vmatpush1.bf16.msra.mxu0 %v7754
    %7949 = vmatprep.subr.bf16.mxu0 %v7759
    %7950 = vmatpush1.bf16.msra.mxu0 %v7758
    %7951 = vmatprep.mubr.bf16.mxu0 %v7574
    %7952 = vmatmul.mubr.bf16.gmra.mrb[0].mxu0 %v7562
    %v7953 = vpop.f32.mrb[0].mxu0
    %v7954 = vadd.f32 %v7901, %v7953
    %v7955 = vpop.f32.mrb[0].mxu0
    %v7956 = vadd.f32 %v7903, %v7955
    %v7957 = vpop.f32.mrb[0].mxu0
    %v7958 = vadd.f32 %v7905, %v7957
    %v7959 = vpop.f32.mrb[0].mxu0
    %v7960 = vadd.f32 %v7907, %v7959
    %7961 = vmatprep.mubr.bf16.mxu0 %v7622
    %7962 = vmatmul.mubr.bf16.gmra.mrb[0].mxu0 %v7610
    %v7963 = vpop.f32.mrb[0].mxu0
    %v7964 = vadd.f32 %v7911, %v7963
    %v7965 = vpop.f32.mrb[0].mxu0
    %v7966 = vadd.f32 %v7913, %v7965
    %v7967 = vpop.f32.mrb[0].mxu0
    %v7968 = vadd.f32 %v7915, %v7967
    %v7969 = vpop.f32.mrb[0].mxu0
    %v7970 = vadd.f32 %v7917, %v7969
    %7971 = vdwg.mxu0
    %v7972 = vadd.f32 %v7495, %v7848
    %v7973 = vadd.f32 %v7496, %v7850
    %v7974 = vadd.f32 %v7497, %v7954
    %v7975 = vadd.f32 %v7498, %v7956
    %v7976 = vadd.f32 %v7499, %v7852
    %v7977 = vadd.f32 %v7500, %v7854
    %v7978 = vadd.f32 %v7501, %v7958
    %v7979 = vadd.f32 %v7502, %v7960
    %v7980 = vadd.f32 %v7503, %v7858
    %v7981 = vadd.f32 %v7504, %v7860
    %v7982 = vadd.f32 %v7505, %v7964
    %v7983 = vadd.f32 %v7506, %v7966
    %v7984 = vadd.f32 %v7507, %v7862
    %v7985 = vadd.f32 %v7508, %v7864
    %v7986 = vadd.f32 %v7509, %v7968
    %v7987 = vadd.f32 %v7510, %v7970
    %v7988 = vld [vmem:[#allocation3 + $0x20] sm:$0xfe]
    %v7989 = vld [vmem:[#allocation3 + $0x28] sm:$0xfe]
    %v7990 = vld [vmem:[#allocation3 + $0x30] sm:$0xfe]
    %v7991 = vld [vmem:[#allocation3 + $0x38] sm:$0xfe]
    %v7992 = vld [vmem:[#allocation3 + $0x80] sm:$0xfe]
    %v7993 = vld [vmem:[#allocation3 + $0x88] sm:$0xfe]
    %v7994 = vld [vmem:[#allocation3 + $0x90] sm:$0xfe]
    %v7995 = vld [vmem:[#allocation3 + $0x98] sm:$0xfe]
    %v8012 = vrot.slane %v7988, 1
    %v8013 = vrot.slane %v7515, 1
    %v8014 = vsel %vm1544, %v8012, %v8013
    %v8015 = vrot.slane %v7989, 1
    %v8016 = vrot.slane %v7516, 1
    %v8017 = vsel %vm1544, %v8015, %v8016
    %v8018 = vrot.slane %v7990, 1
    %v8019 = vrot.slane %v7517, 1
    %v8020 = vsel %vm1544, %v8018, %v8019
    %v8021 = vrot.slane %v7991, 1
    %v8022 = vrot.slane %v7518, 1
    %v8023 = vsel %vm1544, %v8021, %v8022
    %v8024 = vrot.slane %v7992, 1
    %v8025 = vrot.slane %v7523, 1
    %v8026 = vsel %vm1544, %v8024, %v8025
    %v8027 = vrot.slane %v7993, 1
    %v8028 = vrot.slane %v7524, 1
    %v8029 = vsel %vm1544, %v8027, %v8028
    %v8030 = vrot.slane %v7994, 1
    %v8031 = vrot.slane %v7525, 1
    %v8032 = vsel %vm1544, %v8030, %v8031
    %v8033 = vrot.slane %v7995, 1
    %v8034 = vrot.slane %v7526, 1
    %v8035 = vsel %vm1544, %v8033, %v8034
    %s8044 = scalar_lea.vmem [#allocation4], 14336
    %v8045 = vld [vmem:[%s8044] sm:$0xff]
    %v8046 = vld [vmem:[%s8044 + $0x8] sm:$0xff]
    %v8047 = vld [vmem:[%s8044 + $0x10] sm:$0xff]
    %v8048 = vld [vmem:[%s8044 + $0x18] sm:$0xff]
    %v8049 = vld [vmem:[%s8044 + $0x20] sm:$0xff]
    %v8050 = vld [vmem:[%s8044 + $0x28] sm:$0xff]
    %v8051 = vld [vmem:[%s8044 + $0x30] sm:$0xff]
    %v8052 = vld [vmem:[%s8044 + $0x38] sm:$0xff]
    %v8053 = vld [vmem:[%s8044 + $0x40] sm:$0xff]
    %v8054 = vld [vmem:[%s8044 + $0x48] sm:$0xff]
    %v8055 = vld [vmem:[%s8044 + $0x50] sm:$0xff]
    %v8056 = vld [vmem:[%s8044 + $0x58] sm:$0xff]
    %v8057 = vld [vmem:[%s8044 + $0x60] sm:$0xff]
    %v8058 = vld [vmem:[%s8044 + $0x68] sm:$0xff]
    %v8059 = vld [vmem:[%s8044 + $0x70] sm:$0xff]
    %v8060 = vld [vmem:[%s8044 + $0x78] sm:$0xff]
    %v8061 = vld [vmem:[%s8044 + $0x80] sm:$0xff]
    %v8062 = vld [vmem:[%s8044 + $0x88] sm:$0xff]
    %v8063 = vld [vmem:[%s8044 + $0x90] sm:$0xff]
    %v8064 = vld [vmem:[%s8044 + $0x98] sm:$0xff]
    %v8065 = vld [vmem:[%s8044 + $0xa0] sm:$0xff]
    %v8066 = vld [vmem:[%s8044 + $0xa8] sm:$0xff]
    %v8067 = vld [vmem:[%s8044 + $0xb0] sm:$0xff]
    %v8068 = vld [vmem:[%s8044 + $0xb8] sm:$0xff]
    %v8069 = vld [vmem:[%s8044 + $0xc0] sm:$0xff]
    %v8070 = vld [vmem:[%s8044 + $0xc8] sm:$0xff]
    %v8071 = vld [vmem:[%s8044 + $0xd0] sm:$0xff]
    %v8072 = vld [vmem:[%s8044 + $0xd8] sm:$0xff]
    %v8073 = vld [vmem:[%s8044 + $0xe0] sm:$0xff]
    %v8074 = vld [vmem:[%s8044 + $0xe8] sm:$0xff]
    %v8075 = vld [vmem:[%s8044 + $0xf0] sm:$0xff]
    %v8076 = vld [vmem:[%s8044 + $0xf8] sm:$0xff]
    %v8077 = vld [vmem:[%s8044 + $0x100] sm:$0xff]
    %v8078 = vld [vmem:[%s8044 + $0x108] sm:$0xff]
    %v8079 = vld [vmem:[%s8044 + $0x110] sm:$0xff]
    %v8080 = vld [vmem:[%s8044 + $0x118] sm:$0xff]
    %v8081 = vld [vmem:[%s8044 + $0x120] sm:$0xff]
    %v8082 = vld [vmem:[%s8044 + $0x128] sm:$0xff]
    %v8083 = vld [vmem:[%s8044 + $0x130] sm:$0xff]
    %v8084 = vld [vmem:[%s8044 + $0x138] sm:$0xff]
    %v8085 = vld [vmem:[%s8044 + $0x140] sm:$0xff]
    %v8086 = vld [vmem:[%s8044 + $0x148] sm:$0xff]
    %v8087 = vld [vmem:[%s8044 + $0x150] sm:$0xff]
    %v8088 = vld [vmem:[%s8044 + $0x158] sm:$0xff]
    %v8089 = vld [vmem:[%s8044 + $0x160] sm:$0xff]
    %v8090 = vld [vmem:[%s8044 + $0x168] sm:$0xff]
    %v8091 = vld [vmem:[%s8044 + $0x170] sm:$0xff]
    %v8092 = vld [vmem:[%s8044 + $0x178] sm:$0xff]
    %v8093 = vld [vmem:[%s8044 + $0x180] sm:$0xff]
    %v8094 = vld [vmem:[%s8044 + $0x188] sm:$0xff]
    %v8095 = vld [vmem:[%s8044 + $0x190] sm:$0xff]
    %v8096 = vld [vmem:[%s8044 + $0x198] sm:$0xff]
    %v8097 = vld [vmem:[%s8044 + $0x1a0] sm:$0xff]
    %v8098 = vld [vmem:[%s8044 + $0x1a8] sm:$0xff]
    %v8099 = vld [vmem:[%s8044 + $0x1b0] sm:$0xff]
    %v8100 = vld [vmem:[%s8044 + $0x1b8] sm:$0xff]
    %v8101 = vld [vmem:[%s8044 + $0x1c0] sm:$0xff]
    %v8102 = vld [vmem:[%s8044 + $0x1c8] sm:$0xff]
    %v8103 = vld [vmem:[%s8044 + $0x1d0] sm:$0xff]
    %v8104 = vld [vmem:[%s8044 + $0x1d8] sm:$0xff]
    %v8105 = vld [vmem:[%s8044 + $0x1e0] sm:$0xff]
    %v8106 = vld [vmem:[%s8044 + $0x1e8] sm:$0xff]
    %v8107 = vld [vmem:[%s8044 + $0x1f0] sm:$0xff]
    %v8108 = vld [vmem:[%s8044 + $0x1f8] sm:$0xff]
    %v8109 = vld [vmem:[%s8044 + $0x200] sm:$0xff]
    %v8110 = vld [vmem:[%s8044 + $0x208] sm:$0xff]
    %v8111 = vld [vmem:[%s8044 + $0x210] sm:$0xff]
    %v8112 = vld [vmem:[%s8044 + $0x218] sm:$0xff]
    %v8113 = vld [vmem:[%s8044 + $0x220] sm:$0xff]
    %v8114 = vld [vmem:[%s8044 + $0x228] sm:$0xff]
    %v8115 = vld [vmem:[%s8044 + $0x230] sm:$0xff]
    %v8116 = vld [vmem:[%s8044 + $0x238] sm:$0xff]
    %v8117 = vld [vmem:[%s8044 + $0x240] sm:$0xff]
    %v8118 = vld [vmem:[%s8044 + $0x248] sm:$0xff]
    %v8119 = vld [vmem:[%s8044 + $0x250] sm:$0xff]
    %v8120 = vld [vmem:[%s8044 + $0x258] sm:$0xff]
    %v8121 = vld [vmem:[%s8044 + $0x260] sm:$0xff]
    %v8122 = vld [vmem:[%s8044 + $0x268] sm:$0xff]
    %v8123 = vld [vmem:[%s8044 + $0x270] sm:$0xff]
    %v8124 = vld [vmem:[%s8044 + $0x278] sm:$0xff]
    %v8125 = vld [vmem:[%s8044 + $0x280] sm:$0xff]
    %v8126 = vld [vmem:[%s8044 + $0x288] sm:$0xff]
    %v8127 = vld [vmem:[%s8044 + $0x290] sm:$0xff]
    %v8128 = vld [vmem:[%s8044 + $0x298] sm:$0xff]
    %v8129 = vld [vmem:[%s8044 + $0x2a0] sm:$0xff]
    %v8130 = vld [vmem:[%s8044 + $0x2a8] sm:$0xff]
    %v8131 = vld [vmem:[%s8044 + $0x2b0] sm:$0xff]
    %v8132 = vld [vmem:[%s8044 + $0x2b8] sm:$0xff]
    %v8133 = vld [vmem:[%s8044 + $0x2c0] sm:$0xff]
    %v8134 = vld [vmem:[%s8044 + $0x2c8] sm:$0xff]
    %v8135 = vld [vmem:[%s8044 + $0x2d0] sm:$0xff]
    %v8136 = vld [vmem:[%s8044 + $0x2d8] sm:$0xff]
    %v8137 = vld [vmem:[%s8044 + $0x2e0] sm:$0xff]
    %v8138 = vld [vmem:[%s8044 + $0x2e8] sm:$0xff]
    %v8139 = vld [vmem:[%s8044 + $0x2f0] sm:$0xff]
    %v8140 = vld [vmem:[%s8044 + $0x2f8] sm:$0xff]
    %v8141 = vld [vmem:[%s8044 + $0x300] sm:$0xff]
    %v8142 = vld [vmem:[%s8044 + $0x308] sm:$0xff]
    %v8143 = vld [vmem:[%s8044 + $0x310] sm:$0xff]
    %v8144 = vld [vmem:[%s8044 + $0x318] sm:$0xff]
    %v8145 = vld [vmem:[%s8044 + $0x320] sm:$0xff]
    %v8146 = vld [vmem:[%s8044 + $0x328] sm:$0xff]
    %v8147 = vld [vmem:[%s8044 + $0x330] sm:$0xff]
    %v8148 = vld [vmem:[%s8044 + $0x338] sm:$0xff]
    %v8149 = vld [vmem:[%s8044 + $0x340] sm:$0xff]
    %v8150 = vld [vmem:[%s8044 + $0x348] sm:$0xff]
    %v8151 = vld [vmem:[%s8044 + $0x350] sm:$0xff]
    %v8152 = vld [vmem:[%s8044 + $0x358] sm:$0xff]
    %v8153 = vld [vmem:[%s8044 + $0x360] sm:$0xff]
    %v8154 = vld [vmem:[%s8044 + $0x368] sm:$0xff]
    %v8155 = vld [vmem:[%s8044 + $0x370] sm:$0xff]
    %v8156 = vld [vmem:[%s8044 + $0x378] sm:$0xff]
    %v8157 = vld [vmem:[%s8044 + $0x380] sm:$0xff]
    %v8158 = vld [vmem:[%s8044 + $0x388] sm:$0xff]
    %v8159 = vld [vmem:[%s8044 + $0x390] sm:$0xff]
    %v8160 = vld [vmem:[%s8044 + $0x398] sm:$0xff]
    %v8161 = vld [vmem:[%s8044 + $0x3a0] sm:$0xff]
    %v8162 = vld [vmem:[%s8044 + $0x3a8] sm:$0xff]
    %v8163 = vld [vmem:[%s8044 + $0x3b0] sm:$0xff]
    %v8164 = vld [vmem:[%s8044 + $0x3b8] sm:$0xff]
    %v8165 = vld [vmem:[%s8044 + $0x3c0] sm:$0xff]
    %v8166 = vld [vmem:[%s8044 + $0x3c8] sm:$0xff]
    %v8167 = vld [vmem:[%s8044 + $0x3d0] sm:$0xff]
    %v8168 = vld [vmem:[%s8044 + $0x3d8] sm:$0xff]
    %v8169 = vld [vmem:[%s8044 + $0x3e0] sm:$0xff]
    %v8170 = vld [vmem:[%s8044 + $0x3e8] sm:$0xff]
    %v8171 = vld [vmem:[%s8044 + $0x3f0] sm:$0xff]
    %v8172 = vld [vmem:[%s8044 + $0x3f8] sm:$0xff]
    %8173 = vmatprep.subr.bf16.mxu0 %v8046
    %8174 = vmatpush1.bf16.msra.mxu0 %v8045
    %8175 = vmatprep.subr.bf16.mxu0 %v8050
    %8176 = vmatpush1.bf16.msra.mxu0 %v8049
    %8177 = vmatprep.subr.bf16.mxu0 %v8054
    %8178 = vmatpush1.bf16.msra.mxu0 %v8053
    %8179 = vmatprep.subr.bf16.mxu0 %v8058
    %8180 = vmatpush1.bf16.msra.mxu0 %v8057
    %8181 = vmatprep.subr.bf16.mxu0 %v8062
    %8182 = vmatpush1.bf16.msra.mxu0 %v8061
    %8183 = vmatprep.subr.bf16.mxu0 %v8066
    %8184 = vmatpush1.bf16.msra.mxu0 %v8065
    %8185 = vmatprep.subr.bf16.mxu0 %v8070
    %8186 = vmatpush1.bf16.msra.mxu0 %v8069
    %8187 = vmatprep.subr.bf16.mxu0 %v8074
    %8188 = vmatpush1.bf16.msra.mxu0 %v8073
    %8189 = vmatprep.subr.bf16.mxu0 %v8078
    %8190 = vmatpush1.bf16.msra.mxu0 %v8077
    %8191 = vmatprep.subr.bf16.mxu0 %v8082
    %8192 = vmatpush1.bf16.msra.mxu0 %v8081
    %8193 = vmatprep.subr.bf16.mxu0 %v8086
    %8194 = vmatpush1.bf16.msra.mxu0 %v8085
    %8195 = vmatprep.subr.bf16.mxu0 %v8090
    %8196 = vmatpush1.bf16.msra.mxu0 %v8089
    %8197 = vmatprep.subr.bf16.mxu0 %v8094
    %8198 = vmatpush1.bf16.msra.mxu0 %v8093
    %8199 = vmatprep.subr.bf16.mxu0 %v8098
    %8200 = vmatpush1.bf16.msra.mxu0 %v8097
    %8201 = vmatprep.subr.bf16.mxu0 %v8102
    %8202 = vmatpush1.bf16.msra.mxu0 %v8101
    %8203 = vmatprep.subr.bf16.mxu0 %v8106
    %8204 = vmatpush1.bf16.msra.mxu0 %v8105
    %8205 = vmatprep.mubr.bf16.mxu0 %v8017
    %8206 = vmatmul.mubr.bf16.gmra.mrb[0].mxu0 %v8014
    %v8207 = vpop.f32.mrb[0].mxu0
    %v8208 = vadd.f32 0.0, %v8207
    %v8209 = vpop.f32.mrb[0].mxu0
    %v8210 = vadd.f32 0.0, %v8209
    %v8211 = vpop.f32.mrb[0].mxu0
    %v8212 = vadd.f32 0.0, %v8211
    %v8213 = vpop.f32.mrb[0].mxu0
    %v8214 = vadd.f32 0.0, %v8213
    %8215 = vmatprep.mubr.bf16.mxu0 %v8029
    %8216 = vmatmul.mubr.bf16.gmra.mrb[0].mxu0 %v8026
    %v8217 = vpop.f32.mrb[0].mxu0
    %v8218 = vadd.f32 0.0, %v8217
    %v8219 = vpop.f32.mrb[0].mxu0
    %v8220 = vadd.f32 0.0, %v8219
    %v8221 = vpop.f32.mrb[0].mxu0
    %v8222 = vadd.f32 0.0, %v8221
    %v8223 = vpop.f32.mrb[0].mxu0
    %v8224 = vadd.f32 0.0, %v8223
    %8225 = vdwg.mxu0
    %8226 = vmatprep.subr.bf16.mxu0 %v8110
    %8227 = vmatpush1.bf16.msra.mxu0 %v8109
    %8228 = vmatprep.subr.bf16.mxu0 %v8114
    %8229 = vmatpush1.bf16.msra.mxu0 %v8113
    %8230 = vmatprep.subr.bf16.mxu0 %v8118
    %8231 = vmatpush1.bf16.msra.mxu0 %v8117
    %8232 = vmatprep.subr.bf16.mxu0 %v8122
    %8233 = vmatpush1.bf16.msra.mxu0 %v8121
    %8234 = vmatprep.subr.bf16.mxu0 %v8126
    %8235 = vmatpush1.bf16.msra.mxu0 %v8125
    %8236 = vmatprep.subr.bf16.mxu0 %v8130
    %8237 = vmatpush1.bf16.msra.mxu0 %v8129
    %8238 = vmatprep.subr.bf16.mxu0 %v8134
    %8239 = vmatpush1.bf16.msra.mxu0 %v8133
    %8240 = vmatprep.subr.bf16.mxu0 %v8138
    %8241 = vmatpush1.bf16.msra.mxu0 %v8137
    %8242 = vmatprep.subr.bf16.mxu0 %v8142
    %8243 = vmatpush1.bf16.msra.mxu0 %v8141
    %8244 = vmatprep.subr.bf16.mxu0 %v8146
    %8245 = vmatpush1.bf16.msra.mxu0 %v8145
    %8246 = vmatprep.subr.bf16.mxu0 %v8150
    %8247 = vmatpush1.bf16.msra.mxu0 %v8149
    %8248 = vmatprep.subr.bf16.mxu0 %v8154
    %8249 = vmatpush1.bf16.msra.mxu0 %v8153
    %8250 = vmatprep.subr.bf16.mxu0 %v8158
    %8251 = vmatpush1.bf16.msra.mxu0 %v8157
    %8252 = vmatprep.subr.bf16.mxu0 %v8162
    %8253 = vmatpush1.bf16.msra.mxu0 %v8161
    %8254 = vmatprep.subr.bf16.mxu0 %v8166
    %8255 = vmatpush1.bf16.msra.mxu0 %v8165
    %8256 = vmatprep.subr.bf16.mxu0 %v8170
    %8257 = vmatpush1.bf16.msra.mxu0 %v8169
    %8258 = vmatprep.mubr.bf16.mxu0 %v8023
    %8259 = vmatmul.mubr.bf16.gmra.mrb[0].mxu0 %v8020
    %v8260 = vpop.f32.mrb[0].mxu0
    %v8261 = vadd.f32 %v8208, %v8260
    %v8262 = vpop.f32.mrb[0].mxu0
    %v8263 = vadd.f32 %v8210, %v8262
    %v8264 = vpop.f32.mrb[0].mxu0
    %v8265 = vadd.f32 %v8212, %v8264
    %v8266 = vpop.f32.mrb[0].mxu0
    %v8267 = vadd.f32 %v8214, %v8266
    %8268 = vmatprep.mubr.bf16.mxu0 %v8035
    %8269 = vmatmul.mubr.bf16.gmra.mrb[0].mxu0 %v8032
    %v8270 = vpop.f32.mrb[0].mxu0
    %v8271 = vadd.f32 %v8218, %v8270
    %v8272 = vpop.f32.mrb[0].mxu0
    %v8273 = vadd.f32 %v8220, %v8272
    %v8274 = vpop.f32.mrb[0].mxu0
    %v8275 = vadd.f32 %v8222, %v8274
    %v8276 = vpop.f32.mrb[0].mxu0
    %v8277 = vadd.f32 %v8224, %v8276
    %8278 = vdwg.mxu0
    %8279 = vmatprep.subr.bf16.mxu0 %v8048
    %8280 = vmatpush1.bf16.msra.mxu0 %v8047
    %8281 = vmatprep.subr.bf16.mxu0 %v8052
    %8282 = vmatpush1.bf16.msra.mxu0 %v8051
    %8283 = vmatprep.subr.bf16.mxu0 %v8056
    %8284 = vmatpush1.bf16.msra.mxu0 %v8055
    %8285 = vmatprep.subr.bf16.mxu0 %v8060
    %8286 = vmatpush1.bf16.msra.mxu0 %v8059
    %8287 = vmatprep.subr.bf16.mxu0 %v8064
    %8288 = vmatpush1.bf16.msra.mxu0 %v8063
    %8289 = vmatprep.subr.bf16.mxu0 %v8068
    %8290 = vmatpush1.bf16.msra.mxu0 %v8067
    %8291 = vmatprep.subr.bf16.mxu0 %v8072
    %8292 = vmatpush1.bf16.msra.mxu0 %v8071
    %8293 = vmatprep.subr.bf16.mxu0 %v8076
    %8294 = vmatpush1.bf16.msra.mxu0 %v8075
    %8295 = vmatprep.subr.bf16.mxu0 %v8080
    %8296 = vmatpush1.bf16.msra.mxu0 %v8079
    %8297 = vmatprep.subr.bf16.mxu0 %v8084
    %8298 = vmatpush1.bf16.msra.mxu0 %v8083
    %8299 = vmatprep.subr.bf16.mxu0 %v8088
    %8300 = vmatpush1.bf16.msra.mxu0 %v8087
    %8301 = vmatprep.subr.bf16.mxu0 %v8092
    %8302 = vmatpush1.bf16.msra.mxu0 %v8091
    %8303 = vmatprep.subr.bf16.mxu0 %v8096
    %8304 = vmatpush1.bf16.msra.mxu0 %v8095
    %8305 = vmatprep.subr.bf16.mxu0 %v8100
    %8306 = vmatpush1.bf16.msra.mxu0 %v8099
    %8307 = vmatprep.subr.bf16.mxu0 %v8104
    %8308 = vmatpush1.bf16.msra.mxu0 %v8103
    %8309 = vmatprep.subr.bf16.mxu0 %v8108
    %8310 = vmatpush1.bf16.msra.mxu0 %v8107
    %8311 = vmatprep.mubr.bf16.mxu0 %v8017
    %8312 = vmatmul.mubr.bf16.gmra.mrb[0].mxu0 %v8014
    %v8313 = vpop.f32.mrb[0].mxu0
    %v8314 = vadd.f32 0.0, %v8313
    %v8315 = vpop.f32.mrb[0].mxu0
    %v8316 = vadd.f32 0.0, %v8315
    %v8317 = vpop.f32.mrb[0].mxu0
    %v8318 = vadd.f32 0.0, %v8317
    %v8319 = vpop.f32.mrb[0].mxu0
    %v8320 = vadd.f32 0.0, %v8319
    %8321 = vmatprep.mubr.bf16.mxu0 %v8029
    %8322 = vmatmul.mubr.bf16.gmra.mrb[0].mxu0 %v8026
    %v8323 = vpop.f32.mrb[0].mxu0
    %v8324 = vadd.f32 0.0, %v8323
    %v8325 = vpop.f32.mrb[0].mxu0
    %v8326 = vadd.f32 0.0, %v8325
    %v8327 = vpop.f32.mrb[0].mxu0
    %v8328 = vadd.f32 0.0, %v8327
    %v8329 = vpop.f32.mrb[0].mxu0
    %v8330 = vadd.f32 0.0, %v8329
    %8331 = vdwg.mxu0
    %8332 = vmatprep.subr.bf16.mxu0 %v8112
    %8333 = vmatpush1.bf16.msra.mxu0 %v8111
    %8334 = vmatprep.subr.bf16.mxu0 %v8116
    %8335 = vmatpush1.bf16.msra.mxu0 %v8115
    %8336 = vmatprep.subr.bf16.mxu0 %v8120
    %8337 = vmatpush1.bf16.msra.mxu0 %v8119
    %8338 = vmatprep.subr.bf16.mxu0 %v8124
    %8339 = vmatpush1.bf16.msra.mxu0 %v8123
    %8340 = vmatprep.subr.bf16.mxu0 %v8128
    %8341 = vmatpush1.bf16.msra.mxu0 %v8127
    %8342 = vmatprep.subr.bf16.mxu0 %v8132
    %8343 = vmatpush1.bf16.msra.mxu0 %v8131
    %8344 = vmatprep.subr.bf16.mxu0 %v8136
    %8345 = vmatpush1.bf16.msra.mxu0 %v8135
    %8346 = vmatprep.subr.bf16.mxu0 %v8140
    %8347 = vmatpush1.bf16.msra.mxu0 %v8139
    %8348 = vmatprep.subr.bf16.mxu0 %v8144
    %8349 = vmatpush1.bf16.msra.mxu0 %v8143
    %8350 = vmatprep.subr.bf16.mxu0 %v8148
    %8351 = vmatpush1.bf16.msra.mxu0 %v8147
    %8352 = vmatprep.subr.bf16.mxu0 %v8152
    %8353 = vmatpush1.bf16.msra.mxu0 %v8151
    %8354 = vmatprep.subr.bf16.mxu0 %v8156
    %8355 = vmatpush1.bf16.msra.mxu0 %v8155
    %8356 = vmatprep.subr.bf16.mxu0 %v8160
    %8357 = vmatpush1.bf16.msra.mxu0 %v8159
    %8358 = vmatprep.subr.bf16.mxu0 %v8164
    %8359 = vmatpush1.bf16.msra.mxu0 %v8163
    %8360 = vmatprep.subr.bf16.mxu0 %v8168
    %8361 = vmatpush1.bf16.msra.mxu0 %v8167
    %8362 = vmatprep.subr.bf16.mxu0 %v8172
    %8363 = vmatpush1.bf16.msra.mxu0 %v8171
    %8364 = vmatprep.mubr.bf16.mxu0 %v8023
    %8365 = vmatmul.mubr.bf16.gmra.mrb[0].mxu0 %v8020
    %v8366 = vpop.f32.mrb[0].mxu0
    %v8367 = vadd.f32 %v8314, %v8366
    %v8368 = vpop.f32.mrb[0].mxu0
    %v8369 = vadd.f32 %v8316, %v8368
    %v8370 = vpop.f32.mrb[0].mxu0
    %v8371 = vadd.f32 %v8318, %v8370
    %v8372 = vpop.f32.mrb[0].mxu0
    %v8373 = vadd.f32 %v8320, %v8372
    %8374 = vmatprep.mubr.bf16.mxu0 %v8035
    %8375 = vmatmul.mubr.bf16.gmra.mrb[0].mxu0 %v8032
    %v8376 = vpop.f32.mrb[0].mxu0
    %v8377 = vadd.f32 %v8324, %v8376
    %v8378 = vpop.f32.mrb[0].mxu0
    %v8379 = vadd.f32 %v8326, %v8378
    %v8380 = vpop.f32.mrb[0].mxu0
    %v8381 = vadd.f32 %v8328, %v8380
    %v8382 = vpop.f32.mrb[0].mxu0
    %v8383 = vadd.f32 %v8330, %v8382
    %8384 = vdwg.mxu0
    %v8385 = vadd.f32 %v7972, %v8261
    %v8386 = vadd.f32 %v7973, %v8263
    %v8387 = vadd.f32 %v7974, %v8367
    %v8388 = vadd.f32 %v7975, %v8369
    %v8389 = vadd.f32 %v7976, %v8265
    %v8390 = vadd.f32 %v7977, %v8267
    %v8391 = vadd.f32 %v7978, %v8371
    %v8392 = vadd.f32 %v7979, %v8373
    %v8393 = vadd.f32 %v7980, %v8271
    %v8394 = vadd.f32 %v7981, %v8273
    %v8395 = vadd.f32 %v7982, %v8377
    %v8396 = vadd.f32 %v7983, %v8379
    %v8397 = vadd.f32 %v7984, %v8275
    %v8398 = vadd.f32 %v7985, %v8277
    %v8399 = vadd.f32 %v7986, %v8381
    %v8400 = vadd.f32 %v7987, %v8383
    %s8401 = scalar_lea.vmem [#allocation12], 3
    %v8402 = vld [vmem:[%s8401] ss:$4 sm:$0xf]
    %v8404 = vlaneseq
    %v8405 = vshrl.u32 %v8404, 7
    %v8406 = vsub.s32 0, %v8405
    %v8407 = vrot.slane %v8402, %v8406
    %v8408 = vlaneseq
    %v8409 = vshrl.u32 %v8408, 7
    %v8410 = vsub.s32 1, %v8409
    %v8411 = vrot.slane %v8402, %v8410
    %v8412 = vlaneseq
    %v8413 = vshrl.u32 %v8412, 7
    %v8414 = vsub.s32 2, %v8413
    %v8415 = vrot.slane %v8402, %v8414
    %v8416 = vlaneseq
    %v8417 = vshrl.u32 %v8416, 7
    %v8418 = vsub.s32 3, %v8417
    %v8419 = vrot.slane %v8402, %v8418
    %v8424 = vadd.f32 %v8385, %v8407
    %v8425 = vadd.f32 %v8386, %v8411
    %v8426 = vadd.f32 %v8387, %v8415
    %v8427 = vadd.f32 %v8388, %v8419
    %v8428 = vadd.f32 %v8389, %v8407
    %v8429 = vadd.f32 %v8390, %v8411
    %v8430 = vadd.f32 %v8391, %v8415
    %v8431 = vadd.f32 %v8392, %v8419
    %v8432 = vadd.f32 %v8393, %v8407
    %v8433 = vadd.f32 %v8394, %v8411
    %v8434 = vadd.f32 %v8395, %v8415
    %v8435 = vadd.f32 %v8396, %v8419
    %v8436 = vadd.f32 %v8397, %v8407
    %v8437 = vadd.f32 %v8398, %v8411
    %v8438 = vadd.f32 %v8399, %v8415
    %v8439 = vadd.f32 %v8400, %v8419
    %v8440 = vtanh.pop %v8424
    %v8441 = vtanh.pop %v8425
    %v8442 = vtanh.pop %v8426
    %v8443 = vtanh.pop %v8427
    %v8444 = vtanh.pop %v8428
    %v8445 = vtanh.pop %v8429
    %v8446 = vtanh.pop %v8430
    %v8447 = vtanh.pop %v8431
    %v8448 = vtanh.pop %v8432
    %v8449 = vtanh.pop %v8433
    %v8450 = vtanh.pop %v8434
    %v8451 = vtanh.pop %v8435
    %v8452 = vtanh.pop %v8436
    %v8453 = vtanh.pop %v8437
    %v8454 = vtanh.pop %v8438
    %v8455 = vtanh.pop %v8439
    %v8456 = vpack.c.bf16 %v8444, %v8440
    %v8457 = vpack.c.bf16 %v8445, %v8441
    %v8458 = vpack.c.bf16 %v8446, %v8442
    %v8459 = vpack.c.bf16 %v8447, %v8443
    %v8460 = vpack.c.bf16 %v8452, %v8448
    %v8461 = vpack.c.bf16 %v8453, %v8449
    %v8462 = vpack.c.bf16 %v8454, %v8450
    %v8463 = vpack.c.bf16 %v8455, %v8451
    %8464 = vst [vmem:[#allocation3 + $0x20] sm:$0xff] %v8456
    %8465 = vst [vmem:[#allocation3 + $0x28] sm:$0xff] %v8457
    %8466 = vst [vmem:[#allocation3 + $0x30] sm:$0xff] %v8458
    %8467 = vst [vmem:[#allocation3 + $0x38] sm:$0xff] %v8459
    %8468 = vst [vmem:[#allocation3 + $0x80] sm:$0xff] %v8460
    %8469 = vst [vmem:[#allocation3 + $0x88] sm:$0xff] %v8461
    %8470 = vst [vmem:[#allocation3 + $0x90] sm:$0xff] %v8462
    %8471 = vst [vmem:[#allocation3 + $0x98] sm:$0xff] %v8463
    %v8472 = vld [vmem:[#allocation3] sm:$0x80]
    %v8473 = vld [vmem:[#allocation3 + $0x8] sm:$0x80]
    %v8474 = vld [vmem:[#allocation3 + $0x10] sm:$0x80]
    %v8475 = vld [vmem:[#allocation3 + $0x18] sm:$0x80]
    %v8476 = vld [vmem:[#allocation3 + $0x20] sm:$0x7f]
    %v8477 = vld [vmem:[#allocation3 + $0x28] sm:$0x7f]
    %v8478 = vld [vmem:[#allocation3 + $0x30] sm:$0x7f]
    %v8479 = vld [vmem:[#allocation3 + $0x38] sm:$0x7f]
    %v8480 = vld [vmem:[#allocation3 + $0x60] sm:$0x80]
    %v8481 = vld [vmem:[#allocation3 + $0x68] sm:$0x80]
    %v8482 = vld [vmem:[#allocation3 + $0x70] sm:$0x80]
    %v8483 = vld [vmem:[#allocation3 + $0x78] sm:$0x80]
    %v8484 = vld [vmem:[#allocation3 + $0x80] sm:$0x7f]
    %v8485 = vld [vmem:[#allocation3 + $0x88] sm:$0x7f]
    %v8486 = vld [vmem:[#allocation3 + $0x90] sm:$0x7f]
    %v8487 = vld [vmem:[#allocation3 + $0x98] sm:$0x7f]
    %v8504 = vrot.slane %v8472, 7
    %v8505 = vrot.slane %v8476, 7
    %v8506 = vsel %vm242, %v8504, %v8505
    %v8507 = vrot.slane %v8473, 7
    %v8508 = vrot.slane %v8477, 7
    %v8509 = vsel %vm242, %v8507, %v8508
    %v8510 = vrot.slane %v8474, 7
    %v8511 = vrot.slane %v8478, 7
    %v8512 = vsel %vm242, %v8510, %v8511
    %v8513 = vrot.slane %v8475, 7
    %v8514 = vrot.slane %v8479, 7
    %v8515 = vsel %vm242, %v8513, %v8514
    %v8516 = vrot.slane %v8480, 7
    %v8517 = vrot.slane %v8484, 7
    %v8518 = vsel %vm242, %v8516, %v8517
    %v8519 = vrot.slane %v8481, 7
    %v8520 = vrot.slane %v8485, 7
    %v8521 = vsel %vm242, %v8519, %v8520
    %v8522 = vrot.slane %v8482, 7
    %v8523 = vrot.slane %v8486, 7
    %v8524 = vsel %vm242, %v8522, %v8523
    %v8525 = vrot.slane %v8483, 7
    %v8526 = vrot.slane %v8487, 7
    %v8527 = vsel %vm242, %v8525, %v8526
    %v8536 = vld [vmem:[#allocation11] sm:$0xf]
    %v8537 = vld [vmem:[#allocation11 + $0x4] sm:$0xf]
    %v8538 = vld [vmem:[#allocation11 + $0x8] sm:$0xf]
    %v8539 = vld [vmem:[#allocation11 + $0xc] sm:$0xf]
    %v8540 = vld [vmem:[#allocation11 + $0x10] sm:$0xf]
    %v8541 = vld [vmem:[#allocation11 + $0x14] sm:$0xf]
    %v8542 = vld [vmem:[#allocation11 + $0x18] sm:$0xf]
    %v8543 = vld [vmem:[#allocation11 + $0x1c] sm:$0xf]
    %v8544 = vld [vmem:[#allocation11 + $0x20] sm:$0xf]
    %v8545 = vld [vmem:[#allocation11 + $0x24] sm:$0xf]
    %v8546 = vld [vmem:[#allocation11 + $0x28] sm:$0xf]
    %v8547 = vld [vmem:[#allocation11 + $0x2c] sm:$0xf]
    %v8548 = vld [vmem:[#allocation11 + $0x30] sm:$0xf]
    %v8549 = vld [vmem:[#allocation11 + $0x34] sm:$0xf]
    %v8550 = vld [vmem:[#allocation11 + $0x38] sm:$0xf]
    %v8551 = vld [vmem:[#allocation11 + $0x3c] sm:$0xf]
    %v8552 = vld [vmem:[#allocation11 + $0x40] sm:$0xf]
    %v8553 = vld [vmem:[#allocation11 + $0x44] sm:$0xf]
    %v8554 = vld [vmem:[#allocation11 + $0x48] sm:$0xf]
    %v8555 = vld [vmem:[#allocation11 + $0x4c] sm:$0xf]
    %v8556 = vld [vmem:[#allocation11 + $0x50] sm:$0xf]
    %v8557 = vld [vmem:[#allocation11 + $0x54] sm:$0xf]
    %v8558 = vld [vmem:[#allocation11 + $0x58] sm:$0xf]
    %v8559 = vld [vmem:[#allocation11 + $0x5c] sm:$0xf]
    %v8560 = vld [vmem:[#allocation11 + $0x60] sm:$0xf]
    %v8561 = vld [vmem:[#allocation11 + $0x64] sm:$0xf]
    %v8562 = vld [vmem:[#allocation11 + $0x68] sm:$0xf]
    %v8563 = vld [vmem:[#allocation11 + $0x6c] sm:$0xf]
    %v8564 = vld [vmem:[#allocation11 + $0x70] sm:$0xf]
    %v8565 = vld [vmem:[#allocation11 + $0x74] sm:$0xf]
    %v8566 = vld [vmem:[#allocation11 + $0x78] sm:$0xf]
    %v8567 = vld [vmem:[#allocation11 + $0x7c] sm:$0xf]
    %v8568 = vld [vmem:[#allocation11 + $0x80] sm:$0xf]
    %v8569 = vld [vmem:[#allocation11 + $0x84] sm:$0xf]
    %v8570 = vld [vmem:[#allocation11 + $0x88] sm:$0xf]
    %v8571 = vld [vmem:[#allocation11 + $0x8c] sm:$0xf]
    %v8572 = vld [vmem:[#allocation11 + $0x90] sm:$0xf]
    %v8573 = vld [vmem:[#allocation11 + $0x94] sm:$0xf]
    %v8574 = vld [vmem:[#allocation11 + $0x98] sm:$0xf]
    %v8575 = vld [vmem:[#allocation11 + $0x9c] sm:$0xf]
    %v8576 = vld [vmem:[#allocation11 + $0xa0] sm:$0xf]
    %v8577 = vld [vmem:[#allocation11 + $0xa4] sm:$0xf]
    %v8578 = vld [vmem:[#allocation11 + $0xa8] sm:$0xf]
    %v8579 = vld [vmem:[#allocation11 + $0xac] sm:$0xf]
    %v8580 = vld [vmem:[#allocation11 + $0xb0] sm:$0xf]
    %v8581 = vld [vmem:[#allocation11 + $0xb4] sm:$0xf]
    %v8582 = vld [vmem:[#allocation11 + $0xb8] sm:$0xf]
    %v8583 = vld [vmem:[#allocation11 + $0xbc] sm:$0xf]
    %v8584 = vld [vmem:[#allocation11 + $0xc0] sm:$0xf]
    %v8585 = vld [vmem:[#allocation11 + $0xc4] sm:$0xf]
    %v8586 = vld [vmem:[#allocation11 + $0xc8] sm:$0xf]
    %v8587 = vld [vmem:[#allocation11 + $0xcc] sm:$0xf]
    %v8588 = vld [vmem:[#allocation11 + $0xd0] sm:$0xf]
    %v8589 = vld [vmem:[#allocation11 + $0xd4] sm:$0xf]
    %v8590 = vld [vmem:[#allocation11 + $0xd8] sm:$0xf]
    %v8591 = vld [vmem:[#allocation11 + $0xdc] sm:$0xf]
    %v8592 = vld [vmem:[#allocation11 + $0xe0] sm:$0xf]
    %v8593 = vld [vmem:[#allocation11 + $0xe4] sm:$0xf]
    %v8594 = vld [vmem:[#allocation11 + $0xe8] sm:$0xf]
    %v8595 = vld [vmem:[#allocation11 + $0xec] sm:$0xf]
    %v8596 = vld [vmem:[#allocation11 + $0xf0] sm:$0xf]
    %v8597 = vld [vmem:[#allocation11 + $0xf4] sm:$0xf]
    %v8598 = vld [vmem:[#allocation11 + $0xf8] sm:$0xf]
    %v8599 = vld [vmem:[#allocation11 + $0xfc] sm:$0xf]
    %v8600 = vld [vmem:[#allocation3 + $0x20] sm:$0xff]
    %v8601 = vld [vmem:[#allocation3 + $0x28] sm:$0xff]
    %v8602 = vld [vmem:[#allocation3 + $0x30] sm:$0xff]
    %v8603 = vld [vmem:[#allocation3 + $0x38] sm:$0xff]
    %v8604 = vld [vmem:[#allocation3 + $0x80] sm:$0xff]
    %v8605 = vld [vmem:[#allocation3 + $0x88] sm:$0xff]
    %v8606 = vld [vmem:[#allocation3 + $0x90] sm:$0xff]
    %v8607 = vld [vmem:[#allocation3 + $0x98] sm:$0xff]
    %v8609 = vshrl.u32 %v8472, 16
    %v8611 = vrot.slane %v8609, 7
    %v8613 = vshrl.u32 %v8600, 16
    %v8615 = vrot.slane %v8613, 7
    %v8616 = vshll.u32 %v8600, 16
    %v8618 = vor.u32 %v8615, %v8616
    %v8619 = vsel %vm285, %v8611, %v8618
    %v8621 = vshrl.u32 %v8473, 16
    %v8623 = vrot.slane %v8621, 7
    %v8625 = vshrl.u32 %v8601, 16
    %v8627 = vrot.slane %v8625, 7
    %v8628 = vshll.u32 %v8601, 16
    %v8630 = vor.u32 %v8627, %v8628
    %v8631 = vsel %vm285, %v8623, %v8630
    %v8633 = vshrl.u32 %v8474, 16
    %v8635 = vrot.slane %v8633, 7
    %v8637 = vshrl.u32 %v8602, 16
    %v8639 = vrot.slane %v8637, 7
    %v8640 = vshll.u32 %v8602, 16
    %v8642 = vor.u32 %v8639, %v8640
    %v8643 = vsel %vm285, %v8635, %v8642
    %v8645 = vshrl.u32 %v8475, 16
    %v8647 = vrot.slane %v8645, 7
    %v8649 = vshrl.u32 %v8603, 16
    %v8651 = vrot.slane %v8649, 7
    %v8652 = vshll.u32 %v8603, 16
    %v8654 = vor.u32 %v8651, %v8652
    %v8655 = vsel %vm285, %v8647, %v8654
    %v8657 = vshrl.u32 %v8480, 16
    %v8659 = vrot.slane %v8657, 7
    %v8661 = vshrl.u32 %v8604, 16
    %v8663 = vrot.slane %v8661, 7
    %v8664 = vshll.u32 %v8604, 16
    %v8666 = vor.u32 %v8663, %v8664
    %v8667 = vsel %vm285, %v8659, %v8666
    %v8669 = vshrl.u32 %v8481, 16
    %v8671 = vrot.slane %v8669, 7
    %v8673 = vshrl.u32 %v8605, 16
    %v8675 = vrot.slane %v8673, 7
    %v8676 = vshll.u32 %v8605, 16
    %v8678 = vor.u32 %v8675, %v8676
    %v8679 = vsel %vm285, %v8671, %v8678
    %v8681 = vshrl.u32 %v8482, 16
    %v8683 = vrot.slane %v8681, 7
    %v8685 = vshrl.u32 %v8606, 16
    %v8687 = vrot.slane %v8685, 7
    %v8688 = vshll.u32 %v8606, 16
    %v8690 = vor.u32 %v8687, %v8688
    %v8691 = vsel %vm285, %v8683, %v8690
    %v8693 = vshrl.u32 %v8483, 16
    %v8695 = vrot.slane %v8693, 7
    %v8697 = vshrl.u32 %v8607, 16
    %v8699 = vrot.slane %v8697, 7
    %v8700 = vshll.u32 %v8607, 16
    %v8702 = vor.u32 %v8699, %v8700
    %v8703 = vsel %vm285, %v8695, %v8702
    %s8712 = scalar_lea.vmem [#allocation11], 256
    %v8713 = vld [vmem:[%s8712] sm:$0xf]
    %v8714 = vld [vmem:[%s8712 + $0x4] sm:$0xf]
    %v8715 = vld [vmem:[%s8712 + $0x8] sm:$0xf]
    %v8716 = vld [vmem:[%s8712 + $0xc] sm:$0xf]
    %v8717 = vld [vmem:[%s8712 + $0x10] sm:$0xf]
    %v8718 = vld [vmem:[%s8712 + $0x14] sm:$0xf]
    %v8719 = vld [vmem:[%s8712 + $0x18] sm:$0xf]
    %v8720 = vld [vmem:[%s8712 + $0x1c] sm:$0xf]
    %v8721 = vld [vmem:[%s8712 + $0x20] sm:$0xf]
    %v8722 = vld [vmem:[%s8712 + $0x24] sm:$0xf]
    %v8723 = vld [vmem:[%s8712 + $0x28] sm:$0xf]
    %v8724 = vld [vmem:[%s8712 + $0x2c] sm:$0xf]
    %v8725 = vld [vmem:[%s8712 + $0x30] sm:$0xf]
    %v8726 = vld [vmem:[%s8712 + $0x34] sm:$0xf]
    %v8727 = vld [vmem:[%s8712 + $0x38] sm:$0xf]
    %v8728 = vld [vmem:[%s8712 + $0x3c] sm:$0xf]
    %v8729 = vld [vmem:[%s8712 + $0x40] sm:$0xf]
    %v8730 = vld [vmem:[%s8712 + $0x44] sm:$0xf]
    %v8731 = vld [vmem:[%s8712 + $0x48] sm:$0xf]
    %v8732 = vld [vmem:[%s8712 + $0x4c] sm:$0xf]
    %v8733 = vld [vmem:[%s8712 + $0x50] sm:$0xf]
    %v8734 = vld [vmem:[%s8712 + $0x54] sm:$0xf]
    %v8735 = vld [vmem:[%s8712 + $0x58] sm:$0xf]
    %v8736 = vld [vmem:[%s8712 + $0x5c] sm:$0xf]
    %v8737 = vld [vmem:[%s8712 + $0x60] sm:$0xf]
    %v8738 = vld [vmem:[%s8712 + $0x64] sm:$0xf]
    %v8739 = vld [vmem:[%s8712 + $0x68] sm:$0xf]
    %v8740 = vld [vmem:[%s8712 + $0x6c] sm:$0xf]
    %v8741 = vld [vmem:[%s8712 + $0x70] sm:$0xf]
    %v8742 = vld [vmem:[%s8712 + $0x74] sm:$0xf]
    %v8743 = vld [vmem:[%s8712 + $0x78] sm:$0xf]
    %v8744 = vld [vmem:[%s8712 + $0x7c] sm:$0xf]
    %v8745 = vld [vmem:[%s8712 + $0x80] sm:$0xf]
    %v8746 = vld [vmem:[%s8712 + $0x84] sm:$0xf]
    %v8747 = vld [vmem:[%s8712 + $0x88] sm:$0xf]
    %v8748 = vld [vmem:[%s8712 + $0x8c] sm:$0xf]
    %v8749 = vld [vmem:[%s8712 + $0x90] sm:$0xf]
    %v8750 = vld [vmem:[%s8712 + $0x94] sm:$0xf]
    %v8751 = vld [vmem:[%s8712 + $0x98] sm:$0xf]
    %v8752 = vld [vmem:[%s8712 + $0x9c] sm:$0xf]
    %v8753 = vld [vmem:[%s8712 + $0xa0] sm:$0xf]
    %v8754 = vld [vmem:[%s8712 + $0xa4] sm:$0xf]
    %v8755 = vld [vmem:[%s8712 + $0xa8] sm:$0xf]
    %v8756 = vld [vmem:[%s8712 + $0xac] sm:$0xf]
    %v8757 = vld [vmem:[%s8712 + $0xb0] sm:$0xf]
    %v8758 = vld [vmem:[%s8712 + $0xb4] sm:$0xf]
    %v8759 = vld [vmem:[%s8712 + $0xb8] sm:$0xf]
    %v8760 = vld [vmem:[%s8712 + $0xbc] sm:$0xf]
    %v8761 = vld [vmem:[%s8712 + $0xc0] sm:$0xf]
    %v8762 = vld [vmem:[%s8712 + $0xc4] sm:$0xf]
    %v8763 = vld [vmem:[%s8712 + $0xc8] sm:$0xf]
    %v8764 = vld [vmem:[%s8712 + $0xcc] sm:$0xf]
    %v8765 = vld [vmem:[%s8712 + $0xd0] sm:$0xf]
    %v8766 = vld [vmem:[%s8712 + $0xd4] sm:$0xf]
    %v8767 = vld [vmem:[%s8712 + $0xd8] sm:$0xf]
    %v8768 = vld [vmem:[%s8712 + $0xdc] sm:$0xf]
    %v8769 = vld [vmem:[%s8712 + $0xe0] sm:$0xf]
    %v8770 = vld [vmem:[%s8712 + $0xe4] sm:$0xf]
    %v8771 = vld [vmem:[%s8712 + $0xe8] sm:$0xf]
    %v8772 = vld [vmem:[%s8712 + $0xec] sm:$0xf]
    %v8773 = vld [vmem:[%s8712 + $0xf0] sm:$0xf]
    %v8774 = vld [vmem:[%s8712 + $0xf4] sm:$0xf]
    %v8775 = vld [vmem:[%s8712 + $0xf8] sm:$0xf]
    %v8776 = vld [vmem:[%s8712 + $0xfc] sm:$0xf]
    %v8841 = vunpack.c.l.b16 %v8713
    %v8842 = vunpack.c.l.b16 %v8714
    %v8843 = vunpack.c.l.b16 %v8715
    %v8844 = vunpack.c.l.b16 %v8716
    %v8845 = vunpack.c.l.b16 %v8717
    %v8846 = vunpack.c.l.b16 %v8718
    %v8847 = vunpack.c.l.b16 %v8719
    %v8848 = vunpack.c.l.b16 %v8720
    %v8849 = vunpack.c.l.b16 %v8721
    %v8850 = vunpack.c.l.b16 %v8722
    %v8851 = vunpack.c.l.b16 %v8723
    %v8852 = vunpack.c.l.b16 %v8724
    %v8853 = vunpack.c.l.b16 %v8725
    %v8854 = vunpack.c.l.b16 %v8726
    %v8855 = vunpack.c.l.b16 %v8727
    %v8856 = vunpack.c.l.b16 %v8728
    %v8857 = vunpack.c.l.b16 %v8729
    %v8858 = vunpack.c.l.b16 %v8730
    %v8859 = vunpack.c.l.b16 %v8731
    %v8860 = vunpack.c.l.b16 %v8732
    %v8861 = vunpack.c.l.b16 %v8733
    %v8862 = vunpack.c.l.b16 %v8734
    %v8863 = vunpack.c.l.b16 %v8735
    %v8864 = vunpack.c.l.b16 %v8736
    %v8865 = vunpack.c.l.b16 %v8737
    %v8866 = vunpack.c.l.b16 %v8738
    %v8867 = vunpack.c.l.b16 %v8739
    %v8868 = vunpack.c.l.b16 %v8740
    %v8869 = vunpack.c.l.b16 %v8741
    %v8870 = vunpack.c.l.b16 %v8742
    %v8871 = vunpack.c.l.b16 %v8743
    %v8872 = vunpack.c.l.b16 %v8744
    %v8873 = vunpack.c.l.b16 %v8745
    %v8874 = vunpack.c.l.b16 %v8746
    %v8875 = vunpack.c.l.b16 %v8747
    %v8876 = vunpack.c.l.b16 %v8748
    %v8877 = vunpack.c.l.b16 %v8749
    %v8878 = vunpack.c.l.b16 %v8750
    %v8879 = vunpack.c.l.b16 %v8751
    %v8880 = vunpack.c.l.b16 %v8752
    %v8881 = vunpack.c.l.b16 %v8753
    %v8882 = vunpack.c.l.b16 %v8754
    %v8883 = vunpack.c.l.b16 %v8755
    %v8884 = vunpack.c.l.b16 %v8756
    %v8885 = vunpack.c.l.b16 %v8757
    %v8886 = vunpack.c.l.b16 %v8758
    %v8887 = vunpack.c.l.b16 %v8759
    %v8888 = vunpack.c.l.b16 %v8760
    %v8889 = vunpack.c.l.b16 %v8761
    %v8890 = vunpack.c.l.b16 %v8762
    %v8891 = vunpack.c.l.b16 %v8763
    %v8892 = vunpack.c.l.b16 %v8764
    %v8893 = vunpack.c.l.b16 %v8765
    %v8894 = vunpack.c.l.b16 %v8766
    %v8895 = vunpack.c.l.b16 %v8767
    %v8896 = vunpack.c.l.b16 %v8768
    %v8897 = vunpack.c.l.b16 %v8769
    %v8898 = vunpack.c.l.b16 %v8770
    %v8899 = vunpack.c.l.b16 %v8771
    %v8900 = vunpack.c.l.b16 %v8772
    %v8901 = vunpack.c.l.b16 %v8773
    %v8902 = vunpack.c.l.b16 %v8774
    %v8903 = vunpack.c.l.b16 %v8775
    %v8904 = vunpack.c.l.b16 %v8776
    %v8905 = vpack.c.b16 %v8842, %v8841
    %v8906 = vpack.c.b16 %v8844, %v8843
    %v8907 = vpack.c.b16 %v8846, %v8845
    %v8908 = vpack.c.b16 %v8848, %v8847
    %v8909 = vpack.c.b16 %v8850, %v8849
    %v8910 = vpack.c.b16 %v8852, %v8851
    %v8911 = vpack.c.b16 %v8854, %v8853
    %v8912 = vpack.c.b16 %v8856, %v8855
    %v8913 = vpack.c.b16 %v8858, %v8857
    %v8914 = vpack.c.b16 %v8860, %v8859
    %v8915 = vpack.c.b16 %v8862, %v8861
    %v8916 = vpack.c.b16 %v8864, %v8863
    %v8917 = vpack.c.b16 %v8866, %v8865
    %v8918 = vpack.c.b16 %v8868, %v8867
    %v8919 = vpack.c.b16 %v8870, %v8869
    %v8920 = vpack.c.b16 %v8872, %v8871
    %v8921 = vpack.c.b16 %v8874, %v8873
    %v8922 = vpack.c.b16 %v8876, %v8875
    %v8923 = vpack.c.b16 %v8878, %v8877
    %v8924 = vpack.c.b16 %v8880, %v8879
    %v8925 = vpack.c.b16 %v8882, %v8881
    %v8926 = vpack.c.b16 %v8884, %v8883
    %v8927 = vpack.c.b16 %v8886, %v8885
    %v8928 = vpack.c.b16 %v8888, %v8887
    %v8929 = vpack.c.b16 %v8890, %v8889
    %v8930 = vpack.c.b16 %v8892, %v8891
    %v8931 = vpack.c.b16 %v8894, %v8893
    %v8932 = vpack.c.b16 %v8896, %v8895
    %v8933 = vpack.c.b16 %v8898, %v8897
    %v8934 = vpack.c.b16 %v8900, %v8899
    %v8935 = vpack.c.b16 %v8902, %v8901
    %v8936 = vpack.c.b16 %v8904, %v8903
    %8969 = vmatprep.subr.bf16.mxu0 0
    %8970 = vmatpush1.bf16.msra.mxu0 %v8905
    %8971 = vmatprep.subr.bf16.mxu0 0
    %8972 = vmatpush1.bf16.msra.mxu0 %v8906
    %8973 = vmatprep.subr.bf16.mxu0 0
    %8974 = vmatpush1.bf16.msra.mxu0 %v8907
    %8975 = vmatprep.subr.bf16.mxu0 0
    %8976 = vmatpush1.bf16.msra.mxu0 %v8908
    %8977 = vmatprep.subr.bf16.mxu0 0
    %8978 = vmatpush1.bf16.msra.mxu0 %v8909
    %8979 = vmatprep.subr.bf16.mxu0 0
    %8980 = vmatpush1.bf16.msra.mxu0 %v8910
    %8981 = vmatprep.subr.bf16.mxu0 0
    %8982 = vmatpush1.bf16.msra.mxu0 %v8911
    %8983 = vmatprep.subr.bf16.mxu0 0
    %8984 = vmatpush1.bf16.msra.mxu0 %v8912
    %8985 = vmatprep.subr.bf16.mxu0 0
    %8986 = vmatpush1.bf16.msra.mxu0 %v8913
    %8987 = vmatprep.subr.bf16.mxu0 0
    %8988 = vmatpush1.bf16.msra.mxu0 %v8914
    %8989 = vmatprep.subr.bf16.mxu0 0
    %8990 = vmatpush1.bf16.msra.mxu0 %v8915
    %8991 = vmatprep.subr.bf16.mxu0 0
    %8992 = vmatpush1.bf16.msra.mxu0 %v8916
    %8993 = vmatprep.subr.bf16.mxu0 0
    %8994 = vmatpush1.bf16.msra.mxu0 %v8917
    %8995 = vmatprep.subr.bf16.mxu0 0
    %8996 = vmatpush1.bf16.msra.mxu0 %v8918
    %8997 = vmatprep.subr.bf16.mxu0 0
    %8998 = vmatpush1.bf16.msra.mxu0 %v8919
    %8999 = vmatprep.subr.bf16.mxu0 0
    %9000 = vmatpush1.bf16.msra.mxu0 %v8920
    %9001 = vmatprep.mubr.bf16.mxu0 %v8631
    %9002 = vmatmul.mubr.bf16.gmra.mrb[0].mxu0 %v8619
    %v9003 = vpop.f32.mrb[0].mxu0
    %v9004 = vadd.f32 0.0, %v9003
    %v9005 = vpop.f32.mrb[0].mxu0
    %v9006 = vpop.f32.mrb[0].mxu0
    %v9007 = vadd.f32 0.0, %v9006
    %v9008 = vpop.f32.mrb[0].mxu0
    %9009 = vmatprep.mubr.bf16.mxu0 %v8679
    %9010 = vmatmul.mubr.bf16.gmra.mrb[0].mxu0 %v8667
    %v9011 = vpop.f32.mrb[0].mxu0
    %v9012 = vadd.f32 0.0, %v9011
    %v9013 = vpop.f32.mrb[0].mxu0
    %v9014 = vpop.f32.mrb[0].mxu0
    %v9015 = vadd.f32 0.0, %v9014
    %v9016 = vpop.f32.mrb[0].mxu0
    %9017 = vdwg.mxu0
    %9018 = vmatprep.subr.bf16.mxu0 0
    %9019 = vmatpush1.bf16.msra.mxu0 %v8921
    %9020 = vmatprep.subr.bf16.mxu0 0
    %9021 = vmatpush1.bf16.msra.mxu0 %v8922
    %9022 = vmatprep.subr.bf16.mxu0 0
    %9023 = vmatpush1.bf16.msra.mxu0 %v8923
    %9024 = vmatprep.subr.bf16.mxu0 0
    %9025 = vmatpush1.bf16.msra.mxu0 %v8924
    %9026 = vmatprep.subr.bf16.mxu0 0
    %9027 = vmatpush1.bf16.msra.mxu0 %v8925
    %9028 = vmatprep.subr.bf16.mxu0 0
    %9029 = vmatpush1.bf16.msra.mxu0 %v8926
    %9030 = vmatprep.subr.bf16.mxu0 0
    %9031 = vmatpush1.bf16.msra.mxu0 %v8927
    %9032 = vmatprep.subr.bf16.mxu0 0
    %9033 = vmatpush1.bf16.msra.mxu0 %v8928
    %9034 = vmatprep.subr.bf16.mxu0 0
    %9035 = vmatpush1.bf16.msra.mxu0 %v8929
    %9036 = vmatprep.subr.bf16.mxu0 0
    %9037 = vmatpush1.bf16.msra.mxu0 %v8930
    %9038 = vmatprep.subr.bf16.mxu0 0
    %9039 = vmatpush1.bf16.msra.mxu0 %v8931
    %9040 = vmatprep.subr.bf16.mxu0 0
    %9041 = vmatpush1.bf16.msra.mxu0 %v8932
    %9042 = vmatprep.subr.bf16.mxu0 0
    %9043 = vmatpush1.bf16.msra.mxu0 %v8933
    %9044 = vmatprep.subr.bf16.mxu0 0
    %9045 = vmatpush1.bf16.msra.mxu0 %v8934
    %9046 = vmatprep.subr.bf16.mxu0 0
    %9047 = vmatpush1.bf16.msra.mxu0 %v8935
    %9048 = vmatprep.subr.bf16.mxu0 0
    %9049 = vmatpush1.bf16.msra.mxu0 %v8936
    %9050 = vmatprep.mubr.bf16.mxu0 %v8655
    %9051 = vmatmul.mubr.bf16.gmra.mrb[0].mxu0 %v8643
    %v9052 = vpop.f32.mrb[0].mxu0
    %v9053 = vadd.f32 %v9004, %v9052
    %v9054 = vpop.f32.mrb[0].mxu0
    %v9055 = vpop.f32.mrb[0].mxu0
    %v9056 = vadd.f32 %v9007, %v9055
    %v9057 = vpop.f32.mrb[0].mxu0
    %9058 = vmatprep.mubr.bf16.mxu0 %v8703
    %9059 = vmatmul.mubr.bf16.gmra.mrb[0].mxu0 %v8691
    %v9060 = vpop.f32.mrb[0].mxu0
    %v9061 = vadd.f32 %v9012, %v9060
    %v9062 = vpop.f32.mrb[0].mxu0
    %v9063 = vpop.f32.mrb[0].mxu0
    %v9064 = vadd.f32 %v9015, %v9063
    %v9065 = vpop.f32.mrb[0].mxu0
    %9066 = vdwg.mxu0
    %v9131 = vunpack.c.l.b16 %v8536
    %v9132 = vunpack.c.l.b16 %v8537
    %v9133 = vunpack.c.l.b16 %v8538
    %v9134 = vunpack.c.l.b16 %v8539
    %v9135 = vunpack.c.l.b16 %v8540
    %v9136 = vunpack.c.l.b16 %v8541
    %v9137 = vunpack.c.l.b16 %v8542
    %v9138 = vunpack.c.l.b16 %v8543
    %v9139 = vunpack.c.l.b16 %v8544
    %v9140 = vunpack.c.l.b16 %v8545
    %v9141 = vunpack.c.l.b16 %v8546
    %v9142 = vunpack.c.l.b16 %v8547
    %v9143 = vunpack.c.l.b16 %v8548
    %v9144 = vunpack.c.l.b16 %v8549
    %v9145 = vunpack.c.l.b16 %v8550
    %v9146 = vunpack.c.l.b16 %v8551
    %v9147 = vunpack.c.l.b16 %v8552
    %v9148 = vunpack.c.l.b16 %v8553
    %v9149 = vunpack.c.l.b16 %v8554
    %v9150 = vunpack.c.l.b16 %v8555
    %v9151 = vunpack.c.l.b16 %v8556
    %v9152 = vunpack.c.l.b16 %v8557
    %v9153 = vunpack.c.l.b16 %v8558
    %v9154 = vunpack.c.l.b16 %v8559
    %v9155 = vunpack.c.l.b16 %v8560
    %v9156 = vunpack.c.l.b16 %v8561
    %v9157 = vunpack.c.l.b16 %v8562
    %v9158 = vunpack.c.l.b16 %v8563
    %v9159 = vunpack.c.l.b16 %v8564
    %v9160 = vunpack.c.l.b16 %v8565
    %v9161 = vunpack.c.l.b16 %v8566
    %v9162 = vunpack.c.l.b16 %v8567
    %v9163 = vunpack.c.l.b16 %v8568
    %v9164 = vunpack.c.l.b16 %v8569
    %v9165 = vunpack.c.l.b16 %v8570
    %v9166 = vunpack.c.l.b16 %v8571
    %v9167 = vunpack.c.l.b16 %v8572
    %v9168 = vunpack.c.l.b16 %v8573
    %v9169 = vunpack.c.l.b16 %v8574
    %v9170 = vunpack.c.l.b16 %v8575
    %v9171 = vunpack.c.l.b16 %v8576
    %v9172 = vunpack.c.l.b16 %v8577
    %v9173 = vunpack.c.l.b16 %v8578
    %v9174 = vunpack.c.l.b16 %v8579
    %v9175 = vunpack.c.l.b16 %v8580
    %v9176 = vunpack.c.l.b16 %v8581
    %v9177 = vunpack.c.l.b16 %v8582
    %v9178 = vunpack.c.l.b16 %v8583
    %v9179 = vunpack.c.l.b16 %v8584
    %v9180 = vunpack.c.l.b16 %v8585
    %v9181 = vunpack.c.l.b16 %v8586
    %v9182 = vunpack.c.l.b16 %v8587
    %v9183 = vunpack.c.l.b16 %v8588
    %v9184 = vunpack.c.l.b16 %v8589
    %v9185 = vunpack.c.l.b16 %v8590
    %v9186 = vunpack.c.l.b16 %v8591
    %v9187 = vunpack.c.l.b16 %v8592
    %v9188 = vunpack.c.l.b16 %v8593
    %v9189 = vunpack.c.l.b16 %v8594
    %v9190 = vunpack.c.l.b16 %v8595
    %v9191 = vunpack.c.l.b16 %v8596
    %v9192 = vunpack.c.l.b16 %v8597
    %v9193 = vunpack.c.l.b16 %v8598
    %v9194 = vunpack.c.l.b16 %v8599
    %v9195 = vpack.c.b16 %v9132, %v9131
    %v9196 = vpack.c.b16 %v9134, %v9133
    %v9197 = vpack.c.b16 %v9136, %v9135
    %v9198 = vpack.c.b16 %v9138, %v9137
    %v9199 = vpack.c.b16 %v9140, %v9139
    %v9200 = vpack.c.b16 %v9142, %v9141
    %v9201 = vpack.c.b16 %v9144, %v9143
    %v9202 = vpack.c.b16 %v9146, %v9145
    %v9203 = vpack.c.b16 %v9148, %v9147
    %v9204 = vpack.c.b16 %v9150, %v9149
    %v9205 = vpack.c.b16 %v9152, %v9151
    %v9206 = vpack.c.b16 %v9154, %v9153
    %v9207 = vpack.c.b16 %v9156, %v9155
    %v9208 = vpack.c.b16 %v9158, %v9157
    %v9209 = vpack.c.b16 %v9160, %v9159
    %v9210 = vpack.c.b16 %v9162, %v9161
    %v9211 = vpack.c.b16 %v9164, %v9163
    %v9212 = vpack.c.b16 %v9166, %v9165
    %v9213 = vpack.c.b16 %v9168, %v9167
    %v9214 = vpack.c.b16 %v9170, %v9169
    %v9215 = vpack.c.b16 %v9172, %v9171
    %v9216 = vpack.c.b16 %v9174, %v9173
    %v9217 = vpack.c.b16 %v9176, %v9175
    %v9218 = vpack.c.b16 %v9178, %v9177
    %v9219 = vpack.c.b16 %v9180, %v9179
    %v9220 = vpack.c.b16 %v9182, %v9181
    %v9221 = vpack.c.b16 %v9184, %v9183
    %v9222 = vpack.c.b16 %v9186, %v9185
    %v9223 = vpack.c.b16 %v9188, %v9187
    %v9224 = vpack.c.b16 %v9190, %v9189
    %v9225 = vpack.c.b16 %v9192, %v9191
    %v9226 = vpack.c.b16 %v9194, %v9193
    %9259 = vmatprep.subr.bf16.mxu0 0
    %9260 = vmatpush1.bf16.msra.mxu0 %v9195
    %9261 = vmatprep.subr.bf16.mxu0 0
    %9262 = vmatpush1.bf16.msra.mxu0 %v9196
    %9263 = vmatprep.subr.bf16.mxu0 0
    %9264 = vmatpush1.bf16.msra.mxu0 %v9197
    %9265 = vmatprep.subr.bf16.mxu0 0
    %9266 = vmatpush1.bf16.msra.mxu0 %v9198
    %9267 = vmatprep.subr.bf16.mxu0 0
    %9268 = vmatpush1.bf16.msra.mxu0 %v9199
    %9269 = vmatprep.subr.bf16.mxu0 0
    %9270 = vmatpush1.bf16.msra.mxu0 %v9200
    %9271 = vmatprep.subr.bf16.mxu0 0
    %9272 = vmatpush1.bf16.msra.mxu0 %v9201
    %9273 = vmatprep.subr.bf16.mxu0 0
    %9274 = vmatpush1.bf16.msra.mxu0 %v9202
    %9275 = vmatprep.subr.bf16.mxu0 0
    %9276 = vmatpush1.bf16.msra.mxu0 %v9203
    %9277 = vmatprep.subr.bf16.mxu0 0
    %9278 = vmatpush1.bf16.msra.mxu0 %v9204
    %9279 = vmatprep.subr.bf16.mxu0 0
    %9280 = vmatpush1.bf16.msra.mxu0 %v9205
    %9281 = vmatprep.subr.bf16.mxu0 0
    %9282 = vmatpush1.bf16.msra.mxu0 %v9206
    %9283 = vmatprep.subr.bf16.mxu0 0
    %9284 = vmatpush1.bf16.msra.mxu0 %v9207
    %9285 = vmatprep.subr.bf16.mxu0 0
    %9286 = vmatpush1.bf16.msra.mxu0 %v9208
    %9287 = vmatprep.subr.bf16.mxu0 0
    %9288 = vmatpush1.bf16.msra.mxu0 %v9209
    %9289 = vmatprep.subr.bf16.mxu0 0
    %9290 = vmatpush1.bf16.msra.mxu0 %v9210
    %9291 = vmatprep.mubr.bf16.mxu0 %v8509
    %9292 = vmatmul.mubr.bf16.gmra.mrb[0].mxu0 %v8506
    %v9293 = vpop.f32.mrb[0].mxu0
    %v9294 = vadd.f32 %v9053, %v9293
    %v9295 = vpop.f32.mrb[0].mxu0
    %v9296 = vpop.f32.mrb[0].mxu0
    %v9297 = vadd.f32 %v9056, %v9296
    %v9298 = vpop.f32.mrb[0].mxu0
    %9299 = vmatprep.mubr.bf16.mxu0 %v8521
    %9300 = vmatmul.mubr.bf16.gmra.mrb[0].mxu0 %v8518
    %v9301 = vpop.f32.mrb[0].mxu0
    %v9302 = vadd.f32 %v9061, %v9301
    %v9303 = vpop.f32.mrb[0].mxu0
    %v9304 = vpop.f32.mrb[0].mxu0
    %v9305 = vadd.f32 %v9064, %v9304
    %v9306 = vpop.f32.mrb[0].mxu0
    %9307 = vdwg.mxu0
    %9308 = vmatprep.subr.bf16.mxu0 0
    %9309 = vmatpush1.bf16.msra.mxu0 %v9211
    %9310 = vmatprep.subr.bf16.mxu0 0
    %9311 = vmatpush1.bf16.msra.mxu0 %v9212
    %9312 = vmatprep.subr.bf16.mxu0 0
    %9313 = vmatpush1.bf16.msra.mxu0 %v9213
    %9314 = vmatprep.subr.bf16.mxu0 0
    %9315 = vmatpush1.bf16.msra.mxu0 %v9214
    %9316 = vmatprep.subr.bf16.mxu0 0
    %9317 = vmatpush1.bf16.msra.mxu0 %v9215
    %9318 = vmatprep.subr.bf16.mxu0 0
    %9319 = vmatpush1.bf16.msra.mxu0 %v9216
    %9320 = vmatprep.subr.bf16.mxu0 0
    %9321 = vmatpush1.bf16.msra.mxu0 %v9217
    %9322 = vmatprep.subr.bf16.mxu0 0
    %9323 = vmatpush1.bf16.msra.mxu0 %v9218
    %9324 = vmatprep.subr.bf16.mxu0 0
    %9325 = vmatpush1.bf16.msra.mxu0 %v9219
    %9326 = vmatprep.subr.bf16.mxu0 0
    %9327 = vmatpush1.bf16.msra.mxu0 %v9220
    %9328 = vmatprep.subr.bf16.mxu0 0
    %9329 = vmatpush1.bf16.msra.mxu0 %v9221
    %9330 = vmatprep.subr.bf16.mxu0 0
    %9331 = vmatpush1.bf16.msra.mxu0 %v9222
    %9332 = vmatprep.subr.bf16.mxu0 0
    %9333 = vmatpush1.bf16.msra.mxu0 %v9223
    %9334 = vmatprep.subr.bf16.mxu0 0
    %9335 = vmatpush1.bf16.msra.mxu0 %v9224
    %9336 = vmatprep.subr.bf16.mxu0 0
    %9337 = vmatpush1.bf16.msra.mxu0 %v9225
    %9338 = vmatprep.subr.bf16.mxu0 0
    %9339 = vmatpush1.bf16.msra.mxu0 %v9226
    %9340 = vmatprep.mubr.bf16.mxu0 %v8515
    %9341 = vmatmul.mubr.bf16.gmra.mrb[0].mxu0 %v8512
    %v9342 = vpop.f32.mrb[0].mxu0
    %v9343 = vadd.f32 %v9294, %v9342
    %v9344 = vpop.f32.mrb[0].mxu0
    %v9345 = vpop.f32.mrb[0].mxu0
    %v9346 = vadd.f32 %v9297, %v9345
    %v9347 = vpop.f32.mrb[0].mxu0
    %9348 = vmatprep.mubr.bf16.mxu0 %v8527
    %9349 = vmatmul.mubr.bf16.gmra.mrb[0].mxu0 %v8524
    %v9350 = vpop.f32.mrb[0].mxu0
    %v9351 = vadd.f32 %v9302, %v9350
    %v9352 = vpop.f32.mrb[0].mxu0
    %v9353 = vpop.f32.mrb[0].mxu0
    %v9354 = vadd.f32 %v9305, %v9353
    %v9355 = vpop.f32.mrb[0].mxu0
    %9356 = vdwg.mxu0
    %s9357 = scalar_lea.vmem [#allocation11], 512
    %v9358 = vld [vmem:[%s9357] sm:$0xf]
    %v9359 = vld [vmem:[%s9357 + $0x4] sm:$0xf]
    %v9360 = vld [vmem:[%s9357 + $0x8] sm:$0xf]
    %v9361 = vld [vmem:[%s9357 + $0xc] sm:$0xf]
    %v9362 = vld [vmem:[%s9357 + $0x10] sm:$0xf]
    %v9363 = vld [vmem:[%s9357 + $0x14] sm:$0xf]
    %v9364 = vld [vmem:[%s9357 + $0x18] sm:$0xf]
    %v9365 = vld [vmem:[%s9357 + $0x1c] sm:$0xf]
    %v9366 = vld [vmem:[%s9357 + $0x20] sm:$0xf]
    %v9367 = vld [vmem:[%s9357 + $0x24] sm:$0xf]
    %v9368 = vld [vmem:[%s9357 + $0x28] sm:$0xf]
    %v9369 = vld [vmem:[%s9357 + $0x2c] sm:$0xf]
    %v9370 = vld [vmem:[%s9357 + $0x30] sm:$0xf]
    %v9371 = vld [vmem:[%s9357 + $0x34] sm:$0xf]
    %v9372 = vld [vmem:[%s9357 + $0x38] sm:$0xf]
    %v9373 = vld [vmem:[%s9357 + $0x3c] sm:$0xf]
    %v9374 = vld [vmem:[%s9357 + $0x40] sm:$0xf]
    %v9375 = vld [vmem:[%s9357 + $0x44] sm:$0xf]
    %v9376 = vld [vmem:[%s9357 + $0x48] sm:$0xf]
    %v9377 = vld [vmem:[%s9357 + $0x4c] sm:$0xf]
    %v9378 = vld [vmem:[%s9357 + $0x50] sm:$0xf]
    %v9379 = vld [vmem:[%s9357 + $0x54] sm:$0xf]
    %v9380 = vld [vmem:[%s9357 + $0x58] sm:$0xf]
    %v9381 = vld [vmem:[%s9357 + $0x5c] sm:$0xf]
    %v9382 = vld [vmem:[%s9357 + $0x60] sm:$0xf]
    %v9383 = vld [vmem:[%s9357 + $0x64] sm:$0xf]
    %v9384 = vld [vmem:[%s9357 + $0x68] sm:$0xf]
    %v9385 = vld [vmem:[%s9357 + $0x6c] sm:$0xf]
    %v9386 = vld [vmem:[%s9357 + $0x70] sm:$0xf]
    %v9387 = vld [vmem:[%s9357 + $0x74] sm:$0xf]
    %v9388 = vld [vmem:[%s9357 + $0x78] sm:$0xf]
    %v9389 = vld [vmem:[%s9357 + $0x7c] sm:$0xf]
    %v9390 = vld [vmem:[%s9357 + $0x80] sm:$0xf]
    %v9391 = vld [vmem:[%s9357 + $0x84] sm:$0xf]
    %v9392 = vld [vmem:[%s9357 + $0x88] sm:$0xf]
    %v9393 = vld [vmem:[%s9357 + $0x8c] sm:$0xf]
    %v9394 = vld [vmem:[%s9357 + $0x90] sm:$0xf]
    %v9395 = vld [vmem:[%s9357 + $0x94] sm:$0xf]
    %v9396 = vld [vmem:[%s9357 + $0x98] sm:$0xf]
    %v9397 = vld [vmem:[%s9357 + $0x9c] sm:$0xf]
    %v9398 = vld [vmem:[%s9357 + $0xa0] sm:$0xf]
    %v9399 = vld [vmem:[%s9357 + $0xa4] sm:$0xf]
    %v9400 = vld [vmem:[%s9357 + $0xa8] sm:$0xf]
    %v9401 = vld [vmem:[%s9357 + $0xac] sm:$0xf]
    %v9402 = vld [vmem:[%s9357 + $0xb0] sm:$0xf]
    %v9403 = vld [vmem:[%s9357 + $0xb4] sm:$0xf]
    %v9404 = vld [vmem:[%s9357 + $0xb8] sm:$0xf]
    %v9405 = vld [vmem:[%s9357 + $0xbc] sm:$0xf]
    %v9406 = vld [vmem:[%s9357 + $0xc0] sm:$0xf]
    %v9407 = vld [vmem:[%s9357 + $0xc4] sm:$0xf]
    %v9408 = vld [vmem:[%s9357 + $0xc8] sm:$0xf]
    %v9409 = vld [vmem:[%s9357 + $0xcc] sm:$0xf]
    %v9410 = vld [vmem:[%s9357 + $0xd0] sm:$0xf]
    %v9411 = vld [vmem:[%s9357 + $0xd4] sm:$0xf]
    %v9412 = vld [vmem:[%s9357 + $0xd8] sm:$0xf]
    %v9413 = vld [vmem:[%s9357 + $0xdc] sm:$0xf]
    %v9414 = vld [vmem:[%s9357 + $0xe0] sm:$0xf]
    %v9415 = vld [vmem:[%s9357 + $0xe4] sm:$0xf]
    %v9416 = vld [vmem:[%s9357 + $0xe8] sm:$0xf]
    %v9417 = vld [vmem:[%s9357 + $0xec] sm:$0xf]
    %v9418 = vld [vmem:[%s9357 + $0xf0] sm:$0xf]
    %v9419 = vld [vmem:[%s9357 + $0xf4] sm:$0xf]
    %v9420 = vld [vmem:[%s9357 + $0xf8] sm:$0xf]
    %v9421 = vld [vmem:[%s9357 + $0xfc] sm:$0xf]
    %v9486 = vunpack.c.l.b16 %v9358
    %v9487 = vunpack.c.l.b16 %v9359
    %v9488 = vunpack.c.l.b16 %v9360
    %v9489 = vunpack.c.l.b16 %v9361
    %v9490 = vunpack.c.l.b16 %v9362
    %v9491 = vunpack.c.l.b16 %v9363
    %v9492 = vunpack.c.l.b16 %v9364
    %v9493 = vunpack.c.l.b16 %v9365
    %v9494 = vunpack.c.l.b16 %v9366
    %v9495 = vunpack.c.l.b16 %v9367
    %v9496 = vunpack.c.l.b16 %v9368
    %v9497 = vunpack.c.l.b16 %v9369
    %v9498 = vunpack.c.l.b16 %v9370
    %v9499 = vunpack.c.l.b16 %v9371
    %v9500 = vunpack.c.l.b16 %v9372
    %v9501 = vunpack.c.l.b16 %v9373
    %v9502 = vunpack.c.l.b16 %v9374
    %v9503 = vunpack.c.l.b16 %v9375
    %v9504 = vunpack.c.l.b16 %v9376
    %v9505 = vunpack.c.l.b16 %v9377
    %v9506 = vunpack.c.l.b16 %v9378
    %v9507 = vunpack.c.l.b16 %v9379
    %v9508 = vunpack.c.l.b16 %v9380
    %v9509 = vunpack.c.l.b16 %v9381
    %v9510 = vunpack.c.l.b16 %v9382
    %v9511 = vunpack.c.l.b16 %v9383
    %v9512 = vunpack.c.l.b16 %v9384
    %v9513 = vunpack.c.l.b16 %v9385
    %v9514 = vunpack.c.l.b16 %v9386
    %v9515 = vunpack.c.l.b16 %v9387
    %v9516 = vunpack.c.l.b16 %v9388
    %v9517 = vunpack.c.l.b16 %v9389
    %v9518 = vunpack.c.l.b16 %v9390
    %v9519 = vunpack.c.l.b16 %v9391
    %v9520 = vunpack.c.l.b16 %v9392
    %v9521 = vunpack.c.l.b16 %v9393
    %v9522 = vunpack.c.l.b16 %v9394
    %v9523 = vunpack.c.l.b16 %v9395
    %v9524 = vunpack.c.l.b16 %v9396
    %v9525 = vunpack.c.l.b16 %v9397
    %v9526 = vunpack.c.l.b16 %v9398
    %v9527 = vunpack.c.l.b16 %v9399
    %v9528 = vunpack.c.l.b16 %v9400
    %v9529 = vunpack.c.l.b16 %v9401
    %v9530 = vunpack.c.l.b16 %v9402
    %v9531 = vunpack.c.l.b16 %v9403
    %v9532 = vunpack.c.l.b16 %v9404
    %v9533 = vunpack.c.l.b16 %v9405
    %v9534 = vunpack.c.l.b16 %v9406
    %v9535 = vunpack.c.l.b16 %v9407
    %v9536 = vunpack.c.l.b16 %v9408
    %v9537 = vunpack.c.l.b16 %v9409
    %v9538 = vunpack.c.l.b16 %v9410
    %v9539 = vunpack.c.l.b16 %v9411
    %v9540 = vunpack.c.l.b16 %v9412
    %v9541 = vunpack.c.l.b16 %v9413
    %v9542 = vunpack.c.l.b16 %v9414
    %v9543 = vunpack.c.l.b16 %v9415
    %v9544 = vunpack.c.l.b16 %v9416
    %v9545 = vunpack.c.l.b16 %v9417
    %v9546 = vunpack.c.l.b16 %v9418
    %v9547 = vunpack.c.l.b16 %v9419
    %v9548 = vunpack.c.l.b16 %v9420
    %v9549 = vunpack.c.l.b16 %v9421
    %v9550 = vpack.c.b16 %v9487, %v9486
    %v9551 = vpack.c.b16 %v9489, %v9488
    %v9552 = vpack.c.b16 %v9491, %v9490
    %v9553 = vpack.c.b16 %v9493, %v9492
    %v9554 = vpack.c.b16 %v9495, %v9494
    %v9555 = vpack.c.b16 %v9497, %v9496
    %v9556 = vpack.c.b16 %v9499, %v9498
    %v9557 = vpack.c.b16 %v9501, %v9500
    %v9558 = vpack.c.b16 %v9503, %v9502
    %v9559 = vpack.c.b16 %v9505, %v9504
    %v9560 = vpack.c.b16 %v9507, %v9506
    %v9561 = vpack.c.b16 %v9509, %v9508
    %v9562 = vpack.c.b16 %v9511, %v9510
    %v9563 = vpack.c.b16 %v9513, %v9512
    %v9564 = vpack.c.b16 %v9515, %v9514
    %v9565 = vpack.c.b16 %v9517, %v9516
    %v9566 = vpack.c.b16 %v9519, %v9518
    %v9567 = vpack.c.b16 %v9521, %v9520
    %v9568 = vpack.c.b16 %v9523, %v9522
    %v9569 = vpack.c.b16 %v9525, %v9524
    %v9570 = vpack.c.b16 %v9527, %v9526
    %v9571 = vpack.c.b16 %v9529, %v9528
    %v9572 = vpack.c.b16 %v9531, %v9530
    %v9573 = vpack.c.b16 %v9533, %v9532
    %v9574 = vpack.c.b16 %v9535, %v9534
    %v9575 = vpack.c.b16 %v9537, %v9536
    %v9576 = vpack.c.b16 %v9539, %v9538
    %v9577 = vpack.c.b16 %v9541, %v9540
    %v9578 = vpack.c.b16 %v9543, %v9542
    %v9579 = vpack.c.b16 %v9545, %v9544
    %v9580 = vpack.c.b16 %v9547, %v9546
    %v9581 = vpack.c.b16 %v9549, %v9548
    %9614 = vmatprep.subr.bf16.mxu0 0
    %9615 = vmatpush1.bf16.msra.mxu0 %v9550
    %9616 = vmatprep.subr.bf16.mxu0 0
    %9617 = vmatpush1.bf16.msra.mxu0 %v9551
    %9618 = vmatprep.subr.bf16.mxu0 0
    %9619 = vmatpush1.bf16.msra.mxu0 %v9552
    %9620 = vmatprep.subr.bf16.mxu0 0
    %9621 = vmatpush1.bf16.msra.mxu0 %v9553
    %9622 = vmatprep.subr.bf16.mxu0 0
    %9623 = vmatpush1.bf16.msra.mxu0 %v9554
    %9624 = vmatprep.subr.bf16.mxu0 0
    %9625 = vmatpush1.bf16.msra.mxu0 %v9555
    %9626 = vmatprep.subr.bf16.mxu0 0
    %9627 = vmatpush1.bf16.msra.mxu0 %v9556
    %9628 = vmatprep.subr.bf16.mxu0 0
    %9629 = vmatpush1.bf16.msra.mxu0 %v9557
    %9630 = vmatprep.subr.bf16.mxu0 0
    %9631 = vmatpush1.bf16.msra.mxu0 %v9558
    %9632 = vmatprep.subr.bf16.mxu0 0
    %9633 = vmatpush1.bf16.msra.mxu0 %v9559
    %9634 = vmatprep.subr.bf16.mxu0 0
    %9635 = vmatpush1.bf16.msra.mxu0 %v9560
    %9636 = vmatprep.subr.bf16.mxu0 0
    %9637 = vmatpush1.bf16.msra.mxu0 %v9561
    %9638 = vmatprep.subr.bf16.mxu0 0
    %9639 = vmatpush1.bf16.msra.mxu0 %v9562
    %9640 = vmatprep.subr.bf16.mxu0 0
    %9641 = vmatpush1.bf16.msra.mxu0 %v9563
    %9642 = vmatprep.subr.bf16.mxu0 0
    %9643 = vmatpush1.bf16.msra.mxu0 %v9564
    %9644 = vmatprep.subr.bf16.mxu0 0
    %9645 = vmatpush1.bf16.msra.mxu0 %v9565
    %9646 = vmatprep.mubr.bf16.mxu0 %v8601
    %9647 = vmatmul.mubr.bf16.gmra.mrb[0].mxu0 %v8600
    %v9648 = vpop.f32.mrb[0].mxu0
    %v9649 = vadd.f32 0.0, %v9648
    %v9650 = vpop.f32.mrb[0].mxu0
    %v9651 = vpop.f32.mrb[0].mxu0
    %v9652 = vadd.f32 0.0, %v9651
    %v9653 = vpop.f32.mrb[0].mxu0
    %9654 = vmatprep.mubr.bf16.mxu0 %v8605
    %9655 = vmatmul.mubr.bf16.gmra.mrb[0].mxu0 %v8604
    %v9656 = vpop.f32.mrb[0].mxu0
    %v9657 = vadd.f32 0.0, %v9656
    %v9658 = vpop.f32.mrb[0].mxu0
    %v9659 = vpop.f32.mrb[0].mxu0
    %v9660 = vadd.f32 0.0, %v9659
    %v9661 = vpop.f32.mrb[0].mxu0
    %9662 = vdwg.mxu0
    %9663 = vmatprep.subr.bf16.mxu0 0
    %9664 = vmatpush1.bf16.msra.mxu0 %v9566
    %9665 = vmatprep.subr.bf16.mxu0 0
    %9666 = vmatpush1.bf16.msra.mxu0 %v9567
    %9667 = vmatprep.subr.bf16.mxu0 0
    %9668 = vmatpush1.bf16.msra.mxu0 %v9568
    %9669 = vmatprep.subr.bf16.mxu0 0
    %9670 = vmatpush1.bf16.msra.mxu0 %v9569
    %9671 = vmatprep.subr.bf16.mxu0 0
    %9672 = vmatpush1.bf16.msra.mxu0 %v9570
    %9673 = vmatprep.subr.bf16.mxu0 0
    %9674 = vmatpush1.bf16.msra.mxu0 %v9571
    %9675 = vmatprep.subr.bf16.mxu0 0
    %9676 = vmatpush1.bf16.msra.mxu0 %v9572
    %9677 = vmatprep.subr.bf16.mxu0 0
    %9678 = vmatpush1.bf16.msra.mxu0 %v9573
    %9679 = vmatprep.subr.bf16.mxu0 0
    %9680 = vmatpush1.bf16.msra.mxu0 %v9574
    %9681 = vmatprep.subr.bf16.mxu0 0
    %9682 = vmatpush1.bf16.msra.mxu0 %v9575
    %9683 = vmatprep.subr.bf16.mxu0 0
    %9684 = vmatpush1.bf16.msra.mxu0 %v9576
    %9685 = vmatprep.subr.bf16.mxu0 0
    %9686 = vmatpush1.bf16.msra.mxu0 %v9577
    %9687 = vmatprep.subr.bf16.mxu0 0
    %9688 = vmatpush1.bf16.msra.mxu0 %v9578
    %9689 = vmatprep.subr.bf16.mxu0 0
    %9690 = vmatpush1.bf16.msra.mxu0 %v9579
    %9691 = vmatprep.subr.bf16.mxu0 0
    %9692 = vmatpush1.bf16.msra.mxu0 %v9580
    %9693 = vmatprep.subr.bf16.mxu0 0
    %9694 = vmatpush1.bf16.msra.mxu0 %v9581
    %9695 = vmatprep.mubr.bf16.mxu0 %v8603
    %9696 = vmatmul.mubr.bf16.gmra.mrb[0].mxu0 %v8602
    %v9697 = vpop.f32.mrb[0].mxu0
    %v9698 = vadd.f32 %v9649, %v9697
    %v9699 = vpop.f32.mrb[0].mxu0
    %v9700 = vpop.f32.mrb[0].mxu0
    %v9701 = vadd.f32 %v9652, %v9700
    %v9702 = vpop.f32.mrb[0].mxu0
    %9703 = vmatprep.mubr.bf16.mxu0 %v8607
    %9704 = vmatmul.mubr.bf16.gmra.mrb[0].mxu0 %v8606
    %v9705 = vpop.f32.mrb[0].mxu0
    %v9706 = vadd.f32 %v9657, %v9705
    %v9707 = vpop.f32.mrb[0].mxu0
    %v9708 = vpop.f32.mrb[0].mxu0
    %v9709 = vadd.f32 %v9660, %v9708
    %v9710 = vpop.f32.mrb[0].mxu0
    %9711 = vdwg.mxu0
    %v9712 = vadd.f32 %v9343, %v9698
    %v9713 = vadd.f32 %v9346, %v9701
    %v9714 = vadd.f32 %v9351, %v9706
    %v9715 = vadd.f32 %v9354, %v9709
    %v9716 = vld [vmem:[#allocation3 + $0x20] sm:$0xff]
    %v9717 = vld [vmem:[#allocation3 + $0x28] sm:$0xff]
    %v9718 = vld [vmem:[#allocation3 + $0x30] sm:$0xff]
    %v9719 = vld [vmem:[#allocation3 + $0x38] sm:$0xff]
    %v9720 = vld [vmem:[#allocation3 + $0x40] sm:$0x1]
    %v9721 = vld [vmem:[#allocation3 + $0x48] sm:$0x1]
    %v9722 = vld [vmem:[#allocation3 + $0x50] sm:$0x1]
    %v9723 = vld [vmem:[#allocation3 + $0x58] sm:$0x1]
    %v9724 = vld [vmem:[#allocation3 + $0x80] sm:$0xff]
    %v9725 = vld [vmem:[#allocation3 + $0x88] sm:$0xff]
    %v9726 = vld [vmem:[#allocation3 + $0x90] sm:$0xff]
    %v9727 = vld [vmem:[#allocation3 + $0x98] sm:$0xff]
    %v9728 = vld [vmem:[#allocation3 + $0xa0] sm:$0x1]
    %v9729 = vld [vmem:[#allocation3 + $0xa8] sm:$0x1]
    %v9730 = vld [vmem:[#allocation3 + $0xb0] sm:$0x1]
    %v9731 = vld [vmem:[#allocation3 + $0xb8] sm:$0x1]
    %v9733 = vshrl.u32 %v9716, 16
    %v9735 = vshll.u32 %v9716, 16
    %v9737 = vrot.slane %v9735, 1
    %v9738 = vor.u32 %v9733, %v9737
    %v9740 = vshll.u32 %v9720, 16
    %v9742 = vrot.slane %v9740, 1
    %v9743 = vsel %vm1196, %v9738, %v9742
    %v9745 = vshrl.u32 %v9717, 16
    %v9747 = vshll.u32 %v9717, 16
    %v9749 = vrot.slane %v9747, 1
    %v9750 = vor.u32 %v9745, %v9749
    %v9752 = vshll.u32 %v9721, 16
    %v9754 = vrot.slane %v9752, 1
    %v9755 = vsel %vm1196, %v9750, %v9754
    %v9757 = vshrl.u32 %v9718, 16
    %v9759 = vshll.u32 %v9718, 16
    %v9761 = vrot.slane %v9759, 1
    %v9762 = vor.u32 %v9757, %v9761
    %v9764 = vshll.u32 %v9722, 16
    %v9766 = vrot.slane %v9764, 1
    %v9767 = vsel %vm1196, %v9762, %v9766
    %v9769 = vshrl.u32 %v9719, 16
    %v9771 = vshll.u32 %v9719, 16
    %v9773 = vrot.slane %v9771, 1
    %v9774 = vor.u32 %v9769, %v9773
    %v9776 = vshll.u32 %v9723, 16
    %v9778 = vrot.slane %v9776, 1
    %v9779 = vsel %vm1196, %v9774, %v9778
    %v9781 = vshrl.u32 %v9724, 16
    %v9783 = vshll.u32 %v9724, 16
    %v9785 = vrot.slane %v9783, 1
    %v9786 = vor.u32 %v9781, %v9785
    %v9788 = vshll.u32 %v9728, 16
    %v9790 = vrot.slane %v9788, 1
    %v9791 = vsel %vm1196, %v9786, %v9790
    %v9793 = vshrl.u32 %v9725, 16
    %v9795 = vshll.u32 %v9725, 16
    %v9797 = vrot.slane %v9795, 1
    %v9798 = vor.u32 %v9793, %v9797
    %v9800 = vshll.u32 %v9729, 16
    %v9802 = vrot.slane %v9800, 1
    %v9803 = vsel %vm1196, %v9798, %v9802
    %v9805 = vshrl.u32 %v9726, 16
    %v9807 = vshll.u32 %v9726, 16
    %v9809 = vrot.slane %v9807, 1
    %v9810 = vor.u32 %v9805, %v9809
    %v9812 = vshll.u32 %v9730, 16
    %v9814 = vrot.slane %v9812, 1
    %v9815 = vsel %vm1196, %v9810, %v9814
    %v9817 = vshrl.u32 %v9727, 16
    %v9819 = vshll.u32 %v9727, 16
    %v9821 = vrot.slane %v9819, 1
    %v9822 = vor.u32 %v9817, %v9821
    %v9824 = vshll.u32 %v9731, 16
    %v9826 = vrot.slane %v9824, 1
    %v9827 = vsel %vm1196, %v9822, %v9826
    %s9836 = scalar_lea.vmem [#allocation11], 768
    %v9837 = vld [vmem:[%s9836] sm:$0xf]
    %v9838 = vld [vmem:[%s9836 + $0x4] sm:$0xf]
    %v9839 = vld [vmem:[%s9836 + $0x8] sm:$0xf]
    %v9840 = vld [vmem:[%s9836 + $0xc] sm:$0xf]
    %v9841 = vld [vmem:[%s9836 + $0x10] sm:$0xf]
    %v9842 = vld [vmem:[%s9836 + $0x14] sm:$0xf]
    %v9843 = vld [vmem:[%s9836 + $0x18] sm:$0xf]
    %v9844 = vld [vmem:[%s9836 + $0x1c] sm:$0xf]
    %v9845 = vld [vmem:[%s9836 + $0x20] sm:$0xf]
    %v9846 = vld [vmem:[%s9836 + $0x24] sm:$0xf]
    %v9847 = vld [vmem:[%s9836 + $0x28] sm:$0xf]
    %v9848 = vld [vmem:[%s9836 + $0x2c] sm:$0xf]
    %v9849 = vld [vmem:[%s9836 + $0x30] sm:$0xf]
    %v9850 = vld [vmem:[%s9836 + $0x34] sm:$0xf]
    %v9851 = vld [vmem:[%s9836 + $0x38] sm:$0xf]
    %v9852 = vld [vmem:[%s9836 + $0x3c] sm:$0xf]
    %v9853 = vld [vmem:[%s9836 + $0x40] sm:$0xf]
    %v9854 = vld [vmem:[%s9836 + $0x44] sm:$0xf]
    %v9855 = vld [vmem:[%s9836 + $0x48] sm:$0xf]
    %v9856 = vld [vmem:[%s9836 + $0x4c] sm:$0xf]
    %v9857 = vld [vmem:[%s9836 + $0x50] sm:$0xf]
    %v9858 = vld [vmem:[%s9836 + $0x54] sm:$0xf]
    %v9859 = vld [vmem:[%s9836 + $0x58] sm:$0xf]
    %v9860 = vld [vmem:[%s9836 + $0x5c] sm:$0xf]
    %v9861 = vld [vmem:[%s9836 + $0x60] sm:$0xf]
    %v9862 = vld [vmem:[%s9836 + $0x64] sm:$0xf]
    %v9863 = vld [vmem:[%s9836 + $0x68] sm:$0xf]
    %v9864 = vld [vmem:[%s9836 + $0x6c] sm:$0xf]
    %v9865 = vld [vmem:[%s9836 + $0x70] sm:$0xf]
    %v9866 = vld [vmem:[%s9836 + $0x74] sm:$0xf]
    %v9867 = vld [vmem:[%s9836 + $0x78] sm:$0xf]
    %v9868 = vld [vmem:[%s9836 + $0x7c] sm:$0xf]
    %v9869 = vld [vmem:[%s9836 + $0x80] sm:$0xf]
    %v9870 = vld [vmem:[%s9836 + $0x84] sm:$0xf]
    %v9871 = vld [vmem:[%s9836 + $0x88] sm:$0xf]
    %v9872 = vld [vmem:[%s9836 + $0x8c] sm:$0xf]
    %v9873 = vld [vmem:[%s9836 + $0x90] sm:$0xf]
    %v9874 = vld [vmem:[%s9836 + $0x94] sm:$0xf]
    %v9875 = vld [vmem:[%s9836 + $0x98] sm:$0xf]
    %v9876 = vld [vmem:[%s9836 + $0x9c] sm:$0xf]
    %v9877 = vld [vmem:[%s9836 + $0xa0] sm:$0xf]
    %v9878 = vld [vmem:[%s9836 + $0xa4] sm:$0xf]
    %v9879 = vld [vmem:[%s9836 + $0xa8] sm:$0xf]
    %v9880 = vld [vmem:[%s9836 + $0xac] sm:$0xf]
    %v9881 = vld [vmem:[%s9836 + $0xb0] sm:$0xf]
    %v9882 = vld [vmem:[%s9836 + $0xb4] sm:$0xf]
    %v9883 = vld [vmem:[%s9836 + $0xb8] sm:$0xf]
    %v9884 = vld [vmem:[%s9836 + $0xbc] sm:$0xf]
    %v9885 = vld [vmem:[%s9836 + $0xc0] sm:$0xf]
    %v9886 = vld [vmem:[%s9836 + $0xc4] sm:$0xf]
    %v9887 = vld [vmem:[%s9836 + $0xc8] sm:$0xf]
    %v9888 = vld [vmem:[%s9836 + $0xcc] sm:$0xf]
    %v9889 = vld [vmem:[%s9836 + $0xd0] sm:$0xf]
    %v9890 = vld [vmem:[%s9836 + $0xd4] sm:$0xf]
    %v9891 = vld [vmem:[%s9836 + $0xd8] sm:$0xf]
    %v9892 = vld [vmem:[%s9836 + $0xdc] sm:$0xf]
    %v9893 = vld [vmem:[%s9836 + $0xe0] sm:$0xf]
    %v9894 = vld [vmem:[%s9836 + $0xe4] sm:$0xf]
    %v9895 = vld [vmem:[%s9836 + $0xe8] sm:$0xf]
    %v9896 = vld [vmem:[%s9836 + $0xec] sm:$0xf]
    %v9897 = vld [vmem:[%s9836 + $0xf0] sm:$0xf]
    %v9898 = vld [vmem:[%s9836 + $0xf4] sm:$0xf]
    %v9899 = vld [vmem:[%s9836 + $0xf8] sm:$0xf]
    %v9900 = vld [vmem:[%s9836 + $0xfc] sm:$0xf]
    %v9965 = vunpack.c.l.b16 %v9837
    %v9966 = vunpack.c.l.b16 %v9838
    %v9967 = vunpack.c.l.b16 %v9839
    %v9968 = vunpack.c.l.b16 %v9840
    %v9969 = vunpack.c.l.b16 %v9841
    %v9970 = vunpack.c.l.b16 %v9842
    %v9971 = vunpack.c.l.b16 %v9843
    %v9972 = vunpack.c.l.b16 %v9844
    %v9973 = vunpack.c.l.b16 %v9845
    %v9974 = vunpack.c.l.b16 %v9846
    %v9975 = vunpack.c.l.b16 %v9847
    %v9976 = vunpack.c.l.b16 %v9848
    %v9977 = vunpack.c.l.b16 %v9849
    %v9978 = vunpack.c.l.b16 %v9850
    %v9979 = vunpack.c.l.b16 %v9851
    %v9980 = vunpack.c.l.b16 %v9852
    %v9981 = vunpack.c.l.b16 %v9853
    %v9982 = vunpack.c.l.b16 %v9854
    %v9983 = vunpack.c.l.b16 %v9855
    %v9984 = vunpack.c.l.b16 %v9856
    %v9985 = vunpack.c.l.b16 %v9857
    %v9986 = vunpack.c.l.b16 %v9858
    %v9987 = vunpack.c.l.b16 %v9859
    %v9988 = vunpack.c.l.b16 %v9860
    %v9989 = vunpack.c.l.b16 %v9861
    %v9990 = vunpack.c.l.b16 %v9862
    %v9991 = vunpack.c.l.b16 %v9863
    %v9992 = vunpack.c.l.b16 %v9864
    %v9993 = vunpack.c.l.b16 %v9865
    %v9994 = vunpack.c.l.b16 %v9866
    %v9995 = vunpack.c.l.b16 %v9867
    %v9996 = vunpack.c.l.b16 %v9868
    %v9997 = vunpack.c.l.b16 %v9869
    %v9998 = vunpack.c.l.b16 %v9870
    %v9999 = vunpack.c.l.b16 %v9871
    %v10000 = vunpack.c.l.b16 %v9872
    %v10001 = vunpack.c.l.b16 %v9873
    %v10002 = vunpack.c.l.b16 %v9874
    %v10003 = vunpack.c.l.b16 %v9875
    %v10004 = vunpack.c.l.b16 %v9876
    %v10005 = vunpack.c.l.b16 %v9877
    %v10006 = vunpack.c.l.b16 %v9878
    %v10007 = vunpack.c.l.b16 %v9879
    %v10008 = vunpack.c.l.b16 %v9880
    %v10009 = vunpack.c.l.b16 %v9881
    %v10010 = vunpack.c.l.b16 %v9882
    %v10011 = vunpack.c.l.b16 %v9883
    %v10012 = vunpack.c.l.b16 %v9884
    %v10013 = vunpack.c.l.b16 %v9885
    %v10014 = vunpack.c.l.b16 %v9886
    %v10015 = vunpack.c.l.b16 %v9887
    %v10016 = vunpack.c.l.b16 %v9888
    %v10017 = vunpack.c.l.b16 %v9889
    %v10018 = vunpack.c.l.b16 %v9890
    %v10019 = vunpack.c.l.b16 %v9891
    %v10020 = vunpack.c.l.b16 %v9892
    %v10021 = vunpack.c.l.b16 %v9893
    %v10022 = vunpack.c.l.b16 %v9894
    %v10023 = vunpack.c.l.b16 %v9895
    %v10024 = vunpack.c.l.b16 %v9896
    %v10025 = vunpack.c.l.b16 %v9897
    %v10026 = vunpack.c.l.b16 %v9898
    %v10027 = vunpack.c.l.b16 %v9899
    %v10028 = vunpack.c.l.b16 %v9900
    %v10029 = vpack.c.b16 %v9966, %v9965
    %v10030 = vpack.c.b16 %v9968, %v9967
    %v10031 = vpack.c.b16 %v9970, %v9969
    %v10032 = vpack.c.b16 %v9972, %v9971
    %v10033 = vpack.c.b16 %v9974, %v9973
    %v10034 = vpack.c.b16 %v9976, %v9975
    %v10035 = vpack.c.b16 %v9978, %v9977
    %v10036 = vpack.c.b16 %v9980, %v9979
    %v10037 = vpack.c.b16 %v9982, %v9981
    %v10038 = vpack.c.b16 %v9984, %v9983
    %v10039 = vpack.c.b16 %v9986, %v9985
    %v10040 = vpack.c.b16 %v9988, %v9987
    %v10041 = vpack.c.b16 %v9990, %v9989
    %v10042 = vpack.c.b16 %v9992, %v9991
    %v10043 = vpack.c.b16 %v9994, %v9993
    %v10044 = vpack.c.b16 %v9996, %v9995
    %v10045 = vpack.c.b16 %v9998, %v9997
    %v10046 = vpack.c.b16 %v10000, %v9999
    %v10047 = vpack.c.b16 %v10002, %v10001
    %v10048 = vpack.c.b16 %v10004, %v10003
    %v10049 = vpack.c.b16 %v10006, %v10005
    %v10050 = vpack.c.b16 %v10008, %v10007
    %v10051 = vpack.c.b16 %v10010, %v10009
    %v10052 = vpack.c.b16 %v10012, %v10011
    %v10053 = vpack.c.b16 %v10014, %v10013
    %v10054 = vpack.c.b16 %v10016, %v10015
    %v10055 = vpack.c.b16 %v10018, %v10017
    %v10056 = vpack.c.b16 %v10020, %v10019
    %v10057 = vpack.c.b16 %v10022, %v10021
    %v10058 = vpack.c.b16 %v10024, %v10023
    %v10059 = vpack.c.b16 %v10026, %v10025
    %v10060 = vpack.c.b16 %v10028, %v10027
    %10093 = vmatprep.subr.bf16.mxu0 0
    %10094 = vmatpush1.bf16.msra.mxu0 %v10029
    %10095 = vmatprep.subr.bf16.mxu0 0
    %10096 = vmatpush1.bf16.msra.mxu0 %v10030
    %10097 = vmatprep.subr.bf16.mxu0 0
    %10098 = vmatpush1.bf16.msra.mxu0 %v10031
    %10099 = vmatprep.subr.bf16.mxu0 0
    %10100 = vmatpush1.bf16.msra.mxu0 %v10032
    %10101 = vmatprep.subr.bf16.mxu0 0
    %10102 = vmatpush1.bf16.msra.mxu0 %v10033
    %10103 = vmatprep.subr.bf16.mxu0 0
    %10104 = vmatpush1.bf16.msra.mxu0 %v10034
    %10105 = vmatprep.subr.bf16.mxu0 0
    %10106 = vmatpush1.bf16.msra.mxu0 %v10035
    %10107 = vmatprep.subr.bf16.mxu0 0
    %10108 = vmatpush1.bf16.msra.mxu0 %v10036
    %10109 = vmatprep.subr.bf16.mxu0 0
    %10110 = vmatpush1.bf16.msra.mxu0 %v10037
    %10111 = vmatprep.subr.bf16.mxu0 0
    %10112 = vmatpush1.bf16.msra.mxu0 %v10038
    %10113 = vmatprep.subr.bf16.mxu0 0
    %10114 = vmatpush1.bf16.msra.mxu0 %v10039
    %10115 = vmatprep.subr.bf16.mxu0 0
    %10116 = vmatpush1.bf16.msra.mxu0 %v10040
    %10117 = vmatprep.subr.bf16.mxu0 0
    %10118 = vmatpush1.bf16.msra.mxu0 %v10041
    %10119 = vmatprep.subr.bf16.mxu0 0
    %10120 = vmatpush1.bf16.msra.mxu0 %v10042
    %10121 = vmatprep.subr.bf16.mxu0 0
    %10122 = vmatpush1.bf16.msra.mxu0 %v10043
    %10123 = vmatprep.subr.bf16.mxu0 0
    %10124 = vmatpush1.bf16.msra.mxu0 %v10044
    %10125 = vmatprep.mubr.bf16.mxu0 %v9755
    %10126 = vmatmul.mubr.bf16.gmra.mrb[0].mxu0 %v9743
    %v10127 = vpop.f32.mrb[0].mxu0
    %v10128 = vadd.f32 0.0, %v10127
    %v10129 = vpop.f32.mrb[0].mxu0
    %v10130 = vpop.f32.mrb[0].mxu0
    %v10131 = vadd.f32 0.0, %v10130
    %v10132 = vpop.f32.mrb[0].mxu0
    %10133 = vmatprep.mubr.bf16.mxu0 %v9803
    %10134 = vmatmul.mubr.bf16.gmra.mrb[0].mxu0 %v9791
    %v10135 = vpop.f32.mrb[0].mxu0
    %v10136 = vadd.f32 0.0, %v10135
    %v10137 = vpop.f32.mrb[0].mxu0
    %v10138 = vpop.f32.mrb[0].mxu0
    %v10139 = vadd.f32 0.0, %v10138
    %v10140 = vpop.f32.mrb[0].mxu0
    %10141 = vdwg.mxu0
    %10142 = vmatprep.subr.bf16.mxu0 0
    %10143 = vmatpush1.bf16.msra.mxu0 %v10045
    %10144 = vmatprep.subr.bf16.mxu0 0
    %10145 = vmatpush1.bf16.msra.mxu0 %v10046
    %10146 = vmatprep.subr.bf16.mxu0 0
    %10147 = vmatpush1.bf16.msra.mxu0 %v10047
    %10148 = vmatprep.subr.bf16.mxu0 0
    %10149 = vmatpush1.bf16.msra.mxu0 %v10048
    %10150 = vmatprep.subr.bf16.mxu0 0
    %10151 = vmatpush1.bf16.msra.mxu0 %v10049
    %10152 = vmatprep.subr.bf16.mxu0 0
    %10153 = vmatpush1.bf16.msra.mxu0 %v10050
    %10154 = vmatprep.subr.bf16.mxu0 0
    %10155 = vmatpush1.bf16.msra.mxu0 %v10051
    %10156 = vmatprep.subr.bf16.mxu0 0
    %10157 = vmatpush1.bf16.msra.mxu0 %v10052
    %10158 = vmatprep.subr.bf16.mxu0 0
    %10159 = vmatpush1.bf16.msra.mxu0 %v10053
    %10160 = vmatprep.subr.bf16.mxu0 0
    %10161 = vmatpush1.bf16.msra.mxu0 %v10054
    %10162 = vmatprep.subr.bf16.mxu0 0
    %10163 = vmatpush1.bf16.msra.mxu0 %v10055
    %10164 = vmatprep.subr.bf16.mxu0 0
    %10165 = vmatpush1.bf16.msra.mxu0 %v10056
    %10166 = vmatprep.subr.bf16.mxu0 0
    %10167 = vmatpush1.bf16.msra.mxu0 %v10057
    %10168 = vmatprep.subr.bf16.mxu0 0
    %10169 = vmatpush1.bf16.msra.mxu0 %v10058
    %10170 = vmatprep.subr.bf16.mxu0 0
    %10171 = vmatpush1.bf16.msra.mxu0 %v10059
    %10172 = vmatprep.subr.bf16.mxu0 0
    %10173 = vmatpush1.bf16.msra.mxu0 %v10060
    %10174 = vmatprep.mubr.bf16.mxu0 %v9779
    %10175 = vmatmul.mubr.bf16.gmra.mrb[0].mxu0 %v9767
    %v10176 = vpop.f32.mrb[0].mxu0
    %v10177 = vadd.f32 %v10128, %v10176
    %v10178 = vpop.f32.mrb[0].mxu0
    %v10179 = vpop.f32.mrb[0].mxu0
    %v10180 = vadd.f32 %v10131, %v10179
    %v10181 = vpop.f32.mrb[0].mxu0
    %10182 = vmatprep.mubr.bf16.mxu0 %v9827
    %10183 = vmatmul.mubr.bf16.gmra.mrb[0].mxu0 %v9815
    %v10184 = vpop.f32.mrb[0].mxu0
    %v10185 = vadd.f32 %v10136, %v10184
    %v10186 = vpop.f32.mrb[0].mxu0
    %v10187 = vpop.f32.mrb[0].mxu0
    %v10188 = vadd.f32 %v10139, %v10187
    %v10189 = vpop.f32.mrb[0].mxu0
    %10190 = vdwg.mxu0
    %v10191 = vadd.f32 %v9712, %v10177
    %v10192 = vadd.f32 %v9713, %v10180
    %v10193 = vadd.f32 %v9714, %v10185
    %v10194 = vadd.f32 %v9715, %v10188
    %v10195 = vld [vmem:[#allocation3 + $0x20] sm:$0xfe]
    %v10196 = vld [vmem:[#allocation3 + $0x28] sm:$0xfe]
    %v10197 = vld [vmem:[#allocation3 + $0x30] sm:$0xfe]
    %v10198 = vld [vmem:[#allocation3 + $0x38] sm:$0xfe]
    %v10199 = vld [vmem:[#allocation3 + $0x80] sm:$0xfe]
    %v10200 = vld [vmem:[#allocation3 + $0x88] sm:$0xfe]
    %v10201 = vld [vmem:[#allocation3 + $0x90] sm:$0xfe]
    %v10202 = vld [vmem:[#allocation3 + $0x98] sm:$0xfe]
    %v10219 = vrot.slane %v10195, 1
    %v10220 = vrot.slane %v9720, 1
    %v10221 = vsel %vm1544, %v10219, %v10220
    %v10222 = vrot.slane %v10196, 1
    %v10223 = vrot.slane %v9721, 1
    %v10224 = vsel %vm1544, %v10222, %v10223
    %v10225 = vrot.slane %v10197, 1
    %v10226 = vrot.slane %v9722, 1
    %v10227 = vsel %vm1544, %v10225, %v10226
    %v10228 = vrot.slane %v10198, 1
    %v10229 = vrot.slane %v9723, 1
    %v10230 = vsel %vm1544, %v10228, %v10229
    %v10231 = vrot.slane %v10199, 1
    %v10232 = vrot.slane %v9728, 1
    %v10233 = vsel %vm1544, %v10231, %v10232
    %v10234 = vrot.slane %v10200, 1
    %v10235 = vrot.slane %v9729, 1
    %v10236 = vsel %vm1544, %v10234, %v10235
    %v10237 = vrot.slane %v10201, 1
    %v10238 = vrot.slane %v9730, 1
    %v10239 = vsel %vm1544, %v10237, %v10238
    %v10240 = vrot.slane %v10202, 1
    %v10241 = vrot.slane %v9731, 1
    %v10242 = vsel %vm1544, %v10240, %v10241
    %s10251 = scalar_lea.vmem [#allocation11], 1024
    %v10252 = vld [vmem:[%s10251] sm:$0xf]
    %v10253 = vld [vmem:[%s10251 + $0x4] sm:$0xf]
    %v10254 = vld [vmem:[%s10251 + $0x8] sm:$0xf]
    %v10255 = vld [vmem:[%s10251 + $0xc] sm:$0xf]
    %v10256 = vld [vmem:[%s10251 + $0x10] sm:$0xf]
    %v10257 = vld [vmem:[%s10251 + $0x14] sm:$0xf]
    %v10258 = vld [vmem:[%s10251 + $0x18] sm:$0xf]
    %v10259 = vld [vmem:[%s10251 + $0x1c] sm:$0xf]
    %v10260 = vld [vmem:[%s10251 + $0x20] sm:$0xf]
    %v10261 = vld [vmem:[%s10251 + $0x24] sm:$0xf]
    %v10262 = vld [vmem:[%s10251 + $0x28] sm:$0xf]
    %v10263 = vld [vmem:[%s10251 + $0x2c] sm:$0xf]
    %v10264 = vld [vmem:[%s10251 + $0x30] sm:$0xf]
    %v10265 = vld [vmem:[%s10251 + $0x34] sm:$0xf]
    %v10266 = vld [vmem:[%s10251 + $0x38] sm:$0xf]
    %v10267 = vld [vmem:[%s10251 + $0x3c] sm:$0xf]
    %v10268 = vld [vmem:[%s10251 + $0x40] sm:$0xf]
    %v10269 = vld [vmem:[%s10251 + $0x44] sm:$0xf]
    %v10270 = vld [vmem:[%s10251 + $0x48] sm:$0xf]
    %v10271 = vld [vmem:[%s10251 + $0x4c] sm:$0xf]
    %v10272 = vld [vmem:[%s10251 + $0x50] sm:$0xf]
    %v10273 = vld [vmem:[%s10251 + $0x54] sm:$0xf]
    %v10274 = vld [vmem:[%s10251 + $0x58] sm:$0xf]
    %v10275 = vld [vmem:[%s10251 + $0x5c] sm:$0xf]
    %v10276 = vld [vmem:[%s10251 + $0x60] sm:$0xf]
    %v10277 = vld [vmem:[%s10251 + $0x64] sm:$0xf]
    %v10278 = vld [vmem:[%s10251 + $0x68] sm:$0xf]
    %v10279 = vld [vmem:[%s10251 + $0x6c] sm:$0xf]
    %v10280 = vld [vmem:[%s10251 + $0x70] sm:$0xf]
    %v10281 = vld [vmem:[%s10251 + $0x74] sm:$0xf]
    %v10282 = vld [vmem:[%s10251 + $0x78] sm:$0xf]
    %v10283 = vld [vmem:[%s10251 + $0x7c] sm:$0xf]
    %v10284 = vld [vmem:[%s10251 + $0x80] sm:$0xf]
    %v10285 = vld [vmem:[%s10251 + $0x84] sm:$0xf]
    %v10286 = vld [vmem:[%s10251 + $0x88] sm:$0xf]
    %v10287 = vld [vmem:[%s10251 + $0x8c] sm:$0xf]
    %v10288 = vld [vmem:[%s10251 + $0x90] sm:$0xf]
    %v10289 = vld [vmem:[%s10251 + $0x94] sm:$0xf]
    %v10290 = vld [vmem:[%s10251 + $0x98] sm:$0xf]
    %v10291 = vld [vmem:[%s10251 + $0x9c] sm:$0xf]
    %v10292 = vld [vmem:[%s10251 + $0xa0] sm:$0xf]
    %v10293 = vld [vmem:[%s10251 + $0xa4] sm:$0xf]
    %v10294 = vld [vmem:[%s10251 + $0xa8] sm:$0xf]
    %v10295 = vld [vmem:[%s10251 + $0xac] sm:$0xf]
    %v10296 = vld [vmem:[%s10251 + $0xb0] sm:$0xf]
    %v10297 = vld [vmem:[%s10251 + $0xb4] sm:$0xf]
    %v10298 = vld [vmem:[%s10251 + $0xb8] sm:$0xf]
    %v10299 = vld [vmem:[%s10251 + $0xbc] sm:$0xf]
    %v10300 = vld [vmem:[%s10251 + $0xc0] sm:$0xf]
    %v10301 = vld [vmem:[%s10251 + $0xc4] sm:$0xf]
    %v10302 = vld [vmem:[%s10251 + $0xc8] sm:$0xf]
    %v10303 = vld [vmem:[%s10251 + $0xcc] sm:$0xf]
    %v10304 = vld [vmem:[%s10251 + $0xd0] sm:$0xf]
    %v10305 = vld [vmem:[%s10251 + $0xd4] sm:$0xf]
    %v10306 = vld [vmem:[%s10251 + $0xd8] sm:$0xf]
    %v10307 = vld [vmem:[%s10251 + $0xdc] sm:$0xf]
    %v10308 = vld [vmem:[%s10251 + $0xe0] sm:$0xf]
    %v10309 = vld [vmem:[%s10251 + $0xe4] sm:$0xf]
    %v10310 = vld [vmem:[%s10251 + $0xe8] sm:$0xf]
    %v10311 = vld [vmem:[%s10251 + $0xec] sm:$0xf]
    %v10312 = vld [vmem:[%s10251 + $0xf0] sm:$0xf]
    %v10313 = vld [vmem:[%s10251 + $0xf4] sm:$0xf]
    %v10314 = vld [vmem:[%s10251 + $0xf8] sm:$0xf]
    %v10315 = vld [vmem:[%s10251 + $0xfc] sm:$0xf]
    %v10380 = vunpack.c.l.b16 %v10252
    %v10381 = vunpack.c.l.b16 %v10253
    %v10382 = vunpack.c.l.b16 %v10254
    %v10383 = vunpack.c.l.b16 %v10255
    %v10384 = vunpack.c.l.b16 %v10256
    %v10385 = vunpack.c.l.b16 %v10257
    %v10386 = vunpack.c.l.b16 %v10258
    %v10387 = vunpack.c.l.b16 %v10259
    %v10388 = vunpack.c.l.b16 %v10260
    %v10389 = vunpack.c.l.b16 %v10261
    %v10390 = vunpack.c.l.b16 %v10262
    %v10391 = vunpack.c.l.b16 %v10263
    %v10392 = vunpack.c.l.b16 %v10264
    %v10393 = vunpack.c.l.b16 %v10265
    %v10394 = vunpack.c.l.b16 %v10266
    %v10395 = vunpack.c.l.b16 %v10267
    %v10396 = vunpack.c.l.b16 %v10268
    %v10397 = vunpack.c.l.b16 %v10269
    %v10398 = vunpack.c.l.b16 %v10270
    %v10399 = vunpack.c.l.b16 %v10271
    %v10400 = vunpack.c.l.b16 %v10272
    %v10401 = vunpack.c.l.b16 %v10273
    %v10402 = vunpack.c.l.b16 %v10274
    %v10403 = vunpack.c.l.b16 %v10275
    %v10404 = vunpack.c.l.b16 %v10276
    %v10405 = vunpack.c.l.b16 %v10277
    %v10406 = vunpack.c.l.b16 %v10278
    %v10407 = vunpack.c.l.b16 %v10279
    %v10408 = vunpack.c.l.b16 %v10280
    %v10409 = vunpack.c.l.b16 %v10281
    %v10410 = vunpack.c.l.b16 %v10282
    %v10411 = vunpack.c.l.b16 %v10283
    %v10412 = vunpack.c.l.b16 %v10284
    %v10413 = vunpack.c.l.b16 %v10285
    %v10414 = vunpack.c.l.b16 %v10286
    %v10415 = vunpack.c.l.b16 %v10287
    %v10416 = vunpack.c.l.b16 %v10288
    %v10417 = vunpack.c.l.b16 %v10289
    %v10418 = vunpack.c.l.b16 %v10290
    %v10419 = vunpack.c.l.b16 %v10291
    %v10420 = vunpack.c.l.b16 %v10292
    %v10421 = vunpack.c.l.b16 %v10293
    %v10422 = vunpack.c.l.b16 %v10294
    %v10423 = vunpack.c.l.b16 %v10295
    %v10424 = vunpack.c.l.b16 %v10296
    %v10425 = vunpack.c.l.b16 %v10297
    %v10426 = vunpack.c.l.b16 %v10298
    %v10427 = vunpack.c.l.b16 %v10299
    %v10428 = vunpack.c.l.b16 %v10300
    %v10429 = vunpack.c.l.b16 %v10301
    %v10430 = vunpack.c.l.b16 %v10302
    %v10431 = vunpack.c.l.b16 %v10303
    %v10432 = vunpack.c.l.b16 %v10304
    %v10433 = vunpack.c.l.b16 %v10305
    %v10434 = vunpack.c.l.b16 %v10306
    %v10435 = vunpack.c.l.b16 %v10307
    %v10436 = vunpack.c.l.b16 %v10308
    %v10437 = vunpack.c.l.b16 %v10309
    %v10438 = vunpack.c.l.b16 %v10310
    %v10439 = vunpack.c.l.b16 %v10311
    %v10440 = vunpack.c.l.b16 %v10312
    %v10441 = vunpack.c.l.b16 %v10313
    %v10442 = vunpack.c.l.b16 %v10314
    %v10443 = vunpack.c.l.b16 %v10315
    %v10444 = vpack.c.b16 %v10381, %v10380
    %v10445 = vpack.c.b16 %v10383, %v10382
    %v10446 = vpack.c.b16 %v10385, %v10384
    %v10447 = vpack.c.b16 %v10387, %v10386
    %v10448 = vpack.c.b16 %v10389, %v10388
    %v10449 = vpack.c.b16 %v10391, %v10390
    %v10450 = vpack.c.b16 %v10393, %v10392
    %v10451 = vpack.c.b16 %v10395, %v10394
    %v10452 = vpack.c.b16 %v10397, %v10396
    %v10453 = vpack.c.b16 %v10399, %v10398
    %v10454 = vpack.c.b16 %v10401, %v10400
    %v10455 = vpack.c.b16 %v10403, %v10402
    %v10456 = vpack.c.b16 %v10405, %v10404
    %v10457 = vpack.c.b16 %v10407, %v10406
    %v10458 = vpack.c.b16 %v10409, %v10408
    %v10459 = vpack.c.b16 %v10411, %v10410
    %v10460 = vpack.c.b16 %v10413, %v10412
    %v10461 = vpack.c.b16 %v10415, %v10414
    %v10462 = vpack.c.b16 %v10417, %v10416
    %v10463 = vpack.c.b16 %v10419, %v10418
    %v10464 = vpack.c.b16 %v10421, %v10420
    %v10465 = vpack.c.b16 %v10423, %v10422
    %v10466 = vpack.c.b16 %v10425, %v10424
    %v10467 = vpack.c.b16 %v10427, %v10426
    %v10468 = vpack.c.b16 %v10429, %v10428
    %v10469 = vpack.c.b16 %v10431, %v10430
    %v10470 = vpack.c.b16 %v10433, %v10432
    %v10471 = vpack.c.b16 %v10435, %v10434
    %v10472 = vpack.c.b16 %v10437, %v10436
    %v10473 = vpack.c.b16 %v10439, %v10438
    %v10474 = vpack.c.b16 %v10441, %v10440
    %v10475 = vpack.c.b16 %v10443, %v10442
    %10508 = vmatprep.subr.bf16.mxu0 0
    %10509 = vmatpush1.bf16.msra.mxu0 %v10444
    %10510 = vmatprep.subr.bf16.mxu0 0
    %10511 = vmatpush1.bf16.msra.mxu0 %v10445
    %10512 = vmatprep.subr.bf16.mxu0 0
    %10513 = vmatpush1.bf16.msra.mxu0 %v10446
    %10514 = vmatprep.subr.bf16.mxu0 0
    %10515 = vmatpush1.bf16.msra.mxu0 %v10447
    %10516 = vmatprep.subr.bf16.mxu0 0
    %10517 = vmatpush1.bf16.msra.mxu0 %v10448
    %10518 = vmatprep.subr.bf16.mxu0 0
    %10519 = vmatpush1.bf16.msra.mxu0 %v10449
    %10520 = vmatprep.subr.bf16.mxu0 0
    %10521 = vmatpush1.bf16.msra.mxu0 %v10450
    %10522 = vmatprep.subr.bf16.mxu0 0
    %10523 = vmatpush1.bf16.msra.mxu0 %v10451
    %10524 = vmatprep.subr.bf16.mxu0 0
    %10525 = vmatpush1.bf16.msra.mxu0 %v10452
    %10526 = vmatprep.subr.bf16.mxu0 0
    %10527 = vmatpush1.bf16.msra.mxu0 %v10453
    %10528 = vmatprep.subr.bf16.mxu0 0
    %10529 = vmatpush1.bf16.msra.mxu0 %v10454
    %10530 = vmatprep.subr.bf16.mxu0 0
    %10531 = vmatpush1.bf16.msra.mxu0 %v10455
    %10532 = vmatprep.subr.bf16.mxu0 0
    %10533 = vmatpush1.bf16.msra.mxu0 %v10456
    %10534 = vmatprep.subr.bf16.mxu0 0
    %10535 = vmatpush1.bf16.msra.mxu0 %v10457
    %10536 = vmatprep.subr.bf16.mxu0 0
    %10537 = vmatpush1.bf16.msra.mxu0 %v10458
    %10538 = vmatprep.subr.bf16.mxu0 0
    %10539 = vmatpush1.bf16.msra.mxu0 %v10459
    %10540 = vmatprep.mubr.bf16.mxu0 %v10224
    %10541 = vmatmul.mubr.bf16.gmra.mrb[0].mxu0 %v10221
    %v10542 = vpop.f32.mrb[0].mxu0
    %v10543 = vadd.f32 0.0, %v10542
    %v10544 = vpop.f32.mrb[0].mxu0
    %v10545 = vpop.f32.mrb[0].mxu0
    %v10546 = vadd.f32 0.0, %v10545
    %v10547 = vpop.f32.mrb[0].mxu0
    %10548 = vmatprep.mubr.bf16.mxu0 %v10236
    %10549 = vmatmul.mubr.bf16.gmra.mrb[0].mxu0 %v10233
    %v10550 = vpop.f32.mrb[0].mxu0
    %v10551 = vadd.f32 0.0, %v10550
    %v10552 = vpop.f32.mrb[0].mxu0
    %v10553 = vpop.f32.mrb[0].mxu0
    %v10554 = vadd.f32 0.0, %v10553
    %v10555 = vpop.f32.mrb[0].mxu0
    %10556 = vdwg.mxu0
    %10557 = vmatprep.subr.bf16.mxu0 0
    %10558 = vmatpush1.bf16.msra.mxu0 %v10460
    %10559 = vmatprep.subr.bf16.mxu0 0
    %10560 = vmatpush1.bf16.msra.mxu0 %v10461
    %10561 = vmatprep.subr.bf16.mxu0 0
    %10562 = vmatpush1.bf16.msra.mxu0 %v10462
    %10563 = vmatprep.subr.bf16.mxu0 0
    %10564 = vmatpush1.bf16.msra.mxu0 %v10463
    %10565 = vmatprep.subr.bf16.mxu0 0
    %10566 = vmatpush1.bf16.msra.mxu0 %v10464
    %10567 = vmatprep.subr.bf16.mxu0 0
    %10568 = vmatpush1.bf16.msra.mxu0 %v10465
    %10569 = vmatprep.subr.bf16.mxu0 0
    %10570 = vmatpush1.bf16.msra.mxu0 %v10466
    %10571 = vmatprep.subr.bf16.mxu0 0
    %10572 = vmatpush1.bf16.msra.mxu0 %v10467
    %10573 = vmatprep.subr.bf16.mxu0 0
    %10574 = vmatpush1.bf16.msra.mxu0 %v10468
    %10575 = vmatprep.subr.bf16.mxu0 0
    %10576 = vmatpush1.bf16.msra.mxu0 %v10469
    %10577 = vmatprep.subr.bf16.mxu0 0
    %10578 = vmatpush1.bf16.msra.mxu0 %v10470
    %10579 = vmatprep.subr.bf16.mxu0 0
    %10580 = vmatpush1.bf16.msra.mxu0 %v10471
    %10581 = vmatprep.subr.bf16.mxu0 0
    %10582 = vmatpush1.bf16.msra.mxu0 %v10472
    %10583 = vmatprep.subr.bf16.mxu0 0
    %10584 = vmatpush1.bf16.msra.mxu0 %v10473
    %10585 = vmatprep.subr.bf16.mxu0 0
    %10586 = vmatpush1.bf16.msra.mxu0 %v10474
    %10587 = vmatprep.subr.bf16.mxu0 0
    %10588 = vmatpush1.bf16.msra.mxu0 %v10475
    %10589 = vmatprep.mubr.bf16.mxu0 %v10230
    %10590 = vmatmul.mubr.bf16.gmra.mrb[0].mxu0 %v10227
    %v10591 = vpop.f32.mrb[0].mxu0
    %v10592 = vadd.f32 %v10543, %v10591
    %v10593 = vpop.f32.mrb[0].mxu0
    %v10594 = vpop.f32.mrb[0].mxu0
    %v10595 = vadd.f32 %v10546, %v10594
    %v10596 = vpop.f32.mrb[0].mxu0
    %10597 = vmatprep.mubr.bf16.mxu0 %v10242
    %10598 = vmatmul.mubr.bf16.gmra.mrb[0].mxu0 %v10239
    %v10599 = vpop.f32.mrb[0].mxu0
    %v10600 = vadd.f32 %v10551, %v10599
    %v10601 = vpop.f32.mrb[0].mxu0
    %v10602 = vpop.f32.mrb[0].mxu0
    %v10603 = vadd.f32 %v10554, %v10602
    %v10604 = vpop.f32.mrb[0].mxu0
    %10605 = vdwg.mxu0
    %v10606 = vadd.f32 %v10191, %v10592
    %v10607 = vadd.f32 %v10192, %v10595
    %v10608 = vadd.f32 %v10193, %v10600
    %v10609 = vadd.f32 %v10194, %v10603
    %v10610 = vld [vmem:[#allocation14] sm:$0x1]
    %v10612 = vlaneseq
    %v10613 = vshrl.u32 %v10612, 7
    %v10614 = vsub.s32 0, %v10613
    %v10615 = vrot.slane %v10610, %v10614
    %v10617 = vadd.f32 %v10606, %v10615
    %v10618 = vadd.f32 %v10607, %v10615
    %v10619 = vadd.f32 %v10608, %v10615
    %v10620 = vadd.f32 %v10609, %v10615
    %10621 = vst [vmem:[#allocation15] sm:$0xff] %v10617
    %10622 = vst [vmem:[#allocation15 + $0x8] sm:$0xff] %v10618
    %10623 = vst [vmem:[#allocation15 + $0x10] sm:$0xff] %v10619
    %10624 = vst [vmem:[#allocation15 + $0x18] sm:$0xff] %v10620
    // Predicated region
    $region42: #{tpu_custom_call.1} parent=1 // pred_check
      _
    $region43: #{tpu_custom_call.1} parent=1 // pred_check_branch
      %10626 = sbr.rel (0) target = $region45
    $region44: #{tpu_custom_call.1} parent=1 // pred_region
      %s10628 = ssub.s32 512, 512
      %10629 = vsyncadd [#allocation8], %s10628
      %s10630 = sshll.u32 [#allocation15], 4
      %s10631 = int_to_ptr.vmem [resolvable:$true] %s10630
      %10636 = dma.vmem_to_hbm [thread:$0]  %s10631, 512, %s6, [#allocation8], 128, 128, 8
    $region45: #{tpu_custom_call.1} parent=1 // pred_fallthru
      _
    // Predicated region
    $region46: #{tpu_custom_call.1} parent=1 // pred_check
      _
    $region47: #{tpu_custom_call.1} parent=1 // pred_check_branch
      %10638 = sbr.rel (0) target = $region49
    $region48: #{tpu_custom_call.1} parent=1 // pred_region
      %10639 = dma.done [#allocation8], 512
    $region49: #{tpu_custom_call.1} parent=1 // pred_fallthru
      _
    %10640 = vsyncpa [#allocation7], 1
    %10641 = vsyncpa [#allocation10], 1
    %10642 = vsyncpa [#allocation13], 1
    %10643 = vsyncpa [#allocation8], 1
  %10644 = vsyncmov [#allocation5]
  %s10645 = vpop.sfrf %10644
  %p10646 = scmp.eq.s32.totalorder %s10645, 0
  %p10647 = pneg %p10646
  %10649 = shalt.err (%p10647)
  %s10650 = scalar_lea.sflag [#allocation5], 1
  %10651 = vsyncmov %s10650
  %s10652 = vpop.sfrf %10651
  %p10653 = scmp.eq.s32.totalorder %s10652, 0
  %p10654 = pneg %p10653
  %10656 = shalt.err (%p10654)
  %s10657 = scalar_lea.sflag [#allocation5], 2
  %10658 = vsyncmov %s10657
  %s10659 = vpop.sfrf %10658
  %p10660 = scmp.eq.s32.totalorder %s10659, 0
  %p10661 = pneg %p10660
  %10663 = shalt.err (%p10661)

</llo_original>
